<compile_context>
chip_gen: v6e
topology: v6e:2x2x1
jax: 0.10.0
libtpu: 0.0.40
codegen_flags: <defaults>
</compile_context>

<pallas_src>
import functools

import numpy as np
import jax
import jax.numpy as jnp
from jax import lax
from jax.experimental import pallas as pl
from jax.experimental.pallas import tpu as pltpu


# ----------------------------- bilinear x2 matrix (align_corners=False) ------

def _bilinear_matrix(n_in, scale=2):
    """PyTorch F.interpolate(mode='bilinear', align_corners=False), 1-D factor, as a matrix."""
    n_out = n_in * scale
    M = np.zeros((n_out, n_in), dtype=np.float32)
    for j in range(n_out):
        xsrc = (j + 0.5) / scale - 0.5
        x0 = int(np.floor(xsrc))
        w1 = xsrc - x0
        i0 = min(max(x0, 0), n_in - 1)
        i1 = min(max(x0 + 1, 0), n_in - 1)
        M[j, i0] += 1.0 - w1
        M[j, i1] += w1
    return M


# ----------------------------- the fused kernel (one batch element / grid step)

def _pixel_decoder_kernel(x_ref, oq_ref, wfeat_ref, bfeat_ref, pos_ref,
                          caw_ref, cab_ref, saw_ref, sab_ref, ln_ref,
                          w1_ref, b1_ref, w2_ref, b2_ref,
                          wfin_ref, bfin_ref, out_ref, *, num_heads):
    f32 = jnp.float32
    bf16 = jnp.bfloat16

    x = x_ref[0]                          # (c, hw)    f32  -- NCHW-native channels-major
    oq = oq_ref[0]                        # (d, nq)    f32  -- object queries, channels-major
    lnp = ln_ref[...]                     # (6, d, 1)  f32

    d, hw = pos_ref.shape
    dh = d // num_heads
    scale = 1.0 / float(np.sqrt(dh))

    # bf16 MXU operands, f32 accumulation (weights are already stored bf16).
    def mm(a, b):                         # plain 2-D matmul on the MXU
        return jnp.dot(a.astype(bf16), b.astype(bf16), preferred_element_type=f32)

    def bdot(a, b, dims):                 # heads-batched matmul on the MXU
        return lax.dot_general(a.astype(bf16), b.astype(bf16), dims,
                               preferred_element_type=f32)

    def softmax_lanes(s):                 # softmax over the last (lane) axis, f32
        m = jnp.max(s, axis=-1, keepdims=True)
        e = jnp.exp(s - m)
        # normalise via EUP approximate reciprocal (free slot next to the VPU/XLU work)
        return e * pl.reciprocal(jnp.sum(e, axis=-1, keepdims=True), approx=True)

    def layernorm(z, gamma, beta, eps=1e-5):   # LN over the channel (sublane) axis, f32
        mu = jnp.mean(z, axis=0, keepdims=True)
        var = jnp.mean((z - mu) ** 2, axis=0, keepdims=True)
        return (z - mu) * lax.rsqrt(var + eps) * gamma + beta

    def mha(q_src, kv_src, w_ref, b_ref, softmax_over_pixels):
        """All heads at once via batched dot_general; channels-major activations."""
        W = w_ref[...]                    # (4, d, d) bf16  -- [Wq, Wk, Wv, Wo], left-multiply
        B = b_ref[...]                    # (4, d, 1) f32
        q = mm(W[0], q_src) + B[0]        # (d, Lq)
        k = mm(W[1], kv_src) + B[1]       # (d, Lk)
        v = mm(W[2], kv_src) + B[2]       # (d, Lk)
        lq, lk = q.shape[1], k.shape[1]
        # head split = pure leading-dim reshape (lane axis untouched)
        qh = q.reshape(num_heads, dh, lq)
        kh = k.reshape(num_heads, dh, lk)
        vh = v.reshape(num_heads, dh, lk)
        if softmax_over_pixels:
            # cross-attention: scores transposed (nh, Lk=nq, Lq=hw) so the softmax over the
            # pixel axis is a full-width lane reduce, not an 8-lane cross-sublane chain.
            s = bdot(kh, qh, (((1,), (1,)), ((0,), (0,)))) * scale        # (nh, nq, hw)
            a = softmax_lanes(s)                                          # softmax over pixels
            o = bdot(vh, a, (((2,), (1,)), ((0,), (0,))))                 # (nh, dh, hw)
        else:
            # self-attention: standard scores (nh, Lq, Lk), softmax over keys (lanes).
            s = bdot(qh, kh, (((1,), (1,)), ((0,), (0,)))) * scale        # (nh, hw, hw)
            a = softmax_lanes(s)
            o = bdot(vh, a, (((2,), (2,)), ((0,), (0,))))                 # (nh, dh, hw)
        o = o.reshape(d, lq)                                              # merge heads (free)
        return mm(W[3], o) + B[3]                                         # output projection

    # feature_conv: 1x1 conv + folded SyncBN, channels-major: (d, c) @ (c, hw)
    f = mm(wfeat_ref[...], x) + bfeat_ref[...]
    # positional embedding (additive)
    f = f + pos_ref[...]

    # cross-attention (query = pixels, key/value = object queries), softmax over pixels
    f = layernorm(f + mha(f, oq, caw_ref, cab_ref, True), lnp[0], lnp[1])
    # self-attention over pixels, softmax over keys
    f = layernorm(f + mha(f, f, saw_ref, sab_ref, False), lnp[2], lnp[3])
    # feed-forward network (relu)
    hdn = jnp.maximum(mm(w1_ref[...], f) + b1_ref[...], 0.0)              # (ffn, hw)
    f = layernorm(f + (mm(w2_ref[...], hdn) + b2_ref[...]), lnp[4], lnp[5])

    # final_conv: 1x1 conv + folded SyncBN: (c_out, d) @ (d, hw)
    y = mm(wfin_ref[...], f) + bfin_ref[...]                              # (c_out, hw)

    # lane-dense store: c_out rows x hw(=256) lanes -> full-width unmasked vst
    out_ref[0] = y


# ----------------------------- wrapper ---------------------------------------

def pixel_decoder_layer(feature, object_query, params, *, num_heads, core_parallel=False):
    b, c, h, w = feature.shape
    hw = h * w
    d = params["pos"].shape[0]
    nq = object_query.shape[1]
    ffn = params["ffn_w1"].shape[0]
    c_out = params["w_final"].shape[0]

    # NCHW is already channels-major (c, hw): pure reshape, no HBM transpose.
    x = feature.reshape(b, c, hw).astype(jnp.float32)
    # object queries channels-major: (b, d, nq) (tiny XLA transpose outside the kernel)
    oq = object_query.astype(jnp.float32).transpose(0, 2, 1)

    kernel = functools.partial(_pixel_decoder_kernel, num_heads=num_heads)

    in_specs = [
        pl.BlockSpec((1, c, hw), lambda i: (i, 0, 0)),        # feature (per batch element)
        pl.BlockSpec((1, d, nq), lambda i: (i, 0, 0)),        # object_query
        pl.BlockSpec((d, c), lambda i: (0, 0)),               # w_feat     (bf16)
        pl.BlockSpec((d, 1), lambda i: (0, 0)),               # b_feat
        pl.BlockSpec((d, hw), lambda i: (0, 0)),              # pos
        pl.BlockSpec((4, d, d), lambda i: (0, 0, 0)),         # ca_w       (bf16)
        pl.BlockSpec((4, d, 1), lambda i: (0, 0, 0)),         # ca_b
        pl.BlockSpec((4, d, d), lambda i: (0, 0, 0)),         # sa_w       (bf16)
        pl.BlockSpec((4, d, 1), lambda i: (0, 0, 0)),         # sa_b
        pl.BlockSpec((6, d, 1), lambda i: (0, 0, 0)),         # ln params
        pl.BlockSpec((ffn, d), lambda i: (0, 0)),             # ffn_w1     (bf16)
        pl.BlockSpec((ffn, 1), lambda i: (0, 0)),             # ffn_b1
        pl.BlockSpec((d, ffn), lambda i: (0, 0)),             # ffn_w2     (bf16)
        pl.BlockSpec((d, 1), lambda i: (0, 0)),               # ffn_b2
        pl.BlockSpec((c_out, d), lambda i: (0, 0)),           # w_final    (bf16)
        pl.BlockSpec((c_out, 1), lambda i: (0, 0)),           # b_final
    ]

    # v7x has 2 TensorCores/chip: core_parallel=True shards the batch grid across both TCs.
    dim_sem = (pltpu.CORE_PARALLEL,) if core_parallel else ("parallel",)

    y = pl.pallas_call(
        kernel,
        out_shape=jax.ShapeDtypeStruct((b, c_out, hw), jnp.float32),
        grid_spec=pltpu.PrefetchScalarGridSpec(
            num_scalar_prefetch=0,
            grid=(b,),
            in_specs=in_specs,
            out_specs=pl.BlockSpec((1, c_out, hw), lambda i: (i, 0, 0)),
        ),
        compiler_params=pltpu.CompilerParams(
            dimension_semantics=dim_sem,
            vmem_limit_bytes=48 * 1024 * 1024,   # explicit scoped-VMEM budget (fits all gens)
        ),
    )(x, oq,
      params["w_feat"], params["b_feat"], params["pos"],
      params["ca_w"], params["ca_b"], params["sa_w"], params["sa_b"], params["ln"],
      params["ffn_w1"], params["ffn_b1"], params["ffn_w2"], params["ffn_b2"],
      params["w_final"], params["b_final"])

    # Separable bilinear x2 upsample == kron(Mh, Mw) @ tokens, as two tiny matmuls.
    # Applied on the already-NCHW kernel output; (mh, mw) are identities when interpolate=False.
    mh, mw = params["mh"], params["mw"]            # (out_h, h), (out_w, w)
    y = y.reshape(b, c_out, h, w)                  # pure metadata reshape (row-major hw -> h, w)
    y = jnp.einsum("bchw,Ww->bchW", y, mw)
    y = jnp.einsum("bchW,Hh->bcHW", y, mh)
    return y                                       # (b, c_out, out_h, out_w), NCHW


# ----------------------------- parameters ------------------------------------

def _fold_conv_bn(key, cin, cout):
    """Conv1d(cin->cout, k=1) + SyncBN (eval) folded into left-multiply W (cout,cin) + bias."""
    k1, k2, k3, k4, k5, k6 = jax.random.split(key, 6)
    wconv = jax.random.normal(k1, (cout, cin), jnp.float32) / np.sqrt(cin)
    bconv = 0.1 * jax.random.normal(k2, (cout,), jnp.float32)
    gamma = 1.0 + 0.1 * jax.random.normal(k3, (cout,), jnp.float32)
    beta = 0.1 * jax.random.normal(k4, (cout,), jnp.float32)
    rmean = 0.1 * jax.random.normal(k5, (cout,), jnp.float32)
    rvar = 1.0 + jnp.abs(0.1 * jax.random.normal(k6, (cout,), jnp.float32))
    s = gamma / jnp.sqrt(rvar + 1e-5)
    w = (wconv * s[:, None]).astype(jnp.bfloat16)                      # (cout, cin), bf16
    b = (((bconv - rmean) * s + beta)[:, None]).astype(jnp.float32)    # (cout, 1),   f32
    return w, b


def init_params(key, *, query_dim, d_model, num_heads, ffn_dim, resolution, interpolate):
    hw = resolution * resolution
    c_out = query_dim // 2 if interpolate else query_dim
    ks = jax.random.split(key, 11)

    w_feat, b_feat = _fold_conv_bn(ks[0], query_dim, d_model)     # (d, c), (d, 1)
    w_final, b_final = _fold_conv_bn(ks[1], d_model, c_out)       # (c_out, d), (c_out, 1)

    pos = 0.05 * jax.random.normal(ks[2], (d_model, hw), jnp.float32)   # channels-major

    def attn_params(k):
        ka, kb = jax.random.split(k)
        W = jax.random.normal(ka, (4, d_model, d_model), jnp.float32) / np.sqrt(d_model)
        B = 0.05 * jax.random.normal(kb, (4, d_model, 1), jnp.float32)
        return W.astype(jnp.bfloat16), B          # left-multiply (channels-major) convention

    ca_w, ca_b = attn_params(ks[3])
    sa_w, sa_b = attn_params(ks[4])

    # ln params stacked: [ca_gamma, ca_beta, sa_gamma, sa_beta, ffn_gamma, ffn_beta], each (d, 1)
    g = 1.0 + 0.05 * jax.random.normal(ks[5], (3, d_model, 1), jnp.float32)
    bt = 0.05 * jax.random.normal(ks[6], (3, d_model, 1), jnp.float32)
    ln = jnp.stack([g[0], bt[0], g[1], bt[1], g[2], bt[2]], axis=0)

    ffn_w1 = (jax.random.normal(ks[7], (ffn_dim, d_model), jnp.float32)
              / np.sqrt(d_model)).astype(jnp.bfloat16)
    ffn_b1 = 0.05 * jax.random.normal(ks[8], (ffn_dim, 1), jnp.float32)
    ffn_w2 = (jax.random.normal(ks[9], (d_model, ffn_dim), jnp.float32)
              / np.sqrt(ffn_dim)).astype(jnp.bfloat16)
    ffn_b2 = 0.05 * jax.random.normal(ks[10], (d_model, 1), jnp.float32)

    if interpolate:
        mh = jnp.asarray(_bilinear_matrix(resolution), jnp.float32)   # (2h, h)
        mw = jnp.asarray(_bilinear_matrix(resolution), jnp.float32)   # (2w, w)
    else:
        mh = jnp.eye(resolution, dtype=jnp.float32)
        mw = jnp.eye(resolution, dtype=jnp.float32)

    return dict(w_feat=w_feat, b_feat=b_feat, pos=pos,
                ca_w=ca_w, ca_b=ca_b, sa_w=sa_w, sa_b=sa_b, ln=ln,
                ffn_w1=ffn_w1, ffn_b1=ffn_b1, ffn_w2=ffn_w2, ffn_b2=ffn_b2,
                w_final=w_final, b_final=b_final, mh=mh, mw=mw)


# ----------------------------- pure-JAX reference ----------------------------

def reference(feature, object_query, params, *, num_heads):
    """Token-major reference with the dense kron(Mh, Mw) upsample.

    Uses bf16 MXU operands + f32 accumulation / f32 softmax + LayerNorm, mirroring the kernel's
    precision policy so the comparison isolates structural correctness.
    """
    b, c, h, w = feature.shape
    hw = h * w
    f32 = jnp.float32
    md = jnp.bfloat16

    def ln_tok(z, gamma, beta, eps=1e-5):
        mu = jnp.mean(z, axis=-1, keepdims=True)
        var = jnp.mean((z - mu) ** 2, axis=-1, keepdims=True)
        return (z - mu) / jnp.sqrt(var + eps) * gamma + beta

    x = feature.reshape(b, c, hw).transpose(0, 2, 1)                       # (b, hw, c)
    f = jnp.einsum("btc,cd->btd", x.astype(md), params["w_feat"].T.astype(md),
                   preferred_element_type=f32) + params["b_feat"][:, 0]
    f = f + params["pos"].T

    def mha(q_in, k_in, v_in, W, B, softmax_over_pixels):
        d = q_in.shape[-1]
        dh = d // num_heads

        def proj(z, i):
            return jnp.einsum("btd,de->bte", z.astype(md), W[i].T.astype(md),
                              preferred_element_type=f32) + B[i][:, 0]

        q, k, v = proj(q_in, 0), proj(k_in, 1), proj(v_in, 2)
        qh = q.reshape(b, -1, num_heads, dh)
        kh = k.reshape(b, -1, num_heads, dh)
        vh = v.reshape(b, -1, num_heads, dh)
        s = jnp.einsum("bqhd,bkhd->bhqk", qh.astype(md), kh.astype(md),
                       preferred_element_type=f32) * (1.0 / np.sqrt(dh))
        a = jax.nn.softmax(s, axis=2 if softmax_over_pixels else 3)
        o = jnp.einsum("bhqk,bkhd->bqhd", a.astype(md), vh.astype(md),
                       preferred_element_type=f32).reshape(b, -1, d)
        return jnp.einsum("btd,de->bte", o.astype(md), W[3].T.astype(md),
                          preferred_element_type=f32) + B[3][:, 0]

    lnp = params["ln"]
    res = f
    f = ln_tok(res + mha(f, object_query, object_query, params["ca_w"], params["ca_b"], True),
               lnp[0][:, 0], lnp[1][:, 0])
    res = f
    f = ln_tok(res + mha(f, f, f, params["sa_w"], params["sa_b"], False),
               lnp[2][:, 0], lnp[3][:, 0])
    res = f
    hdn = jnp.maximum(jnp.einsum("btd,df->btf", f.astype(md), params["ffn_w1"].T.astype(md),
                                 preferred_element_type=f32) + params["ffn_b1"][:, 0], 0.0)
    f = jnp.einsum("btf,fd->btd", hdn.astype(md), params["ffn_w2"].T.astype(md),
                   preferred_element_type=f32) + params["ffn_b2"][:, 0]
    f = ln_tok(res + f, lnp[4][:, 0], lnp[5][:, 0])

    y = jnp.einsum("btd,dc->btc", f.astype(md), params["w_final"].T.astype(md),
                   preferred_element_type=f32) + params["b_final"][:, 0]   # (b, hw, c_out)

    # dense kron upsample = ground truth for the kernel/wrapper separable version
    m2 = jnp.asarray(np.kron(np.asarray(params["mh"]), np.asarray(params["mw"])), f32)
    up = jnp.einsum("pq,bqc->bpc", m2, y)
    c_out = y.shape[-1]
    out_h = params["mh"].shape[0]
    out_w = params["mw"].shape[0]
    return up.reshape(b, out_h, out_w, c_out).transpose(0, 3, 1, 2)


# ----------------------------- main -------------------------------------------

if __name__ == "__main__":
    batch = 2
    resolution = 16          # h = w = 16  -> hw = 256 tokens (the lane axis in the kernel)
    query_dim = 4            # feature channels c
    d_model = 32
    num_heads = 4
    ffn_dim = 64
    num_queries = 8
    interpolate = True

    key = jax.random.PRNGKey(0)
    kf, ko, kp = jax.random.split(key, 3)

    feature = jax.random.normal(kf, (batch, query_dim, resolution, resolution), jnp.float32)
    object_query = jax.random.normal(ko, (batch, num_queries, d_model), jnp.float32)

    params = init_params(kp, query_dim=query_dim, d_model=d_model, num_heads=num_heads,
                         ffn_dim=ffn_dim, resolution=resolution, interpolate=interpolate)

    out = pixel_decoder_layer(feature, object_query, params, num_heads=num_heads)
    out = jax.block_until_ready(out)
    assert out.shape == (batch, query_dim // 2, 2 * resolution, 2 * resolution), out.shape

    # Structural check against a reference that mirrors the kernel's mixed-precision policy.
    ref = jax.block_until_ready(reference(feature, object_query, params, num_heads=num_heads))
    np.testing.assert_allclose(np.asarray(out), np.asarray(ref), rtol=2e-2, atol=2e-2)

    print("KERNEL_OK")
</pallas_src>

<mosaic_0001>
module attributes {stable_mosaic.version = 11 : i64} {
  func.func @_pixel_decoder_kernel(%arg0: i32, %arg1: memref<1x4x256xf32, #tpu.memory_space<vmem>>, %arg2: memref<1x32x8xf32, #tpu.memory_space<vmem>>, %arg3: memref<32x4xbf16, #tpu.memory_space<vmem>>, %arg4: memref<32x1xf32, #tpu.memory_space<vmem>>, %arg5: memref<32x256xf32, #tpu.memory_space<vmem>>, %arg6: memref<4x32x32xbf16, #tpu.memory_space<vmem>>, %arg7: memref<4x32x1xf32, #tpu.memory_space<vmem>>, %arg8: memref<4x32x32xbf16, #tpu.memory_space<vmem>>, %arg9: memref<4x32x1xf32, #tpu.memory_space<vmem>>, %arg10: memref<6x32x1xf32, #tpu.memory_space<vmem>>, %arg11: memref<64x32xbf16, #tpu.memory_space<vmem>>, %arg12: memref<64x1xf32, #tpu.memory_space<vmem>>, %arg13: memref<32x64xbf16, #tpu.memory_space<vmem>>, %arg14: memref<32x1xf32, #tpu.memory_space<vmem>>, %arg15: memref<2x32xbf16, #tpu.memory_space<vmem>>, %arg16: memref<2x1xf32, #tpu.memory_space<vmem>>, %arg17: memref<1x2x256xf32, #tpu.memory_space<vmem>>) attributes {dimension_semantics = [#tpu.dimension_semantics<parallel>], iteration_bounds = array<i64: 2>, scalar_prefetch = 0 : i64, scratch_operands = 0 : i64, tpu.core_type = #tpu.core_type<tc>, window_params = [{transform_indices = @transform_0, window_bounds = array<i64: 1, 4, 256>}, {transform_indices = @transform_1, window_bounds = array<i64: 1, 32, 8>}, {pipeline_mode = #tpu.pipeline_mode<synchronous>, transform_indices = @transform_2, window_bounds = array<i64: 32, 4>}, {pipeline_mode = #tpu.pipeline_mode<synchronous>, transform_indices = @transform_3, window_bounds = array<i64: 32, 1>}, {pipeline_mode = #tpu.pipeline_mode<synchronous>, transform_indices = @transform_4, window_bounds = array<i64: 32, 256>}, {pipeline_mode = #tpu.pipeline_mode<synchronous>, transform_indices = @transform_5, window_bounds = array<i64: 4, 32, 32>}, {pipeline_mode = #tpu.pipeline_mode<synchronous>, transform_indices = @transform_6, window_bounds = array<i64: 4, 32, 1>}, {pipeline_mode = #tpu.pipeline_mode<synchronous>, transform_indices = @transform_7, window_bounds = array<i64: 4, 32, 32>}, {pipeline_mode = #tpu.pipeline_mode<synchronous>, transform_indices = @transform_8, window_bounds = array<i64: 4, 32, 1>}, {pipeline_mode = #tpu.pipeline_mode<synchronous>, transform_indices = @transform_9, window_bounds = array<i64: 6, 32, 1>}, {pipeline_mode = #tpu.pipeline_mode<synchronous>, transform_indices = @transform_10, window_bounds = array<i64: 64, 32>}, {pipeline_mode = #tpu.pipeline_mode<synchronous>, transform_indices = @transform_11, window_bounds = array<i64: 64, 1>}, {pipeline_mode = #tpu.pipeline_mode<synchronous>, transform_indices = @transform_12, window_bounds = array<i64: 32, 64>}, {pipeline_mode = #tpu.pipeline_mode<synchronous>, transform_indices = @transform_13, window_bounds = array<i64: 32, 1>}, {pipeline_mode = #tpu.pipeline_mode<synchronous>, transform_indices = @transform_14, window_bounds = array<i64: 2, 32>}, {pipeline_mode = #tpu.pipeline_mode<synchronous>, transform_indices = @transform_15, window_bounds = array<i64: 2, 1>}, {transform_indices = @transform_16, window_bounds = array<i64: 1, 2, 256>}]} {
    %c0 = arith.constant 0 : index
    %c0_0 = arith.constant 0 : index
    %c0_1 = arith.constant 0 : index
    %0 = vector.load %arg1[%c0, %c0_0, %c0_1] : memref<1x4x256xf32, #tpu.memory_space<vmem>>, vector<1x4x256xf32>
    %1 = vector.shape_cast %0 : vector<1x4x256xf32> to vector<4x256xf32>
    %c0_2 = arith.constant 0 : index
    %c0_3 = arith.constant 0 : index
    %c0_4 = arith.constant 0 : index
    %2 = vector.load %arg2[%c0_2, %c0_3, %c0_4] : memref<1x32x8xf32, #tpu.memory_space<vmem>>, vector<1x32x8xf32>
    %3 = vector.shape_cast %2 : vector<1x32x8xf32> to vector<32x8xf32>
    %c0_5 = arith.constant 0 : index
    %c0_6 = arith.constant 0 : index
    %c0_7 = arith.constant 0 : index
    %4 = vector.load %arg10[%c0_5, %c0_6, %c0_7] : memref<6x32x1xf32, #tpu.memory_space<vmem>>, vector<6x32x1xf32>
    %c0_8 = arith.constant 0 : index
    %c0_9 = arith.constant 0 : index
    %5 = vector.load %arg3[%c0_8, %c0_9] : memref<32x4xbf16, #tpu.memory_space<vmem>>, vector<32x4xbf16>
    %6 = arith.truncf %1 : vector<4x256xf32> to vector<4x256xbf16>
    %cst = arith.constant dense<0.000000e+00> : vector<32x256xf32>
    %7 = tpu.matmul %5, %6, %cst {dimension_numbers = #tpu.dot_dimension_numbers<[1], [0], [0], [1], [0, 0, 1, 1], [], []>} : vector<32x4xbf16>, vector<4x256xbf16>, vector<32x256xf32> -> vector<32x256xf32>
    %c0_10 = arith.constant 0 : index
    %c0_11 = arith.constant 0 : index
    %8 = vector.load %arg4[%c0_10, %c0_11] : memref<32x1xf32, #tpu.memory_space<vmem>>, vector<32x1xf32>
    %9 = vector.broadcast %8 : vector<32x1xf32> to vector<32x256xf32>
    %10 = arith.addf %7, %9 : vector<32x256xf32>
    %c0_12 = arith.constant 0 : index
    %c0_13 = arith.constant 0 : index
    %11 = vector.load %arg5[%c0_12, %c0_13] : memref<32x256xf32, #tpu.memory_space<vmem>>, vector<32x256xf32>
    %12 = arith.addf %10, %11 : vector<32x256xf32>
    %c0_14 = arith.constant 0 : index
    %c0_15 = arith.constant 0 : index
    %c0_16 = arith.constant 0 : index
    %13 = vector.load %arg6[%c0_14, %c0_15, %c0_16] : memref<4x32x32xbf16, #tpu.memory_space<vmem>>, vector<4x32x32xbf16>
    %c0_17 = arith.constant 0 : index
    %c0_18 = arith.constant 0 : index
    %c0_19 = arith.constant 0 : index
    %14 = vector.load %arg7[%c0_17, %c0_18, %c0_19] : memref<4x32x1xf32, #tpu.memory_space<vmem>>, vector<4x32x1xf32>
    %15 = vector.extract_strided_slice %13 {offsets = [0, 0, 0], sizes = [1, 32, 32], strides = [1, 1, 1]} : vector<4x32x32xbf16> to vector<1x32x32xbf16>
    %16 = vector.shape_cast %15 : vector<1x32x32xbf16> to vector<32x32xbf16>
    %17 = arith.truncf %12 : vector<32x256xf32> to vector<32x256xbf16>
    %cst_20 = arith.constant dense<0.000000e+00> : vector<32x256xf32>
    %18 = tpu.matmul %16, %17, %cst_20 {dimension_numbers = #tpu.dot_dimension_numbers<[1], [0], [0], [1], [0, 0, 1, 1], [], []>} : vector<32x32xbf16>, vector<32x256xbf16>, vector<32x256xf32> -> vector<32x256xf32>
    %19 = vector.extract_strided_slice %14 {offsets = [0, 0, 0], sizes = [1, 32, 1], strides = [1, 1, 1]} : vector<4x32x1xf32> to vector<1x32x1xf32>
    %20 = vector.shape_cast %19 : vector<1x32x1xf32> to vector<32x1xf32>
    %21 = vector.broadcast %20 : vector<32x1xf32> to vector<32x256xf32>
    %22 = arith.addf %18, %21 : vector<32x256xf32>
    %23 = vector.extract_strided_slice %13 {offsets = [1, 0, 0], sizes = [1, 32, 32], strides = [1, 1, 1]} : vector<4x32x32xbf16> to vector<1x32x32xbf16>
    %24 = vector.shape_cast %23 : vector<1x32x32xbf16> to vector<32x32xbf16>
    %25 = arith.truncf %3 : vector<32x8xf32> to vector<32x8xbf16>
    %cst_21 = arith.constant dense<0.000000e+00> : vector<32x8xf32>
    %26 = tpu.matmul %24, %25, %cst_21 {dimension_numbers = #tpu.dot_dimension_numbers<[1], [0], [0], [1], [0, 0, 1, 1], [], []>} : vector<32x32xbf16>, vector<32x8xbf16>, vector<32x8xf32> -> vector<32x8xf32>
    %27 = vector.extract_strided_slice %14 {offsets = [1, 0, 0], sizes = [1, 32, 1], strides = [1, 1, 1]} : vector<4x32x1xf32> to vector<1x32x1xf32>
    %28 = vector.shape_cast %27 : vector<1x32x1xf32> to vector<32x1xf32>
    %29 = vector.broadcast %28 : vector<32x1xf32> to vector<32x8xf32>
    %30 = arith.addf %26, %29 : vector<32x8xf32>
    %31 = vector.extract_strided_slice %13 {offsets = [2, 0, 0], sizes = [1, 32, 32], strides = [1, 1, 1]} : vector<4x32x32xbf16> to vector<1x32x32xbf16>
    %32 = vector.shape_cast %31 : vector<1x32x32xbf16> to vector<32x32xbf16>
    %33 = arith.truncf %3 : vector<32x8xf32> to vector<32x8xbf16>
    %cst_22 = arith.constant dense<0.000000e+00> : vector<32x8xf32>
    %34 = tpu.matmul %32, %33, %cst_22 {dimension_numbers = #tpu.dot_dimension_numbers<[1], [0], [0], [1], [0, 0, 1, 1], [], []>} : vector<32x32xbf16>, vector<32x8xbf16>, vector<32x8xf32> -> vector<32x8xf32>
    %35 = vector.extract_strided_slice %14 {offsets = [2, 0, 0], sizes = [1, 32, 1], strides = [1, 1, 1]} : vector<4x32x1xf32> to vector<1x32x1xf32>
    %36 = vector.shape_cast %35 : vector<1x32x1xf32> to vector<32x1xf32>
    %37 = vector.broadcast %36 : vector<32x1xf32> to vector<32x8xf32>
    %38 = arith.addf %34, %37 : vector<32x8xf32>
    %39 = vector.shape_cast %22 : vector<32x256xf32> to vector<4x8x256xf32>
    %40 = vector.shape_cast %30 : vector<32x8xf32> to vector<4x8x8xf32>
    %41 = vector.shape_cast %38 : vector<32x8xf32> to vector<4x8x8xf32>
    %42 = arith.truncf %40 : vector<4x8x8xf32> to vector<4x8x8xbf16>
    %43 = arith.truncf %39 : vector<4x8x256xf32> to vector<4x8x256xbf16>
    %cst_23 = arith.constant dense<0.000000e+00> : vector<4x8x256xf32>
    %44 = tpu.matmul %42, %43, %cst_23 {dimension_numbers = #tpu.dot_dimension_numbers<[1], [1], [2], [2], [0, 0, 0, 2, 1, 2], [0], [0]>} : vector<4x8x8xbf16>, vector<4x8x256xbf16>, vector<4x8x256xf32> -> vector<4x8x256xf32>
    %cst_24 = arith.constant 0.353553385 : f32
    %45 = vector.broadcast %cst_24 : f32 to vector<4x8x256xf32>
    %46 = arith.mulf %44, %45 : vector<4x8x256xf32>
    %cst_25 = arith.constant dense<0xFF800000> : vector<4x8xf32>
    %47 = vector.multi_reduction <maximumf>, %46, %cst_25 [2] : vector<4x8x256xf32> to vector<4x8xf32>
    %48 = vector.shape_cast %47 : vector<4x8xf32> to vector<4x8x1xf32>
    %49 = vector.broadcast %48 : vector<4x8x1xf32> to vector<4x8x256xf32>
    %50 = arith.subf %46, %49 : vector<4x8x256xf32>
    %51 = math.exp %50 : vector<4x8x256xf32>
    %cst_26 = arith.constant dense<0.000000e+00> : vector<4x8xf32>
    %52 = vector.multi_reduction <add>, %51, %cst_26 [2] : vector<4x8x256xf32> to vector<4x8xf32>
    %53 = vector.shape_cast %52 : vector<4x8xf32> to vector<4x8x1xf32>
    %54 = tpu.reciprocal %53 {approx = true} : vector<4x8x1xf32> -> vector<4x8x1xf32>
    %55 = vector.broadcast %54 : vector<4x8x1xf32> to vector<4x8x256xf32>
    %56 = arith.mulf %51, %55 : vector<4x8x256xf32>
    %57 = arith.truncf %41 : vector<4x8x8xf32> to vector<4x8x8xbf16>
    %58 = arith.truncf %56 : vector<4x8x256xf32> to vector<4x8x256xbf16>
    %cst_27 = arith.constant dense<0.000000e+00> : vector<4x8x256xf32>
    %59 = tpu.matmul %57, %58, %cst_27 {dimension_numbers = #tpu.dot_dimension_numbers<[2], [1], [1], [2], [0, 0, 0, 1, 1, 2], [0], [0]>} : vector<4x8x8xbf16>, vector<4x8x256xbf16>, vector<4x8x256xf32> -> vector<4x8x256xf32>
    %60 = vector.shape_cast %59 : vector<4x8x256xf32> to vector<32x256xf32>
    %61 = vector.extract_strided_slice %13 {offsets = [3, 0, 0], sizes = [1, 32, 32], strides = [1, 1, 1]} : vector<4x32x32xbf16> to vector<1x32x32xbf16>
    %62 = vector.shape_cast %61 : vector<1x32x32xbf16> to vector<32x32xbf16>
    %63 = arith.truncf %60 : vector<32x256xf32> to vector<32x256xbf16>
    %cst_28 = arith.constant dense<0.000000e+00> : vector<32x256xf32>
    %64 = tpu.matmul %62, %63, %cst_28 {dimension_numbers = #tpu.dot_dimension_numbers<[1], [0], [0], [1], [0, 0, 1, 1], [], []>} : vector<32x32xbf16>, vector<32x256xbf16>, vector<32x256xf32> -> vector<32x256xf32>
    %65 = vector.extract_strided_slice %14 {offsets = [3, 0, 0], sizes = [1, 32, 1], strides = [1, 1, 1]} : vector<4x32x1xf32> to vector<1x32x1xf32>
    %66 = vector.shape_cast %65 : vector<1x32x1xf32> to vector<32x1xf32>
    %67 = vector.broadcast %66 : vector<32x1xf32> to vector<32x256xf32>
    %68 = arith.addf %64, %67 : vector<32x256xf32>
    %69 = arith.addf %12, %68 : vector<32x256xf32>
    %70 = vector.extract_strided_slice %4 {offsets = [0, 0, 0], sizes = [1, 32, 1], strides = [1, 1, 1]} : vector<6x32x1xf32> to vector<1x32x1xf32>
    %71 = vector.shape_cast %70 : vector<1x32x1xf32> to vector<32x1xf32>
    %72 = vector.extract_strided_slice %4 {offsets = [1, 0, 0], sizes = [1, 32, 1], strides = [1, 1, 1]} : vector<6x32x1xf32> to vector<1x32x1xf32>
    %73 = vector.shape_cast %72 : vector<1x32x1xf32> to vector<32x1xf32>
    %cst_29 = arith.constant dense<0.000000e+00> : vector<256xf32>
    %74 = vector.multi_reduction <add>, %69, %cst_29 [0] : vector<32x256xf32> to vector<256xf32>
    %75 = vector.shape_cast %74 : vector<256xf32> to vector<1x256xf32>
    %cst_30 = arith.constant 3.200000e+01 : f32
    %76 = vector.broadcast %cst_30 : f32 to vector<1x256xf32>
    %77 = arith.divf %75, %76 : vector<1x256xf32>
    %78 = vector.broadcast %77 : vector<1x256xf32> to vector<32x256xf32>
    %79 = arith.subf %69, %78 : vector<32x256xf32>
    %80 = arith.mulf %79, %79 : vector<32x256xf32>
    %cst_31 = arith.constant dense<0.000000e+00> : vector<256xf32>
    %81 = vector.multi_reduction <add>, %80, %cst_31 [0] : vector<32x256xf32> to vector<256xf32>
    %82 = vector.shape_cast %81 : vector<256xf32> to vector<1x256xf32>
    %cst_32 = arith.constant 3.200000e+01 : f32
    %83 = vector.broadcast %cst_32 : f32 to vector<1x256xf32>
    %84 = arith.divf %82, %83 : vector<1x256xf32>
    %85 = vector.broadcast %77 : vector<1x256xf32> to vector<32x256xf32>
    %86 = arith.subf %69, %85 : vector<32x256xf32>
    %cst_33 = arith.constant 9.99999974E-6 : f32
    %87 = vector.broadcast %cst_33 : f32 to vector<1x256xf32>
    %88 = arith.addf %84, %87 : vector<1x256xf32>
    %89 = math.rsqrt %88 : vector<1x256xf32>
    %90 = vector.broadcast %89 : vector<1x256xf32> to vector<32x256xf32>
    %91 = arith.mulf %86, %90 : vector<32x256xf32>
    %92 = vector.broadcast %71 : vector<32x1xf32> to vector<32x256xf32>
    %93 = arith.mulf %91, %92 : vector<32x256xf32>
    %94 = vector.broadcast %73 : vector<32x1xf32> to vector<32x256xf32>
    %95 = arith.addf %93, %94 : vector<32x256xf32>
    %c0_34 = arith.constant 0 : index
    %c0_35 = arith.constant 0 : index
    %c0_36 = arith.constant 0 : index
    %96 = vector.load %arg8[%c0_34, %c0_35, %c0_36] : memref<4x32x32xbf16, #tpu.memory_space<vmem>>, vector<4x32x32xbf16>
    %c0_37 = arith.constant 0 : index
    %c0_38 = arith.constant 0 : index
    %c0_39 = arith.constant 0 : index
    %97 = vector.load %arg9[%c0_37, %c0_38, %c0_39] : memref<4x32x1xf32, #tpu.memory_space<vmem>>, vector<4x32x1xf32>
    %98 = vector.extract_strided_slice %96 {offsets = [0, 0, 0], sizes = [1, 32, 32], strides = [1, 1, 1]} : vector<4x32x32xbf16> to vector<1x32x32xbf16>
    %99 = vector.shape_cast %98 : vector<1x32x32xbf16> to vector<32x32xbf16>
    %100 = arith.truncf %95 : vector<32x256xf32> to vector<32x256xbf16>
    %cst_40 = arith.constant dense<0.000000e+00> : vector<32x256xf32>
    %101 = tpu.matmul %99, %100, %cst_40 {dimension_numbers = #tpu.dot_dimension_numbers<[1], [0], [0], [1], [0, 0, 1, 1], [], []>} : vector<32x32xbf16>, vector<32x256xbf16>, vector<32x256xf32> -> vector<32x256xf32>
    %102 = vector.extract_strided_slice %97 {offsets = [0, 0, 0], sizes = [1, 32, 1], strides = [1, 1, 1]} : vector<4x32x1xf32> to vector<1x32x1xf32>
    %103 = vector.shape_cast %102 : vector<1x32x1xf32> to vector<32x1xf32>
    %104 = vector.broadcast %103 : vector<32x1xf32> to vector<32x256xf32>
    %105 = arith.addf %101, %104 : vector<32x256xf32>
    %106 = vector.extract_strided_slice %96 {offsets = [1, 0, 0], sizes = [1, 32, 32], strides = [1, 1, 1]} : vector<4x32x32xbf16> to vector<1x32x32xbf16>
    %107 = vector.shape_cast %106 : vector<1x32x32xbf16> to vector<32x32xbf16>
    %108 = arith.truncf %95 : vector<32x256xf32> to vector<32x256xbf16>
    %cst_41 = arith.constant dense<0.000000e+00> : vector<32x256xf32>
    %109 = tpu.matmul %107, %108, %cst_41 {dimension_numbers = #tpu.dot_dimension_numbers<[1], [0], [0], [1], [0, 0, 1, 1], [], []>} : vector<32x32xbf16>, vector<32x256xbf16>, vector<32x256xf32> -> vector<32x256xf32>
    %110 = vector.extract_strided_slice %97 {offsets = [1, 0, 0], sizes = [1, 32, 1], strides = [1, 1, 1]} : vector<4x32x1xf32> to vector<1x32x1xf32>
    %111 = vector.shape_cast %110 : vector<1x32x1xf32> to vector<32x1xf32>
    %112 = vector.broadcast %111 : vector<32x1xf32> to vector<32x256xf32>
    %113 = arith.addf %109, %112 : vector<32x256xf32>
    %114 = vector.extract_strided_slice %96 {offsets = [2, 0, 0], sizes = [1, 32, 32], strides = [1, 1, 1]} : vector<4x32x32xbf16> to vector<1x32x32xbf16>
    %115 = vector.shape_cast %114 : vector<1x32x32xbf16> to vector<32x32xbf16>
    %116 = arith.truncf %95 : vector<32x256xf32> to vector<32x256xbf16>
    %cst_42 = arith.constant dense<0.000000e+00> : vector<32x256xf32>
    %117 = tpu.matmul %115, %116, %cst_42 {dimension_numbers = #tpu.dot_dimension_numbers<[1], [0], [0], [1], [0, 0, 1, 1], [], []>} : vector<32x32xbf16>, vector<32x256xbf16>, vector<32x256xf32> -> vector<32x256xf32>
    %118 = vector.extract_strided_slice %97 {offsets = [2, 0, 0], sizes = [1, 32, 1], strides = [1, 1, 1]} : vector<4x32x1xf32> to vector<1x32x1xf32>
    %119 = vector.shape_cast %118 : vector<1x32x1xf32> to vector<32x1xf32>
    %120 = vector.broadcast %119 : vector<32x1xf32> to vector<32x256xf32>
    %121 = arith.addf %117, %120 : vector<32x256xf32>
    %122 = vector.shape_cast %105 : vector<32x256xf32> to vector<4x8x256xf32>
    %123 = vector.shape_cast %113 : vector<32x256xf32> to vector<4x8x256xf32>
    %124 = vector.shape_cast %121 : vector<32x256xf32> to vector<4x8x256xf32>
    %125 = arith.truncf %122 : vector<4x8x256xf32> to vector<4x8x256xbf16>
    %126 = arith.truncf %123 : vector<4x8x256xf32> to vector<4x8x256xbf16>
    %cst_43 = arith.constant dense<0.000000e+00> : vector<4x256x256xf32>
    %127 = tpu.matmul %125, %126, %cst_43 {dimension_numbers = #tpu.dot_dimension_numbers<[1], [1], [2], [2], [0, 0, 0, 2, 1, 2], [0], [0]>} : vector<4x8x256xbf16>, vector<4x8x256xbf16>, vector<4x256x256xf32> -> vector<4x256x256xf32>
    %cst_44 = arith.constant 0.353553385 : f32
    %128 = vector.broadcast %cst_44 : f32 to vector<4x256x256xf32>
    %129 = arith.mulf %127, %128 : vector<4x256x256xf32>
    %cst_45 = arith.constant dense<0xFF800000> : vector<4x256xf32>
    %130 = vector.multi_reduction <maximumf>, %129, %cst_45 [2] : vector<4x256x256xf32> to vector<4x256xf32>
    %131 = vector.shape_cast %130 : vector<4x256xf32> to vector<4x256x1xf32>
    %132 = vector.broadcast %131 : vector<4x256x1xf32> to vector<4x256x256xf32>
    %133 = arith.subf %129, %132 : vector<4x256x256xf32>
    %134 = math.exp %133 : vector<4x256x256xf32>
    %cst_46 = arith.constant dense<0.000000e+00> : vector<4x256xf32>
    %135 = vector.multi_reduction <add>, %134, %cst_46 [2] : vector<4x256x256xf32> to vector<4x256xf32>
    %136 = vector.shape_cast %135 : vector<4x256xf32> to vector<4x256x1xf32>
    %137 = tpu.reciprocal %136 {approx = true} : vector<4x256x1xf32> -> vector<4x256x1xf32>
    %138 = vector.broadcast %137 : vector<4x256x1xf32> to vector<4x256x256xf32>
    %139 = arith.mulf %134, %138 : vector<4x256x256xf32>
    %140 = arith.truncf %124 : vector<4x8x256xf32> to vector<4x8x256xbf16>
    %141 = arith.truncf %139 : vector<4x256x256xf32> to vector<4x256x256xbf16>
    %cst_47 = arith.constant dense<0.000000e+00> : vector<4x8x256xf32>
    %142 = tpu.matmul %140, %141, %cst_47 {dimension_numbers = #tpu.dot_dimension_numbers<[2], [2], [1], [1], [0, 0, 0, 1, 1, 1], [0], [0]>} : vector<4x8x256xbf16>, vector<4x256x256xbf16>, vector<4x8x256xf32> -> vector<4x8x256xf32>
    %143 = vector.shape_cast %142 : vector<4x8x256xf32> to vector<32x256xf32>
    %144 = vector.extract_strided_slice %96 {offsets = [3, 0, 0], sizes = [1, 32, 32], strides = [1, 1, 1]} : vector<4x32x32xbf16> to vector<1x32x32xbf16>
    %145 = vector.shape_cast %144 : vector<1x32x32xbf16> to vector<32x32xbf16>
    %146 = arith.truncf %143 : vector<32x256xf32> to vector<32x256xbf16>
    %cst_48 = arith.constant dense<0.000000e+00> : vector<32x256xf32>
    %147 = tpu.matmul %145, %146, %cst_48 {dimension_numbers = #tpu.dot_dimension_numbers<[1], [0], [0], [1], [0, 0, 1, 1], [], []>} : vector<32x32xbf16>, vector<32x256xbf16>, vector<32x256xf32> -> vector<32x256xf32>
    %148 = vector.extract_strided_slice %97 {offsets = [3, 0, 0], sizes = [1, 32, 1], strides = [1, 1, 1]} : vector<4x32x1xf32> to vector<1x32x1xf32>
    %149 = vector.shape_cast %148 : vector<1x32x1xf32> to vector<32x1xf32>
    %150 = vector.broadcast %149 : vector<32x1xf32> to vector<32x256xf32>
    %151 = arith.addf %147, %150 : vector<32x256xf32>
    %152 = arith.addf %95, %151 : vector<32x256xf32>
    %153 = vector.extract_strided_slice %4 {offsets = [2, 0, 0], sizes = [1, 32, 1], strides = [1, 1, 1]} : vector<6x32x1xf32> to vector<1x32x1xf32>
    %154 = vector.shape_cast %153 : vector<1x32x1xf32> to vector<32x1xf32>
    %155 = vector.extract_strided_slice %4 {offsets = [3, 0, 0], sizes = [1, 32, 1], strides = [1, 1, 1]} : vector<6x32x1xf32> to vector<1x32x1xf32>
    %156 = vector.shape_cast %155 : vector<1x32x1xf32> to vector<32x1xf32>
    %cst_49 = arith.constant dense<0.000000e+00> : vector<256xf32>
    %157 = vector.multi_reduction <add>, %152, %cst_49 [0] : vector<32x256xf32> to vector<256xf32>
    %158 = vector.shape_cast %157 : vector<256xf32> to vector<1x256xf32>
    %cst_50 = arith.constant 3.200000e+01 : f32
    %159 = vector.broadcast %cst_50 : f32 to vector<1x256xf32>
    %160 = arith.divf %158, %159 : vector<1x256xf32>
    %161 = vector.broadcast %160 : vector<1x256xf32> to vector<32x256xf32>
    %162 = arith.subf %152, %161 : vector<32x256xf32>
    %163 = arith.mulf %162, %162 : vector<32x256xf32>
    %cst_51 = arith.constant dense<0.000000e+00> : vector<256xf32>
    %164 = vector.multi_reduction <add>, %163, %cst_51 [0] : vector<32x256xf32> to vector<256xf32>
    %165 = vector.shape_cast %164 : vector<256xf32> to vector<1x256xf32>
    %cst_52 = arith.constant 3.200000e+01 : f32
    %166 = vector.broadcast %cst_52 : f32 to vector<1x256xf32>
    %167 = arith.divf %165, %166 : vector<1x256xf32>
    %168 = vector.broadcast %160 : vector<1x256xf32> to vector<32x256xf32>
    %169 = arith.subf %152, %168 : vector<32x256xf32>
    %cst_53 = arith.constant 9.99999974E-6 : f32
    %170 = vector.broadcast %cst_53 : f32 to vector<1x256xf32>
    %171 = arith.addf %167, %170 : vector<1x256xf32>
    %172 = math.rsqrt %171 : vector<1x256xf32>
    %173 = vector.broadcast %172 : vector<1x256xf32> to vector<32x256xf32>
    %174 = arith.mulf %169, %173 : vector<32x256xf32>
    %175 = vector.broadcast %154 : vector<32x1xf32> to vector<32x256xf32>
    %176 = arith.mulf %174, %175 : vector<32x256xf32>
    %177 = vector.broadcast %156 : vector<32x1xf32> to vector<32x256xf32>
    %178 = arith.addf %176, %177 : vector<32x256xf32>
    %c0_54 = arith.constant 0 : index
    %c0_55 = arith.constant 0 : index
    %179 = vector.load %arg11[%c0_54, %c0_55] : memref<64x32xbf16, #tpu.memory_space<vmem>>, vector<64x32xbf16>
    %180 = arith.truncf %178 : vector<32x256xf32> to vector<32x256xbf16>
    %cst_56 = arith.constant dense<0.000000e+00> : vector<64x256xf32>
    %181 = tpu.matmul %179, %180, %cst_56 {dimension_numbers = #tpu.dot_dimension_numbers<[1], [0], [0], [1], [0, 0, 1, 1], [], []>} : vector<64x32xbf16>, vector<32x256xbf16>, vector<64x256xf32> -> vector<64x256xf32>
    %c0_57 = arith.constant 0 : index
    %c0_58 = arith.constant 0 : index
    %182 = vector.load %arg12[%c0_57, %c0_58] : memref<64x1xf32, #tpu.memory_space<vmem>>, vector<64x1xf32>
    %183 = vector.broadcast %182 : vector<64x1xf32> to vector<64x256xf32>
    %184 = arith.addf %181, %183 : vector<64x256xf32>
    %cst_59 = arith.constant 0.000000e+00 : f32
    %185 = vector.broadcast %cst_59 : f32 to vector<64x256xf32>
    %186 = arith.maximumf %184, %185 : vector<64x256xf32>
    %c0_60 = arith.constant 0 : index
    %c0_61 = arith.constant 0 : index
    %187 = vector.load %arg13[%c0_60, %c0_61] : memref<32x64xbf16, #tpu.memory_space<vmem>>, vector<32x64xbf16>
    %188 = arith.truncf %186 : vector<64x256xf32> to vector<64x256xbf16>
    %cst_62 = arith.constant dense<0.000000e+00> : vector<32x256xf32>
    %189 = tpu.matmul %187, %188, %cst_62 {dimension_numbers = #tpu.dot_dimension_numbers<[1], [0], [0], [1], [0, 0, 1, 1], [], []>} : vector<32x64xbf16>, vector<64x256xbf16>, vector<32x256xf32> -> vector<32x256xf32>
    %c0_63 = arith.constant 0 : index
    %c0_64 = arith.constant 0 : index
    %190 = vector.load %arg14[%c0_63, %c0_64] : memref<32x1xf32, #tpu.memory_space<vmem>>, vector<32x1xf32>
    %191 = vector.broadcast %190 : vector<32x1xf32> to vector<32x256xf32>
    %192 = arith.addf %189, %191 : vector<32x256xf32>
    %193 = arith.addf %178, %192 : vector<32x256xf32>
    %194 = vector.extract_strided_slice %4 {offsets = [4, 0, 0], sizes = [1, 32, 1], strides = [1, 1, 1]} : vector<6x32x1xf32> to vector<1x32x1xf32>
    %195 = vector.shape_cast %194 : vector<1x32x1xf32> to vector<32x1xf32>
    %196 = vector.extract_strided_slice %4 {offsets = [5, 0, 0], sizes = [1, 32, 1], strides = [1, 1, 1]} : vector<6x32x1xf32> to vector<1x32x1xf32>
    %197 = vector.shape_cast %196 : vector<1x32x1xf32> to vector<32x1xf32>
    %cst_65 = arith.constant dense<0.000000e+00> : vector<256xf32>
    %198 = vector.multi_reduction <add>, %193, %cst_65 [0] : vector<32x256xf32> to vector<256xf32>
    %199 = vector.shape_cast %198 : vector<256xf32> to vector<1x256xf32>
    %cst_66 = arith.constant 3.200000e+01 : f32
    %200 = vector.broadcast %cst_66 : f32 to vector<1x256xf32>
    %201 = arith.divf %199, %200 : vector<1x256xf32>
    %202 = vector.broadcast %201 : vector<1x256xf32> to vector<32x256xf32>
    %203 = arith.subf %193, %202 : vector<32x256xf32>
    %204 = arith.mulf %203, %203 : vector<32x256xf32>
    %cst_67 = arith.constant dense<0.000000e+00> : vector<256xf32>
    %205 = vector.multi_reduction <add>, %204, %cst_67 [0] : vector<32x256xf32> to vector<256xf32>
    %206 = vector.shape_cast %205 : vector<256xf32> to vector<1x256xf32>
    %cst_68 = arith.constant 3.200000e+01 : f32
    %207 = vector.broadcast %cst_68 : f32 to vector<1x256xf32>
    %208 = arith.divf %206, %207 : vector<1x256xf32>
    %209 = vector.broadcast %201 : vector<1x256xf32> to vector<32x256xf32>
    %210 = arith.subf %193, %209 : vector<32x256xf32>
    %cst_69 = arith.constant 9.99999974E-6 : f32
    %211 = vector.broadcast %cst_69 : f32 to vector<1x256xf32>
    %212 = arith.addf %208, %211 : vector<1x256xf32>
    %213 = math.rsqrt %212 : vector<1x256xf32>
    %214 = vector.broadcast %213 : vector<1x256xf32> to vector<32x256xf32>
    %215 = arith.mulf %210, %214 : vector<32x256xf32>
    %216 = vector.broadcast %195 : vector<32x1xf32> to vector<32x256xf32>
    %217 = arith.mulf %215, %216 : vector<32x256xf32>
    %218 = vector.broadcast %197 : vector<32x1xf32> to vector<32x256xf32>
    %219 = arith.addf %217, %218 : vector<32x256xf32>
    %c0_70 = arith.constant 0 : index
    %c0_71 = arith.constant 0 : index
    %220 = vector.load %arg15[%c0_70, %c0_71] : memref<2x32xbf16, #tpu.memory_space<vmem>>, vector<2x32xbf16>
    %221 = arith.truncf %219 : vector<32x256xf32> to vector<32x256xbf16>
    %cst_72 = arith.constant dense<0.000000e+00> : vector<2x256xf32>
    %222 = tpu.matmul %220, %221, %cst_72 {dimension_numbers = #tpu.dot_dimension_numbers<[1], [0], [0], [1], [0, 0, 1, 1], [], []>} : vector<2x32xbf16>, vector<32x256xbf16>, vector<2x256xf32> -> vector<2x256xf32>
    %c0_73 = arith.constant 0 : index
    %c0_74 = arith.constant 0 : index
    %223 = vector.load %arg16[%c0_73, %c0_74] : memref<2x1xf32, #tpu.memory_space<vmem>>, vector<2x1xf32>
    %224 = vector.broadcast %223 : vector<2x1xf32> to vector<2x256xf32>
    %225 = arith.addf %222, %224 : vector<2x256xf32>
    %c0_75 = arith.constant 0 : index
    %c0_76 = arith.constant 0 : index
    %c0_77 = arith.constant 0 : index
    %226 = vector.load %arg17[%c0_75, %c0_76, %c0_77] : memref<1x2x256xf32, #tpu.memory_space<vmem>>, vector<1x2x256xf32>
    %227 = vector.shape_cast %226 : vector<1x2x256xf32> to vector<2x256xf32>
    %228 = vector.shape_cast %225 : vector<2x256xf32> to vector<1x2x256xf32>
    tpu.vector_store %arg17[%c0_75, %c0_76, %c0_77], %228 {strides = array<i32>} : memref<1x2x256xf32, #tpu.memory_space<vmem>>, vector<1x2x256xf32>,
    return
  }
  func.func @transform_0(%arg0: i32) -> (i32, i32, i32) {
    %c0_i32 = arith.constant 0 : i32
    %c0_i32_0 = arith.constant 0 : i32
    %c0_i32_1 = arith.constant 0 : i32
    return %arg0, %c0_i32, %c0_i32_0 : i32, i32, i32
  }
  func.func @transform_1(%arg0: i32) -> (i32, i32, i32) {
    %c0_i32 = arith.constant 0 : i32
    %c0_i32_0 = arith.constant 0 : i32
    %c0_i32_1 = arith.constant 0 : i32
    return %arg0, %c0_i32, %c0_i32_0 : i32, i32, i32
  }
  func.func @transform_2(%arg0: i32) -> (i32, i32) {
    %c0_i32 = arith.constant 0 : i32
    %c0_i32_0 = arith.constant 0 : i32
    %c0_i32_1 = arith.constant 0 : i32
    return %c0_i32, %c0_i32_0 : i32, i32
  }
  func.func @transform_3(%arg0: i32) -> (i32, i32) {
    %c0_i32 = arith.constant 0 : i32
    %c0_i32_0 = arith.constant 0 : i32
    %c0_i32_1 = arith.constant 0 : i32
    return %c0_i32, %c0_i32_0 : i32, i32
  }
  func.func @transform_4(%arg0: i32) -> (i32, i32) {
    %c0_i32 = arith.constant 0 : i32
    %c0_i32_0 = arith.constant 0 : i32
    %c0_i32_1 = arith.constant 0 : i32
    return %c0_i32, %c0_i32_0 : i32, i32
  }
  func.func @transform_5(%arg0: i32) -> (i32, i32, i32) {
    %c0_i32 = arith.constant 0 : i32
    %c0_i32_0 = arith.constant 0 : i32
    %c0_i32_1 = arith.constant 0 : i32
    %c0_i32_2 = arith.constant 0 : i32
    return %c0_i32, %c0_i32_0, %c0_i32_1 : i32, i32, i32
  }
  func.func @transform_6(%arg0: i32) -> (i32, i32, i32) {
    %c0_i32 = arith.constant 0 : i32
    %c0_i32_0 = arith.constant 0 : i32
    %c0_i32_1 = arith.constant 0 : i32
    %c0_i32_2 = arith.constant 0 : i32
    return %c0_i32, %c0_i32_0, %c0_i32_1 : i32, i32, i32
  }
  func.func @transform_7(%arg0: i32) -> (i32, i32, i32) {
    %c0_i32 = arith.constant 0 : i32
    %c0_i32_0 = arith.constant 0 : i32
    %c0_i32_1 = arith.constant 0 : i32
    %c0_i32_2 = arith.constant 0 : i32
    return %c0_i32, %c0_i32_0, %c0_i32_1 : i32, i32, i32
  }
  func.func @transform_8(%arg0: i32) -> (i32, i32, i32) {
    %c0_i32 = arith.constant 0 : i32
    %c0_i32_0 = arith.constant 0 : i32
    %c0_i32_1 = arith.constant 0 : i32
    %c0_i32_2 = arith.constant 0 : i32
    return %c0_i32, %c0_i32_0, %c0_i32_1 : i32, i32, i32
  }
  func.func @transform_9(%arg0: i32) -> (i32, i32, i32) {
    %c0_i32 = arith.constant 0 : i32
    %c0_i32_0 = arith.constant 0 : i32
    %c0_i32_1 = arith.constant 0 : i32
    %c0_i32_2 = arith.constant 0 : i32
    return %c0_i32, %c0_i32_0, %c0_i32_1 : i32, i32, i32
  }
  func.func @transform_10(%arg0: i32) -> (i32, i32) {
    %c0_i32 = arith.constant 0 : i32
    %c0_i32_0 = arith.constant 0 : i32
    %c0_i32_1 = arith.constant 0 : i32
    return %c0_i32, %c0_i32_0 : i32, i32
  }
  func.func @transform_11(%arg0: i32) -> (i32, i32) {
    %c0_i32 = arith.constant 0 : i32
    %c0_i32_0 = arith.constant 0 : i32
    %c0_i32_1 = arith.constant 0 : i32
    return %c0_i32, %c0_i32_0 : i32, i32
  }
  func.func @transform_12(%arg0: i32) -> (i32, i32) {
    %c0_i32 = arith.constant 0 : i32
    %c0_i32_0 = arith.constant 0 : i32
    %c0_i32_1 = arith.constant 0 : i32
    return %c0_i32, %c0_i32_0 : i32, i32
  }
  func.func @transform_13(%arg0: i32) -> (i32, i32) {
    %c0_i32 = arith.constant 0 : i32
    %c0_i32_0 = arith.constant 0 : i32
    %c0_i32_1 = arith.constant 0 : i32
    return %c0_i32, %c0_i32_0 : i32, i32
  }
  func.func @transform_14(%arg0: i32) -> (i32, i32) {
    %c0_i32 = arith.constant 0 : i32
    %c0_i32_0 = arith.constant 0 : i32
    %c0_i32_1 = arith.constant 0 : i32
    return %c0_i32, %c0_i32_0 : i32, i32
  }
  func.func @transform_15(%arg0: i32) -> (i32, i32) {
    %c0_i32 = arith.constant 0 : i32
    %c0_i32_0 = arith.constant 0 : i32
    %c0_i32_1 = arith.constant 0 : i32
    return %c0_i32, %c0_i32_0 : i32, i32
  }
  func.func @transform_16(%arg0: i32) -> (i32, i32, i32) {
    %c0_i32 = arith.constant 0 : i32
    %c0_i32_0 = arith.constant 0 : i32
    %c0_i32_1 = arith.constant 0 : i32
    return %arg0, %c0_i32, %c0_i32_0 : i32, i32, i32
  }
}

</mosaic_0001>

<llo_original>
// kernel: tpu_custom_call.1
$region0: #{tpu_custom_call.1}
  #allocation0 [shape = 'u32[]', space=smem, size = 0x4, offset = 0x4, fixed_abs, tag = 'smem constant byte address 0x4 - core index']
  #allocation1 [shape = 'u32[144,128]{1,0:T(1,128)}', space=vmem, size = 0x12000, scoped, tag = 'internal scratch']
  %s0 = inlined_call_operand.vmem [shape: f32[2,4,256], index: 0, kind: input, shape index: {}]
  %s1 = inlined_call_operand.vmem [shape: f32[2,32,8], index: 1, kind: input, shape index: {}]
  %s2 = inlined_call_operand.vmem [shape: bf16[32,4], index: 2, kind: input, shape index: {}]
  %s3 = inlined_call_operand.vmem [shape: f32[32,1], index: 3, kind: input, shape index: {}]
  %s4 = inlined_call_operand.vmem [shape: f32[32,256], index: 4, kind: input, shape index: {}]
  %s5 = inlined_call_operand.vmem [shape: bf16[4,32,32], index: 5, kind: input, shape index: {}]
  %s6 = inlined_call_operand.vmem [shape: f32[4,32,1], index: 6, kind: input, shape index: {}]
  %s7 = inlined_call_operand.vmem [shape: bf16[4,32,32], index: 7, kind: input, shape index: {}]
  %s8 = inlined_call_operand.vmem [shape: f32[4,32,1], index: 8, kind: input, shape index: {}]
  %s9 = inlined_call_operand.vmem [shape: f32[6,32,1], index: 9, kind: input, shape index: {}]
  %s10 = inlined_call_operand.vmem [shape: bf16[64,32], index: 10, kind: input, shape index: {}]
  %s11 = inlined_call_operand.vmem [shape: f32[64,1], index: 11, kind: input, shape index: {}]
  %s12 = inlined_call_operand.vmem [shape: bf16[32,64], index: 12, kind: input, shape index: {}]
  %s13 = inlined_call_operand.vmem [shape: f32[32,1], index: 13, kind: input, shape index: {}]
  %s14 = inlined_call_operand.vmem [shape: bf16[2,32], index: 14, kind: input, shape index: {}]
  %s15 = inlined_call_operand.vmem [shape: f32[2,1], index: 15, kind: input, shape index: {}]
  %s16 = inlined_call_operand.hbm [shape: f32[2,2,256], index: 16, kind: output, shape index: {}]
  %s17 = sld [smem:[#allocation0]]
  $region97: #{tpu_custom_call.1} parent=0
    _
  %s19 = ssub.s32 1, %s17
  %s20 = scalar_select 0, %s19, %s17
  $region1: #{tpu_custom_call.1} parent=0
    #allocation2 [shape = 'u8[4096]{0}', space=vmem, size = 0x1000, scoped, tag = 'output window, operand 0']
    #allocation3 [shape = 's32[2]{0}', space=sflag, size = 0x8, scoped, tag = 'scoped memory for tpu_custom_call.1']
    %21 = vsyncpa [#allocation3], 0
    %s22 = scalar_lea.sflag [#allocation3], 1
    %23 = vsyncpa %s22, 0
    loop: start=0, step=1, limit=4
    $region2: #{tpu_custom_call.1} parent=1 // loop_pre_header
      _
    $region3: #{tpu_custom_call.1} parent=1 // loop_header
      %s25 = sphi 0, %s29
      %p26 = scmp.ge.s32.totalorder %s25, 4
      %s35 = sphi 0, %s37
      %s38 = sphi 0, %s35
      %s39 = sphi 0, %s38
      %s55 = sphi 0, %s39
      %s61 = sphi 0, %s63
      %s64 = sphi 0, %s61
      %s65 = sphi 0, %s64
      %s81 = sphi 0, %s65
      %s85 = sphi 0, %s85
      %s87 = sphi 0, %s85
      %s88 = sphi 0, %s87
      %s102 = sphi 0, %s88
      %s106 = sphi 0, %s106
      %s108 = sphi 0, %s106
      %s109 = sphi 0, %s108
      %s123 = sphi 0, %s109
      %s127 = sphi 0, %s127
      %s129 = sphi 0, %s127
      %s130 = sphi 0, %s129
      %s144 = sphi 0, %s130
      %s148 = sphi 0, %s148
      %s150 = sphi 0, %s148
      %s151 = sphi 0, %s150
      %s165 = sphi 0, %s151
      %s169 = sphi 0, %s169
      %s171 = sphi 0, %s169
      %s172 = sphi 0, %s171
      %s186 = sphi 0, %s172
      %s190 = sphi 0, %s190
      %s192 = sphi 0, %s190
      %s193 = sphi 0, %s192
      %s207 = sphi 0, %s193
      %s211 = sphi 0, %s211
      %s213 = sphi 0, %s211
      %s214 = sphi 0, %s213
      %s228 = sphi 0, %s214
      %s232 = sphi 0, %s232
      %s234 = sphi 0, %s232
      %s235 = sphi 0, %s234
      %s249 = sphi 0, %s235
      %s253 = sphi 0, %s253
      %s255 = sphi 0, %s253
      %s256 = sphi 0, %s255
      %s270 = sphi 0, %s256
      %s274 = sphi 0, %s274
      %s276 = sphi 0, %s274
      %s277 = sphi 0, %s276
      %s291 = sphi 0, %s277
      %s295 = sphi 0, %s295
      %s297 = sphi 0, %s295
      %s298 = sphi 0, %s297
      %s312 = sphi 0, %s298
      %s316 = sphi 0, %s316
      %s318 = sphi 0, %s316
      %s319 = sphi 0, %s318
      %s333 = sphi 0, %s319
      %s337 = sphi 0, %s337
      %s339 = sphi 0, %s337
      %s340 = sphi 0, %s339
      %s354 = sphi 0, %s340
      %s358 = sphi 0, %s358
      %s360 = sphi 0, %s358
      %s361 = sphi 0, %s360
      %s375 = sphi 0, %s361
      %s381 = sphi 0, %s383
      %s384 = sphi 0, %s381
      %s385 = sphi 0, %s384
      %s401 = sphi 0, %s385
    $region4: #{tpu_custom_call.1} parent=1 // loop_header_branch
      %28 = sbr.rel (%p26) target = $region8
    $region5: #{tpu_custom_call.1} parent=1 // loop_body
      %s30 = ssub.s32 %s25, 1
      %s31 = ssub.s32 %s25, 2
      %s32 = sadd.s32 %s25, 1
      %s33 = ssub.s32 %s25, %s32
      %p34 = scmp.eq.s32.totalorder %s33, 0
      %s36 = sadd.s32 %s35, 1
      %s37 = scalar_select %p34, %s35, %s36
      %p40 = pneg %p34
      %p41 = scmp.eq.s32.totalorder %s25, 1
      %p42 = por %p40, %p41
      %p43 = scmp.ne.s32.totalorder %s35, %s38
      %p44 = scmp.eq.s32.totalorder %s25, 0
      %p45 = por %p43, %p44
      %p46 = scmp.ne.s32.totalorder %s35, %s38
      %p47 = scmp.eq.s32.totalorder %s30, 1
      %p48 = por %p46, %p47
      %p49 = scmp.ne.s32.totalorder %s38, %s39
      %p50 = scmp.eq.s32.totalorder %s30, 0
      %p51 = por %p49, %p50
      %p52 = scmp.ne.s32.totalorder %s38, %s39
      %p53 = scmp.eq.s32.totalorder %s31, 1
      %p54 = por %p52, %p53
      %p56 = scmp.ne.s32.totalorder %s39, %s55
      %p57 = scmp.eq.s32.totalorder %s31, 0
      %p58 = por %p56, %p57
      %s59 = ssub.s32 %s25, %s32
      %p60 = scmp.eq.s32.totalorder %s59, 0
      %s62 = sadd.s32 %s61, 1
      %s63 = scalar_select %p60, %s61, %s62
      %p66 = pneg %p60
      %p67 = scmp.eq.s32.totalorder %s25, 1
      %p68 = por %p66, %p67
      %p69 = scmp.ne.s32.totalorder %s61, %s64
      %p70 = scmp.eq.s32.totalorder %s25, 0
      %p71 = por %p69, %p70
      %p72 = scmp.ne.s32.totalorder %s61, %s64
      %p73 = scmp.eq.s32.totalorder %s30, 1
      %p74 = por %p72, %p73
      %p75 = scmp.ne.s32.totalorder %s64, %s65
      %p76 = scmp.eq.s32.totalorder %s30, 0
      %p77 = por %p75, %p76
      %p78 = scmp.ne.s32.totalorder %s64, %s65
      %p79 = scmp.eq.s32.totalorder %s31, 1
      %p80 = por %p78, %p79
      %p82 = scmp.ne.s32.totalorder %s65, %s81
      %p83 = scmp.eq.s32.totalorder %s31, 0
      %p84 = por %p82, %p83
      %s86 = sadd.s32 %s85, 1
      %p89 = scmp.eq.s32.totalorder %s25, 1
      %p90 = scmp.ne.s32.totalorder %s85, %s87
      %p91 = scmp.eq.s32.totalorder %s25, 0
      %p92 = por %p90, %p91
      %p93 = scmp.ne.s32.totalorder %s85, %s87
      %p94 = scmp.eq.s32.totalorder %s30, 1
      %p95 = por %p93, %p94
      %p96 = scmp.ne.s32.totalorder %s87, %s88
      %p97 = scmp.eq.s32.totalorder %s30, 0
      %p98 = por %p96, %p97
      %p99 = scmp.ne.s32.totalorder %s87, %s88
      %p100 = scmp.eq.s32.totalorder %s31, 1
      %p101 = por %p99, %p100
      %p103 = scmp.ne.s32.totalorder %s88, %s102
      %p104 = scmp.eq.s32.totalorder %s31, 0
      %p105 = por %p103, %p104
      %s107 = sadd.s32 %s106, 1
      %p110 = scmp.eq.s32.totalorder %s25, 1
      %p111 = scmp.ne.s32.totalorder %s106, %s108
      %p112 = scmp.eq.s32.totalorder %s25, 0
      %p113 = por %p111, %p112
      %p114 = scmp.ne.s32.totalorder %s106, %s108
      %p115 = scmp.eq.s32.totalorder %s30, 1
      %p116 = por %p114, %p115
      %p117 = scmp.ne.s32.totalorder %s108, %s109
      %p118 = scmp.eq.s32.totalorder %s30, 0
      %p119 = por %p117, %p118
      %p120 = scmp.ne.s32.totalorder %s108, %s109
      %p121 = scmp.eq.s32.totalorder %s31, 1
      %p122 = por %p120, %p121
      %p124 = scmp.ne.s32.totalorder %s109, %s123
      %p125 = scmp.eq.s32.totalorder %s31, 0
      %p126 = por %p124, %p125
      %s128 = sadd.s32 %s127, 1
      %p131 = scmp.eq.s32.totalorder %s25, 1
      %p132 = scmp.ne.s32.totalorder %s127, %s129
      %p133 = scmp.eq.s32.totalorder %s25, 0
      %p134 = por %p132, %p133
      %p135 = scmp.ne.s32.totalorder %s127, %s129
      %p136 = scmp.eq.s32.totalorder %s30, 1
      %p137 = por %p135, %p136
      %p138 = scmp.ne.s32.totalorder %s129, %s130
      %p139 = scmp.eq.s32.totalorder %s30, 0
      %p140 = por %p138, %p139
      %p141 = scmp.ne.s32.totalorder %s129, %s130
      %p142 = scmp.eq.s32.totalorder %s31, 1
      %p143 = por %p141, %p142
      %p145 = scmp.ne.s32.totalorder %s130, %s144
      %p146 = scmp.eq.s32.totalorder %s31, 0
      %p147 = por %p145, %p146
      %s149 = sadd.s32 %s148, 1
      %p152 = scmp.eq.s32.totalorder %s25, 1
      %p153 = scmp.ne.s32.totalorder %s148, %s150
      %p154 = scmp.eq.s32.totalorder %s25, 0
      %p155 = por %p153, %p154
      %p156 = scmp.ne.s32.totalorder %s148, %s150
      %p157 = scmp.eq.s32.totalorder %s30, 1
      %p158 = por %p156, %p157
      %p159 = scmp.ne.s32.totalorder %s150, %s151
      %p160 = scmp.eq.s32.totalorder %s30, 0
      %p161 = por %p159, %p160
      %p162 = scmp.ne.s32.totalorder %s150, %s151
      %p163 = scmp.eq.s32.totalorder %s31, 1
      %p164 = por %p162, %p163
      %p166 = scmp.ne.s32.totalorder %s151, %s165
      %p167 = scmp.eq.s32.totalorder %s31, 0
      %p168 = por %p166, %p167
      %s170 = sadd.s32 %s169, 1
      %p173 = scmp.eq.s32.totalorder %s25, 1
      %p174 = scmp.ne.s32.totalorder %s169, %s171
      %p175 = scmp.eq.s32.totalorder %s25, 0
      %p176 = por %p174, %p175
      %p177 = scmp.ne.s32.totalorder %s169, %s171
      %p178 = scmp.eq.s32.totalorder %s30, 1
      %p179 = por %p177, %p178
      %p180 = scmp.ne.s32.totalorder %s171, %s172
      %p181 = scmp.eq.s32.totalorder %s30, 0
      %p182 = por %p180, %p181
      %p183 = scmp.ne.s32.totalorder %s171, %s172
      %p184 = scmp.eq.s32.totalorder %s31, 1
      %p185 = por %p183, %p184
      %p187 = scmp.ne.s32.totalorder %s172, %s186
      %p188 = scmp.eq.s32.totalorder %s31, 0
      %p189 = por %p187, %p188
      %s191 = sadd.s32 %s190, 1
      %p194 = scmp.eq.s32.totalorder %s25, 1
      %p195 = scmp.ne.s32.totalorder %s190, %s192
      %p196 = scmp.eq.s32.totalorder %s25, 0
      %p197 = por %p195, %p196
      %p198 = scmp.ne.s32.totalorder %s190, %s192
      %p199 = scmp.eq.s32.totalorder %s30, 1
      %p200 = por %p198, %p199
      %p201 = scmp.ne.s32.totalorder %s192, %s193
      %p202 = scmp.eq.s32.totalorder %s30, 0
      %p203 = por %p201, %p202
      %p204 = scmp.ne.s32.totalorder %s192, %s193
      %p205 = scmp.eq.s32.totalorder %s31, 1
      %p206 = por %p204, %p205
      %p208 = scmp.ne.s32.totalorder %s193, %s207
      %p209 = scmp.eq.s32.totalorder %s31, 0
      %p210 = por %p208, %p209
      %s212 = sadd.s32 %s211, 1
      %p215 = scmp.eq.s32.totalorder %s25, 1
      %p216 = scmp.ne.s32.totalorder %s211, %s213
      %p217 = scmp.eq.s32.totalorder %s25, 0
      %p218 = por %p216, %p217
      %p219 = scmp.ne.s32.totalorder %s211, %s213
      %p220 = scmp.eq.s32.totalorder %s30, 1
      %p221 = por %p219, %p220
      %p222 = scmp.ne.s32.totalorder %s213, %s214
      %p223 = scmp.eq.s32.totalorder %s30, 0
      %p224 = por %p222, %p223
      %p225 = scmp.ne.s32.totalorder %s213, %s214
      %p226 = scmp.eq.s32.totalorder %s31, 1
      %p227 = por %p225, %p226
      %p229 = scmp.ne.s32.totalorder %s214, %s228
      %p230 = scmp.eq.s32.totalorder %s31, 0
      %p231 = por %p229, %p230
      %s233 = sadd.s32 %s232, 1
      %p236 = scmp.eq.s32.totalorder %s25, 1
      %p237 = scmp.ne.s32.totalorder %s232, %s234
      %p238 = scmp.eq.s32.totalorder %s25, 0
      %p239 = por %p237, %p238
      %p240 = scmp.ne.s32.totalorder %s232, %s234
      %p241 = scmp.eq.s32.totalorder %s30, 1
      %p242 = por %p240, %p241
      %p243 = scmp.ne.s32.totalorder %s234, %s235
      %p244 = scmp.eq.s32.totalorder %s30, 0
      %p245 = por %p243, %p244
      %p246 = scmp.ne.s32.totalorder %s234, %s235
      %p247 = scmp.eq.s32.totalorder %s31, 1
      %p248 = por %p246, %p247
      %p250 = scmp.ne.s32.totalorder %s235, %s249
      %p251 = scmp.eq.s32.totalorder %s31, 0
      %p252 = por %p250, %p251
      %s254 = sadd.s32 %s253, 1
      %p257 = scmp.eq.s32.totalorder %s25, 1
      %p258 = scmp.ne.s32.totalorder %s253, %s255
      %p259 = scmp.eq.s32.totalorder %s25, 0
      %p260 = por %p258, %p259
      %p261 = scmp.ne.s32.totalorder %s253, %s255
      %p262 = scmp.eq.s32.totalorder %s30, 1
      %p263 = por %p261, %p262
      %p264 = scmp.ne.s32.totalorder %s255, %s256
      %p265 = scmp.eq.s32.totalorder %s30, 0
      %p266 = por %p264, %p265
      %p267 = scmp.ne.s32.totalorder %s255, %s256
      %p268 = scmp.eq.s32.totalorder %s31, 1
      %p269 = por %p267, %p268
      %p271 = scmp.ne.s32.totalorder %s256, %s270
      %p272 = scmp.eq.s32.totalorder %s31, 0
      %p273 = por %p271, %p272
      %s275 = sadd.s32 %s274, 1
      %p278 = scmp.eq.s32.totalorder %s25, 1
      %p279 = scmp.ne.s32.totalorder %s274, %s276
      %p280 = scmp.eq.s32.totalorder %s25, 0
      %p281 = por %p279, %p280
      %p282 = scmp.ne.s32.totalorder %s274, %s276
      %p283 = scmp.eq.s32.totalorder %s30, 1
      %p284 = por %p282, %p283
      %p285 = scmp.ne.s32.totalorder %s276, %s277
      %p286 = scmp.eq.s32.totalorder %s30, 0
      %p287 = por %p285, %p286
      %p288 = scmp.ne.s32.totalorder %s276, %s277
      %p289 = scmp.eq.s32.totalorder %s31, 1
      %p290 = por %p288, %p289
      %p292 = scmp.ne.s32.totalorder %s277, %s291
      %p293 = scmp.eq.s32.totalorder %s31, 0
      %p294 = por %p292, %p293
      %s296 = sadd.s32 %s295, 1
      %p299 = scmp.eq.s32.totalorder %s25, 1
      %p300 = scmp.ne.s32.totalorder %s295, %s297
      %p301 = scmp.eq.s32.totalorder %s25, 0
      %p302 = por %p300, %p301
      %p303 = scmp.ne.s32.totalorder %s295, %s297
      %p304 = scmp.eq.s32.totalorder %s30, 1
      %p305 = por %p303, %p304
      %p306 = scmp.ne.s32.totalorder %s297, %s298
      %p307 = scmp.eq.s32.totalorder %s30, 0
      %p308 = por %p306, %p307
      %p309 = scmp.ne.s32.totalorder %s297, %s298
      %p310 = scmp.eq.s32.totalorder %s31, 1
      %p311 = por %p309, %p310
      %p313 = scmp.ne.s32.totalorder %s298, %s312
      %p314 = scmp.eq.s32.totalorder %s31, 0
      %p315 = por %p313, %p314
      %s317 = sadd.s32 %s316, 1
      %p320 = scmp.eq.s32.totalorder %s25, 1
      %p321 = scmp.ne.s32.totalorder %s316, %s318
      %p322 = scmp.eq.s32.totalorder %s25, 0
      %p323 = por %p321, %p322
      %p324 = scmp.ne.s32.totalorder %s316, %s318
      %p325 = scmp.eq.s32.totalorder %s30, 1
      %p326 = por %p324, %p325
      %p327 = scmp.ne.s32.totalorder %s318, %s319
      %p328 = scmp.eq.s32.totalorder %s30, 0
      %p329 = por %p327, %p328
      %p330 = scmp.ne.s32.totalorder %s318, %s319
      %p331 = scmp.eq.s32.totalorder %s31, 1
      %p332 = por %p330, %p331
      %p334 = scmp.ne.s32.totalorder %s319, %s333
      %p335 = scmp.eq.s32.totalorder %s31, 0
      %p336 = por %p334, %p335
      %s338 = sadd.s32 %s337, 1
      %p341 = scmp.eq.s32.totalorder %s25, 1
      %p342 = scmp.ne.s32.totalorder %s337, %s339
      %p343 = scmp.eq.s32.totalorder %s25, 0
      %p344 = por %p342, %p343
      %p345 = scmp.ne.s32.totalorder %s337, %s339
      %p346 = scmp.eq.s32.totalorder %s30, 1
      %p347 = por %p345, %p346
      %p348 = scmp.ne.s32.totalorder %s339, %s340
      %p349 = scmp.eq.s32.totalorder %s30, 0
      %p350 = por %p348, %p349
      %p351 = scmp.ne.s32.totalorder %s339, %s340
      %p352 = scmp.eq.s32.totalorder %s31, 1
      %p353 = por %p351, %p352
      %p355 = scmp.ne.s32.totalorder %s340, %s354
      %p356 = scmp.eq.s32.totalorder %s31, 0
      %p357 = por %p355, %p356
      %s359 = sadd.s32 %s358, 1
      %p362 = scmp.eq.s32.totalorder %s25, 1
      %p363 = scmp.ne.s32.totalorder %s358, %s360
      %p364 = scmp.eq.s32.totalorder %s25, 0
      %p365 = por %p363, %p364
      %p366 = scmp.ne.s32.totalorder %s358, %s360
      %p367 = scmp.eq.s32.totalorder %s30, 1
      %p368 = por %p366, %p367
      %p369 = scmp.ne.s32.totalorder %s360, %s361
      %p370 = scmp.eq.s32.totalorder %s30, 0
      %p371 = por %p369, %p370
      %p372 = scmp.ne.s32.totalorder %s360, %s361
      %p373 = scmp.eq.s32.totalorder %s31, 1
      %p374 = por %p372, %p373
      %p376 = scmp.ne.s32.totalorder %s361, %s375
      %p377 = scmp.eq.s32.totalorder %s31, 0
      %p378 = por %p376, %p377
      %s379 = ssub.s32 %s25, %s32
      %p380 = scmp.eq.s32.totalorder %s379, 0
      %s382 = sadd.s32 %s381, 1
      %s383 = scalar_select %p380, %s381, %s382
      %p386 = pneg %p380
      %p387 = scmp.eq.s32.totalorder %s25, 1
      %p388 = por %p386, %p387
      %p389 = scmp.ne.s32.totalorder %s381, %s384
      %p390 = scmp.eq.s32.totalorder %s25, 0
      %p391 = por %p389, %p390
      %p392 = scmp.ne.s32.totalorder %s381, %s384
      %p393 = scmp.eq.s32.totalorder %s30, 1
      %p394 = por %p392, %p393
      %p395 = scmp.ne.s32.totalorder %s384, %s385
      %p396 = scmp.eq.s32.totalorder %s30, 0
      %p397 = por %p395, %p396
      %p398 = scmp.ne.s32.totalorder %s384, %s385
      %p399 = scmp.eq.s32.totalorder %s31, 1
      %p400 = por %p398, %p399
      %p402 = scmp.ne.s32.totalorder %s385, %s401
      %p403 = scmp.eq.s32.totalorder %s31, 0
      %p404 = por %p402, %p403
      %p405 = scmp.le.s32.totalorder 1, %s25
      %p406 = scmp.lt.s32.totalorder %s25, 3
      %p407 = pnand %p405, %p406
      %p408 = pneg %p407
      // Predicated region
      $region9: #{tpu_custom_call.1} parent=5 // pred_check
        _
      $region10: #{tpu_custom_call.1} parent=5 // pred_check_branch
        %410 = sbr.rel (%p407) target = $region12
      $region11: #{tpu_custom_call.1} parent=5 // pred_region
        %s411 = ssub.s32 %s25, 1
        // Predicated region
        $region13: #{tpu_custom_call.1} parent=11 // pred_check
          %p412 = pneg %p98
        $region14: #{tpu_custom_call.1} parent=11 // pred_check_branch
          %414 = sbr.rel (%p412) target = $region16
        $region15: #{tpu_custom_call.1} parent=11 // pred_region
          _
        $region16: #{tpu_custom_call.1} parent=11 // pred_fallthru
          _
        // Predicated region
        $region17: #{tpu_custom_call.1} parent=11 // pred_check
          %p415 = pneg %p119
        $region18: #{tpu_custom_call.1} parent=11 // pred_check_branch
          %417 = sbr.rel (%p415) target = $region20
        $region19: #{tpu_custom_call.1} parent=11 // pred_region
          _
        $region20: #{tpu_custom_call.1} parent=11 // pred_fallthru
          _
        // Predicated region
        $region21: #{tpu_custom_call.1} parent=11 // pred_check
          %p418 = pneg %p140
        $region22: #{tpu_custom_call.1} parent=11 // pred_check_branch
          %420 = sbr.rel (%p418) target = $region24
        $region23: #{tpu_custom_call.1} parent=11 // pred_region
          _
        $region24: #{tpu_custom_call.1} parent=11 // pred_fallthru
          _
        // Predicated region
        $region25: #{tpu_custom_call.1} parent=11 // pred_check
          %p421 = pneg %p161
        $region26: #{tpu_custom_call.1} parent=11 // pred_check_branch
          %423 = sbr.rel (%p421) target = $region28
        $region27: #{tpu_custom_call.1} parent=11 // pred_region
          _
        $region28: #{tpu_custom_call.1} parent=11 // pred_fallthru
          _
        // Predicated region
        $region29: #{tpu_custom_call.1} parent=11 // pred_check
          %p424 = pneg %p182
        $region30: #{tpu_custom_call.1} parent=11 // pred_check_branch
          %426 = sbr.rel (%p424) target = $region32
        $region31: #{tpu_custom_call.1} parent=11 // pred_region
          _
        $region32: #{tpu_custom_call.1} parent=11 // pred_fallthru
          _
        // Predicated region
        $region33: #{tpu_custom_call.1} parent=11 // pred_check
          %p427 = pneg %p203
        $region34: #{tpu_custom_call.1} parent=11 // pred_check_branch
          %429 = sbr.rel (%p427) target = $region36
        $region35: #{tpu_custom_call.1} parent=11 // pred_region
          _
        $region36: #{tpu_custom_call.1} parent=11 // pred_fallthru
          _
        // Predicated region
        $region37: #{tpu_custom_call.1} parent=11 // pred_check
          %p430 = pneg %p224
        $region38: #{tpu_custom_call.1} parent=11 // pred_check_branch
          %432 = sbr.rel (%p430) target = $region40
        $region39: #{tpu_custom_call.1} parent=11 // pred_region
          _
        $region40: #{tpu_custom_call.1} parent=11 // pred_fallthru
          _
        // Predicated region
        $region41: #{tpu_custom_call.1} parent=11 // pred_check
          %p433 = pneg %p245
        $region42: #{tpu_custom_call.1} parent=11 // pred_check_branch
          %435 = sbr.rel (%p433) target = $region44
        $region43: #{tpu_custom_call.1} parent=11 // pred_region
          _
        $region44: #{tpu_custom_call.1} parent=11 // pred_fallthru
          _
        // Predicated region
        $region45: #{tpu_custom_call.1} parent=11 // pred_check
          %p436 = pneg %p266
        $region46: #{tpu_custom_call.1} parent=11 // pred_check_branch
          %438 = sbr.rel (%p436) target = $region48
        $region47: #{tpu_custom_call.1} parent=11 // pred_region
          _
        $region48: #{tpu_custom_call.1} parent=11 // pred_fallthru
          _
        // Predicated region
        $region49: #{tpu_custom_call.1} parent=11 // pred_check
          %p439 = pneg %p287
        $region50: #{tpu_custom_call.1} parent=11 // pred_check_branch
          %441 = sbr.rel (%p439) target = $region52
        $region51: #{tpu_custom_call.1} parent=11 // pred_region
          _
        $region52: #{tpu_custom_call.1} parent=11 // pred_fallthru
          _
        // Predicated region
        $region53: #{tpu_custom_call.1} parent=11 // pred_check
          %p442 = pneg %p308
        $region54: #{tpu_custom_call.1} parent=11 // pred_check_branch
          %444 = sbr.rel (%p442) target = $region56
        $region55: #{tpu_custom_call.1} parent=11 // pred_region
          _
        $region56: #{tpu_custom_call.1} parent=11 // pred_fallthru
          _
        // Predicated region
        $region57: #{tpu_custom_call.1} parent=11 // pred_check
          %p445 = pneg %p329
        $region58: #{tpu_custom_call.1} parent=11 // pred_check_branch
          %447 = sbr.rel (%p445) target = $region60
        $region59: #{tpu_custom_call.1} parent=11 // pred_region
          _
        $region60: #{tpu_custom_call.1} parent=11 // pred_fallthru
          _
        // Predicated region
        $region61: #{tpu_custom_call.1} parent=11 // pred_check
          %p448 = pneg %p350
        $region62: #{tpu_custom_call.1} parent=11 // pred_check_branch
          %450 = sbr.rel (%p448) target = $region64
        $region63: #{tpu_custom_call.1} parent=11 // pred_region
          _
        $region64: #{tpu_custom_call.1} parent=11 // pred_fallthru
          _
        // Predicated region
        $region65: #{tpu_custom_call.1} parent=11 // pred_check
          %p451 = pneg %p371
        $region66: #{tpu_custom_call.1} parent=11 // pred_check_branch
          %453 = sbr.rel (%p451) target = $region68
        $region67: #{tpu_custom_call.1} parent=11 // pred_region
          _
        $region68: #{tpu_custom_call.1} parent=11 // pred_fallthru
          _
      $region12: #{tpu_custom_call.1} parent=5 // pred_fallthru
        _
      %p454 = scmp.lt.s32.totalorder %s25, 2
      // Predicated region
      $region69: #{tpu_custom_call.1} parent=5 // pred_check
        %p455 = pneg %p454
      $region70: #{tpu_custom_call.1} parent=5 // pred_check_branch
        %457 = sbr.rel (%p455) target = $region72
      $region71: #{tpu_custom_call.1} parent=5 // pred_region
        // Predicated region
        $region73: #{tpu_custom_call.1} parent=71 // pred_check
          %p458 = pneg %p45
        $region74: #{tpu_custom_call.1} parent=71 // pred_check_branch
          %460 = sbr.rel (%p458) target = $region76
        $region75: #{tpu_custom_call.1} parent=71 // pred_region
          %p461 = scmp.lt.s32.totalorder %s25, 1
          %s462 = scalar_select %p461, %s25, 1
          %s463 = smul.addr %s462, 2
          %s464 = smul.addr %s463, 4
          %s465 = scalar_lea.vmem %s0, %s464
        $region76: #{tpu_custom_call.1} parent=71 // pred_fallthru
          _
        // Predicated region
        $region77: #{tpu_custom_call.1} parent=71 // pred_check
          %p466 = pneg %p71
        $region78: #{tpu_custom_call.1} parent=71 // pred_check_branch
          %468 = sbr.rel (%p466) target = $region80
        $region79: #{tpu_custom_call.1} parent=71 // pred_region
          %p469 = scmp.lt.s32.totalorder %s25, 1
          %s470 = scalar_select %p469, %s25, 1
          %s471 = smul.addr %s470, 4
          %s472 = smul.addr %s471, 8
          %s473 = scalar_lea.vmem %s1, %s472
        $region80: #{tpu_custom_call.1} parent=71 // pred_fallthru
          _
      $region72: #{tpu_custom_call.1} parent=5 // pred_fallthru
        _
      %p474 = scmp.le.s32.totalorder 1, %s25
      %p475 = scmp.lt.s32.totalorder %s25, 3
      %p476 = pnand %p474, %p475
      %p477 = pneg %p476
      // Predicated region
      $region81: #{tpu_custom_call.1} parent=5 // pred_check
        _
      $region82: #{tpu_custom_call.1} parent=5 // pred_check_branch
        %479 = sbr.rel (%p476) target = $region84
      $region83: #{tpu_custom_call.1} parent=5 // pred_region
        %s480 = ssub.s32 %s25, 1
        %p481 = scmp.lt.s32.totalorder %s30, 1
        %s482 = scalar_select %p481, %s30, 1
        %s483 = smul.addr %s482, 2
        %s484 = smul.addr %s483, 4
        %s485 = scalar_lea.vmem %s0, %s484
        %p486 = pneg %p51
        %p487 = pneg %p48
        %p488 = scmp.lt.s32.totalorder %s30, 1
        %s489 = scalar_select %p488, %s30, 1
        %s490 = smul.addr %s489, 4
        %s491 = smul.addr %s490, 8
        %s492 = scalar_lea.vmem %s1, %s491
        %p493 = pneg %p77
        %p494 = pneg %p74
        %p495 = pneg %p98
        %p496 = pneg %p95
        %p497 = pneg %p119
        %p498 = pneg %p116
        %p499 = pneg %p140
        %p500 = pneg %p137
        %p501 = pneg %p161
        %p502 = pneg %p158
        %p503 = pneg %p182
        %p504 = pneg %p179
        %p505 = pneg %p203
        %p506 = pneg %p200
        %p507 = pneg %p224
        %p508 = pneg %p221
        %p509 = pneg %p245
        %p510 = pneg %p242
        %p511 = pneg %p266
        %p512 = pneg %p263
        %p513 = pneg %p287
        %p514 = pneg %p284
        %p515 = pneg %p308
        %p516 = pneg %p305
        %p517 = pneg %p329
        %p518 = pneg %p326
        %p519 = pneg %p350
        %p520 = pneg %p347
        %p521 = pneg %p371
        %p522 = pneg %p368
        %p523 = pneg %p397
        %p524 = pneg %p394
        %s525 = sand.u32 %s384, 1
        %s526 = scalar_lea.sflag [#allocation3], %s525
        %s527 = sand.u32 %s384, 1
        %s528 = smul.addr %s527, 4
        %s529 = scalar_lea.vmem [#allocation2], %s528
        %p530 = scmp.lt.s32.totalorder %s30, 1
        %s531 = scalar_select %p530, %s30, 1
        %s532 = smul.addr %s531, 2
        %s533 = smul.addr %s532, 4
        %s534 = scalar_lea.vmem %s0, %s533
        %p535 = scmp.lt.s32.totalorder %s30, 1
        %s536 = scalar_select %p535, %s30, 1
        %s537 = smul.addr %s536, 4
        %s538 = smul.addr %s537, 8
        %s539 = scalar_lea.vmem %s1, %s538
        %v541 = vld [vmem:[%s534] sm:$0xff]
        %v542 = vld [vmem:[%s539] sm:$0xff]
        %v543 = vld [vmem:[%s539 + $0x8] sm:$0xff]
        %v544 = vld [vmem:[%s539 + $0x10] sm:$0xff]
        %v545 = vld [vmem:[%s539 + $0x18] sm:$0xff]
        %v546 = vld [vmem:[%s9] sm:$0xff]
        %v547 = vld [vmem:[%s9 + $0x8] sm:$0xff]
        %v548 = vld [vmem:[%s9 + $0x10] sm:$0xff]
        %v549 = vld [vmem:[%s9 + $0x18] sm:$0xff]
        %v550 = vld [vmem:[%s9 + $0x20] sm:$0xff]
        %v551 = vld [vmem:[%s9 + $0x28] sm:$0xff]
        %v552 = vld [vmem:[%s9 + $0x30] sm:$0xff]
        %v553 = vld [vmem:[%s9 + $0x38] sm:$0xff]
        %v554 = vld [vmem:[%s9 + $0x40] sm:$0xff]
        %v555 = vld [vmem:[%s9 + $0x48] sm:$0xff]
        %v556 = vld [vmem:[%s9 + $0x50] sm:$0xff]
        %v557 = vld [vmem:[%s9 + $0x58] sm:$0xff]
        %v558 = vld [vmem:[%s9 + $0x60] sm:$0xff]
        %v559 = vld [vmem:[%s9 + $0x68] sm:$0xff]
        %v560 = vld [vmem:[%s9 + $0x70] sm:$0xff]
        %v561 = vld [vmem:[%s9 + $0x78] sm:$0xff]
        %v562 = vld [vmem:[%s9 + $0x80] sm:$0xff]
        %v563 = vld [vmem:[%s9 + $0x88] sm:$0xff]
        %v564 = vld [vmem:[%s9 + $0x90] sm:$0xff]
        %v565 = vld [vmem:[%s9 + $0x98] sm:$0xff]
        %v566 = vld [vmem:[%s9 + $0xa0] sm:$0xff]
        %v567 = vld [vmem:[%s9 + $0xa8] sm:$0xff]
        %v568 = vld [vmem:[%s9 + $0xb0] sm:$0xff]
        %v569 = vld [vmem:[%s9 + $0xb8] sm:$0xff]
        %v570 = vld [vmem:[%s2] sm:$0xf]
        %v571 = vld [vmem:[%s2 + $0x4] sm:$0xf]
        %v572 = vld [vmem:[%s2 + $0x8] sm:$0xf]
        %v573 = vld [vmem:[%s2 + $0xc] sm:$0xf]
        %v575 = vcombine.high %v541, %v541
        %v577 = vpack.c.bf16 %v541, %v541
        %v578 = vpack.c.bf16 %v575, %v575
        %v579 = vld [vmem:[%s3] sm:$0xff]
        %v580 = vld [vmem:[%s3 + $0x8] sm:$0xff]
        %v581 = vld [vmem:[%s3 + $0x10] sm:$0xff]
        %v582 = vld [vmem:[%s3 + $0x18] sm:$0xff]
        %584 = vset.pattern.permute.xlu0 0
        %585 = vperm.xlu0 %584, %v579
        %v586 = vpop.permute.xlu0 %585
        %589 = vset.pattern.permute.xlu0 0
        %590 = vperm.xlu0 %589, %v580
        %v591 = vpop.permute.xlu0 %590
        %594 = vset.pattern.permute.xlu0 0
        %595 = vperm.xlu0 %594, %v581
        %v596 = vpop.permute.xlu0 %595
        %599 = vset.pattern.permute.xlu0 0
        %600 = vperm.xlu0 %599, %v582
        %v601 = vpop.permute.xlu0 %600
        %v607 = vunpack.c.l.b16 %v570
        %v608 = vunpack.c.l.b16 %v571
        %v609 = vunpack.c.l.b16 %v572
        %v610 = vunpack.c.l.b16 %v573
        %v611 = vpack.c.b16 %v608, %v607
        %v612 = vpack.c.b16 %v610, %v609
        %vm613 = vcmask 31744
        %v615 = vsel %vm613, %v611, 0
        %v618 = vsel %vm613, %v612, 0
        %vm620 = vcmask 1041408
        %v622 = vsel %vm620, %v577, 0
        %v625 = vsel %vm620, %v578, 0
        %627 = vmatprep.subr.bf16.mxu0 0
        %628 = vmatpush1.bf16.msra.mxu0 0
        %629 = vmatprep.subr.bf16.mxu0 0
        %630 = vmatpush1.bf16.msra.mxu0 0
        %631 = vmatprep.subr.bf16.mxu0 0
        %632 = vmatpush1.bf16.msra.mxu0 0
        %633 = vmatprep.subr.bf16.mxu0 0
        %634 = vmatpush1.bf16.msra.mxu0 0
        %635 = vmatprep.subr.bf16.mxu0 0
        %636 = vmatpush1.bf16.msra.mxu0 0
        %637 = vmatprep.subr.bf16.mxu0 0
        %638 = vmatpush1.bf16.msra.mxu0 0
        %639 = vmatprep.subr.bf16.mxu0 0
        %640 = vmatpush1.bf16.msra.mxu0 0
        %641 = vmatprep.subr.bf16.mxu0 %v625
        %642 = vmatpush1.bf16.msra.mxu0 %v622
        %643 = vmatprep.subr.bf16.mxu0 0
        %644 = vmatpush2.bf16.msra.mxu0 0
        %645 = vmatprep.subr.bf16.mxu0 0
        %646 = vmatpush2.bf16.msra.mxu0 0
        %647 = vmatprep.subr.bf16.mxu0 0
        %648 = vmatpush2.bf16.msra.mxu0 0
        %649 = vmatprep.subr.bf16.mxu0 0
        %650 = vmatpush2.bf16.msra.mxu0 0
        %651 = vmatprep.subr.bf16.mxu0 0
        %652 = vmatpush2.bf16.msra.mxu0 0
        %653 = vmatprep.subr.bf16.mxu0 0
        %654 = vmatpush2.bf16.msra.mxu0 0
        %655 = vmatprep.subr.bf16.mxu0 0
        %656 = vmatpush2.bf16.msra.mxu0 0
        %657 = vmatprep.subr.bf16.mxu0 0
        %658 = vmatpush2.bf16.msra.mxu0 0
        %659 = vmatprep.mubr.bf16.mxu0 0
        %660 = vmatmul.mubr.bf16.gmra.mxu0 %v615
        %v661 = vpop.f32.mrf.mxu0
        %v662 = vadd.f32 %v586, %v661
        %v663 = vpop.f32.mrf.mxu0
        %v664 = vadd.f32 %v586, %v663
        %v665 = vpop.f32.mrf.mxu0
        %v666 = vadd.f32 %v591, %v665
        %v667 = vpop.f32.mrf.mxu0
        %v668 = vadd.f32 %v591, %v667
        %669 = vmatprep.mubr.bf16.mxu0 0
        %670 = vmatmul.mubr.bf16.gmra.mxu0 %v618
        %v671 = vpop.f32.mrf.mxu0
        %v672 = vadd.f32 %v596, %v671
        %v673 = vpop.f32.mrf.mxu0
        %v674 = vadd.f32 %v596, %v673
        %v675 = vpop.f32.mrf.mxu0
        %v676 = vadd.f32 %v601, %v675
        %v677 = vpop.f32.mrf.mxu0
        %v678 = vadd.f32 %v601, %v677
        %679 = vdwg.mxu0
        %v680 = vld [vmem:[%s4] sm:$0xff]
        %v681 = vld [vmem:[%s4 + $0x8] sm:$0xff]
        %v682 = vld [vmem:[%s4 + $0x10] sm:$0xff]
        %v683 = vld [vmem:[%s4 + $0x18] sm:$0xff]
        %v684 = vld [vmem:[%s4 + $0x20] sm:$0xff]
        %v685 = vld [vmem:[%s4 + $0x28] sm:$0xff]
        %v686 = vld [vmem:[%s4 + $0x30] sm:$0xff]
        %v687 = vld [vmem:[%s4 + $0x38] sm:$0xff]
        %v688 = vadd.f32 %v662, %v680
        %v689 = vadd.f32 %v664, %v681
        %v690 = vadd.f32 %v666, %v682
        %v691 = vadd.f32 %v668, %v683
        %v692 = vadd.f32 %v672, %v684
        %v693 = vadd.f32 %v674, %v685
        %v694 = vadd.f32 %v676, %v686
        %v695 = vadd.f32 %v678, %v687
        %v696 = vld [vmem:[%s5] sm:$0xf]
        %v697 = vld [vmem:[%s5 + $0x4] sm:$0xf]
        %v698 = vld [vmem:[%s5 + $0x8] sm:$0xf]
        %v699 = vld [vmem:[%s5 + $0xc] sm:$0xf]
        %v700 = vld [vmem:[%s5 + $0x10] sm:$0xf]
        %v701 = vld [vmem:[%s5 + $0x14] sm:$0xf]
        %v702 = vld [vmem:[%s5 + $0x18] sm:$0xf]
        %v703 = vld [vmem:[%s5 + $0x1c] sm:$0xf]
        %v704 = vld [vmem:[%s5 + $0x20] sm:$0xf]
        %v705 = vld [vmem:[%s5 + $0x24] sm:$0xf]
        %v706 = vld [vmem:[%s5 + $0x28] sm:$0xf]
        %v707 = vld [vmem:[%s5 + $0x2c] sm:$0xf]
        %v708 = vld [vmem:[%s5 + $0x30] sm:$0xf]
        %v709 = vld [vmem:[%s5 + $0x34] sm:$0xf]
        %v710 = vld [vmem:[%s5 + $0x38] sm:$0xf]
        %v711 = vld [vmem:[%s5 + $0x3c] sm:$0xf]
        %v712 = vld [vmem:[%s6] sm:$0xff]
        %v713 = vld [vmem:[%s6 + $0x8] sm:$0xff]
        %v714 = vld [vmem:[%s6 + $0x10] sm:$0xff]
        %v715 = vld [vmem:[%s6 + $0x18] sm:$0xff]
        %v716 = vld [vmem:[%s6 + $0x20] sm:$0xff]
        %v717 = vld [vmem:[%s6 + $0x28] sm:$0xff]
        %v718 = vld [vmem:[%s6 + $0x30] sm:$0xff]
        %v719 = vld [vmem:[%s6 + $0x38] sm:$0xff]
        %v720 = vld [vmem:[%s6 + $0x40] sm:$0xff]
        %v721 = vld [vmem:[%s6 + $0x48] sm:$0xff]
        %v722 = vld [vmem:[%s6 + $0x50] sm:$0xff]
        %v723 = vld [vmem:[%s6 + $0x58] sm:$0xff]
        %v724 = vld [vmem:[%s6 + $0x60] sm:$0xff]
        %v725 = vld [vmem:[%s6 + $0x68] sm:$0xff]
        %v726 = vld [vmem:[%s6 + $0x70] sm:$0xff]
        %v727 = vld [vmem:[%s6 + $0x78] sm:$0xff]
        %v728 = vpack.c.bf16 %v690, %v688
        %v729 = vpack.c.bf16 %v691, %v689
        %v730 = vpack.c.bf16 %v694, %v692
        %v731 = vpack.c.bf16 %v695, %v693
        %733 = vset.pattern.permute.xlu0 0
        %734 = vperm.xlu0 %733, %v712
        %v735 = vpop.permute.xlu0 %734
        %738 = vset.pattern.permute.xlu0 0
        %739 = vperm.xlu0 %738, %v713
        %v740 = vpop.permute.xlu0 %739
        %743 = vset.pattern.permute.xlu0 0
        %744 = vperm.xlu0 %743, %v714
        %v745 = vpop.permute.xlu0 %744
        %748 = vset.pattern.permute.xlu0 0
        %749 = vperm.xlu0 %748, %v715
        %v750 = vpop.permute.xlu0 %749
        %v756 = vunpack.c.l.b16 %v696
        %v757 = vunpack.c.l.b16 %v697
        %v758 = vunpack.c.l.b16 %v698
        %v759 = vunpack.c.l.b16 %v699
        %v760 = vpack.c.b16 %v757, %v756
        %v761 = vpack.c.b16 %v759, %v758
        %vm762 = vcmask 261120
        %v764 = vsel %vm762, %v760, 0
        %v767 = vsel %vm762, %v761, 0
        %769 = vmatprep.subr.bf16.mxu0 0
        %770 = vmatpush1.bf16.msra.mxu0 0
        %771 = vmatprep.subr.bf16.mxu0 0
        %772 = vmatpush1.bf16.msra.mxu0 0
        %773 = vmatprep.subr.bf16.mxu0 0
        %774 = vmatpush1.bf16.msra.mxu0 0
        %775 = vmatprep.subr.bf16.mxu0 0
        %776 = vmatpush1.bf16.msra.mxu0 0
        %777 = vmatprep.subr.bf16.mxu0 0
        %778 = vmatpush1.bf16.msra.mxu0 0
        %779 = vmatprep.subr.bf16.mxu0 0
        %780 = vmatpush1.bf16.msra.mxu0 0
        %781 = vmatprep.subr.bf16.mxu0 %v731
        %782 = vmatpush1.bf16.msra.mxu0 %v730
        %783 = vmatprep.subr.bf16.mxu0 %v729
        %784 = vmatpush1.bf16.msra.mxu0 %v728
        %785 = vmatprep.subr.bf16.mxu0 0
        %786 = vmatpush2.bf16.msra.mxu0 0
        %787 = vmatprep.subr.bf16.mxu0 0
        %788 = vmatpush2.bf16.msra.mxu0 0
        %789 = vmatprep.subr.bf16.mxu0 0
        %790 = vmatpush2.bf16.msra.mxu0 0
        %791 = vmatprep.subr.bf16.mxu0 0
        %792 = vmatpush2.bf16.msra.mxu0 0
        %793 = vmatprep.subr.bf16.mxu0 0
        %794 = vmatpush2.bf16.msra.mxu0 0
        %795 = vmatprep.subr.bf16.mxu0 0
        %796 = vmatpush2.bf16.msra.mxu0 0
        %797 = vmatprep.subr.bf16.mxu0 0
        %798 = vmatpush2.bf16.msra.mxu0 0
        %799 = vmatprep.subr.bf16.mxu0 0
        %800 = vmatpush2.bf16.msra.mxu0 0
        %801 = vmatprep.mubr.bf16.mxu0 0
        %802 = vmatmul.mubr.bf16.gmra.mxu0 %v764
        %v803 = vpop.f32.mrf.mxu0
        %v804 = vadd.f32 %v735, %v803
        %v805 = vpop.f32.mrf.mxu0
        %v806 = vadd.f32 %v735, %v805
        %v807 = vpop.f32.mrf.mxu0
        %v808 = vadd.f32 %v740, %v807
        %v809 = vpop.f32.mrf.mxu0
        %v810 = vadd.f32 %v740, %v809
        %811 = vmatprep.mubr.bf16.mxu0 0
        %812 = vmatmul.mubr.bf16.gmra.mxu0 %v767
        %v813 = vpop.f32.mrf.mxu0
        %v814 = vadd.f32 %v745, %v813
        %v815 = vpop.f32.mrf.mxu0
        %v816 = vadd.f32 %v745, %v815
        %v817 = vpop.f32.mrf.mxu0
        %v818 = vadd.f32 %v750, %v817
        %v819 = vpop.f32.mrf.mxu0
        %v820 = vadd.f32 %v750, %v819
        %821 = vdwg.mxu0
        %v822 = vpack.c.bf16 %v543, %v542
        %v823 = vpack.c.bf16 %v545, %v544
        %825 = vset.pattern.permute.xlu0 0
        %826 = vperm.xlu0 %825, %v716
        %v827 = vpop.permute.xlu0 %826
        %830 = vset.pattern.permute.xlu0 0
        %831 = vperm.xlu0 %830, %v717
        %v832 = vpop.permute.xlu0 %831
        %835 = vset.pattern.permute.xlu0 0
        %836 = vperm.xlu0 %835, %v718
        %v837 = vpop.permute.xlu0 %836
        %840 = vset.pattern.permute.xlu0 0
        %841 = vperm.xlu0 %840, %v719
        %v842 = vpop.permute.xlu0 %841
        %v848 = vunpack.c.l.b16 %v700
        %v849 = vunpack.c.l.b16 %v701
        %v850 = vunpack.c.l.b16 %v702
        %v851 = vunpack.c.l.b16 %v703
        %v852 = vpack.c.b16 %v849, %v848
        %v853 = vpack.c.b16 %v851, %v850
        %v855 = vsel %vm762, %v852, 0
        %v858 = vsel %vm762, %v853, 0
        %860 = vmatprep.subr.bf16.mxu0 0
        %861 = vmatpush1.bf16.msra.mxu0 0
        %862 = vmatprep.subr.bf16.mxu0 0
        %863 = vmatpush1.bf16.msra.mxu0 0
        %864 = vmatprep.subr.bf16.mxu0 0
        %865 = vmatpush1.bf16.msra.mxu0 0
        %866 = vmatprep.subr.bf16.mxu0 0
        %867 = vmatpush1.bf16.msra.mxu0 0
        %868 = vmatprep.subr.bf16.mxu0 0
        %869 = vmatpush1.bf16.msra.mxu0 0
        %870 = vmatprep.subr.bf16.mxu0 0
        %871 = vmatpush1.bf16.msra.mxu0 0
        %872 = vmatprep.subr.bf16.mxu0 0
        %873 = vmatpush1.bf16.msra.mxu0 %v823
        %874 = vmatprep.subr.bf16.mxu0 0
        %875 = vmatpush1.bf16.msra.mxu0 %v822
        %876 = vmatprep.subr.bf16.mxu0 0
        %877 = vmatpush2.bf16.msra.mxu0 0
        %878 = vmatprep.subr.bf16.mxu0 0
        %879 = vmatpush2.bf16.msra.mxu0 0
        %880 = vmatprep.subr.bf16.mxu0 0
        %881 = vmatpush2.bf16.msra.mxu0 0
        %882 = vmatprep.subr.bf16.mxu0 0
        %883 = vmatpush2.bf16.msra.mxu0 0
        %884 = vmatprep.subr.bf16.mxu0 0
        %885 = vmatpush2.bf16.msra.mxu0 0
        %886 = vmatprep.subr.bf16.mxu0 0
        %887 = vmatpush2.bf16.msra.mxu0 0
        %888 = vmatprep.subr.bf16.mxu0 0
        %889 = vmatpush2.bf16.msra.mxu0 0
        %890 = vmatprep.subr.bf16.mxu0 0
        %891 = vmatpush2.bf16.msra.mxu0 0
        %892 = vmatprep.mubr.bf16.mxu0 0
        %893 = vmatmul.mubr.bf16.gmra.mxu0 %v855
        %v894 = vpop.f32.mrf.mxu0
        %v895 = vadd.f32 %v827, %v894
        %v896 = vpop.f32.mrf.mxu0
        %v897 = vpop.f32.mrf.mxu0
        %v898 = vadd.f32 %v832, %v897
        %v899 = vpop.f32.mrf.mxu0
        %900 = vmatprep.mubr.bf16.mxu0 0
        %901 = vmatmul.mubr.bf16.gmra.mxu0 %v858
        %v902 = vpop.f32.mrf.mxu0
        %v903 = vadd.f32 %v837, %v902
        %v904 = vpop.f32.mrf.mxu0
        %v905 = vpop.f32.mrf.mxu0
        %v906 = vadd.f32 %v842, %v905
        %v907 = vpop.f32.mrf.mxu0
        %908 = vdwg.mxu0
        %910 = vset.pattern.permute.xlu0 0
        %911 = vperm.xlu0 %910, %v720
        %v912 = vpop.permute.xlu0 %911
        %915 = vset.pattern.permute.xlu0 0
        %916 = vperm.xlu0 %915, %v721
        %v917 = vpop.permute.xlu0 %916
        %920 = vset.pattern.permute.xlu0 0
        %921 = vperm.xlu0 %920, %v722
        %v922 = vpop.permute.xlu0 %921
        %925 = vset.pattern.permute.xlu0 0
        %926 = vperm.xlu0 %925, %v723
        %v927 = vpop.permute.xlu0 %926
        %v933 = vunpack.c.l.b16 %v704
        %v934 = vunpack.c.l.b16 %v705
        %v935 = vunpack.c.l.b16 %v706
        %v936 = vunpack.c.l.b16 %v707
        %v937 = vpack.c.b16 %v934, %v933
        %v938 = vpack.c.b16 %v936, %v935
        %v940 = vsel %vm762, %v937, 0
        %v943 = vsel %vm762, %v938, 0
        %945 = vmatprep.subr.bf16.mxu0 0
        %946 = vmatpush1.bf16.msra.mxu0 0
        %947 = vmatprep.subr.bf16.mxu0 0
        %948 = vmatpush1.bf16.msra.mxu0 0
        %949 = vmatprep.subr.bf16.mxu0 0
        %950 = vmatpush1.bf16.msra.mxu0 0
        %951 = vmatprep.subr.bf16.mxu0 0
        %952 = vmatpush1.bf16.msra.mxu0 0
        %953 = vmatprep.subr.bf16.mxu0 0
        %954 = vmatpush1.bf16.msra.mxu0 0
        %955 = vmatprep.subr.bf16.mxu0 0
        %956 = vmatpush1.bf16.msra.mxu0 0
        %957 = vmatprep.subr.bf16.mxu0 0
        %958 = vmatpush1.bf16.msra.mxu0 %v823
        %959 = vmatprep.subr.bf16.mxu0 0
        %960 = vmatpush1.bf16.msra.mxu0 %v822
        %961 = vmatprep.subr.bf16.mxu0 0
        %962 = vmatpush2.bf16.msra.mxu0 0
        %963 = vmatprep.subr.bf16.mxu0 0
        %964 = vmatpush2.bf16.msra.mxu0 0
        %965 = vmatprep.subr.bf16.mxu0 0
        %966 = vmatpush2.bf16.msra.mxu0 0
        %967 = vmatprep.subr.bf16.mxu0 0
        %968 = vmatpush2.bf16.msra.mxu0 0
        %969 = vmatprep.subr.bf16.mxu0 0
        %970 = vmatpush2.bf16.msra.mxu0 0
        %971 = vmatprep.subr.bf16.mxu0 0
        %972 = vmatpush2.bf16.msra.mxu0 0
        %973 = vmatprep.subr.bf16.mxu0 0
        %974 = vmatpush2.bf16.msra.mxu0 0
        %975 = vmatprep.subr.bf16.mxu0 0
        %976 = vmatpush2.bf16.msra.mxu0 0
        %977 = vmatprep.mubr.bf16.mxu0 0
        %978 = vmatmul.mubr.bf16.gmra.mxu0 %v940
        %v979 = vpop.f32.mrf.mxu0
        %v980 = vadd.f32 %v912, %v979
        %v981 = vpop.f32.mrf.mxu0
        %v982 = vpop.f32.mrf.mxu0
        %v983 = vadd.f32 %v917, %v982
        %v984 = vpop.f32.mrf.mxu0
        %985 = vmatprep.mubr.bf16.mxu0 0
        %986 = vmatmul.mubr.bf16.gmra.mxu0 %v943
        %v987 = vpop.f32.mrf.mxu0
        %v988 = vadd.f32 %v922, %v987
        %v989 = vpop.f32.mrf.mxu0
        %v990 = vpop.f32.mrf.mxu0
        %v991 = vadd.f32 %v927, %v990
        %v992 = vpop.f32.mrf.mxu0
        %993 = vdwg.mxu0
        %v994 = vpack.c.bf16 %v895, %v895
        %v995 = vpack.c.bf16 %v898, %v898
        %v996 = vpack.c.bf16 %v903, %v903
        %v997 = vpack.c.bf16 %v906, %v906
        %v998 = vpack.c.bf16 %v804, %v804
        %v999 = vpack.c.bf16 %v806, %v806
        %v1000 = vpack.c.bf16 %v808, %v808
        %v1001 = vpack.c.bf16 %v810, %v810
        %v1002 = vpack.c.bf16 %v814, %v814
        %v1003 = vpack.c.bf16 %v816, %v816
        %v1004 = vpack.c.bf16 %v818, %v818
        %v1005 = vpack.c.bf16 %v820, %v820
        %1006 = vxpose.xlu0.c.b16.start [1/8] %v994, 128
        %1007 = vxpose.xlu0.c.b16.cont [2/8] 0, 128
        %1008 = vxpose.xlu0.c.b16.cont [3/8] 0, 128
        %1009 = vxpose.xlu0.c.b16.cont [4/8] 0, 128
        %1010 = vxpose.xlu0.c.b16.cont [5/8] 0, 128
        %1011 = vxpose.xlu0.c.b16.cont [6/8] 0, 128
        %1012 = vxpose.xlu0.c.b16.cont [7/8] 0, 128
        %1013 = vxpose.xlu0.c.b16.end [8/8] 0, 128
        %v1014 = vpop.trf.xlu0
        %v1015 = vpop.trf.xlu0
        %v1016 = vpop.trf.xlu0
        %v1017 = vpop.trf.xlu0
        %v1018 = vpop.trf.xlu0
        %v1019 = vpop.trf.xlu0
        %v1020 = vpop.trf.xlu0
        %v1021 = vpop.trf.xlu0
        %vm1022 = vcmask 64512
        %v1024 = vsel %vm1022, %v1014, 0
        %vm1026 = vcmask 1043456
        %v1028 = vsel %vm1026, %v998, 0
        %v1031 = vsel %vm1026, %v999, 0
        %1033 = vmatprep.subr.bf16.mxu0 0
        %1034 = vmatpush1.bf16.msra.mxu0 0
        %1035 = vmatprep.subr.bf16.mxu0 0
        %1036 = vmatpush1.bf16.msra.mxu0 0
        %1037 = vmatprep.subr.bf16.mxu0 0
        %1038 = vmatpush1.bf16.msra.mxu0 0
        %1039 = vmatprep.subr.bf16.mxu0 0
        %1040 = vmatpush1.bf16.msra.mxu0 0
        %1041 = vmatprep.subr.bf16.mxu0 0
        %1042 = vmatpush1.bf16.msra.mxu0 0
        %1043 = vmatprep.subr.bf16.mxu0 0
        %1044 = vmatpush1.bf16.msra.mxu0 0
        %1045 = vmatprep.subr.bf16.mxu0 0
        %1046 = vmatpush1.bf16.msra.mxu0 0
        %1047 = vmatprep.subr.bf16.mxu0 %v1031
        %1048 = vmatpush1.bf16.msra.mxu0 %v1028
        %1049 = vmatprep.subr.bf16.mxu0 0
        %1050 = vmatpush2.bf16.msra.mxu0 0
        %1051 = vmatprep.subr.bf16.mxu0 0
        %1052 = vmatpush2.bf16.msra.mxu0 0
        %1053 = vmatprep.subr.bf16.mxu0 0
        %1054 = vmatpush2.bf16.msra.mxu0 0
        %1055 = vmatprep.subr.bf16.mxu0 0
        %1056 = vmatpush2.bf16.msra.mxu0 0
        %1057 = vmatprep.subr.bf16.mxu0 0
        %1058 = vmatpush2.bf16.msra.mxu0 0
        %1059 = vmatprep.subr.bf16.mxu0 0
        %1060 = vmatpush2.bf16.msra.mxu0 0
        %1061 = vmatprep.subr.bf16.mxu0 0
        %1062 = vmatpush2.bf16.msra.mxu0 0
        %1063 = vmatprep.subr.bf16.mxu0 0
        %1064 = vmatpush2.bf16.msra.mxu0 0
        %1065 = vmatprep.mubr.bf16.mxu0 0
        %1066 = vmatmul.mubr.bf16.gmra.mxu0 %v1024
        %v1067 = vpop.f32.mrf.mxu0
        %v1068 = vadd.f32 0.0, %v1067
        %v1069 = vpop.f32.mrf.mxu0
        %v1070 = vadd.f32 0.0, %v1069
        %v1071 = vpop.f32.mrf.mxu0
        %v1072 = vpop.f32.mrf.mxu0
        %1073 = vdwg.mxu0
        %1074 = vxpose.xlu0.c.b16.start [1/8] %v995, 128
        %1075 = vxpose.xlu0.c.b16.cont [2/8] 0, 128
        %1076 = vxpose.xlu0.c.b16.cont [3/8] 0, 128
        %1077 = vxpose.xlu0.c.b16.cont [4/8] 0, 128
        %1078 = vxpose.xlu0.c.b16.cont [5/8] 0, 128
        %1079 = vxpose.xlu0.c.b16.cont [6/8] 0, 128
        %1080 = vxpose.xlu0.c.b16.cont [7/8] 0, 128
        %1081 = vxpose.xlu0.c.b16.end [8/8] 0, 128
        %v1082 = vpop.trf.xlu0
        %v1083 = vpop.trf.xlu0
        %v1084 = vpop.trf.xlu0
        %v1085 = vpop.trf.xlu0
        %v1086 = vpop.trf.xlu0
        %v1087 = vpop.trf.xlu0
        %v1088 = vpop.trf.xlu0
        %v1089 = vpop.trf.xlu0
        %v1091 = vsel %vm1022, %v1082, 0
        %v1094 = vsel %vm1026, %v1000, 0
        %v1097 = vsel %vm1026, %v1001, 0
        %1099 = vmatprep.subr.bf16.mxu0 0
        %1100 = vmatpush1.bf16.msra.mxu0 0
        %1101 = vmatprep.subr.bf16.mxu0 0
        %1102 = vmatpush1.bf16.msra.mxu0 0
        %1103 = vmatprep.subr.bf16.mxu0 0
        %1104 = vmatpush1.bf16.msra.mxu0 0
        %1105 = vmatprep.subr.bf16.mxu0 0
        %1106 = vmatpush1.bf16.msra.mxu0 0
        %1107 = vmatprep.subr.bf16.mxu0 0
        %1108 = vmatpush1.bf16.msra.mxu0 0
        %1109 = vmatprep.subr.bf16.mxu0 0
        %1110 = vmatpush1.bf16.msra.mxu0 0
        %1111 = vmatprep.subr.bf16.mxu0 0
        %1112 = vmatpush1.bf16.msra.mxu0 0
        %1113 = vmatprep.subr.bf16.mxu0 %v1097
        %1114 = vmatpush1.bf16.msra.mxu0 %v1094
        %1115 = vmatprep.subr.bf16.mxu0 0
        %1116 = vmatpush2.bf16.msra.mxu0 0
        %1117 = vmatprep.subr.bf16.mxu0 0
        %1118 = vmatpush2.bf16.msra.mxu0 0
        %1119 = vmatprep.subr.bf16.mxu0 0
        %1120 = vmatpush2.bf16.msra.mxu0 0
        %1121 = vmatprep.subr.bf16.mxu0 0
        %1122 = vmatpush2.bf16.msra.mxu0 0
        %1123 = vmatprep.subr.bf16.mxu0 0
        %1124 = vmatpush2.bf16.msra.mxu0 0
        %1125 = vmatprep.subr.bf16.mxu0 0
        %1126 = vmatpush2.bf16.msra.mxu0 0
        %1127 = vmatprep.subr.bf16.mxu0 0
        %1128 = vmatpush2.bf16.msra.mxu0 0
        %1129 = vmatprep.subr.bf16.mxu0 0
        %1130 = vmatpush2.bf16.msra.mxu0 0
        %1131 = vmatprep.mubr.bf16.mxu0 0
        %1132 = vmatmul.mubr.bf16.gmra.mxu0 %v1091
        %v1133 = vpop.f32.mrf.mxu0
        %v1134 = vadd.f32 0.0, %v1133
        %v1135 = vpop.f32.mrf.mxu0
        %v1136 = vadd.f32 0.0, %v1135
        %v1137 = vpop.f32.mrf.mxu0
        %v1138 = vpop.f32.mrf.mxu0
        %1139 = vdwg.mxu0
        %1140 = vxpose.xlu0.c.b16.start [1/8] %v996, 128
        %1141 = vxpose.xlu0.c.b16.cont [2/8] 0, 128
        %1142 = vxpose.xlu0.c.b16.cont [3/8] 0, 128
        %1143 = vxpose.xlu0.c.b16.cont [4/8] 0, 128
        %1144 = vxpose.xlu0.c.b16.cont [5/8] 0, 128
        %1145 = vxpose.xlu0.c.b16.cont [6/8] 0, 128
        %1146 = vxpose.xlu0.c.b16.cont [7/8] 0, 128
        %1147 = vxpose.xlu0.c.b16.end [8/8] 0, 128
        %v1148 = vpop.trf.xlu0
        %v1149 = vpop.trf.xlu0
        %v1150 = vpop.trf.xlu0
        %v1151 = vpop.trf.xlu0
        %v1152 = vpop.trf.xlu0
        %v1153 = vpop.trf.xlu0
        %v1154 = vpop.trf.xlu0
        %v1155 = vpop.trf.xlu0
        %v1157 = vsel %vm1022, %v1148, 0
        %v1160 = vsel %vm1026, %v1002, 0
        %v1163 = vsel %vm1026, %v1003, 0
        %1165 = vmatprep.subr.bf16.mxu0 0
        %1166 = vmatpush1.bf16.msra.mxu0 0
        %1167 = vmatprep.subr.bf16.mxu0 0
        %1168 = vmatpush1.bf16.msra.mxu0 0
        %1169 = vmatprep.subr.bf16.mxu0 0
        %1170 = vmatpush1.bf16.msra.mxu0 0
        %1171 = vmatprep.subr.bf16.mxu0 0
        %1172 = vmatpush1.bf16.msra.mxu0 0
        %1173 = vmatprep.subr.bf16.mxu0 0
        %1174 = vmatpush1.bf16.msra.mxu0 0
        %1175 = vmatprep.subr.bf16.mxu0 0
        %1176 = vmatpush1.bf16.msra.mxu0 0
        %1177 = vmatprep.subr.bf16.mxu0 0
        %1178 = vmatpush1.bf16.msra.mxu0 0
        %1179 = vmatprep.subr.bf16.mxu0 %v1163
        %1180 = vmatpush1.bf16.msra.mxu0 %v1160
        %1181 = vmatprep.subr.bf16.mxu0 0
        %1182 = vmatpush2.bf16.msra.mxu0 0
        %1183 = vmatprep.subr.bf16.mxu0 0
        %1184 = vmatpush2.bf16.msra.mxu0 0
        %1185 = vmatprep.subr.bf16.mxu0 0
        %1186 = vmatpush2.bf16.msra.mxu0 0
        %1187 = vmatprep.subr.bf16.mxu0 0
        %1188 = vmatpush2.bf16.msra.mxu0 0
        %1189 = vmatprep.subr.bf16.mxu0 0
        %1190 = vmatpush2.bf16.msra.mxu0 0
        %1191 = vmatprep.subr.bf16.mxu0 0
        %1192 = vmatpush2.bf16.msra.mxu0 0
        %1193 = vmatprep.subr.bf16.mxu0 0
        %1194 = vmatpush2.bf16.msra.mxu0 0
        %1195 = vmatprep.subr.bf16.mxu0 0
        %1196 = vmatpush2.bf16.msra.mxu0 0
        %1197 = vmatprep.mubr.bf16.mxu0 0
        %1198 = vmatmul.mubr.bf16.gmra.mxu0 %v1157
        %v1199 = vpop.f32.mrf.mxu0
        %v1200 = vadd.f32 0.0, %v1199
        %v1201 = vpop.f32.mrf.mxu0
        %v1202 = vadd.f32 0.0, %v1201
        %v1203 = vpop.f32.mrf.mxu0
        %v1204 = vpop.f32.mrf.mxu0
        %1205 = vdwg.mxu0
        %1206 = vxpose.xlu0.c.b16.start [1/8] %v997, 128
        %1207 = vxpose.xlu0.c.b16.cont [2/8] 0, 128
        %1208 = vxpose.xlu0.c.b16.cont [3/8] 0, 128
        %1209 = vxpose.xlu0.c.b16.cont [4/8] 0, 128
        %1210 = vxpose.xlu0.c.b16.cont [5/8] 0, 128
        %1211 = vxpose.xlu0.c.b16.cont [6/8] 0, 128
        %1212 = vxpose.xlu0.c.b16.cont [7/8] 0, 128
        %1213 = vxpose.xlu0.c.b16.end [8/8] 0, 128
        %v1214 = vpop.trf.xlu0
        %v1215 = vpop.trf.xlu0
        %v1216 = vpop.trf.xlu0
        %v1217 = vpop.trf.xlu0
        %v1218 = vpop.trf.xlu0
        %v1219 = vpop.trf.xlu0
        %v1220 = vpop.trf.xlu0
        %v1221 = vpop.trf.xlu0
        %v1223 = vsel %vm1022, %v1214, 0
        %v1226 = vsel %vm1026, %v1004, 0
        %v1229 = vsel %vm1026, %v1005, 0
        %1231 = vmatprep.subr.bf16.mxu0 0
        %1232 = vmatpush1.bf16.msra.mxu0 0
        %1233 = vmatprep.subr.bf16.mxu0 0
        %1234 = vmatpush1.bf16.msra.mxu0 0
        %1235 = vmatprep.subr.bf16.mxu0 0
        %1236 = vmatpush1.bf16.msra.mxu0 0
        %1237 = vmatprep.subr.bf16.mxu0 0
        %1238 = vmatpush1.bf16.msra.mxu0 0
        %1239 = vmatprep.subr.bf16.mxu0 0
        %1240 = vmatpush1.bf16.msra.mxu0 0
        %1241 = vmatprep.subr.bf16.mxu0 0
        %1242 = vmatpush1.bf16.msra.mxu0 0
        %1243 = vmatprep.subr.bf16.mxu0 0
        %1244 = vmatpush1.bf16.msra.mxu0 0
        %1245 = vmatprep.subr.bf16.mxu0 %v1229
        %1246 = vmatpush1.bf16.msra.mxu0 %v1226
        %1247 = vmatprep.subr.bf16.mxu0 0
        %1248 = vmatpush2.bf16.msra.mxu0 0
        %1249 = vmatprep.subr.bf16.mxu0 0
        %1250 = vmatpush2.bf16.msra.mxu0 0
        %1251 = vmatprep.subr.bf16.mxu0 0
        %1252 = vmatpush2.bf16.msra.mxu0 0
        %1253 = vmatprep.subr.bf16.mxu0 0
        %1254 = vmatpush2.bf16.msra.mxu0 0
        %1255 = vmatprep.subr.bf16.mxu0 0
        %1256 = vmatpush2.bf16.msra.mxu0 0
        %1257 = vmatprep.subr.bf16.mxu0 0
        %1258 = vmatpush2.bf16.msra.mxu0 0
        %1259 = vmatprep.subr.bf16.mxu0 0
        %1260 = vmatpush2.bf16.msra.mxu0 0
        %1261 = vmatprep.subr.bf16.mxu0 0
        %1262 = vmatpush2.bf16.msra.mxu0 0
        %1263 = vmatprep.mubr.bf16.mxu0 0
        %1264 = vmatmul.mubr.bf16.gmra.mxu0 %v1223
        %v1265 = vpop.f32.mrf.mxu0
        %v1266 = vadd.f32 0.0, %v1265
        %v1267 = vpop.f32.mrf.mxu0
        %v1268 = vadd.f32 0.0, %v1267
        %v1269 = vpop.f32.mrf.mxu0
        %v1270 = vpop.f32.mrf.mxu0
        %1271 = vdwg.mxu0
        %v1272 = vmul.f32 %v1068, 0.35355338
        %v1273 = vmul.f32 %v1070, 0.35355338
        %v1274 = vmul.f32 %v1134, 0.35355338
        %v1275 = vmul.f32 %v1136, 0.35355338
        %v1276 = vmul.f32 %v1200, 0.35355338
        %v1277 = vmul.f32 %v1202, 0.35355338
        %v1278 = vmul.f32 %v1266, 0.35355338
        %v1279 = vmul.f32 %v1268, 0.35355338
        %v1280 = vmax.f32 %v1272, %v1273
        %1281 = vmax.xlane.f32.xlu0 %v1280
        %v1282 = vpop.xlane.xlu0 %1281
        %v1283 = vmax.f32 %v1274, %v1275
        %1284 = vmax.xlane.f32.xlu0 %v1283
        %v1285 = vpop.xlane.xlu0 %1284
        %v1286 = vmax.f32 %v1276, %v1277
        %1287 = vmax.xlane.f32.xlu0 %v1286
        %v1288 = vpop.xlane.xlu0 %1287
        %v1289 = vmax.f32 %v1278, %v1279
        %1290 = vmax.xlane.f32.xlu0 %v1289
        %v1291 = vpop.xlane.xlu0 %1290
        %v1292 = vsub.f32 %v1272, %v1282
        %v1293 = vsub.f32 %v1273, %v1282
        %v1294 = vsub.f32 %v1274, %v1285
        %v1295 = vsub.f32 %v1275, %v1285
        %v1296 = vsub.f32 %v1276, %v1288
        %v1297 = vsub.f32 %v1277, %v1288
        %v1298 = vsub.f32 %v1278, %v1291
        %v1299 = vsub.f32 %v1279, %v1291
        %v1300 = vmul.f32 %v1292, 1.442695
        %v1301 = vpow.pop %v1300
        %v1302 = vmul.f32 %v1293, 1.442695
        %v1303 = vpow.pop %v1302
        %v1304 = vmul.f32 %v1294, 1.442695
        %v1305 = vpow.pop %v1304
        %v1306 = vmul.f32 %v1295, 1.442695
        %v1307 = vpow.pop %v1306
        %v1308 = vmul.f32 %v1296, 1.442695
        %v1309 = vpow.pop %v1308
        %v1310 = vmul.f32 %v1297, 1.442695
        %v1311 = vpow.pop %v1310
        %v1312 = vmul.f32 %v1298, 1.442695
        %v1313 = vpow.pop %v1312
        %v1314 = vmul.f32 %v1299, 1.442695
        %v1315 = vpow.pop %v1314
        %v1316 = vadd.f32 %v1301, %v1303
        %1317 = vadd.xlane.f32.xlu0 %v1316
        %v1318 = vpop.xlane.xlu0 %1317
        %v1319 = vadd.f32 %v1305, %v1307
        %1320 = vadd.xlane.f32.xlu0 %v1319
        %v1321 = vpop.xlane.xlu0 %1320
        %v1322 = vadd.f32 %v1309, %v1311
        %1323 = vadd.xlane.f32.xlu0 %v1322
        %v1324 = vpop.xlane.xlu0 %1323
        %v1325 = vadd.f32 %v1313, %v1315
        %1326 = vadd.xlane.f32.xlu0 %v1325
        %v1327 = vpop.xlane.xlu0 %1326
        %v1328 = vrcp.pop %v1318
        %v1329 = vrcp.pop %v1321
        %v1330 = vrcp.pop %v1324
        %v1331 = vrcp.pop %v1327
        %v1332 = vmul.f32 %v1301, %v1328
        %v1333 = vmul.f32 %v1303, %v1328
        %v1334 = vmul.f32 %v1305, %v1329
        %v1335 = vmul.f32 %v1307, %v1329
        %v1336 = vmul.f32 %v1309, %v1330
        %v1337 = vmul.f32 %v1311, %v1330
        %v1338 = vmul.f32 %v1313, %v1331
        %v1339 = vmul.f32 %v1315, %v1331
        %v1340 = vpack.c.bf16 %v980, %v980
        %v1341 = vpack.c.bf16 %v983, %v983
        %v1342 = vpack.c.bf16 %v988, %v988
        %v1343 = vpack.c.bf16 %v991, %v991
        %v1344 = vpack.c.bf16 %v1332, %v1332
        %v1345 = vpack.c.bf16 %v1333, %v1333
        %v1346 = vpack.c.bf16 %v1334, %v1334
        %v1347 = vpack.c.bf16 %v1335, %v1335
        %v1348 = vpack.c.bf16 %v1336, %v1336
        %v1349 = vpack.c.bf16 %v1337, %v1337
        %v1350 = vpack.c.bf16 %v1338, %v1338
        %v1351 = vpack.c.bf16 %v1339, %v1339
        %v1353 = vsel %vm1022, %v1340, 0
        %v1356 = vsel %vm1026, %v1344, 0
        %v1359 = vsel %vm1026, %v1345, 0
        %1361 = vmatprep.subr.bf16.mxu0 0
        %1362 = vmatpush1.bf16.msra.mxu0 0
        %1363 = vmatprep.subr.bf16.mxu0 0
        %1364 = vmatpush1.bf16.msra.mxu0 0
        %1365 = vmatprep.subr.bf16.mxu0 0
        %1366 = vmatpush1.bf16.msra.mxu0 0
        %1367 = vmatprep.subr.bf16.mxu0 0
        %1368 = vmatpush1.bf16.msra.mxu0 0
        %1369 = vmatprep.subr.bf16.mxu0 0
        %1370 = vmatpush1.bf16.msra.mxu0 0
        %1371 = vmatprep.subr.bf16.mxu0 0
        %1372 = vmatpush1.bf16.msra.mxu0 0
        %1373 = vmatprep.subr.bf16.mxu0 0
        %1374 = vmatpush1.bf16.msra.mxu0 0
        %1375 = vmatprep.subr.bf16.mxu0 %v1359
        %1376 = vmatpush1.bf16.msra.mxu0 %v1356
        %1377 = vmatprep.subr.bf16.mxu0 0
        %1378 = vmatpush2.bf16.msra.mxu0 0
        %1379 = vmatprep.subr.bf16.mxu0 0
        %1380 = vmatpush2.bf16.msra.mxu0 0
        %1381 = vmatprep.subr.bf16.mxu0 0
        %1382 = vmatpush2.bf16.msra.mxu0 0
        %1383 = vmatprep.subr.bf16.mxu0 0
        %1384 = vmatpush2.bf16.msra.mxu0 0
        %1385 = vmatprep.subr.bf16.mxu0 0
        %1386 = vmatpush2.bf16.msra.mxu0 0
        %1387 = vmatprep.subr.bf16.mxu0 0
        %1388 = vmatpush2.bf16.msra.mxu0 0
        %1389 = vmatprep.subr.bf16.mxu0 0
        %1390 = vmatpush2.bf16.msra.mxu0 0
        %1391 = vmatprep.subr.bf16.mxu0 0
        %1392 = vmatpush2.bf16.msra.mxu0 0
        %1393 = vmatprep.mubr.bf16.mxu0 0
        %1394 = vmatmul.mubr.bf16.gmra.mxu0 %v1353
        %v1395 = vpop.f32.mrf.mxu0
        %v1396 = vadd.f32 0.0, %v1395
        %v1397 = vpop.f32.mrf.mxu0
        %v1398 = vadd.f32 0.0, %v1397
        %v1399 = vpop.f32.mrf.mxu0
        %v1400 = vpop.f32.mrf.mxu0
        %1401 = vdwg.mxu0
        %v1403 = vsel %vm1022, %v1341, 0
        %v1406 = vsel %vm1026, %v1346, 0
        %v1409 = vsel %vm1026, %v1347, 0
        %1411 = vmatprep.subr.bf16.mxu0 0
        %1412 = vmatpush1.bf16.msra.mxu0 0
        %1413 = vmatprep.subr.bf16.mxu0 0
        %1414 = vmatpush1.bf16.msra.mxu0 0
        %1415 = vmatprep.subr.bf16.mxu0 0
        %1416 = vmatpush1.bf16.msra.mxu0 0
        %1417 = vmatprep.subr.bf16.mxu0 0
        %1418 = vmatpush1.bf16.msra.mxu0 0
        %1419 = vmatprep.subr.bf16.mxu0 0
        %1420 = vmatpush1.bf16.msra.mxu0 0
        %1421 = vmatprep.subr.bf16.mxu0 0
        %1422 = vmatpush1.bf16.msra.mxu0 0
        %1423 = vmatprep.subr.bf16.mxu0 0
        %1424 = vmatpush1.bf16.msra.mxu0 0
        %1425 = vmatprep.subr.bf16.mxu0 %v1409
        %1426 = vmatpush1.bf16.msra.mxu0 %v1406
        %1427 = vmatprep.subr.bf16.mxu0 0
        %1428 = vmatpush2.bf16.msra.mxu0 0
        %1429 = vmatprep.subr.bf16.mxu0 0
        %1430 = vmatpush2.bf16.msra.mxu0 0
        %1431 = vmatprep.subr.bf16.mxu0 0
        %1432 = vmatpush2.bf16.msra.mxu0 0
        %1433 = vmatprep.subr.bf16.mxu0 0
        %1434 = vmatpush2.bf16.msra.mxu0 0
        %1435 = vmatprep.subr.bf16.mxu0 0
        %1436 = vmatpush2.bf16.msra.mxu0 0
        %1437 = vmatprep.subr.bf16.mxu0 0
        %1438 = vmatpush2.bf16.msra.mxu0 0
        %1439 = vmatprep.subr.bf16.mxu0 0
        %1440 = vmatpush2.bf16.msra.mxu0 0
        %1441 = vmatprep.subr.bf16.mxu0 0
        %1442 = vmatpush2.bf16.msra.mxu0 0
        %1443 = vmatprep.mubr.bf16.mxu0 0
        %1444 = vmatmul.mubr.bf16.gmra.mxu0 %v1403
        %v1445 = vpop.f32.mrf.mxu0
        %v1446 = vadd.f32 0.0, %v1445
        %v1447 = vpop.f32.mrf.mxu0
        %v1448 = vadd.f32 0.0, %v1447
        %v1449 = vpop.f32.mrf.mxu0
        %v1450 = vpop.f32.mrf.mxu0
        %1451 = vdwg.mxu0
        %v1453 = vsel %vm1022, %v1342, 0
        %v1456 = vsel %vm1026, %v1348, 0
        %v1459 = vsel %vm1026, %v1349, 0
        %1461 = vmatprep.subr.bf16.mxu0 0
        %1462 = vmatpush1.bf16.msra.mxu0 0
        %1463 = vmatprep.subr.bf16.mxu0 0
        %1464 = vmatpush1.bf16.msra.mxu0 0
        %1465 = vmatprep.subr.bf16.mxu0 0
        %1466 = vmatpush1.bf16.msra.mxu0 0
        %1467 = vmatprep.subr.bf16.mxu0 0
        %1468 = vmatpush1.bf16.msra.mxu0 0
        %1469 = vmatprep.subr.bf16.mxu0 0
        %1470 = vmatpush1.bf16.msra.mxu0 0
        %1471 = vmatprep.subr.bf16.mxu0 0
        %1472 = vmatpush1.bf16.msra.mxu0 0
        %1473 = vmatprep.subr.bf16.mxu0 0
        %1474 = vmatpush1.bf16.msra.mxu0 0
        %1475 = vmatprep.subr.bf16.mxu0 %v1459
        %1476 = vmatpush1.bf16.msra.mxu0 %v1456
        %1477 = vmatprep.subr.bf16.mxu0 0
        %1478 = vmatpush2.bf16.msra.mxu0 0
        %1479 = vmatprep.subr.bf16.mxu0 0
        %1480 = vmatpush2.bf16.msra.mxu0 0
        %1481 = vmatprep.subr.bf16.mxu0 0
        %1482 = vmatpush2.bf16.msra.mxu0 0
        %1483 = vmatprep.subr.bf16.mxu0 0
        %1484 = vmatpush2.bf16.msra.mxu0 0
        %1485 = vmatprep.subr.bf16.mxu0 0
        %1486 = vmatpush2.bf16.msra.mxu0 0
        %1487 = vmatprep.subr.bf16.mxu0 0
        %1488 = vmatpush2.bf16.msra.mxu0 0
        %1489 = vmatprep.subr.bf16.mxu0 0
        %1490 = vmatpush2.bf16.msra.mxu0 0
        %1491 = vmatprep.subr.bf16.mxu0 0
        %1492 = vmatpush2.bf16.msra.mxu0 0
        %1493 = vmatprep.mubr.bf16.mxu0 0
        %1494 = vmatmul.mubr.bf16.gmra.mxu0 %v1453
        %v1495 = vpop.f32.mrf.mxu0
        %v1496 = vadd.f32 0.0, %v1495
        %v1497 = vpop.f32.mrf.mxu0
        %v1498 = vadd.f32 0.0, %v1497
        %v1499 = vpop.f32.mrf.mxu0
        %v1500 = vpop.f32.mrf.mxu0
        %1501 = vdwg.mxu0
        %v1503 = vsel %vm1022, %v1343, 0
        %v1506 = vsel %vm1026, %v1350, 0
        %v1509 = vsel %vm1026, %v1351, 0
        %1511 = vmatprep.subr.bf16.mxu0 0
        %1512 = vmatpush1.bf16.msra.mxu0 0
        %1513 = vmatprep.subr.bf16.mxu0 0
        %1514 = vmatpush1.bf16.msra.mxu0 0
        %1515 = vmatprep.subr.bf16.mxu0 0
        %1516 = vmatpush1.bf16.msra.mxu0 0
        %1517 = vmatprep.subr.bf16.mxu0 0
        %1518 = vmatpush1.bf16.msra.mxu0 0
        %1519 = vmatprep.subr.bf16.mxu0 0
        %1520 = vmatpush1.bf16.msra.mxu0 0
        %1521 = vmatprep.subr.bf16.mxu0 0
        %1522 = vmatpush1.bf16.msra.mxu0 0
        %1523 = vmatprep.subr.bf16.mxu0 0
        %1524 = vmatpush1.bf16.msra.mxu0 0
        %1525 = vmatprep.subr.bf16.mxu0 %v1509
        %1526 = vmatpush1.bf16.msra.mxu0 %v1506
        %1527 = vmatprep.subr.bf16.mxu0 0
        %1528 = vmatpush2.bf16.msra.mxu0 0
        %1529 = vmatprep.subr.bf16.mxu0 0
        %1530 = vmatpush2.bf16.msra.mxu0 0
        %1531 = vmatprep.subr.bf16.mxu0 0
        %1532 = vmatpush2.bf16.msra.mxu0 0
        %1533 = vmatprep.subr.bf16.mxu0 0
        %1534 = vmatpush2.bf16.msra.mxu0 0
        %1535 = vmatprep.subr.bf16.mxu0 0
        %1536 = vmatpush2.bf16.msra.mxu0 0
        %1537 = vmatprep.subr.bf16.mxu0 0
        %1538 = vmatpush2.bf16.msra.mxu0 0
        %1539 = vmatprep.subr.bf16.mxu0 0
        %1540 = vmatpush2.bf16.msra.mxu0 0
        %1541 = vmatprep.subr.bf16.mxu0 0
        %1542 = vmatpush2.bf16.msra.mxu0 0
        %1543 = vmatprep.mubr.bf16.mxu0 0
        %1544 = vmatmul.mubr.bf16.gmra.mxu0 %v1503
        %v1545 = vpop.f32.mrf.mxu0
        %v1546 = vadd.f32 0.0, %v1545
        %v1547 = vpop.f32.mrf.mxu0
        %v1548 = vadd.f32 0.0, %v1547
        %v1549 = vpop.f32.mrf.mxu0
        %v1550 = vpop.f32.mrf.mxu0
        %1551 = vdwg.mxu0
        %v1552 = vpack.c.bf16 %v1446, %v1396
        %v1553 = vpack.c.bf16 %v1448, %v1398
        %v1554 = vpack.c.bf16 %v1546, %v1496
        %v1555 = vpack.c.bf16 %v1548, %v1498
        %1557 = vset.pattern.permute.xlu0 0
        %1558 = vperm.xlu0 %1557, %v724
        %v1559 = vpop.permute.xlu0 %1558
        %1562 = vset.pattern.permute.xlu0 0
        %1563 = vperm.xlu0 %1562, %v725
        %v1564 = vpop.permute.xlu0 %1563
        %1567 = vset.pattern.permute.xlu0 0
        %1568 = vperm.xlu0 %1567, %v726
        %v1569 = vpop.permute.xlu0 %1568
        %1572 = vset.pattern.permute.xlu0 0
        %1573 = vperm.xlu0 %1572, %v727
        %v1574 = vpop.permute.xlu0 %1573
        %v1580 = vunpack.c.l.b16 %v708
        %v1581 = vunpack.c.l.b16 %v709
        %v1582 = vunpack.c.l.b16 %v710
        %v1583 = vunpack.c.l.b16 %v711
        %v1584 = vpack.c.b16 %v1581, %v1580
        %v1585 = vpack.c.b16 %v1583, %v1582
        %v1587 = vsel %vm762, %v1584, 0
        %v1590 = vsel %vm762, %v1585, 0
        %1592 = vmatprep.subr.bf16.mxu0 0
        %1593 = vmatpush1.bf16.msra.mxu0 0
        %1594 = vmatprep.subr.bf16.mxu0 0
        %1595 = vmatpush1.bf16.msra.mxu0 0
        %1596 = vmatprep.subr.bf16.mxu0 0
        %1597 = vmatpush1.bf16.msra.mxu0 0
        %1598 = vmatprep.subr.bf16.mxu0 0
        %1599 = vmatpush1.bf16.msra.mxu0 0
        %1600 = vmatprep.subr.bf16.mxu0 0
        %1601 = vmatpush1.bf16.msra.mxu0 0
        %1602 = vmatprep.subr.bf16.mxu0 0
        %1603 = vmatpush1.bf16.msra.mxu0 0
        %1604 = vmatprep.subr.bf16.mxu0 %v1555
        %1605 = vmatpush1.bf16.msra.mxu0 %v1554
        %1606 = vmatprep.subr.bf16.mxu0 %v1553
        %1607 = vmatpush1.bf16.msra.mxu0 %v1552
        %1608 = vmatprep.subr.bf16.mxu0 0
        %1609 = vmatpush2.bf16.msra.mxu0 0
        %1610 = vmatprep.subr.bf16.mxu0 0
        %1611 = vmatpush2.bf16.msra.mxu0 0
        %1612 = vmatprep.subr.bf16.mxu0 0
        %1613 = vmatpush2.bf16.msra.mxu0 0
        %1614 = vmatprep.subr.bf16.mxu0 0
        %1615 = vmatpush2.bf16.msra.mxu0 0
        %1616 = vmatprep.subr.bf16.mxu0 0
        %1617 = vmatpush2.bf16.msra.mxu0 0
        %1618 = vmatprep.subr.bf16.mxu0 0
        %1619 = vmatpush2.bf16.msra.mxu0 0
        %1620 = vmatprep.subr.bf16.mxu0 0
        %1621 = vmatpush2.bf16.msra.mxu0 0
        %1622 = vmatprep.subr.bf16.mxu0 0
        %1623 = vmatpush2.bf16.msra.mxu0 0
        %1624 = vmatprep.mubr.bf16.mxu0 0
        %1625 = vmatmul.mubr.bf16.gmra.mxu0 %v1587
        %v1626 = vpop.f32.mrf.mxu0
        %v1627 = vadd.f32 %v1559, %v1626
        %v1628 = vpop.f32.mrf.mxu0
        %v1629 = vadd.f32 %v1559, %v1628
        %v1630 = vpop.f32.mrf.mxu0
        %v1631 = vadd.f32 %v1564, %v1630
        %v1632 = vpop.f32.mrf.mxu0
        %v1633 = vadd.f32 %v1564, %v1632
        %1634 = vmatprep.mubr.bf16.mxu0 0
        %1635 = vmatmul.mubr.bf16.gmra.mxu0 %v1590
        %v1636 = vpop.f32.mrf.mxu0
        %v1637 = vadd.f32 %v1569, %v1636
        %v1638 = vpop.f32.mrf.mxu0
        %v1639 = vadd.f32 %v1569, %v1638
        %v1640 = vpop.f32.mrf.mxu0
        %v1641 = vadd.f32 %v1574, %v1640
        %v1642 = vpop.f32.mrf.mxu0
        %v1643 = vadd.f32 %v1574, %v1642
        %1644 = vdwg.mxu0
        %v1645 = vadd.f32 %v688, %v1627
        %v1646 = vadd.f32 %v689, %v1629
        %v1647 = vadd.f32 %v690, %v1631
        %v1648 = vadd.f32 %v691, %v1633
        %v1649 = vadd.f32 %v692, %v1637
        %v1650 = vadd.f32 %v693, %v1639
        %v1651 = vadd.f32 %v694, %v1641
        %v1652 = vadd.f32 %v695, %v1643
        %v1653 = vadd.f32 %v1645, %v1647
        %v1654 = vadd.f32 %v1653, %v1649
        %v1655 = vadd.f32 %v1654, %v1651
        %v1656 = vrot.slane %v1655, 4
        %v1657 = vadd.f32 %v1655, %v1656
        %v1658 = vrot.slane %v1657, 2
        %v1659 = vadd.f32 %v1657, %v1658
        %v1660 = vrot.slane %v1659, 1
        %v1661 = vadd.f32 %v1659, %v1660
        %v1662 = vadd.f32 %v1646, %v1648
        %v1663 = vadd.f32 %v1662, %v1650
        %v1664 = vadd.f32 %v1663, %v1652
        %v1665 = vrot.slane %v1664, 4
        %v1666 = vadd.f32 %v1664, %v1665
        %v1667 = vrot.slane %v1666, 2
        %v1668 = vadd.f32 %v1666, %v1667
        %v1669 = vrot.slane %v1668, 1
        %v1670 = vadd.f32 %v1668, %v1669
        %v1671 = vrcp.pop 32.0
        %v1672 = vmul.f32 %v1661, %v1671
        %v1673 = vmul.f32 %v1670, %v1671
        %v1674 = vsub.f32 %v1645, %v1672
        %v1675 = vsub.f32 %v1646, %v1673
        %v1676 = vsub.f32 %v1647, %v1672
        %v1677 = vsub.f32 %v1648, %v1673
        %v1678 = vsub.f32 %v1649, %v1672
        %v1679 = vsub.f32 %v1650, %v1673
        %v1680 = vsub.f32 %v1651, %v1672
        %v1681 = vsub.f32 %v1652, %v1673
        %v1682 = vmul.f32 %v1674, %v1674
        %v1683 = vmul.f32 %v1675, %v1675
        %v1684 = vmul.f32 %v1676, %v1676
        %v1685 = vmul.f32 %v1677, %v1677
        %v1686 = vmul.f32 %v1678, %v1678
        %v1687 = vmul.f32 %v1679, %v1679
        %v1688 = vmul.f32 %v1680, %v1680
        %v1689 = vmul.f32 %v1681, %v1681
        %v1690 = vadd.f32 %v1682, %v1684
        %v1691 = vadd.f32 %v1690, %v1686
        %v1692 = vadd.f32 %v1691, %v1688
        %v1693 = vrot.slane %v1692, 4
        %v1694 = vadd.f32 %v1692, %v1693
        %v1695 = vrot.slane %v1694, 2
        %v1696 = vadd.f32 %v1694, %v1695
        %v1697 = vrot.slane %v1696, 1
        %v1698 = vadd.f32 %v1696, %v1697
        %v1699 = vadd.f32 %v1683, %v1685
        %v1700 = vadd.f32 %v1699, %v1687
        %v1701 = vadd.f32 %v1700, %v1689
        %v1702 = vrot.slane %v1701, 4
        %v1703 = vadd.f32 %v1701, %v1702
        %v1704 = vrot.slane %v1703, 2
        %v1705 = vadd.f32 %v1703, %v1704
        %v1706 = vrot.slane %v1705, 1
        %v1707 = vadd.f32 %v1705, %v1706
        %v1708 = vmul.f32 %v1698, %v1671
        %v1709 = vmul.f32 %v1707, %v1671
        %v1710 = vadd.f32 %v1708, 1e-05
        %v1711 = vadd.f32 %v1709, 1e-05
        %v1712 = vrsqrt.pop %v1710
        %v1713 = vrsqrt.pop %v1711
        %v1714 = vmul.f32 %v1674, %v1712
        %v1715 = vmul.f32 %v1675, %v1713
        %v1716 = vmul.f32 %v1676, %v1712
        %v1717 = vmul.f32 %v1677, %v1713
        %v1718 = vmul.f32 %v1678, %v1712
        %v1719 = vmul.f32 %v1679, %v1713
        %v1720 = vmul.f32 %v1680, %v1712
        %v1721 = vmul.f32 %v1681, %v1713
        %1723 = vset.pattern.permute.xlu0 0
        %1724 = vperm.xlu0 %1723, %v546
        %v1725 = vpop.permute.xlu0 %1724
        %1728 = vset.pattern.permute.xlu0 0
        %1729 = vperm.xlu0 %1728, %v547
        %v1730 = vpop.permute.xlu0 %1729
        %1733 = vset.pattern.permute.xlu0 0
        %1734 = vperm.xlu0 %1733, %v548
        %v1735 = vpop.permute.xlu0 %1734
        %1738 = vset.pattern.permute.xlu0 0
        %1739 = vperm.xlu0 %1738, %v549
        %v1740 = vpop.permute.xlu0 %1739
        %v1742 = vmul.f32 %v1714, %v1725
        %v1743 = vmul.f32 %v1715, %v1725
        %v1744 = vmul.f32 %v1716, %v1730
        %v1745 = vmul.f32 %v1717, %v1730
        %v1746 = vmul.f32 %v1718, %v1735
        %v1747 = vmul.f32 %v1719, %v1735
        %v1748 = vmul.f32 %v1720, %v1740
        %v1749 = vmul.f32 %v1721, %v1740
        %1751 = vset.pattern.permute.xlu0 0
        %1752 = vperm.xlu0 %1751, %v550
        %v1753 = vpop.permute.xlu0 %1752
        %1756 = vset.pattern.permute.xlu0 0
        %1757 = vperm.xlu0 %1756, %v551
        %v1758 = vpop.permute.xlu0 %1757
        %1761 = vset.pattern.permute.xlu0 0
        %1762 = vperm.xlu0 %1761, %v552
        %v1763 = vpop.permute.xlu0 %1762
        %1766 = vset.pattern.permute.xlu0 0
        %1767 = vperm.xlu0 %1766, %v553
        %v1768 = vpop.permute.xlu0 %1767
        %v1770 = vadd.f32 %v1742, %v1753
        %v1771 = vadd.f32 %v1743, %v1753
        %v1772 = vadd.f32 %v1744, %v1758
        %v1773 = vadd.f32 %v1745, %v1758
        %v1774 = vadd.f32 %v1746, %v1763
        %v1775 = vadd.f32 %v1747, %v1763
        %v1776 = vadd.f32 %v1748, %v1768
        %v1777 = vadd.f32 %v1749, %v1768
        %v1778 = vld [vmem:[%s7] sm:$0xf]
        %v1779 = vld [vmem:[%s7 + $0x4] sm:$0xf]
        %v1780 = vld [vmem:[%s7 + $0x8] sm:$0xf]
        %v1781 = vld [vmem:[%s7 + $0xc] sm:$0xf]
        %v1782 = vld [vmem:[%s7 + $0x10] sm:$0xf]
        %v1783 = vld [vmem:[%s7 + $0x14] sm:$0xf]
        %v1784 = vld [vmem:[%s7 + $0x18] sm:$0xf]
        %v1785 = vld [vmem:[%s7 + $0x1c] sm:$0xf]
        %v1786 = vld [vmem:[%s7 + $0x20] sm:$0xf]
        %v1787 = vld [vmem:[%s7 + $0x24] sm:$0xf]
        %v1788 = vld [vmem:[%s7 + $0x28] sm:$0xf]
        %v1789 = vld [vmem:[%s7 + $0x2c] sm:$0xf]
        %v1790 = vld [vmem:[%s7 + $0x30] sm:$0xf]
        %v1791 = vld [vmem:[%s7 + $0x34] sm:$0xf]
        %v1792 = vld [vmem:[%s7 + $0x38] sm:$0xf]
        %v1793 = vld [vmem:[%s7 + $0x3c] sm:$0xf]
        %v1794 = vld [vmem:[%s8] sm:$0xff]
        %v1795 = vld [vmem:[%s8 + $0x8] sm:$0xff]
        %v1796 = vld [vmem:[%s8 + $0x10] sm:$0xff]
        %v1797 = vld [vmem:[%s8 + $0x18] sm:$0xff]
        %v1798 = vld [vmem:[%s8 + $0x20] sm:$0xff]
        %v1799 = vld [vmem:[%s8 + $0x28] sm:$0xff]
        %v1800 = vld [vmem:[%s8 + $0x30] sm:$0xff]
        %v1801 = vld [vmem:[%s8 + $0x38] sm:$0xff]
        %v1802 = vld [vmem:[%s8 + $0x40] sm:$0xff]
        %v1803 = vld [vmem:[%s8 + $0x48] sm:$0xff]
        %v1804 = vld [vmem:[%s8 + $0x50] sm:$0xff]
        %v1805 = vld [vmem:[%s8 + $0x58] sm:$0xff]
        %v1806 = vld [vmem:[%s8 + $0x60] sm:$0xff]
        %v1807 = vld [vmem:[%s8 + $0x68] sm:$0xff]
        %v1808 = vld [vmem:[%s8 + $0x70] sm:$0xff]
        %v1809 = vld [vmem:[%s8 + $0x78] sm:$0xff]
        %v1810 = vpack.c.bf16 %v1772, %v1770
        %v1811 = vpack.c.bf16 %v1773, %v1771
        %v1812 = vpack.c.bf16 %v1776, %v1774
        %v1813 = vpack.c.bf16 %v1777, %v1775
        %1815 = vset.pattern.permute.xlu0 0
        %1816 = vperm.xlu0 %1815, %v1794
        %v1817 = vpop.permute.xlu0 %1816
        %1820 = vset.pattern.permute.xlu0 0
        %1821 = vperm.xlu0 %1820, %v1795
        %v1822 = vpop.permute.xlu0 %1821
        %1825 = vset.pattern.permute.xlu0 0
        %1826 = vperm.xlu0 %1825, %v1796
        %v1827 = vpop.permute.xlu0 %1826
        %1830 = vset.pattern.permute.xlu0 0
        %1831 = vperm.xlu0 %1830, %v1797
        %v1832 = vpop.permute.xlu0 %1831
        %v1838 = vunpack.c.l.b16 %v1778
        %v1839 = vunpack.c.l.b16 %v1779
        %v1840 = vunpack.c.l.b16 %v1780
        %v1841 = vunpack.c.l.b16 %v1781
        %v1842 = vpack.c.b16 %v1839, %v1838
        %v1843 = vpack.c.b16 %v1841, %v1840
        %v1845 = vsel %vm762, %v1842, 0
        %v1848 = vsel %vm762, %v1843, 0
        %1850 = vmatprep.subr.bf16.mxu0 0
        %1851 = vmatpush1.bf16.msra.mxu0 0
        %1852 = vmatprep.subr.bf16.mxu0 0
        %1853 = vmatpush1.bf16.msra.mxu0 0
        %1854 = vmatprep.subr.bf16.mxu0 0
        %1855 = vmatpush1.bf16.msra.mxu0 0
        %1856 = vmatprep.subr.bf16.mxu0 0
        %1857 = vmatpush1.bf16.msra.mxu0 0
        %1858 = vmatprep.subr.bf16.mxu0 0
        %1859 = vmatpush1.bf16.msra.mxu0 0
        %1860 = vmatprep.subr.bf16.mxu0 0
        %1861 = vmatpush1.bf16.msra.mxu0 0
        %1862 = vmatprep.subr.bf16.mxu0 %v1813
        %1863 = vmatpush1.bf16.msra.mxu0 %v1812
        %1864 = vmatprep.subr.bf16.mxu0 %v1811
        %1865 = vmatpush1.bf16.msra.mxu0 %v1810
        %1866 = vmatprep.subr.bf16.mxu0 0
        %1867 = vmatpush2.bf16.msra.mxu0 0
        %1868 = vmatprep.subr.bf16.mxu0 0
        %1869 = vmatpush2.bf16.msra.mxu0 0
        %1870 = vmatprep.subr.bf16.mxu0 0
        %1871 = vmatpush2.bf16.msra.mxu0 0
        %1872 = vmatprep.subr.bf16.mxu0 0
        %1873 = vmatpush2.bf16.msra.mxu0 0
        %1874 = vmatprep.subr.bf16.mxu0 0
        %1875 = vmatpush2.bf16.msra.mxu0 0
        %1876 = vmatprep.subr.bf16.mxu0 0
        %1877 = vmatpush2.bf16.msra.mxu0 0
        %1878 = vmatprep.subr.bf16.mxu0 0
        %1879 = vmatpush2.bf16.msra.mxu0 0
        %1880 = vmatprep.subr.bf16.mxu0 0
        %1881 = vmatpush2.bf16.msra.mxu0 0
        %1882 = vmatprep.mubr.bf16.mxu0 0
        %1883 = vmatmul.mubr.bf16.gmra.mxu0 %v1845
        %v1884 = vpop.f32.mrf.mxu0
        %v1885 = vadd.f32 %v1817, %v1884
        %v1886 = vpop.f32.mrf.mxu0
        %v1887 = vadd.f32 %v1817, %v1886
        %v1888 = vpop.f32.mrf.mxu0
        %v1889 = vadd.f32 %v1822, %v1888
        %v1890 = vpop.f32.mrf.mxu0
        %v1891 = vadd.f32 %v1822, %v1890
        %1892 = vmatprep.mubr.bf16.mxu0 0
        %1893 = vmatmul.mubr.bf16.gmra.mxu0 %v1848
        %v1894 = vpop.f32.mrf.mxu0
        %v1895 = vadd.f32 %v1827, %v1894
        %v1896 = vpop.f32.mrf.mxu0
        %v1897 = vadd.f32 %v1827, %v1896
        %v1898 = vpop.f32.mrf.mxu0
        %v1899 = vadd.f32 %v1832, %v1898
        %v1900 = vpop.f32.mrf.mxu0
        %v1901 = vadd.f32 %v1832, %v1900
        %1902 = vdwg.mxu0
        %1904 = vset.pattern.permute.xlu0 0
        %1905 = vperm.xlu0 %1904, %v1798
        %v1906 = vpop.permute.xlu0 %1905
        %1909 = vset.pattern.permute.xlu0 0
        %1910 = vperm.xlu0 %1909, %v1799
        %v1911 = vpop.permute.xlu0 %1910
        %1914 = vset.pattern.permute.xlu0 0
        %1915 = vperm.xlu0 %1914, %v1800
        %v1916 = vpop.permute.xlu0 %1915
        %1919 = vset.pattern.permute.xlu0 0
        %1920 = vperm.xlu0 %1919, %v1801
        %v1921 = vpop.permute.xlu0 %1920
        %v1927 = vunpack.c.l.b16 %v1782
        %v1928 = vunpack.c.l.b16 %v1783
        %v1929 = vunpack.c.l.b16 %v1784
        %v1930 = vunpack.c.l.b16 %v1785
        %v1931 = vpack.c.b16 %v1928, %v1927
        %v1932 = vpack.c.b16 %v1930, %v1929
        %v1934 = vsel %vm762, %v1931, 0
        %v1937 = vsel %vm762, %v1932, 0
        %1939 = vmatprep.subr.bf16.mxu0 0
        %1940 = vmatpush1.bf16.msra.mxu0 0
        %1941 = vmatprep.subr.bf16.mxu0 0
        %1942 = vmatpush1.bf16.msra.mxu0 0
        %1943 = vmatprep.subr.bf16.mxu0 0
        %1944 = vmatpush1.bf16.msra.mxu0 0
        %1945 = vmatprep.subr.bf16.mxu0 0
        %1946 = vmatpush1.bf16.msra.mxu0 0
        %1947 = vmatprep.subr.bf16.mxu0 0
        %1948 = vmatpush1.bf16.msra.mxu0 0
        %1949 = vmatprep.subr.bf16.mxu0 0
        %1950 = vmatpush1.bf16.msra.mxu0 0
        %1951 = vmatprep.subr.bf16.mxu0 %v1813
        %1952 = vmatpush1.bf16.msra.mxu0 %v1812
        %1953 = vmatprep.subr.bf16.mxu0 %v1811
        %1954 = vmatpush1.bf16.msra.mxu0 %v1810
        %1955 = vmatprep.subr.bf16.mxu0 0
        %1956 = vmatpush2.bf16.msra.mxu0 0
        %1957 = vmatprep.subr.bf16.mxu0 0
        %1958 = vmatpush2.bf16.msra.mxu0 0
        %1959 = vmatprep.subr.bf16.mxu0 0
        %1960 = vmatpush2.bf16.msra.mxu0 0
        %1961 = vmatprep.subr.bf16.mxu0 0
        %1962 = vmatpush2.bf16.msra.mxu0 0
        %1963 = vmatprep.subr.bf16.mxu0 0
        %1964 = vmatpush2.bf16.msra.mxu0 0
        %1965 = vmatprep.subr.bf16.mxu0 0
        %1966 = vmatpush2.bf16.msra.mxu0 0
        %1967 = vmatprep.subr.bf16.mxu0 0
        %1968 = vmatpush2.bf16.msra.mxu0 0
        %1969 = vmatprep.subr.bf16.mxu0 0
        %1970 = vmatpush2.bf16.msra.mxu0 0
        %1971 = vmatprep.mubr.bf16.mxu0 0
        %1972 = vmatmul.mubr.bf16.gmra.mxu0 %v1934
        %v1973 = vpop.f32.mrf.mxu0
        %v1974 = vadd.f32 %v1906, %v1973
        %v1975 = vpop.f32.mrf.mxu0
        %v1976 = vadd.f32 %v1906, %v1975
        %v1977 = vpop.f32.mrf.mxu0
        %v1978 = vadd.f32 %v1911, %v1977
        %v1979 = vpop.f32.mrf.mxu0
        %v1980 = vadd.f32 %v1911, %v1979
        %1981 = vmatprep.mubr.bf16.mxu0 0
        %1982 = vmatmul.mubr.bf16.gmra.mxu0 %v1937
        %v1983 = vpop.f32.mrf.mxu0
        %v1984 = vadd.f32 %v1916, %v1983
        %v1985 = vpop.f32.mrf.mxu0
        %v1986 = vadd.f32 %v1916, %v1985
        %v1987 = vpop.f32.mrf.mxu0
        %v1988 = vadd.f32 %v1921, %v1987
        %v1989 = vpop.f32.mrf.mxu0
        %v1990 = vadd.f32 %v1921, %v1989
        %1991 = vdwg.mxu0
        %1993 = vset.pattern.permute.xlu0 0
        %1994 = vperm.xlu0 %1993, %v1802
        %v1995 = vpop.permute.xlu0 %1994
        %1998 = vset.pattern.permute.xlu0 0
        %1999 = vperm.xlu0 %1998, %v1803
        %v2000 = vpop.permute.xlu0 %1999
        %2003 = vset.pattern.permute.xlu0 0
        %2004 = vperm.xlu0 %2003, %v1804
        %v2005 = vpop.permute.xlu0 %2004
        %2008 = vset.pattern.permute.xlu0 0
        %2009 = vperm.xlu0 %2008, %v1805
        %v2010 = vpop.permute.xlu0 %2009
        %v2016 = vunpack.c.l.b16 %v1786
        %v2017 = vunpack.c.l.b16 %v1787
        %v2018 = vunpack.c.l.b16 %v1788
        %v2019 = vunpack.c.l.b16 %v1789
        %v2020 = vpack.c.b16 %v2017, %v2016
        %v2021 = vpack.c.b16 %v2019, %v2018
        %v2023 = vsel %vm762, %v2020, 0
        %v2026 = vsel %vm762, %v2021, 0
        %2028 = vmatprep.subr.bf16.mxu0 0
        %2029 = vmatpush1.bf16.msra.mxu0 0
        %2030 = vmatprep.subr.bf16.mxu0 0
        %2031 = vmatpush1.bf16.msra.mxu0 0
        %2032 = vmatprep.subr.bf16.mxu0 0
        %2033 = vmatpush1.bf16.msra.mxu0 0
        %2034 = vmatprep.subr.bf16.mxu0 0
        %2035 = vmatpush1.bf16.msra.mxu0 0
        %2036 = vmatprep.subr.bf16.mxu0 0
        %2037 = vmatpush1.bf16.msra.mxu0 0
        %2038 = vmatprep.subr.bf16.mxu0 0
        %2039 = vmatpush1.bf16.msra.mxu0 0
        %2040 = vmatprep.subr.bf16.mxu0 %v1813
        %2041 = vmatpush1.bf16.msra.mxu0 %v1812
        %2042 = vmatprep.subr.bf16.mxu0 %v1811
        %2043 = vmatpush1.bf16.msra.mxu0 %v1810
        %2044 = vmatprep.subr.bf16.mxu0 0
        %2045 = vmatpush2.bf16.msra.mxu0 0
        %2046 = vmatprep.subr.bf16.mxu0 0
        %2047 = vmatpush2.bf16.msra.mxu0 0
        %2048 = vmatprep.subr.bf16.mxu0 0
        %2049 = vmatpush2.bf16.msra.mxu0 0
        %2050 = vmatprep.subr.bf16.mxu0 0
        %2051 = vmatpush2.bf16.msra.mxu0 0
        %2052 = vmatprep.subr.bf16.mxu0 0
        %2053 = vmatpush2.bf16.msra.mxu0 0
        %2054 = vmatprep.subr.bf16.mxu0 0
        %2055 = vmatpush2.bf16.msra.mxu0 0
        %2056 = vmatprep.subr.bf16.mxu0 0
        %2057 = vmatpush2.bf16.msra.mxu0 0
        %2058 = vmatprep.subr.bf16.mxu0 0
        %2059 = vmatpush2.bf16.msra.mxu0 0
        %2060 = vmatprep.mubr.bf16.mxu0 0
        %2061 = vmatmul.mubr.bf16.gmra.mxu0 %v2023
        %v2062 = vpop.f32.mrf.mxu0
        %v2063 = vadd.f32 %v1995, %v2062
        %v2064 = vpop.f32.mrf.mxu0
        %v2065 = vadd.f32 %v1995, %v2064
        %v2066 = vpop.f32.mrf.mxu0
        %v2067 = vadd.f32 %v2000, %v2066
        %v2068 = vpop.f32.mrf.mxu0
        %v2069 = vadd.f32 %v2000, %v2068
        %2070 = vmatprep.mubr.bf16.mxu0 0
        %2071 = vmatmul.mubr.bf16.gmra.mxu0 %v2026
        %v2072 = vpop.f32.mrf.mxu0
        %v2073 = vadd.f32 %v2005, %v2072
        %v2074 = vpop.f32.mrf.mxu0
        %v2075 = vadd.f32 %v2005, %v2074
        %v2076 = vpop.f32.mrf.mxu0
        %v2077 = vadd.f32 %v2010, %v2076
        %v2078 = vpop.f32.mrf.mxu0
        %v2079 = vadd.f32 %v2010, %v2078
        %2080 = vdwg.mxu0
        %v2081 = vpack.c.bf16 %v1885, %v1885
        %v2082 = vpack.c.bf16 %v1887, %v1887
        %v2083 = vpack.c.bf16 %v1889, %v1889
        %v2084 = vpack.c.bf16 %v1891, %v1891
        %v2085 = vpack.c.bf16 %v1895, %v1895
        %v2086 = vpack.c.bf16 %v1897, %v1897
        %v2087 = vpack.c.bf16 %v1899, %v1899
        %v2088 = vpack.c.bf16 %v1901, %v1901
        %v2089 = vpack.c.bf16 %v1974, %v1974
        %v2090 = vpack.c.bf16 %v1976, %v1976
        %v2091 = vpack.c.bf16 %v1978, %v1978
        %v2092 = vpack.c.bf16 %v1980, %v1980
        %v2093 = vpack.c.bf16 %v1984, %v1984
        %v2094 = vpack.c.bf16 %v1986, %v1986
        %v2095 = vpack.c.bf16 %v1988, %v1988
        %v2096 = vpack.c.bf16 %v1990, %v1990
        %2097 = vxpose.xlu0.c.b16.start [1/8] %v2081, 128
        %2098 = vxpose.xlu0.c.b16.cont [2/8] 0, 128
        %2099 = vxpose.xlu0.c.b16.cont [3/8] 0, 128
        %2100 = vxpose.xlu0.c.b16.cont [4/8] 0, 128
        %2101 = vxpose.xlu0.c.b16.cont [5/8] 0, 128
        %2102 = vxpose.xlu0.c.b16.cont [6/8] 0, 128
        %2103 = vxpose.xlu0.c.b16.cont [7/8] 0, 128
        %2104 = vxpose.xlu0.c.b16.end [8/8] 0, 128
        %v2105 = vpop.trf.xlu0
        %v2106 = vpop.trf.xlu0
        %v2107 = vpop.trf.xlu0
        %v2108 = vpop.trf.xlu0
        %v2109 = vpop.trf.xlu0
        %v2110 = vpop.trf.xlu0
        %v2111 = vpop.trf.xlu0
        %v2112 = vpop.trf.xlu0
        %2113 = vxpose.xlu0.c.b16.start [1/8] %v2082, 128
        %2114 = vxpose.xlu0.c.b16.cont [2/8] 0, 128
        %2115 = vxpose.xlu0.c.b16.cont [3/8] 0, 128
        %2116 = vxpose.xlu0.c.b16.cont [4/8] 0, 128
        %2117 = vxpose.xlu0.c.b16.cont [5/8] 0, 128
        %2118 = vxpose.xlu0.c.b16.cont [6/8] 0, 128
        %2119 = vxpose.xlu0.c.b16.cont [7/8] 0, 128
        %2120 = vxpose.xlu0.c.b16.end [8/8] 0, 128
        %v2121 = vpop.trf.xlu0
        %v2122 = vpop.trf.xlu0
        %v2123 = vpop.trf.xlu0
        %v2124 = vpop.trf.xlu0
        %v2125 = vpop.trf.xlu0
        %v2126 = vpop.trf.xlu0
        %v2127 = vpop.trf.xlu0
        %v2128 = vpop.trf.xlu0
        %v2130 = vsel %vm1022, %v2105, 0
        %v2133 = vsel %vm1022, %v2106, 0
        %v2136 = vsel %vm1022, %v2107, 0
        %v2139 = vsel %vm1022, %v2108, 0
        %v2142 = vsel %vm1022, %v2109, 0
        %v2145 = vsel %vm1022, %v2110, 0
        %v2148 = vsel %vm1022, %v2111, 0
        %v2151 = vsel %vm1022, %v2112, 0
        %v2154 = vsel %vm1022, %v2121, 0
        %v2157 = vsel %vm1022, %v2122, 0
        %v2160 = vsel %vm1022, %v2123, 0
        %v2163 = vsel %vm1022, %v2124, 0
        %v2166 = vsel %vm1022, %v2125, 0
        %v2169 = vsel %vm1022, %v2126, 0
        %v2172 = vsel %vm1022, %v2127, 0
        %v2175 = vsel %vm1022, %v2128, 0
        %v2178 = vsel %vm1026, %v2089, 0
        %v2181 = vsel %vm1026, %v2090, 0
        %2183 = vmatprep.subr.bf16.mxu0 0
        %2184 = vmatpush1.bf16.msra.mxu0 0
        %2185 = vmatprep.subr.bf16.mxu0 0
        %2186 = vmatpush1.bf16.msra.mxu0 0
        %2187 = vmatprep.subr.bf16.mxu0 0
        %2188 = vmatpush1.bf16.msra.mxu0 0
        %2189 = vmatprep.subr.bf16.mxu0 0
        %2190 = vmatpush1.bf16.msra.mxu0 0
        %2191 = vmatprep.subr.bf16.mxu0 0
        %2192 = vmatpush1.bf16.msra.mxu0 0
        %2193 = vmatprep.subr.bf16.mxu0 0
        %2194 = vmatpush1.bf16.msra.mxu0 0
        %2195 = vmatprep.subr.bf16.mxu0 0
        %2196 = vmatpush1.bf16.msra.mxu0 0
        %2197 = vmatprep.subr.bf16.mxu0 %v2181
        %2198 = vmatpush1.bf16.msra.mxu0 %v2178
        %2199 = vmatprep.subr.bf16.mxu0 0
        %2200 = vmatpush2.bf16.msra.mxu0 0
        %2201 = vmatprep.subr.bf16.mxu0 0
        %2202 = vmatpush2.bf16.msra.mxu0 0
        %2203 = vmatprep.subr.bf16.mxu0 0
        %2204 = vmatpush2.bf16.msra.mxu0 0
        %2205 = vmatprep.subr.bf16.mxu0 0
        %2206 = vmatpush2.bf16.msra.mxu0 0
        %2207 = vmatprep.subr.bf16.mxu0 0
        %2208 = vmatpush2.bf16.msra.mxu0 0
        %2209 = vmatprep.subr.bf16.mxu0 0
        %2210 = vmatpush2.bf16.msra.mxu0 0
        %2211 = vmatprep.subr.bf16.mxu0 0
        %2212 = vmatpush2.bf16.msra.mxu0 0
        %2213 = vmatprep.subr.bf16.mxu0 0
        %2214 = vmatpush2.bf16.msra.mxu0 0
        %2215 = vmatprep.mubr.bf16.mxu0 0
        %2216 = vmatmul.mubr.bf16.gmra.mxu0 %v2130
        %v2217 = vpop.f32.mrf.mxu0
        %v2218 = vadd.f32 0.0, %v2217
        %v2219 = vpop.f32.mrf.mxu0
        %v2220 = vadd.f32 0.0, %v2219
        %v2221 = vpop.f32.mrf.mxu0
        %v2222 = vadd.f32 0.0, %v2221
        %v2223 = vpop.f32.mrf.mxu0
        %v2224 = vadd.f32 0.0, %v2223
        %2225 = vmatprep.mubr.bf16.mxu0 0
        %2226 = vmatmul.mubr.bf16.gmra.mxu0 %v2133
        %v2227 = vpop.f32.mrf.mxu0
        %v2228 = vadd.f32 0.0, %v2227
        %v2229 = vpop.f32.mrf.mxu0
        %v2230 = vadd.f32 0.0, %v2229
        %v2231 = vpop.f32.mrf.mxu0
        %v2232 = vadd.f32 0.0, %v2231
        %v2233 = vpop.f32.mrf.mxu0
        %v2234 = vadd.f32 0.0, %v2233
        %2235 = vmatprep.mubr.bf16.mxu0 0
        %2236 = vmatmul.mubr.bf16.gmra.mxu0 %v2136
        %v2237 = vpop.f32.mrf.mxu0
        %v2238 = vadd.f32 0.0, %v2237
        %v2239 = vpop.f32.mrf.mxu0
        %v2240 = vadd.f32 0.0, %v2239
        %v2241 = vpop.f32.mrf.mxu0
        %v2242 = vadd.f32 0.0, %v2241
        %v2243 = vpop.f32.mrf.mxu0
        %v2244 = vadd.f32 0.0, %v2243
        %2245 = vmatprep.mubr.bf16.mxu0 0
        %2246 = vmatmul.mubr.bf16.gmra.mxu0 %v2139
        %v2247 = vpop.f32.mrf.mxu0
        %v2248 = vadd.f32 0.0, %v2247
        %v2249 = vpop.f32.mrf.mxu0
        %v2250 = vadd.f32 0.0, %v2249
        %v2251 = vpop.f32.mrf.mxu0
        %v2252 = vadd.f32 0.0, %v2251
        %v2253 = vpop.f32.mrf.mxu0
        %v2254 = vadd.f32 0.0, %v2253
        %2255 = vmatprep.mubr.bf16.mxu0 0
        %2256 = vmatmul.mubr.bf16.gmra.mxu0 %v2142
        %v2257 = vpop.f32.mrf.mxu0
        %v2258 = vadd.f32 0.0, %v2257
        %v2259 = vpop.f32.mrf.mxu0
        %v2260 = vadd.f32 0.0, %v2259
        %v2261 = vpop.f32.mrf.mxu0
        %v2262 = vadd.f32 0.0, %v2261
        %v2263 = vpop.f32.mrf.mxu0
        %v2264 = vadd.f32 0.0, %v2263
        %2265 = vmatprep.mubr.bf16.mxu0 0
        %2266 = vmatmul.mubr.bf16.gmra.mxu0 %v2145
        %v2267 = vpop.f32.mrf.mxu0
        %v2268 = vadd.f32 0.0, %v2267
        %v2269 = vpop.f32.mrf.mxu0
        %v2270 = vadd.f32 0.0, %v2269
        %v2271 = vpop.f32.mrf.mxu0
        %v2272 = vadd.f32 0.0, %v2271
        %v2273 = vpop.f32.mrf.mxu0
        %v2274 = vadd.f32 0.0, %v2273
        %2275 = vmatprep.mubr.bf16.mxu0 0
        %2276 = vmatmul.mubr.bf16.gmra.mxu0 %v2148
        %v2277 = vpop.f32.mrf.mxu0
        %v2278 = vadd.f32 0.0, %v2277
        %v2279 = vpop.f32.mrf.mxu0
        %v2280 = vadd.f32 0.0, %v2279
        %v2281 = vpop.f32.mrf.mxu0
        %v2282 = vadd.f32 0.0, %v2281
        %v2283 = vpop.f32.mrf.mxu0
        %v2284 = vadd.f32 0.0, %v2283
        %2285 = vmatprep.mubr.bf16.mxu0 0
        %2286 = vmatmul.mubr.bf16.gmra.mxu0 %v2151
        %v2287 = vpop.f32.mrf.mxu0
        %v2288 = vadd.f32 0.0, %v2287
        %v2289 = vpop.f32.mrf.mxu0
        %v2290 = vadd.f32 0.0, %v2289
        %v2291 = vpop.f32.mrf.mxu0
        %v2292 = vadd.f32 0.0, %v2291
        %v2293 = vpop.f32.mrf.mxu0
        %v2294 = vadd.f32 0.0, %v2293
        %2295 = vmatprep.mubr.bf16.mxu0 0
        %2296 = vmatmul.mubr.bf16.gmra.mxu0 %v2154
        %v2297 = vpop.f32.mrf.mxu0
        %v2298 = vadd.f32 0.0, %v2297
        %v2299 = vpop.f32.mrf.mxu0
        %v2300 = vadd.f32 0.0, %v2299
        %v2301 = vpop.f32.mrf.mxu0
        %v2302 = vadd.f32 0.0, %v2301
        %v2303 = vpop.f32.mrf.mxu0
        %v2304 = vadd.f32 0.0, %v2303
        %2305 = vmatprep.mubr.bf16.mxu0 0
        %2306 = vmatmul.mubr.bf16.gmra.mxu0 %v2157
        %v2307 = vpop.f32.mrf.mxu0
        %v2308 = vadd.f32 0.0, %v2307
        %v2309 = vpop.f32.mrf.mxu0
        %v2310 = vadd.f32 0.0, %v2309
        %v2311 = vpop.f32.mrf.mxu0
        %v2312 = vadd.f32 0.0, %v2311
        %v2313 = vpop.f32.mrf.mxu0
        %v2314 = vadd.f32 0.0, %v2313
        %2315 = vmatprep.mubr.bf16.mxu0 0
        %2316 = vmatmul.mubr.bf16.gmra.mxu0 %v2160
        %v2317 = vpop.f32.mrf.mxu0
        %v2318 = vadd.f32 0.0, %v2317
        %v2319 = vpop.f32.mrf.mxu0
        %v2320 = vadd.f32 0.0, %v2319
        %v2321 = vpop.f32.mrf.mxu0
        %v2322 = vadd.f32 0.0, %v2321
        %v2323 = vpop.f32.mrf.mxu0
        %v2324 = vadd.f32 0.0, %v2323
        %2325 = vmatprep.mubr.bf16.mxu0 0
        %2326 = vmatmul.mubr.bf16.gmra.mxu0 %v2163
        %v2327 = vpop.f32.mrf.mxu0
        %v2328 = vadd.f32 0.0, %v2327
        %v2329 = vpop.f32.mrf.mxu0
        %v2330 = vadd.f32 0.0, %v2329
        %v2331 = vpop.f32.mrf.mxu0
        %v2332 = vadd.f32 0.0, %v2331
        %v2333 = vpop.f32.mrf.mxu0
        %v2334 = vadd.f32 0.0, %v2333
        %2335 = vmatprep.mubr.bf16.mxu0 0
        %2336 = vmatmul.mubr.bf16.gmra.mxu0 %v2166
        %v2337 = vpop.f32.mrf.mxu0
        %v2338 = vadd.f32 0.0, %v2337
        %v2339 = vpop.f32.mrf.mxu0
        %v2340 = vadd.f32 0.0, %v2339
        %v2341 = vpop.f32.mrf.mxu0
        %v2342 = vadd.f32 0.0, %v2341
        %v2343 = vpop.f32.mrf.mxu0
        %v2344 = vadd.f32 0.0, %v2343
        %2345 = vmatprep.mubr.bf16.mxu0 0
        %2346 = vmatmul.mubr.bf16.gmra.mxu0 %v2169
        %v2347 = vpop.f32.mrf.mxu0
        %v2348 = vadd.f32 0.0, %v2347
        %v2349 = vpop.f32.mrf.mxu0
        %v2350 = vadd.f32 0.0, %v2349
        %v2351 = vpop.f32.mrf.mxu0
        %v2352 = vadd.f32 0.0, %v2351
        %v2353 = vpop.f32.mrf.mxu0
        %v2354 = vadd.f32 0.0, %v2353
        %2355 = vmatprep.mubr.bf16.mxu0 0
        %2356 = vmatmul.mubr.bf16.gmra.mxu0 %v2172
        %v2357 = vpop.f32.mrf.mxu0
        %v2358 = vadd.f32 0.0, %v2357
        %v2359 = vpop.f32.mrf.mxu0
        %v2360 = vadd.f32 0.0, %v2359
        %v2361 = vpop.f32.mrf.mxu0
        %v2362 = vadd.f32 0.0, %v2361
        %v2363 = vpop.f32.mrf.mxu0
        %v2364 = vadd.f32 0.0, %v2363
        %2365 = vmatprep.mubr.bf16.mxu0 0
        %2366 = vmatmul.mubr.bf16.gmra.mxu0 %v2175
        %v2367 = vpop.f32.mrf.mxu0
        %v2368 = vadd.f32 0.0, %v2367
        %v2369 = vpop.f32.mrf.mxu0
        %v2370 = vadd.f32 0.0, %v2369
        %v2371 = vpop.f32.mrf.mxu0
        %v2372 = vadd.f32 0.0, %v2371
        %v2373 = vpop.f32.mrf.mxu0
        %v2374 = vadd.f32 0.0, %v2373
        %2375 = vdwg.mxu0
        %2376 = vxpose.xlu0.c.b16.start [1/8] %v2083, 128
        %2377 = vxpose.xlu0.c.b16.cont [2/8] 0, 128
        %2378 = vxpose.xlu0.c.b16.cont [3/8] 0, 128
        %2379 = vxpose.xlu0.c.b16.cont [4/8] 0, 128
        %2380 = vxpose.xlu0.c.b16.cont [5/8] 0, 128
        %2381 = vxpose.xlu0.c.b16.cont [6/8] 0, 128
        %2382 = vxpose.xlu0.c.b16.cont [7/8] 0, 128
        %2383 = vxpose.xlu0.c.b16.end [8/8] 0, 128
        %v2384 = vpop.trf.xlu0
        %v2385 = vpop.trf.xlu0
        %v2386 = vpop.trf.xlu0
        %v2387 = vpop.trf.xlu0
        %v2388 = vpop.trf.xlu0
        %v2389 = vpop.trf.xlu0
        %v2390 = vpop.trf.xlu0
        %v2391 = vpop.trf.xlu0
        %2392 = vxpose.xlu0.c.b16.start [1/8] %v2084, 128
        %2393 = vxpose.xlu0.c.b16.cont [2/8] 0, 128
        %2394 = vxpose.xlu0.c.b16.cont [3/8] 0, 128
        %2395 = vxpose.xlu0.c.b16.cont [4/8] 0, 128
        %2396 = vxpose.xlu0.c.b16.cont [5/8] 0, 128
        %2397 = vxpose.xlu0.c.b16.cont [6/8] 0, 128
        %2398 = vxpose.xlu0.c.b16.cont [7/8] 0, 128
        %2399 = vxpose.xlu0.c.b16.end [8/8] 0, 128
        %v2400 = vpop.trf.xlu0
        %v2401 = vpop.trf.xlu0
        %v2402 = vpop.trf.xlu0
        %v2403 = vpop.trf.xlu0
        %v2404 = vpop.trf.xlu0
        %v2405 = vpop.trf.xlu0
        %v2406 = vpop.trf.xlu0
        %v2407 = vpop.trf.xlu0
        %v2409 = vsel %vm1022, %v2384, 0
        %v2412 = vsel %vm1022, %v2385, 0
        %v2415 = vsel %vm1022, %v2386, 0
        %v2418 = vsel %vm1022, %v2387, 0
        %v2421 = vsel %vm1022, %v2388, 0
        %v2424 = vsel %vm1022, %v2389, 0
        %v2427 = vsel %vm1022, %v2390, 0
        %v2430 = vsel %vm1022, %v2391, 0
        %v2433 = vsel %vm1022, %v2400, 0
        %v2436 = vsel %vm1022, %v2401, 0
        %v2439 = vsel %vm1022, %v2402, 0
        %v2442 = vsel %vm1022, %v2403, 0
        %v2445 = vsel %vm1022, %v2404, 0
        %v2448 = vsel %vm1022, %v2405, 0
        %v2451 = vsel %vm1022, %v2406, 0
        %v2454 = vsel %vm1022, %v2407, 0
        %v2457 = vsel %vm1026, %v2091, 0
        %v2460 = vsel %vm1026, %v2092, 0
        %2462 = vmatprep.subr.bf16.mxu0 0
        %2463 = vmatpush1.bf16.msra.mxu0 0
        %2464 = vmatprep.subr.bf16.mxu0 0
        %2465 = vmatpush1.bf16.msra.mxu0 0
        %2466 = vmatprep.subr.bf16.mxu0 0
        %2467 = vmatpush1.bf16.msra.mxu0 0
        %2468 = vmatprep.subr.bf16.mxu0 0
        %2469 = vmatpush1.bf16.msra.mxu0 0
        %2470 = vmatprep.subr.bf16.mxu0 0
        %2471 = vmatpush1.bf16.msra.mxu0 0
        %2472 = vmatprep.subr.bf16.mxu0 0
        %2473 = vmatpush1.bf16.msra.mxu0 0
        %2474 = vmatprep.subr.bf16.mxu0 0
        %2475 = vmatpush1.bf16.msra.mxu0 0
        %2476 = vmatprep.subr.bf16.mxu0 %v2460
        %2477 = vmatpush1.bf16.msra.mxu0 %v2457
        %2478 = vmatprep.subr.bf16.mxu0 0
        %2479 = vmatpush2.bf16.msra.mxu0 0
        %2480 = vmatprep.subr.bf16.mxu0 0
        %2481 = vmatpush2.bf16.msra.mxu0 0
        %2482 = vmatprep.subr.bf16.mxu0 0
        %2483 = vmatpush2.bf16.msra.mxu0 0
        %2484 = vmatprep.subr.bf16.mxu0 0
        %2485 = vmatpush2.bf16.msra.mxu0 0
        %2486 = vmatprep.subr.bf16.mxu0 0
        %2487 = vmatpush2.bf16.msra.mxu0 0
        %2488 = vmatprep.subr.bf16.mxu0 0
        %2489 = vmatpush2.bf16.msra.mxu0 0
        %2490 = vmatprep.subr.bf16.mxu0 0
        %2491 = vmatpush2.bf16.msra.mxu0 0
        %2492 = vmatprep.subr.bf16.mxu0 0
        %2493 = vmatpush2.bf16.msra.mxu0 0
        %2494 = vmatprep.mubr.bf16.mxu0 0
        %2495 = vmatmul.mubr.bf16.gmra.mxu0 %v2409
        %v2496 = vpop.f32.mrf.mxu0
        %v2497 = vadd.f32 0.0, %v2496
        %v2498 = vpop.f32.mrf.mxu0
        %v2499 = vadd.f32 0.0, %v2498
        %v2500 = vpop.f32.mrf.mxu0
        %v2501 = vadd.f32 0.0, %v2500
        %v2502 = vpop.f32.mrf.mxu0
        %v2503 = vadd.f32 0.0, %v2502
        %2504 = vmatprep.mubr.bf16.mxu0 0
        %2505 = vmatmul.mubr.bf16.gmra.mxu0 %v2412
        %v2506 = vpop.f32.mrf.mxu0
        %v2507 = vadd.f32 0.0, %v2506
        %v2508 = vpop.f32.mrf.mxu0
        %v2509 = vadd.f32 0.0, %v2508
        %v2510 = vpop.f32.mrf.mxu0
        %v2511 = vadd.f32 0.0, %v2510
        %v2512 = vpop.f32.mrf.mxu0
        %v2513 = vadd.f32 0.0, %v2512
        %2514 = vmatprep.mubr.bf16.mxu0 0
        %2515 = vmatmul.mubr.bf16.gmra.mxu0 %v2415
        %v2516 = vpop.f32.mrf.mxu0
        %v2517 = vadd.f32 0.0, %v2516
        %v2518 = vpop.f32.mrf.mxu0
        %v2519 = vadd.f32 0.0, %v2518
        %v2520 = vpop.f32.mrf.mxu0
        %v2521 = vadd.f32 0.0, %v2520
        %v2522 = vpop.f32.mrf.mxu0
        %v2523 = vadd.f32 0.0, %v2522
        %2524 = vmatprep.mubr.bf16.mxu0 0
        %2525 = vmatmul.mubr.bf16.gmra.mxu0 %v2418
        %v2526 = vpop.f32.mrf.mxu0
        %v2527 = vadd.f32 0.0, %v2526
        %v2528 = vpop.f32.mrf.mxu0
        %v2529 = vadd.f32 0.0, %v2528
        %v2530 = vpop.f32.mrf.mxu0
        %v2531 = vadd.f32 0.0, %v2530
        %v2532 = vpop.f32.mrf.mxu0
        %v2533 = vadd.f32 0.0, %v2532
        %2534 = vmatprep.mubr.bf16.mxu0 0
        %2535 = vmatmul.mubr.bf16.gmra.mxu0 %v2421
        %v2536 = vpop.f32.mrf.mxu0
        %v2537 = vadd.f32 0.0, %v2536
        %v2538 = vpop.f32.mrf.mxu0
        %v2539 = vadd.f32 0.0, %v2538
        %v2540 = vpop.f32.mrf.mxu0
        %v2541 = vadd.f32 0.0, %v2540
        %v2542 = vpop.f32.mrf.mxu0
        %v2543 = vadd.f32 0.0, %v2542
        %2544 = vmatprep.mubr.bf16.mxu0 0
        %2545 = vmatmul.mubr.bf16.gmra.mxu0 %v2424
        %v2546 = vpop.f32.mrf.mxu0
        %v2547 = vadd.f32 0.0, %v2546
        %v2548 = vpop.f32.mrf.mxu0
        %v2549 = vadd.f32 0.0, %v2548
        %v2550 = vpop.f32.mrf.mxu0
        %v2551 = vadd.f32 0.0, %v2550
        %v2552 = vpop.f32.mrf.mxu0
        %v2553 = vadd.f32 0.0, %v2552
        %2554 = vmatprep.mubr.bf16.mxu0 0
        %2555 = vmatmul.mubr.bf16.gmra.mxu0 %v2427
        %v2556 = vpop.f32.mrf.mxu0
        %v2557 = vadd.f32 0.0, %v2556
        %v2558 = vpop.f32.mrf.mxu0
        %v2559 = vadd.f32 0.0, %v2558
        %v2560 = vpop.f32.mrf.mxu0
        %v2561 = vadd.f32 0.0, %v2560
        %v2562 = vpop.f32.mrf.mxu0
        %v2563 = vadd.f32 0.0, %v2562
        %2564 = vmatprep.mubr.bf16.mxu0 0
        %2565 = vmatmul.mubr.bf16.gmra.mxu0 %v2430
        %v2566 = vpop.f32.mrf.mxu0
        %v2567 = vadd.f32 0.0, %v2566
        %v2568 = vpop.f32.mrf.mxu0
        %v2569 = vadd.f32 0.0, %v2568
        %v2570 = vpop.f32.mrf.mxu0
        %v2571 = vadd.f32 0.0, %v2570
        %v2572 = vpop.f32.mrf.mxu0
        %v2573 = vadd.f32 0.0, %v2572
        %2574 = vmatprep.mubr.bf16.mxu0 0
        %2575 = vmatmul.mubr.bf16.gmra.mxu0 %v2433
        %v2576 = vpop.f32.mrf.mxu0
        %v2577 = vadd.f32 0.0, %v2576
        %v2578 = vpop.f32.mrf.mxu0
        %v2579 = vadd.f32 0.0, %v2578
        %v2580 = vpop.f32.mrf.mxu0
        %v2581 = vadd.f32 0.0, %v2580
        %v2582 = vpop.f32.mrf.mxu0
        %v2583 = vadd.f32 0.0, %v2582
        %2584 = vmatprep.mubr.bf16.mxu0 0
        %2585 = vmatmul.mubr.bf16.gmra.mxu0 %v2436
        %v2586 = vpop.f32.mrf.mxu0
        %v2587 = vadd.f32 0.0, %v2586
        %v2588 = vpop.f32.mrf.mxu0
        %v2589 = vadd.f32 0.0, %v2588
        %v2590 = vpop.f32.mrf.mxu0
        %v2591 = vadd.f32 0.0, %v2590
        %v2592 = vpop.f32.mrf.mxu0
        %v2593 = vadd.f32 0.0, %v2592
        %2594 = vmatprep.mubr.bf16.mxu0 0
        %2595 = vmatmul.mubr.bf16.gmra.mxu0 %v2439
        %v2596 = vpop.f32.mrf.mxu0
        %v2597 = vadd.f32 0.0, %v2596
        %v2598 = vpop.f32.mrf.mxu0
        %v2599 = vadd.f32 0.0, %v2598
        %v2600 = vpop.f32.mrf.mxu0
        %v2601 = vadd.f32 0.0, %v2600
        %v2602 = vpop.f32.mrf.mxu0
        %v2603 = vadd.f32 0.0, %v2602
        %2604 = vmatprep.mubr.bf16.mxu0 0
        %2605 = vmatmul.mubr.bf16.gmra.mxu0 %v2442
        %v2606 = vpop.f32.mrf.mxu0
        %v2607 = vadd.f32 0.0, %v2606
        %v2608 = vpop.f32.mrf.mxu0
        %v2609 = vadd.f32 0.0, %v2608
        %v2610 = vpop.f32.mrf.mxu0
        %v2611 = vadd.f32 0.0, %v2610
        %v2612 = vpop.f32.mrf.mxu0
        %v2613 = vadd.f32 0.0, %v2612
        %2614 = vmatprep.mubr.bf16.mxu0 0
        %2615 = vmatmul.mubr.bf16.gmra.mxu0 %v2445
        %v2616 = vpop.f32.mrf.mxu0
        %v2617 = vadd.f32 0.0, %v2616
        %v2618 = vpop.f32.mrf.mxu0
        %v2619 = vadd.f32 0.0, %v2618
        %v2620 = vpop.f32.mrf.mxu0
        %v2621 = vadd.f32 0.0, %v2620
        %v2622 = vpop.f32.mrf.mxu0
        %v2623 = vadd.f32 0.0, %v2622
        %2624 = vmatprep.mubr.bf16.mxu0 0
        %2625 = vmatmul.mubr.bf16.gmra.mxu0 %v2448
        %v2626 = vpop.f32.mrf.mxu0
        %v2627 = vadd.f32 0.0, %v2626
        %v2628 = vpop.f32.mrf.mxu0
        %v2629 = vadd.f32 0.0, %v2628
        %v2630 = vpop.f32.mrf.mxu0
        %v2631 = vadd.f32 0.0, %v2630
        %v2632 = vpop.f32.mrf.mxu0
        %v2633 = vadd.f32 0.0, %v2632
        %2634 = vmatprep.mubr.bf16.mxu0 0
        %2635 = vmatmul.mubr.bf16.gmra.mxu0 %v2451
        %v2636 = vpop.f32.mrf.mxu0
        %v2637 = vadd.f32 0.0, %v2636
        %v2638 = vpop.f32.mrf.mxu0
        %v2639 = vadd.f32 0.0, %v2638
        %v2640 = vpop.f32.mrf.mxu0
        %v2641 = vadd.f32 0.0, %v2640
        %v2642 = vpop.f32.mrf.mxu0
        %v2643 = vadd.f32 0.0, %v2642
        %2644 = vmatprep.mubr.bf16.mxu0 0
        %2645 = vmatmul.mubr.bf16.gmra.mxu0 %v2454
        %v2646 = vpop.f32.mrf.mxu0
        %v2647 = vadd.f32 0.0, %v2646
        %v2648 = vpop.f32.mrf.mxu0
        %v2649 = vadd.f32 0.0, %v2648
        %v2650 = vpop.f32.mrf.mxu0
        %v2651 = vadd.f32 0.0, %v2650
        %v2652 = vpop.f32.mrf.mxu0
        %v2653 = vadd.f32 0.0, %v2652
        %2654 = vdwg.mxu0
        %2655 = vxpose.xlu0.c.b16.start [1/8] %v2085, 128
        %2656 = vxpose.xlu0.c.b16.cont [2/8] 0, 128
        %2657 = vxpose.xlu0.c.b16.cont [3/8] 0, 128
        %2658 = vxpose.xlu0.c.b16.cont [4/8] 0, 128
        %2659 = vxpose.xlu0.c.b16.cont [5/8] 0, 128
        %2660 = vxpose.xlu0.c.b16.cont [6/8] 0, 128
        %2661 = vxpose.xlu0.c.b16.cont [7/8] 0, 128
        %2662 = vxpose.xlu0.c.b16.end [8/8] 0, 128
        %v2663 = vpop.trf.xlu0
        %v2664 = vpop.trf.xlu0
        %v2665 = vpop.trf.xlu0
        %v2666 = vpop.trf.xlu0
        %v2667 = vpop.trf.xlu0
        %v2668 = vpop.trf.xlu0
        %v2669 = vpop.trf.xlu0
        %v2670 = vpop.trf.xlu0
        %2671 = vxpose.xlu0.c.b16.start [1/8] %v2086, 128
        %2672 = vxpose.xlu0.c.b16.cont [2/8] 0, 128
        %2673 = vxpose.xlu0.c.b16.cont [3/8] 0, 128
        %2674 = vxpose.xlu0.c.b16.cont [4/8] 0, 128
        %2675 = vxpose.xlu0.c.b16.cont [5/8] 0, 128
        %2676 = vxpose.xlu0.c.b16.cont [6/8] 0, 128
        %2677 = vxpose.xlu0.c.b16.cont [7/8] 0, 128
        %2678 = vxpose.xlu0.c.b16.end [8/8] 0, 128
        %v2679 = vpop.trf.xlu0
        %v2680 = vpop.trf.xlu0
        %v2681 = vpop.trf.xlu0
        %v2682 = vpop.trf.xlu0
        %v2683 = vpop.trf.xlu0
        %v2684 = vpop.trf.xlu0
        %v2685 = vpop.trf.xlu0
        %v2686 = vpop.trf.xlu0
        %v2688 = vsel %vm1022, %v2663, 0
        %v2691 = vsel %vm1022, %v2664, 0
        %v2694 = vsel %vm1022, %v2665, 0
        %v2697 = vsel %vm1022, %v2666, 0
        %v2700 = vsel %vm1022, %v2667, 0
        %v2703 = vsel %vm1022, %v2668, 0
        %v2706 = vsel %vm1022, %v2669, 0
        %v2709 = vsel %vm1022, %v2670, 0
        %v2712 = vsel %vm1022, %v2679, 0
        %v2715 = vsel %vm1022, %v2680, 0
        %v2718 = vsel %vm1022, %v2681, 0
        %v2721 = vsel %vm1022, %v2682, 0
        %v2724 = vsel %vm1022, %v2683, 0
        %v2727 = vsel %vm1022, %v2684, 0
        %v2730 = vsel %vm1022, %v2685, 0
        %v2733 = vsel %vm1022, %v2686, 0
        %v2736 = vsel %vm1026, %v2093, 0
        %v2739 = vsel %vm1026, %v2094, 0
        %2741 = vmatprep.subr.bf16.mxu0 0
        %2742 = vmatpush1.bf16.msra.mxu0 0
        %2743 = vmatprep.subr.bf16.mxu0 0
        %2744 = vmatpush1.bf16.msra.mxu0 0
        %2745 = vmatprep.subr.bf16.mxu0 0
        %2746 = vmatpush1.bf16.msra.mxu0 0
        %2747 = vmatprep.subr.bf16.mxu0 0
        %2748 = vmatpush1.bf16.msra.mxu0 0
        %2749 = vmatprep.subr.bf16.mxu0 0
        %2750 = vmatpush1.bf16.msra.mxu0 0
        %2751 = vmatprep.subr.bf16.mxu0 0
        %2752 = vmatpush1.bf16.msra.mxu0 0
        %2753 = vmatprep.subr.bf16.mxu0 0
        %2754 = vmatpush1.bf16.msra.mxu0 0
        %2755 = vmatprep.subr.bf16.mxu0 %v2739
        %2756 = vmatpush1.bf16.msra.mxu0 %v2736
        %2757 = vmatprep.subr.bf16.mxu0 0
        %2758 = vmatpush2.bf16.msra.mxu0 0
        %2759 = vmatprep.subr.bf16.mxu0 0
        %2760 = vmatpush2.bf16.msra.mxu0 0
        %2761 = vmatprep.subr.bf16.mxu0 0
        %2762 = vmatpush2.bf16.msra.mxu0 0
        %2763 = vmatprep.subr.bf16.mxu0 0
        %2764 = vmatpush2.bf16.msra.mxu0 0
        %2765 = vmatprep.subr.bf16.mxu0 0
        %2766 = vmatpush2.bf16.msra.mxu0 0
        %2767 = vmatprep.subr.bf16.mxu0 0
        %2768 = vmatpush2.bf16.msra.mxu0 0
        %2769 = vmatprep.subr.bf16.mxu0 0
        %2770 = vmatpush2.bf16.msra.mxu0 0
        %2771 = vmatprep.subr.bf16.mxu0 0
        %2772 = vmatpush2.bf16.msra.mxu0 0
        %2773 = vmatprep.mubr.bf16.mxu0 0
        %2774 = vmatmul.mubr.bf16.gmra.mxu0 %v2688
        %v2775 = vpop.f32.mrf.mxu0
        %v2776 = vadd.f32 0.0, %v2775
        %v2777 = vpop.f32.mrf.mxu0
        %v2778 = vadd.f32 0.0, %v2777
        %v2779 = vpop.f32.mrf.mxu0
        %v2780 = vadd.f32 0.0, %v2779
        %v2781 = vpop.f32.mrf.mxu0
        %v2782 = vadd.f32 0.0, %v2781
        %2783 = vmatprep.mubr.bf16.mxu0 0
        %2784 = vmatmul.mubr.bf16.gmra.mxu0 %v2691
        %v2785 = vpop.f32.mrf.mxu0
        %v2786 = vadd.f32 0.0, %v2785
        %v2787 = vpop.f32.mrf.mxu0
        %v2788 = vadd.f32 0.0, %v2787
        %v2789 = vpop.f32.mrf.mxu0
        %v2790 = vadd.f32 0.0, %v2789
        %v2791 = vpop.f32.mrf.mxu0
        %v2792 = vadd.f32 0.0, %v2791
        %2793 = vmatprep.mubr.bf16.mxu0 0
        %2794 = vmatmul.mubr.bf16.gmra.mxu0 %v2694
        %v2795 = vpop.f32.mrf.mxu0
        %v2796 = vadd.f32 0.0, %v2795
        %v2797 = vpop.f32.mrf.mxu0
        %v2798 = vadd.f32 0.0, %v2797
        %v2799 = vpop.f32.mrf.mxu0
        %v2800 = vadd.f32 0.0, %v2799
        %v2801 = vpop.f32.mrf.mxu0
        %v2802 = vadd.f32 0.0, %v2801
        %2803 = vmatprep.mubr.bf16.mxu0 0
        %2804 = vmatmul.mubr.bf16.gmra.mxu0 %v2697
        %v2805 = vpop.f32.mrf.mxu0
        %v2806 = vadd.f32 0.0, %v2805
        %v2807 = vpop.f32.mrf.mxu0
        %v2808 = vadd.f32 0.0, %v2807
        %v2809 = vpop.f32.mrf.mxu0
        %v2810 = vadd.f32 0.0, %v2809
        %v2811 = vpop.f32.mrf.mxu0
        %v2812 = vadd.f32 0.0, %v2811
        %2813 = vmatprep.mubr.bf16.mxu0 0
        %2814 = vmatmul.mubr.bf16.gmra.mxu0 %v2700
        %v2815 = vpop.f32.mrf.mxu0
        %v2816 = vadd.f32 0.0, %v2815
        %v2817 = vpop.f32.mrf.mxu0
        %v2818 = vadd.f32 0.0, %v2817
        %v2819 = vpop.f32.mrf.mxu0
        %v2820 = vadd.f32 0.0, %v2819
        %v2821 = vpop.f32.mrf.mxu0
        %v2822 = vadd.f32 0.0, %v2821
        %2823 = vmatprep.mubr.bf16.mxu0 0
        %2824 = vmatmul.mubr.bf16.gmra.mxu0 %v2703
        %v2825 = vpop.f32.mrf.mxu0
        %v2826 = vadd.f32 0.0, %v2825
        %v2827 = vpop.f32.mrf.mxu0
        %v2828 = vadd.f32 0.0, %v2827
        %v2829 = vpop.f32.mrf.mxu0
        %v2830 = vadd.f32 0.0, %v2829
        %v2831 = vpop.f32.mrf.mxu0
        %v2832 = vadd.f32 0.0, %v2831
        %2833 = vmatprep.mubr.bf16.mxu0 0
        %2834 = vmatmul.mubr.bf16.gmra.mxu0 %v2706
        %v2835 = vpop.f32.mrf.mxu0
        %v2836 = vadd.f32 0.0, %v2835
        %v2837 = vpop.f32.mrf.mxu0
        %v2838 = vadd.f32 0.0, %v2837
        %v2839 = vpop.f32.mrf.mxu0
        %v2840 = vadd.f32 0.0, %v2839
        %v2841 = vpop.f32.mrf.mxu0
        %v2842 = vadd.f32 0.0, %v2841
        %2843 = vmatprep.mubr.bf16.mxu0 0
        %2844 = vmatmul.mubr.bf16.gmra.mxu0 %v2709
        %v2845 = vpop.f32.mrf.mxu0
        %v2846 = vadd.f32 0.0, %v2845
        %v2847 = vpop.f32.mrf.mxu0
        %v2848 = vadd.f32 0.0, %v2847
        %v2849 = vpop.f32.mrf.mxu0
        %v2850 = vadd.f32 0.0, %v2849
        %v2851 = vpop.f32.mrf.mxu0
        %v2852 = vadd.f32 0.0, %v2851
        %2853 = vmatprep.mubr.bf16.mxu0 0
        %2854 = vmatmul.mubr.bf16.gmra.mxu0 %v2712
        %v2855 = vpop.f32.mrf.mxu0
        %v2856 = vadd.f32 0.0, %v2855
        %v2857 = vpop.f32.mrf.mxu0
        %v2858 = vadd.f32 0.0, %v2857
        %v2859 = vpop.f32.mrf.mxu0
        %v2860 = vadd.f32 0.0, %v2859
        %v2861 = vpop.f32.mrf.mxu0
        %v2862 = vadd.f32 0.0, %v2861
        %2863 = vmatprep.mubr.bf16.mxu0 0
        %2864 = vmatmul.mubr.bf16.gmra.mxu0 %v2715
        %v2865 = vpop.f32.mrf.mxu0
        %v2866 = vadd.f32 0.0, %v2865
        %v2867 = vpop.f32.mrf.mxu0
        %v2868 = vadd.f32 0.0, %v2867
        %v2869 = vpop.f32.mrf.mxu0
        %v2870 = vadd.f32 0.0, %v2869
        %v2871 = vpop.f32.mrf.mxu0
        %v2872 = vadd.f32 0.0, %v2871
        %2873 = vmatprep.mubr.bf16.mxu0 0
        %2874 = vmatmul.mubr.bf16.gmra.mxu0 %v2718
        %v2875 = vpop.f32.mrf.mxu0
        %v2876 = vadd.f32 0.0, %v2875
        %v2877 = vpop.f32.mrf.mxu0
        %v2878 = vadd.f32 0.0, %v2877
        %v2879 = vpop.f32.mrf.mxu0
        %v2880 = vadd.f32 0.0, %v2879
        %v2881 = vpop.f32.mrf.mxu0
        %v2882 = vadd.f32 0.0, %v2881
        %2883 = vmatprep.mubr.bf16.mxu0 0
        %2884 = vmatmul.mubr.bf16.gmra.mxu0 %v2721
        %v2885 = vpop.f32.mrf.mxu0
        %v2886 = vadd.f32 0.0, %v2885
        %v2887 = vpop.f32.mrf.mxu0
        %v2888 = vadd.f32 0.0, %v2887
        %v2889 = vpop.f32.mrf.mxu0
        %v2890 = vadd.f32 0.0, %v2889
        %v2891 = vpop.f32.mrf.mxu0
        %v2892 = vadd.f32 0.0, %v2891
        %2893 = vmatprep.mubr.bf16.mxu0 0
        %2894 = vmatmul.mubr.bf16.gmra.mxu0 %v2724
        %v2895 = vpop.f32.mrf.mxu0
        %v2896 = vadd.f32 0.0, %v2895
        %v2897 = vpop.f32.mrf.mxu0
        %v2898 = vadd.f32 0.0, %v2897
        %v2899 = vpop.f32.mrf.mxu0
        %v2900 = vadd.f32 0.0, %v2899
        %v2901 = vpop.f32.mrf.mxu0
        %v2902 = vadd.f32 0.0, %v2901
        %2903 = vmatprep.mubr.bf16.mxu0 0
        %2904 = vmatmul.mubr.bf16.gmra.mxu0 %v2727
        %v2905 = vpop.f32.mrf.mxu0
        %v2906 = vadd.f32 0.0, %v2905
        %v2907 = vpop.f32.mrf.mxu0
        %v2908 = vadd.f32 0.0, %v2907
        %v2909 = vpop.f32.mrf.mxu0
        %v2910 = vadd.f32 0.0, %v2909
        %v2911 = vpop.f32.mrf.mxu0
        %v2912 = vadd.f32 0.0, %v2911
        %2913 = vmatprep.mubr.bf16.mxu0 0
        %2914 = vmatmul.mubr.bf16.gmra.mxu0 %v2730
        %v2915 = vpop.f32.mrf.mxu0
        %v2916 = vadd.f32 0.0, %v2915
        %v2917 = vpop.f32.mrf.mxu0
        %v2918 = vadd.f32 0.0, %v2917
        %v2919 = vpop.f32.mrf.mxu0
        %v2920 = vadd.f32 0.0, %v2919
        %v2921 = vpop.f32.mrf.mxu0
        %v2922 = vadd.f32 0.0, %v2921
        %2923 = vmatprep.mubr.bf16.mxu0 0
        %2924 = vmatmul.mubr.bf16.gmra.mxu0 %v2733
        %v2925 = vpop.f32.mrf.mxu0
        %v2926 = vadd.f32 0.0, %v2925
        %v2927 = vpop.f32.mrf.mxu0
        %v2928 = vadd.f32 0.0, %v2927
        %v2929 = vpop.f32.mrf.mxu0
        %v2930 = vadd.f32 0.0, %v2929
        %v2931 = vpop.f32.mrf.mxu0
        %v2932 = vadd.f32 0.0, %v2931
        %2933 = vdwg.mxu0
        %2934 = vxpose.xlu0.c.b16.start [1/8] %v2087, 128
        %2935 = vxpose.xlu0.c.b16.cont [2/8] 0, 128
        %2936 = vxpose.xlu0.c.b16.cont [3/8] 0, 128
        %2937 = vxpose.xlu0.c.b16.cont [4/8] 0, 128
        %2938 = vxpose.xlu0.c.b16.cont [5/8] 0, 128
        %2939 = vxpose.xlu0.c.b16.cont [6/8] 0, 128
        %2940 = vxpose.xlu0.c.b16.cont [7/8] 0, 128
        %2941 = vxpose.xlu0.c.b16.end [8/8] 0, 128
        %v2942 = vpop.trf.xlu0
        %v2943 = vpop.trf.xlu0
        %v2944 = vpop.trf.xlu0
        %v2945 = vpop.trf.xlu0
        %v2946 = vpop.trf.xlu0
        %v2947 = vpop.trf.xlu0
        %v2948 = vpop.trf.xlu0
        %v2949 = vpop.trf.xlu0
        %2950 = vxpose.xlu0.c.b16.start [1/8] %v2088, 128
        %2951 = vxpose.xlu0.c.b16.cont [2/8] 0, 128
        %2952 = vxpose.xlu0.c.b16.cont [3/8] 0, 128
        %2953 = vxpose.xlu0.c.b16.cont [4/8] 0, 128
        %2954 = vxpose.xlu0.c.b16.cont [5/8] 0, 128
        %2955 = vxpose.xlu0.c.b16.cont [6/8] 0, 128
        %2956 = vxpose.xlu0.c.b16.cont [7/8] 0, 128
        %2957 = vxpose.xlu0.c.b16.end [8/8] 0, 128
        %v2958 = vpop.trf.xlu0
        %v2959 = vpop.trf.xlu0
        %v2960 = vpop.trf.xlu0
        %v2961 = vpop.trf.xlu0
        %v2962 = vpop.trf.xlu0
        %v2963 = vpop.trf.xlu0
        %v2964 = vpop.trf.xlu0
        %v2965 = vpop.trf.xlu0
        %v2967 = vsel %vm1022, %v2942, 0
        %v2970 = vsel %vm1022, %v2943, 0
        %v2973 = vsel %vm1022, %v2944, 0
        %v2976 = vsel %vm1022, %v2945, 0
        %v2979 = vsel %vm1022, %v2946, 0
        %v2982 = vsel %vm1022, %v2947, 0
        %v2985 = vsel %vm1022, %v2948, 0
        %v2988 = vsel %vm1022, %v2949, 0
        %v2991 = vsel %vm1022, %v2958, 0
        %v2994 = vsel %vm1022, %v2959, 0
        %v2997 = vsel %vm1022, %v2960, 0
        %v3000 = vsel %vm1022, %v2961, 0
        %v3003 = vsel %vm1022, %v2962, 0
        %v3006 = vsel %vm1022, %v2963, 0
        %v3009 = vsel %vm1022, %v2964, 0
        %v3012 = vsel %vm1022, %v2965, 0
        %v3015 = vsel %vm1026, %v2095, 0
        %v3018 = vsel %vm1026, %v2096, 0
        %3020 = vmatprep.subr.bf16.mxu0 0
        %3021 = vmatpush1.bf16.msra.mxu0 0
        %3022 = vmatprep.subr.bf16.mxu0 0
        %3023 = vmatpush1.bf16.msra.mxu0 0
        %3024 = vmatprep.subr.bf16.mxu0 0
        %3025 = vmatpush1.bf16.msra.mxu0 0
        %3026 = vmatprep.subr.bf16.mxu0 0
        %3027 = vmatpush1.bf16.msra.mxu0 0
        %3028 = vmatprep.subr.bf16.mxu0 0
        %3029 = vmatpush1.bf16.msra.mxu0 0
        %3030 = vmatprep.subr.bf16.mxu0 0
        %3031 = vmatpush1.bf16.msra.mxu0 0
        %3032 = vmatprep.subr.bf16.mxu0 0
        %3033 = vmatpush1.bf16.msra.mxu0 0
        %3034 = vmatprep.subr.bf16.mxu0 %v3018
        %3035 = vmatpush1.bf16.msra.mxu0 %v3015
        %3036 = vmatprep.subr.bf16.mxu0 0
        %3037 = vmatpush2.bf16.msra.mxu0 0
        %3038 = vmatprep.subr.bf16.mxu0 0
        %3039 = vmatpush2.bf16.msra.mxu0 0
        %3040 = vmatprep.subr.bf16.mxu0 0
        %3041 = vmatpush2.bf16.msra.mxu0 0
        %3042 = vmatprep.subr.bf16.mxu0 0
        %3043 = vmatpush2.bf16.msra.mxu0 0
        %3044 = vmatprep.subr.bf16.mxu0 0
        %3045 = vmatpush2.bf16.msra.mxu0 0
        %3046 = vmatprep.subr.bf16.mxu0 0
        %3047 = vmatpush2.bf16.msra.mxu0 0
        %3048 = vmatprep.subr.bf16.mxu0 0
        %3049 = vmatpush2.bf16.msra.mxu0 0
        %3050 = vmatprep.subr.bf16.mxu0 0
        %3051 = vmatpush2.bf16.msra.mxu0 0
        %3052 = vmatprep.mubr.bf16.mxu0 0
        %3053 = vmatmul.mubr.bf16.gmra.mxu0 %v2967
        %v3054 = vpop.f32.mrf.mxu0
        %v3055 = vadd.f32 0.0, %v3054
        %v3056 = vpop.f32.mrf.mxu0
        %v3057 = vadd.f32 0.0, %v3056
        %v3058 = vpop.f32.mrf.mxu0
        %v3059 = vadd.f32 0.0, %v3058
        %v3060 = vpop.f32.mrf.mxu0
        %v3061 = vadd.f32 0.0, %v3060
        %3062 = vmatprep.mubr.bf16.mxu0 0
        %3063 = vmatmul.mubr.bf16.gmra.mxu0 %v2970
        %v3064 = vpop.f32.mrf.mxu0
        %v3065 = vadd.f32 0.0, %v3064
        %v3066 = vpop.f32.mrf.mxu0
        %v3067 = vadd.f32 0.0, %v3066
        %v3068 = vpop.f32.mrf.mxu0
        %v3069 = vadd.f32 0.0, %v3068
        %v3070 = vpop.f32.mrf.mxu0
        %v3071 = vadd.f32 0.0, %v3070
        %3072 = vmatprep.mubr.bf16.mxu0 0
        %3073 = vmatmul.mubr.bf16.gmra.mxu0 %v2973
        %v3074 = vpop.f32.mrf.mxu0
        %v3075 = vadd.f32 0.0, %v3074
        %v3076 = vpop.f32.mrf.mxu0
        %v3077 = vadd.f32 0.0, %v3076
        %v3078 = vpop.f32.mrf.mxu0
        %v3079 = vadd.f32 0.0, %v3078
        %v3080 = vpop.f32.mrf.mxu0
        %v3081 = vadd.f32 0.0, %v3080
        %3082 = vmatprep.mubr.bf16.mxu0 0
        %3083 = vmatmul.mubr.bf16.gmra.mxu0 %v2976
        %v3084 = vpop.f32.mrf.mxu0
        %v3085 = vadd.f32 0.0, %v3084
        %v3086 = vpop.f32.mrf.mxu0
        %v3087 = vadd.f32 0.0, %v3086
        %v3088 = vpop.f32.mrf.mxu0
        %v3089 = vadd.f32 0.0, %v3088
        %v3090 = vpop.f32.mrf.mxu0
        %v3091 = vadd.f32 0.0, %v3090
        %3092 = vmatprep.mubr.bf16.mxu0 0
        %3093 = vmatmul.mubr.bf16.gmra.mxu0 %v2979
        %v3094 = vpop.f32.mrf.mxu0
        %v3095 = vadd.f32 0.0, %v3094
        %v3096 = vpop.f32.mrf.mxu0
        %v3097 = vadd.f32 0.0, %v3096
        %v3098 = vpop.f32.mrf.mxu0
        %v3099 = vadd.f32 0.0, %v3098
        %v3100 = vpop.f32.mrf.mxu0
        %v3101 = vadd.f32 0.0, %v3100
        %3102 = vmatprep.mubr.bf16.mxu0 0
        %3103 = vmatmul.mubr.bf16.gmra.mxu0 %v2982
        %v3104 = vpop.f32.mrf.mxu0
        %v3105 = vadd.f32 0.0, %v3104
        %v3106 = vpop.f32.mrf.mxu0
        %v3107 = vadd.f32 0.0, %v3106
        %v3108 = vpop.f32.mrf.mxu0
        %v3109 = vadd.f32 0.0, %v3108
        %v3110 = vpop.f32.mrf.mxu0
        %v3111 = vadd.f32 0.0, %v3110
        %3112 = vmatprep.mubr.bf16.mxu0 0
        %3113 = vmatmul.mubr.bf16.gmra.mxu0 %v2985
        %v3114 = vpop.f32.mrf.mxu0
        %v3115 = vadd.f32 0.0, %v3114
        %v3116 = vpop.f32.mrf.mxu0
        %v3117 = vadd.f32 0.0, %v3116
        %v3118 = vpop.f32.mrf.mxu0
        %v3119 = vadd.f32 0.0, %v3118
        %v3120 = vpop.f32.mrf.mxu0
        %v3121 = vadd.f32 0.0, %v3120
        %3122 = vmatprep.mubr.bf16.mxu0 0
        %3123 = vmatmul.mubr.bf16.gmra.mxu0 %v2988
        %v3124 = vpop.f32.mrf.mxu0
        %v3125 = vadd.f32 0.0, %v3124
        %v3126 = vpop.f32.mrf.mxu0
        %v3127 = vadd.f32 0.0, %v3126
        %v3128 = vpop.f32.mrf.mxu0
        %v3129 = vadd.f32 0.0, %v3128
        %v3130 = vpop.f32.mrf.mxu0
        %v3131 = vadd.f32 0.0, %v3130
        %3132 = vmatprep.mubr.bf16.mxu0 0
        %3133 = vmatmul.mubr.bf16.gmra.mxu0 %v2991
        %v3134 = vpop.f32.mrf.mxu0
        %v3135 = vadd.f32 0.0, %v3134
        %v3136 = vpop.f32.mrf.mxu0
        %v3137 = vadd.f32 0.0, %v3136
        %v3138 = vpop.f32.mrf.mxu0
        %v3139 = vadd.f32 0.0, %v3138
        %v3140 = vpop.f32.mrf.mxu0
        %v3141 = vadd.f32 0.0, %v3140
        %3142 = vmatprep.mubr.bf16.mxu0 0
        %3143 = vmatmul.mubr.bf16.gmra.mxu0 %v2994
        %v3144 = vpop.f32.mrf.mxu0
        %v3145 = vadd.f32 0.0, %v3144
        %v3146 = vpop.f32.mrf.mxu0
        %v3147 = vadd.f32 0.0, %v3146
        %v3148 = vpop.f32.mrf.mxu0
        %v3149 = vadd.f32 0.0, %v3148
        %v3150 = vpop.f32.mrf.mxu0
        %v3151 = vadd.f32 0.0, %v3150
        %3152 = vmatprep.mubr.bf16.mxu0 0
        %3153 = vmatmul.mubr.bf16.gmra.mxu0 %v2997
        %v3154 = vpop.f32.mrf.mxu0
        %v3155 = vadd.f32 0.0, %v3154
        %v3156 = vpop.f32.mrf.mxu0
        %v3157 = vadd.f32 0.0, %v3156
        %v3158 = vpop.f32.mrf.mxu0
        %v3159 = vadd.f32 0.0, %v3158
        %v3160 = vpop.f32.mrf.mxu0
        %v3161 = vadd.f32 0.0, %v3160
        %3162 = vmatprep.mubr.bf16.mxu0 0
        %3163 = vmatmul.mubr.bf16.gmra.mxu0 %v3000
        %v3164 = vpop.f32.mrf.mxu0
        %v3165 = vadd.f32 0.0, %v3164
        %v3166 = vpop.f32.mrf.mxu0
        %v3167 = vadd.f32 0.0, %v3166
        %v3168 = vpop.f32.mrf.mxu0
        %v3169 = vadd.f32 0.0, %v3168
        %v3170 = vpop.f32.mrf.mxu0
        %v3171 = vadd.f32 0.0, %v3170
        %3172 = vmatprep.mubr.bf16.mxu0 0
        %3173 = vmatmul.mubr.bf16.gmra.mxu0 %v3003
        %v3174 = vpop.f32.mrf.mxu0
        %v3175 = vadd.f32 0.0, %v3174
        %v3176 = vpop.f32.mrf.mxu0
        %v3177 = vadd.f32 0.0, %v3176
        %v3178 = vpop.f32.mrf.mxu0
        %v3179 = vadd.f32 0.0, %v3178
        %v3180 = vpop.f32.mrf.mxu0
        %v3181 = vadd.f32 0.0, %v3180
        %3182 = vmatprep.mubr.bf16.mxu0 0
        %3183 = vmatmul.mubr.bf16.gmra.mxu0 %v3006
        %v3184 = vpop.f32.mrf.mxu0
        %v3185 = vadd.f32 0.0, %v3184
        %v3186 = vpop.f32.mrf.mxu0
        %v3187 = vadd.f32 0.0, %v3186
        %v3188 = vpop.f32.mrf.mxu0
        %v3189 = vadd.f32 0.0, %v3188
        %v3190 = vpop.f32.mrf.mxu0
        %v3191 = vadd.f32 0.0, %v3190
        %3192 = vmatprep.mubr.bf16.mxu0 0
        %3193 = vmatmul.mubr.bf16.gmra.mxu0 %v3009
        %v3194 = vpop.f32.mrf.mxu0
        %v3195 = vadd.f32 0.0, %v3194
        %v3196 = vpop.f32.mrf.mxu0
        %v3197 = vadd.f32 0.0, %v3196
        %v3198 = vpop.f32.mrf.mxu0
        %v3199 = vadd.f32 0.0, %v3198
        %v3200 = vpop.f32.mrf.mxu0
        %v3201 = vadd.f32 0.0, %v3200
        %3202 = vmatprep.mubr.bf16.mxu0 0
        %3203 = vmatmul.mubr.bf16.gmra.mxu0 %v3012
        %v3204 = vpop.f32.mrf.mxu0
        %v3205 = vadd.f32 0.0, %v3204
        %v3206 = vpop.f32.mrf.mxu0
        %v3207 = vadd.f32 0.0, %v3206
        %v3208 = vpop.f32.mrf.mxu0
        %v3209 = vadd.f32 0.0, %v3208
        %v3210 = vpop.f32.mrf.mxu0
        %v3211 = vadd.f32 0.0, %v3210
        %3212 = vdwg.mxu0
        %v3213 = vmul.f32 %v2218, 0.35355338
        %v3214 = vmul.f32 %v2220, 0.35355338
        %v3215 = vmul.f32 %v2222, 0.35355338
        %v3216 = vmul.f32 %v2224, 0.35355338
        %v3217 = vmul.f32 %v2228, 0.35355338
        %v3218 = vmul.f32 %v2230, 0.35355338
        %v3219 = vmul.f32 %v2232, 0.35355338
        %v3220 = vmul.f32 %v2234, 0.35355338
        %v3221 = vmul.f32 %v2238, 0.35355338
        %v3222 = vmul.f32 %v2240, 0.35355338
        %v3223 = vmul.f32 %v2242, 0.35355338
        %v3224 = vmul.f32 %v2244, 0.35355338
        %v3225 = vmul.f32 %v2248, 0.35355338
        %v3226 = vmul.f32 %v2250, 0.35355338
        %v3227 = vmul.f32 %v2252, 0.35355338
        %v3228 = vmul.f32 %v2254, 0.35355338
        %v3229 = vmul.f32 %v2258, 0.35355338
        %v3230 = vmul.f32 %v2260, 0.35355338
        %v3231 = vmul.f32 %v2262, 0.35355338
        %v3232 = vmul.f32 %v2264, 0.35355338
        %v3233 = vmul.f32 %v2268, 0.35355338
        %v3234 = vmul.f32 %v2270, 0.35355338
        %v3235 = vmul.f32 %v2272, 0.35355338
        %v3236 = vmul.f32 %v2274, 0.35355338
        %v3237 = vmul.f32 %v2278, 0.35355338
        %v3238 = vmul.f32 %v2280, 0.35355338
        %v3239 = vmul.f32 %v2282, 0.35355338
        %v3240 = vmul.f32 %v2284, 0.35355338
        %v3241 = vmul.f32 %v2288, 0.35355338
        %v3242 = vmul.f32 %v2290, 0.35355338
        %v3243 = vmul.f32 %v2292, 0.35355338
        %v3244 = vmul.f32 %v2294, 0.35355338
        %v3245 = vmul.f32 %v2298, 0.35355338
        %v3246 = vmul.f32 %v2300, 0.35355338
        %v3247 = vmul.f32 %v2302, 0.35355338
        %v3248 = vmul.f32 %v2304, 0.35355338
        %v3249 = vmul.f32 %v2308, 0.35355338
        %v3250 = vmul.f32 %v2310, 0.35355338
        %v3251 = vmul.f32 %v2312, 0.35355338
        %v3252 = vmul.f32 %v2314, 0.35355338
        %v3253 = vmul.f32 %v2318, 0.35355338
        %v3254 = vmul.f32 %v2320, 0.35355338
        %v3255 = vmul.f32 %v2322, 0.35355338
        %v3256 = vmul.f32 %v2324, 0.35355338
        %v3257 = vmul.f32 %v2328, 0.35355338
        %v3258 = vmul.f32 %v2330, 0.35355338
        %v3259 = vmul.f32 %v2332, 0.35355338
        %v3260 = vmul.f32 %v2334, 0.35355338
        %v3261 = vmul.f32 %v2338, 0.35355338
        %v3262 = vmul.f32 %v2340, 0.35355338
        %v3263 = vmul.f32 %v2342, 0.35355338
        %v3264 = vmul.f32 %v2344, 0.35355338
        %v3265 = vmul.f32 %v2348, 0.35355338
        %v3266 = vmul.f32 %v2350, 0.35355338
        %v3267 = vmul.f32 %v2352, 0.35355338
        %v3268 = vmul.f32 %v2354, 0.35355338
        %v3269 = vmul.f32 %v2358, 0.35355338
        %v3270 = vmul.f32 %v2360, 0.35355338
        %v3271 = vmul.f32 %v2362, 0.35355338
        %v3272 = vmul.f32 %v2364, 0.35355338
        %v3273 = vmul.f32 %v2368, 0.35355338
        %v3274 = vmul.f32 %v2370, 0.35355338
        %v3275 = vmul.f32 %v2372, 0.35355338
        %v3276 = vmul.f32 %v2374, 0.35355338
        %v3277 = vmul.f32 %v2497, 0.35355338
        %v3278 = vmul.f32 %v2499, 0.35355338
        %v3279 = vmul.f32 %v2501, 0.35355338
        %v3280 = vmul.f32 %v2503, 0.35355338
        %v3281 = vmul.f32 %v2507, 0.35355338
        %v3282 = vmul.f32 %v2509, 0.35355338
        %v3283 = vmul.f32 %v2511, 0.35355338
        %v3284 = vmul.f32 %v2513, 0.35355338
        %v3285 = vmul.f32 %v2517, 0.35355338
        %v3286 = vmul.f32 %v2519, 0.35355338
        %v3287 = vmul.f32 %v2521, 0.35355338
        %v3288 = vmul.f32 %v2523, 0.35355338
        %v3289 = vmul.f32 %v2527, 0.35355338
        %v3290 = vmul.f32 %v2529, 0.35355338
        %v3291 = vmul.f32 %v2531, 0.35355338
        %v3292 = vmul.f32 %v2533, 0.35355338
        %v3293 = vmul.f32 %v2537, 0.35355338
        %v3294 = vmul.f32 %v2539, 0.35355338
        %v3295 = vmul.f32 %v2541, 0.35355338
        %v3296 = vmul.f32 %v2543, 0.35355338
        %v3297 = vmul.f32 %v2547, 0.35355338
        %v3298 = vmul.f32 %v2549, 0.35355338
        %v3299 = vmul.f32 %v2551, 0.35355338
        %v3300 = vmul.f32 %v2553, 0.35355338
        %v3301 = vmul.f32 %v2557, 0.35355338
        %v3302 = vmul.f32 %v2559, 0.35355338
        %v3303 = vmul.f32 %v2561, 0.35355338
        %v3304 = vmul.f32 %v2563, 0.35355338
        %v3305 = vmul.f32 %v2567, 0.35355338
        %v3306 = vmul.f32 %v2569, 0.35355338
        %v3307 = vmul.f32 %v2571, 0.35355338
        %v3308 = vmul.f32 %v2573, 0.35355338
        %v3309 = vmul.f32 %v2577, 0.35355338
        %v3310 = vmul.f32 %v2579, 0.35355338
        %v3311 = vmul.f32 %v2581, 0.35355338
        %v3312 = vmul.f32 %v2583, 0.35355338
        %v3313 = vmul.f32 %v2587, 0.35355338
        %v3314 = vmul.f32 %v2589, 0.35355338
        %v3315 = vmul.f32 %v2591, 0.35355338
        %v3316 = vmul.f32 %v2593, 0.35355338
        %v3317 = vmul.f32 %v2597, 0.35355338
        %v3318 = vmul.f32 %v2599, 0.35355338
        %v3319 = vmul.f32 %v2601, 0.35355338
        %v3320 = vmul.f32 %v2603, 0.35355338
        %v3321 = vmul.f32 %v2607, 0.35355338
        %v3322 = vmul.f32 %v2609, 0.35355338
        %v3323 = vmul.f32 %v2611, 0.35355338
        %v3324 = vmul.f32 %v2613, 0.35355338
        %v3325 = vmul.f32 %v2617, 0.35355338
        %v3326 = vmul.f32 %v2619, 0.35355338
        %v3327 = vmul.f32 %v2621, 0.35355338
        %v3328 = vmul.f32 %v2623, 0.35355338
        %v3329 = vmul.f32 %v2627, 0.35355338
        %v3330 = vmul.f32 %v2629, 0.35355338
        %v3331 = vmul.f32 %v2631, 0.35355338
        %v3332 = vmul.f32 %v2633, 0.35355338
        %v3333 = vmul.f32 %v2637, 0.35355338
        %v3334 = vmul.f32 %v2639, 0.35355338
        %v3335 = vmul.f32 %v2641, 0.35355338
        %v3336 = vmul.f32 %v2643, 0.35355338
        %v3337 = vmul.f32 %v2647, 0.35355338
        %v3338 = vmul.f32 %v2649, 0.35355338
        %v3339 = vmul.f32 %v2651, 0.35355338
        %v3340 = vmul.f32 %v2653, 0.35355338
        %v3341 = vmul.f32 %v2776, 0.35355338
        %v3342 = vmul.f32 %v2778, 0.35355338
        %v3343 = vmul.f32 %v2780, 0.35355338
        %v3344 = vmul.f32 %v2782, 0.35355338
        %v3345 = vmul.f32 %v2786, 0.35355338
        %v3346 = vmul.f32 %v2788, 0.35355338
        %v3347 = vmul.f32 %v2790, 0.35355338
        %v3348 = vmul.f32 %v2792, 0.35355338
        %v3349 = vmul.f32 %v2796, 0.35355338
        %v3350 = vmul.f32 %v2798, 0.35355338
        %v3351 = vmul.f32 %v2800, 0.35355338
        %v3352 = vmul.f32 %v2802, 0.35355338
        %v3353 = vmul.f32 %v2806, 0.35355338
        %v3354 = vmul.f32 %v2808, 0.35355338
        %v3355 = vmul.f32 %v2810, 0.35355338
        %v3356 = vmul.f32 %v2812, 0.35355338
        %v3357 = vmul.f32 %v2816, 0.35355338
        %v3358 = vmul.f32 %v2818, 0.35355338
        %v3359 = vmul.f32 %v2820, 0.35355338
        %v3360 = vmul.f32 %v2822, 0.35355338
        %v3361 = vmul.f32 %v2826, 0.35355338
        %v3362 = vmul.f32 %v2828, 0.35355338
        %v3363 = vmul.f32 %v2830, 0.35355338
        %v3364 = vmul.f32 %v2832, 0.35355338
        %v3365 = vmul.f32 %v2836, 0.35355338
        %v3366 = vmul.f32 %v2838, 0.35355338
        %v3367 = vmul.f32 %v2840, 0.35355338
        %v3368 = vmul.f32 %v2842, 0.35355338
        %v3369 = vmul.f32 %v2846, 0.35355338
        %v3370 = vmul.f32 %v2848, 0.35355338
        %v3371 = vmul.f32 %v2850, 0.35355338
        %v3372 = vmul.f32 %v2852, 0.35355338
        %v3373 = vmul.f32 %v2856, 0.35355338
        %v3374 = vmul.f32 %v2858, 0.35355338
        %v3375 = vmul.f32 %v2860, 0.35355338
        %v3376 = vmul.f32 %v2862, 0.35355338
        %v3377 = vmul.f32 %v2866, 0.35355338
        %v3378 = vmul.f32 %v2868, 0.35355338
        %v3379 = vmul.f32 %v2870, 0.35355338
        %v3380 = vmul.f32 %v2872, 0.35355338
        %v3381 = vmul.f32 %v2876, 0.35355338
        %v3382 = vmul.f32 %v2878, 0.35355338
        %v3383 = vmul.f32 %v2880, 0.35355338
        %v3384 = vmul.f32 %v2882, 0.35355338
        %v3385 = vmul.f32 %v2886, 0.35355338
        %v3386 = vmul.f32 %v2888, 0.35355338
        %v3387 = vmul.f32 %v2890, 0.35355338
        %v3388 = vmul.f32 %v2892, 0.35355338
        %v3389 = vmul.f32 %v2896, 0.35355338
        %v3390 = vmul.f32 %v2898, 0.35355338
        %v3391 = vmul.f32 %v2900, 0.35355338
        %v3392 = vmul.f32 %v2902, 0.35355338
        %v3393 = vmul.f32 %v2906, 0.35355338
        %v3394 = vmul.f32 %v2908, 0.35355338
        %v3395 = vmul.f32 %v2910, 0.35355338
        %v3396 = vmul.f32 %v2912, 0.35355338
        %v3397 = vmul.f32 %v2916, 0.35355338
        %v3398 = vmul.f32 %v2918, 0.35355338
        %v3399 = vmul.f32 %v2920, 0.35355338
        %v3400 = vmul.f32 %v2922, 0.35355338
        %v3401 = vmul.f32 %v2926, 0.35355338
        %v3402 = vmul.f32 %v2928, 0.35355338
        %v3403 = vmul.f32 %v2930, 0.35355338
        %v3404 = vmul.f32 %v2932, 0.35355338
        %v3405 = vmul.f32 %v3055, 0.35355338
        %v3406 = vmul.f32 %v3057, 0.35355338
        %v3407 = vmul.f32 %v3059, 0.35355338
        %v3408 = vmul.f32 %v3061, 0.35355338
        %v3409 = vmul.f32 %v3065, 0.35355338
        %v3410 = vmul.f32 %v3067, 0.35355338
        %v3411 = vmul.f32 %v3069, 0.35355338
        %v3412 = vmul.f32 %v3071, 0.35355338
        %v3413 = vmul.f32 %v3075, 0.35355338
        %v3414 = vmul.f32 %v3077, 0.35355338
        %v3415 = vmul.f32 %v3079, 0.35355338
        %v3416 = vmul.f32 %v3081, 0.35355338
        %v3417 = vmul.f32 %v3085, 0.35355338
        %v3418 = vmul.f32 %v3087, 0.35355338
        %v3419 = vmul.f32 %v3089, 0.35355338
        %v3420 = vmul.f32 %v3091, 0.35355338
        %v3421 = vmul.f32 %v3095, 0.35355338
        %v3422 = vmul.f32 %v3097, 0.35355338
        %v3423 = vmul.f32 %v3099, 0.35355338
        %v3424 = vmul.f32 %v3101, 0.35355338
        %v3425 = vmul.f32 %v3105, 0.35355338
        %v3426 = vmul.f32 %v3107, 0.35355338
        %v3427 = vmul.f32 %v3109, 0.35355338
        %v3428 = vmul.f32 %v3111, 0.35355338
        %v3429 = vmul.f32 %v3115, 0.35355338
        %v3430 = vmul.f32 %v3117, 0.35355338
        %v3431 = vmul.f32 %v3119, 0.35355338
        %v3432 = vmul.f32 %v3121, 0.35355338
        %v3433 = vmul.f32 %v3125, 0.35355338
        %v3434 = vmul.f32 %v3127, 0.35355338
        %v3435 = vmul.f32 %v3129, 0.35355338
        %v3436 = vmul.f32 %v3131, 0.35355338
        %v3437 = vmul.f32 %v3135, 0.35355338
        %v3438 = vmul.f32 %v3137, 0.35355338
        %v3439 = vmul.f32 %v3139, 0.35355338
        %v3440 = vmul.f32 %v3141, 0.35355338
        %v3441 = vmul.f32 %v3145, 0.35355338
        %v3442 = vmul.f32 %v3147, 0.35355338
        %v3443 = vmul.f32 %v3149, 0.35355338
        %v3444 = vmul.f32 %v3151, 0.35355338
        %v3445 = vmul.f32 %v3155, 0.35355338
        %v3446 = vmul.f32 %v3157, 0.35355338
        %v3447 = vmul.f32 %v3159, 0.35355338
        %v3448 = vmul.f32 %v3161, 0.35355338
        %v3449 = vmul.f32 %v3165, 0.35355338
        %v3450 = vmul.f32 %v3167, 0.35355338
        %v3451 = vmul.f32 %v3169, 0.35355338
        %v3452 = vmul.f32 %v3171, 0.35355338
        %v3453 = vmul.f32 %v3175, 0.35355338
        %v3454 = vmul.f32 %v3177, 0.35355338
        %v3455 = vmul.f32 %v3179, 0.35355338
        %v3456 = vmul.f32 %v3181, 0.35355338
        %v3457 = vmul.f32 %v3185, 0.35355338
        %v3458 = vmul.f32 %v3187, 0.35355338
        %v3459 = vmul.f32 %v3189, 0.35355338
        %v3460 = vmul.f32 %v3191, 0.35355338
        %v3461 = vmul.f32 %v3195, 0.35355338
        %v3462 = vmul.f32 %v3197, 0.35355338
        %v3463 = vmul.f32 %v3199, 0.35355338
        %v3464 = vmul.f32 %v3201, 0.35355338
        %v3465 = vmul.f32 %v3205, 0.35355338
        %v3466 = vmul.f32 %v3207, 0.35355338
        %v3467 = vmul.f32 %v3209, 0.35355338
        %v3468 = vmul.f32 %v3211, 0.35355338
        %v3469 = vmax.f32 %v3213, %v3214
        %3470 = vmax.xlane.f32.xlu0 %v3469
        %v3471 = vpop.xlane.xlu0 %3470
        %v3472 = vmax.f32 %v3215, %v3216
        %3473 = vmax.xlane.f32.xlu0 %v3472
        %v3474 = vpop.xlane.xlu0 %3473
        %v3475 = vmax.f32 %v3217, %v3218
        %3476 = vmax.xlane.f32.xlu0 %v3475
        %v3477 = vpop.xlane.xlu0 %3476
        %v3478 = vmax.f32 %v3219, %v3220
        %3479 = vmax.xlane.f32.xlu0 %v3478
        %v3480 = vpop.xlane.xlu0 %3479
        %v3481 = vmax.f32 %v3221, %v3222
        %3482 = vmax.xlane.f32.xlu0 %v3481
        %v3483 = vpop.xlane.xlu0 %3482
        %v3484 = vmax.f32 %v3223, %v3224
        %3485 = vmax.xlane.f32.xlu0 %v3484
        %v3486 = vpop.xlane.xlu0 %3485
        %v3487 = vmax.f32 %v3225, %v3226
        %3488 = vmax.xlane.f32.xlu0 %v3487
        %v3489 = vpop.xlane.xlu0 %3488
        %v3490 = vmax.f32 %v3227, %v3228
        %3491 = vmax.xlane.f32.xlu0 %v3490
        %v3492 = vpop.xlane.xlu0 %3491
        %v3493 = vmax.f32 %v3229, %v3230
        %3494 = vmax.xlane.f32.xlu0 %v3493
        %v3495 = vpop.xlane.xlu0 %3494
        %v3496 = vmax.f32 %v3231, %v3232
        %3497 = vmax.xlane.f32.xlu0 %v3496
        %v3498 = vpop.xlane.xlu0 %3497
        %v3499 = vmax.f32 %v3233, %v3234
        %3500 = vmax.xlane.f32.xlu0 %v3499
        %v3501 = vpop.xlane.xlu0 %3500
        %v3502 = vmax.f32 %v3235, %v3236
        %3503 = vmax.xlane.f32.xlu0 %v3502
        %v3504 = vpop.xlane.xlu0 %3503
        %v3505 = vmax.f32 %v3237, %v3238
        %3506 = vmax.xlane.f32.xlu0 %v3505
        %v3507 = vpop.xlane.xlu0 %3506
        %v3508 = vmax.f32 %v3239, %v3240
        %3509 = vmax.xlane.f32.xlu0 %v3508
        %v3510 = vpop.xlane.xlu0 %3509
        %v3511 = vmax.f32 %v3241, %v3242
        %3512 = vmax.xlane.f32.xlu0 %v3511
        %v3513 = vpop.xlane.xlu0 %3512
        %v3514 = vmax.f32 %v3243, %v3244
        %3515 = vmax.xlane.f32.xlu0 %v3514
        %v3516 = vpop.xlane.xlu0 %3515
        %v3517 = vmax.f32 %v3245, %v3246
        %3518 = vmax.xlane.f32.xlu0 %v3517
        %v3519 = vpop.xlane.xlu0 %3518
        %v3520 = vmax.f32 %v3247, %v3248
        %3521 = vmax.xlane.f32.xlu0 %v3520
        %v3522 = vpop.xlane.xlu0 %3521
        %v3523 = vmax.f32 %v3249, %v3250
        %3524 = vmax.xlane.f32.xlu0 %v3523
        %v3525 = vpop.xlane.xlu0 %3524
        %v3526 = vmax.f32 %v3251, %v3252
        %3527 = vmax.xlane.f32.xlu0 %v3526
        %v3528 = vpop.xlane.xlu0 %3527
        %v3529 = vmax.f32 %v3253, %v3254
        %3530 = vmax.xlane.f32.xlu0 %v3529
        %v3531 = vpop.xlane.xlu0 %3530
        %v3532 = vmax.f32 %v3255, %v3256
        %3533 = vmax.xlane.f32.xlu0 %v3532
        %v3534 = vpop.xlane.xlu0 %3533
        %v3535 = vmax.f32 %v3257, %v3258
        %3536 = vmax.xlane.f32.xlu0 %v3535
        %v3537 = vpop.xlane.xlu0 %3536
        %v3538 = vmax.f32 %v3259, %v3260
        %3539 = vmax.xlane.f32.xlu0 %v3538
        %v3540 = vpop.xlane.xlu0 %3539
        %v3541 = vmax.f32 %v3261, %v3262
        %3542 = vmax.xlane.f32.xlu0 %v3541
        %v3543 = vpop.xlane.xlu0 %3542
        %v3544 = vmax.f32 %v3263, %v3264
        %3545 = vmax.xlane.f32.xlu0 %v3544
        %v3546 = vpop.xlane.xlu0 %3545
        %v3547 = vmax.f32 %v3265, %v3266
        %3548 = vmax.xlane.f32.xlu0 %v3547
        %v3549 = vpop.xlane.xlu0 %3548
        %v3550 = vmax.f32 %v3267, %v3268
        %3551 = vmax.xlane.f32.xlu0 %v3550
        %v3552 = vpop.xlane.xlu0 %3551
        %v3553 = vmax.f32 %v3269, %v3270
        %3554 = vmax.xlane.f32.xlu0 %v3553
        %v3555 = vpop.xlane.xlu0 %3554
        %v3556 = vmax.f32 %v3271, %v3272
        %3557 = vmax.xlane.f32.xlu0 %v3556
        %v3558 = vpop.xlane.xlu0 %3557
        %v3559 = vmax.f32 %v3273, %v3274
        %3560 = vmax.xlane.f32.xlu0 %v3559
        %v3561 = vpop.xlane.xlu0 %3560
        %v3562 = vmax.f32 %v3275, %v3276
        %3563 = vmax.xlane.f32.xlu0 %v3562
        %v3564 = vpop.xlane.xlu0 %3563
        %v3565 = vmax.f32 %v3277, %v3278
        %3566 = vmax.xlane.f32.xlu0 %v3565
        %v3567 = vpop.xlane.xlu0 %3566
        %v3568 = vmax.f32 %v3279, %v3280
        %3569 = vmax.xlane.f32.xlu0 %v3568
        %v3570 = vpop.xlane.xlu0 %3569
        %v3571 = vmax.f32 %v3281, %v3282
        %3572 = vmax.xlane.f32.xlu0 %v3571
        %v3573 = vpop.xlane.xlu0 %3572
        %v3574 = vmax.f32 %v3283, %v3284
        %3575 = vmax.xlane.f32.xlu0 %v3574
        %v3576 = vpop.xlane.xlu0 %3575
        %v3577 = vmax.f32 %v3285, %v3286
        %3578 = vmax.xlane.f32.xlu0 %v3577
        %v3579 = vpop.xlane.xlu0 %3578
        %v3580 = vmax.f32 %v3287, %v3288
        %3581 = vmax.xlane.f32.xlu0 %v3580
        %v3582 = vpop.xlane.xlu0 %3581
        %v3583 = vmax.f32 %v3289, %v3290
        %3584 = vmax.xlane.f32.xlu0 %v3583
        %v3585 = vpop.xlane.xlu0 %3584
        %v3586 = vmax.f32 %v3291, %v3292
        %3587 = vmax.xlane.f32.xlu0 %v3586
        %v3588 = vpop.xlane.xlu0 %3587
        %v3589 = vmax.f32 %v3293, %v3294
        %3590 = vmax.xlane.f32.xlu0 %v3589
        %v3591 = vpop.xlane.xlu0 %3590
        %v3592 = vmax.f32 %v3295, %v3296
        %3593 = vmax.xlane.f32.xlu0 %v3592
        %v3594 = vpop.xlane.xlu0 %3593
        %v3595 = vmax.f32 %v3297, %v3298
        %3596 = vmax.xlane.f32.xlu0 %v3595
        %v3597 = vpop.xlane.xlu0 %3596
        %v3598 = vmax.f32 %v3299, %v3300
        %3599 = vmax.xlane.f32.xlu0 %v3598
        %v3600 = vpop.xlane.xlu0 %3599
        %v3601 = vmax.f32 %v3301, %v3302
        %3602 = vmax.xlane.f32.xlu0 %v3601
        %v3603 = vpop.xlane.xlu0 %3602
        %v3604 = vmax.f32 %v3303, %v3304
        %3605 = vmax.xlane.f32.xlu0 %v3604
        %v3606 = vpop.xlane.xlu0 %3605
        %v3607 = vmax.f32 %v3305, %v3306
        %3608 = vmax.xlane.f32.xlu0 %v3607
        %v3609 = vpop.xlane.xlu0 %3608
        %v3610 = vmax.f32 %v3307, %v3308
        %3611 = vmax.xlane.f32.xlu0 %v3610
        %v3612 = vpop.xlane.xlu0 %3611
        %v3613 = vmax.f32 %v3309, %v3310
        %3614 = vmax.xlane.f32.xlu0 %v3613
        %v3615 = vpop.xlane.xlu0 %3614
        %v3616 = vmax.f32 %v3311, %v3312
        %3617 = vmax.xlane.f32.xlu0 %v3616
        %v3618 = vpop.xlane.xlu0 %3617
        %v3619 = vmax.f32 %v3313, %v3314
        %3620 = vmax.xlane.f32.xlu0 %v3619
        %v3621 = vpop.xlane.xlu0 %3620
        %v3622 = vmax.f32 %v3315, %v3316
        %3623 = vmax.xlane.f32.xlu0 %v3622
        %v3624 = vpop.xlane.xlu0 %3623
        %v3625 = vmax.f32 %v3317, %v3318
        %3626 = vmax.xlane.f32.xlu0 %v3625
        %v3627 = vpop.xlane.xlu0 %3626
        %v3628 = vmax.f32 %v3319, %v3320
        %3629 = vmax.xlane.f32.xlu0 %v3628
        %v3630 = vpop.xlane.xlu0 %3629
        %v3631 = vmax.f32 %v3321, %v3322
        %3632 = vmax.xlane.f32.xlu0 %v3631
        %v3633 = vpop.xlane.xlu0 %3632
        %v3634 = vmax.f32 %v3323, %v3324
        %3635 = vmax.xlane.f32.xlu0 %v3634
        %v3636 = vpop.xlane.xlu0 %3635
        %v3637 = vmax.f32 %v3325, %v3326
        %3638 = vmax.xlane.f32.xlu0 %v3637
        %v3639 = vpop.xlane.xlu0 %3638
        %v3640 = vmax.f32 %v3327, %v3328
        %3641 = vmax.xlane.f32.xlu0 %v3640
        %v3642 = vpop.xlane.xlu0 %3641
        %v3643 = vmax.f32 %v3329, %v3330
        %3644 = vmax.xlane.f32.xlu0 %v3643
        %v3645 = vpop.xlane.xlu0 %3644
        %v3646 = vmax.f32 %v3331, %v3332
        %3647 = vmax.xlane.f32.xlu0 %v3646
        %v3648 = vpop.xlane.xlu0 %3647
        %v3649 = vmax.f32 %v3333, %v3334
        %3650 = vmax.xlane.f32.xlu0 %v3649
        %v3651 = vpop.xlane.xlu0 %3650
        %v3652 = vmax.f32 %v3335, %v3336
        %3653 = vmax.xlane.f32.xlu0 %v3652
        %v3654 = vpop.xlane.xlu0 %3653
        %v3655 = vmax.f32 %v3337, %v3338
        %3656 = vmax.xlane.f32.xlu0 %v3655
        %v3657 = vpop.xlane.xlu0 %3656
        %v3658 = vmax.f32 %v3339, %v3340
        %3659 = vmax.xlane.f32.xlu0 %v3658
        %v3660 = vpop.xlane.xlu0 %3659
        %v3661 = vmax.f32 %v3341, %v3342
        %3662 = vmax.xlane.f32.xlu0 %v3661
        %v3663 = vpop.xlane.xlu0 %3662
        %v3664 = vmax.f32 %v3343, %v3344
        %3665 = vmax.xlane.f32.xlu0 %v3664
        %v3666 = vpop.xlane.xlu0 %3665
        %v3667 = vmax.f32 %v3345, %v3346
        %3668 = vmax.xlane.f32.xlu0 %v3667
        %v3669 = vpop.xlane.xlu0 %3668
        %v3670 = vmax.f32 %v3347, %v3348
        %3671 = vmax.xlane.f32.xlu0 %v3670
        %v3672 = vpop.xlane.xlu0 %3671
        %v3673 = vmax.f32 %v3349, %v3350
        %3674 = vmax.xlane.f32.xlu0 %v3673
        %v3675 = vpop.xlane.xlu0 %3674
        %v3676 = vmax.f32 %v3351, %v3352
        %3677 = vmax.xlane.f32.xlu0 %v3676
        %v3678 = vpop.xlane.xlu0 %3677
        %v3679 = vmax.f32 %v3353, %v3354
        %3680 = vmax.xlane.f32.xlu0 %v3679
        %v3681 = vpop.xlane.xlu0 %3680
        %v3682 = vmax.f32 %v3355, %v3356
        %3683 = vmax.xlane.f32.xlu0 %v3682
        %v3684 = vpop.xlane.xlu0 %3683
        %v3685 = vmax.f32 %v3357, %v3358
        %3686 = vmax.xlane.f32.xlu0 %v3685
        %v3687 = vpop.xlane.xlu0 %3686
        %v3688 = vmax.f32 %v3359, %v3360
        %3689 = vmax.xlane.f32.xlu0 %v3688
        %v3690 = vpop.xlane.xlu0 %3689
        %v3691 = vmax.f32 %v3361, %v3362
        %3692 = vmax.xlane.f32.xlu0 %v3691
        %v3693 = vpop.xlane.xlu0 %3692
        %v3694 = vmax.f32 %v3363, %v3364
        %3695 = vmax.xlane.f32.xlu0 %v3694
        %v3696 = vpop.xlane.xlu0 %3695
        %v3697 = vmax.f32 %v3365, %v3366
        %3698 = vmax.xlane.f32.xlu0 %v3697
        %v3699 = vpop.xlane.xlu0 %3698
        %v3700 = vmax.f32 %v3367, %v3368
        %3701 = vmax.xlane.f32.xlu0 %v3700
        %v3702 = vpop.xlane.xlu0 %3701
        %v3703 = vmax.f32 %v3369, %v3370
        %3704 = vmax.xlane.f32.xlu0 %v3703
        %v3705 = vpop.xlane.xlu0 %3704
        %v3706 = vmax.f32 %v3371, %v3372
        %3707 = vmax.xlane.f32.xlu0 %v3706
        %v3708 = vpop.xlane.xlu0 %3707
        %v3709 = vmax.f32 %v3373, %v3374
        %3710 = vmax.xlane.f32.xlu0 %v3709
        %v3711 = vpop.xlane.xlu0 %3710
        %v3712 = vmax.f32 %v3375, %v3376
        %3713 = vmax.xlane.f32.xlu0 %v3712
        %v3714 = vpop.xlane.xlu0 %3713
        %v3715 = vmax.f32 %v3377, %v3378
        %3716 = vmax.xlane.f32.xlu0 %v3715
        %v3717 = vpop.xlane.xlu0 %3716
        %v3718 = vmax.f32 %v3379, %v3380
        %3719 = vmax.xlane.f32.xlu0 %v3718
        %v3720 = vpop.xlane.xlu0 %3719
        %v3721 = vmax.f32 %v3381, %v3382
        %3722 = vmax.xlane.f32.xlu0 %v3721
        %v3723 = vpop.xlane.xlu0 %3722
        %v3724 = vmax.f32 %v3383, %v3384
        %3725 = vmax.xlane.f32.xlu0 %v3724
        %v3726 = vpop.xlane.xlu0 %3725
        %v3727 = vmax.f32 %v3385, %v3386
        %3728 = vmax.xlane.f32.xlu0 %v3727
        %v3729 = vpop.xlane.xlu0 %3728
        %v3730 = vmax.f32 %v3387, %v3388
        %3731 = vmax.xlane.f32.xlu0 %v3730
        %v3732 = vpop.xlane.xlu0 %3731
        %v3733 = vmax.f32 %v3389, %v3390
        %3734 = vmax.xlane.f32.xlu0 %v3733
        %v3735 = vpop.xlane.xlu0 %3734
        %v3736 = vmax.f32 %v3391, %v3392
        %3737 = vmax.xlane.f32.xlu0 %v3736
        %v3738 = vpop.xlane.xlu0 %3737
        %v3739 = vmax.f32 %v3393, %v3394
        %3740 = vmax.xlane.f32.xlu0 %v3739
        %v3741 = vpop.xlane.xlu0 %3740
        %v3742 = vmax.f32 %v3395, %v3396
        %3743 = vmax.xlane.f32.xlu0 %v3742
        %v3744 = vpop.xlane.xlu0 %3743
        %v3745 = vmax.f32 %v3397, %v3398
        %3746 = vmax.xlane.f32.xlu0 %v3745
        %v3747 = vpop.xlane.xlu0 %3746
        %v3748 = vmax.f32 %v3399, %v3400
        %3749 = vmax.xlane.f32.xlu0 %v3748
        %v3750 = vpop.xlane.xlu0 %3749
        %v3751 = vmax.f32 %v3401, %v3402
        %3752 = vmax.xlane.f32.xlu0 %v3751
        %v3753 = vpop.xlane.xlu0 %3752
        %v3754 = vmax.f32 %v3403, %v3404
        %3755 = vmax.xlane.f32.xlu0 %v3754
        %v3756 = vpop.xlane.xlu0 %3755
        %v3757 = vmax.f32 %v3405, %v3406
        %3758 = vmax.xlane.f32.xlu0 %v3757
        %v3759 = vpop.xlane.xlu0 %3758
        %v3760 = vmax.f32 %v3407, %v3408
        %3761 = vmax.xlane.f32.xlu0 %v3760
        %v3762 = vpop.xlane.xlu0 %3761
        %v3763 = vmax.f32 %v3409, %v3410
        %3764 = vmax.xlane.f32.xlu0 %v3763
        %v3765 = vpop.xlane.xlu0 %3764
        %v3766 = vmax.f32 %v3411, %v3412
        %3767 = vmax.xlane.f32.xlu0 %v3766
        %v3768 = vpop.xlane.xlu0 %3767
        %v3769 = vmax.f32 %v3413, %v3414
        %3770 = vmax.xlane.f32.xlu0 %v3769
        %v3771 = vpop.xlane.xlu0 %3770
        %v3772 = vmax.f32 %v3415, %v3416
        %3773 = vmax.xlane.f32.xlu0 %v3772
        %v3774 = vpop.xlane.xlu0 %3773
        %v3775 = vmax.f32 %v3417, %v3418
        %3776 = vmax.xlane.f32.xlu0 %v3775
        %v3777 = vpop.xlane.xlu0 %3776
        %v3778 = vmax.f32 %v3419, %v3420
        %3779 = vmax.xlane.f32.xlu0 %v3778
        %v3780 = vpop.xlane.xlu0 %3779
        %v3781 = vmax.f32 %v3421, %v3422
        %3782 = vmax.xlane.f32.xlu0 %v3781
        %v3783 = vpop.xlane.xlu0 %3782
        %v3784 = vmax.f32 %v3423, %v3424
        %3785 = vmax.xlane.f32.xlu0 %v3784
        %v3786 = vpop.xlane.xlu0 %3785
        %v3787 = vmax.f32 %v3425, %v3426
        %3788 = vmax.xlane.f32.xlu0 %v3787
        %v3789 = vpop.xlane.xlu0 %3788
        %v3790 = vmax.f32 %v3427, %v3428
        %3791 = vmax.xlane.f32.xlu0 %v3790
        %v3792 = vpop.xlane.xlu0 %3791
        %v3793 = vmax.f32 %v3429, %v3430
        %3794 = vmax.xlane.f32.xlu0 %v3793
        %v3795 = vpop.xlane.xlu0 %3794
        %v3796 = vmax.f32 %v3431, %v3432
        %3797 = vmax.xlane.f32.xlu0 %v3796
        %v3798 = vpop.xlane.xlu0 %3797
        %v3799 = vmax.f32 %v3433, %v3434
        %3800 = vmax.xlane.f32.xlu0 %v3799
        %v3801 = vpop.xlane.xlu0 %3800
        %v3802 = vmax.f32 %v3435, %v3436
        %3803 = vmax.xlane.f32.xlu0 %v3802
        %v3804 = vpop.xlane.xlu0 %3803
        %v3805 = vmax.f32 %v3437, %v3438
        %3806 = vmax.xlane.f32.xlu0 %v3805
        %v3807 = vpop.xlane.xlu0 %3806
        %v3808 = vmax.f32 %v3439, %v3440
        %3809 = vmax.xlane.f32.xlu0 %v3808
        %v3810 = vpop.xlane.xlu0 %3809
        %v3811 = vmax.f32 %v3441, %v3442
        %3812 = vmax.xlane.f32.xlu0 %v3811
        %v3813 = vpop.xlane.xlu0 %3812
        %v3814 = vmax.f32 %v3443, %v3444
        %3815 = vmax.xlane.f32.xlu0 %v3814
        %v3816 = vpop.xlane.xlu0 %3815
        %v3817 = vmax.f32 %v3445, %v3446
        %3818 = vmax.xlane.f32.xlu0 %v3817
        %v3819 = vpop.xlane.xlu0 %3818
        %v3820 = vmax.f32 %v3447, %v3448
        %3821 = vmax.xlane.f32.xlu0 %v3820
        %v3822 = vpop.xlane.xlu0 %3821
        %v3823 = vmax.f32 %v3449, %v3450
        %3824 = vmax.xlane.f32.xlu0 %v3823
        %v3825 = vpop.xlane.xlu0 %3824
        %v3826 = vmax.f32 %v3451, %v3452
        %3827 = vmax.xlane.f32.xlu0 %v3826
        %v3828 = vpop.xlane.xlu0 %3827
        %v3829 = vmax.f32 %v3453, %v3454
        %3830 = vmax.xlane.f32.xlu0 %v3829
        %v3831 = vpop.xlane.xlu0 %3830
        %v3832 = vmax.f32 %v3455, %v3456
        %3833 = vmax.xlane.f32.xlu0 %v3832
        %v3834 = vpop.xlane.xlu0 %3833
        %v3835 = vmax.f32 %v3457, %v3458
        %3836 = vmax.xlane.f32.xlu0 %v3835
        %v3837 = vpop.xlane.xlu0 %3836
        %v3838 = vmax.f32 %v3459, %v3460
        %3839 = vmax.xlane.f32.xlu0 %v3838
        %v3840 = vpop.xlane.xlu0 %3839
        %v3841 = vmax.f32 %v3461, %v3462
        %3842 = vmax.xlane.f32.xlu0 %v3841
        %v3843 = vpop.xlane.xlu0 %3842
        %v3844 = vmax.f32 %v3463, %v3464
        %3845 = vmax.xlane.f32.xlu0 %v3844
        %v3846 = vpop.xlane.xlu0 %3845
        %v3847 = vmax.f32 %v3465, %v3466
        %3848 = vmax.xlane.f32.xlu0 %v3847
        %v3849 = vpop.xlane.xlu0 %3848
        %v3850 = vmax.f32 %v3467, %v3468
        %3851 = vmax.xlane.f32.xlu0 %v3850
        %v3852 = vpop.xlane.xlu0 %3851
        %v3853 = vsub.f32 %v3213, %v3471
        %v3854 = vsub.f32 %v3214, %v3471
        %v3855 = vsub.f32 %v3215, %v3474
        %v3856 = vsub.f32 %v3216, %v3474
        %v3857 = vsub.f32 %v3217, %v3477
        %v3858 = vsub.f32 %v3218, %v3477
        %v3859 = vsub.f32 %v3219, %v3480
        %v3860 = vsub.f32 %v3220, %v3480
        %v3861 = vsub.f32 %v3221, %v3483
        %v3862 = vsub.f32 %v3222, %v3483
        %v3863 = vsub.f32 %v3223, %v3486
        %v3864 = vsub.f32 %v3224, %v3486
        %v3865 = vsub.f32 %v3225, %v3489
        %v3866 = vsub.f32 %v3226, %v3489
        %v3867 = vsub.f32 %v3227, %v3492
        %v3868 = vsub.f32 %v3228, %v3492
        %v3869 = vsub.f32 %v3229, %v3495
        %v3870 = vsub.f32 %v3230, %v3495
        %v3871 = vsub.f32 %v3231, %v3498
        %v3872 = vsub.f32 %v3232, %v3498
        %v3873 = vsub.f32 %v3233, %v3501
        %v3874 = vsub.f32 %v3234, %v3501
        %v3875 = vsub.f32 %v3235, %v3504
        %v3876 = vsub.f32 %v3236, %v3504
        %v3877 = vsub.f32 %v3237, %v3507
        %v3878 = vsub.f32 %v3238, %v3507
        %v3879 = vsub.f32 %v3239, %v3510
        %v3880 = vsub.f32 %v3240, %v3510
        %v3881 = vsub.f32 %v3241, %v3513
        %v3882 = vsub.f32 %v3242, %v3513
        %v3883 = vsub.f32 %v3243, %v3516
        %v3884 = vsub.f32 %v3244, %v3516
        %v3885 = vsub.f32 %v3245, %v3519
        %v3886 = vsub.f32 %v3246, %v3519
        %v3887 = vsub.f32 %v3247, %v3522
        %v3888 = vsub.f32 %v3248, %v3522
        %v3889 = vsub.f32 %v3249, %v3525
        %v3890 = vsub.f32 %v3250, %v3525
        %v3891 = vsub.f32 %v3251, %v3528
        %v3892 = vsub.f32 %v3252, %v3528
        %v3893 = vsub.f32 %v3253, %v3531
        %v3894 = vsub.f32 %v3254, %v3531
        %v3895 = vsub.f32 %v3255, %v3534
        %v3896 = vsub.f32 %v3256, %v3534
        %v3897 = vsub.f32 %v3257, %v3537
        %v3898 = vsub.f32 %v3258, %v3537
        %v3899 = vsub.f32 %v3259, %v3540
        %v3900 = vsub.f32 %v3260, %v3540
        %v3901 = vsub.f32 %v3261, %v3543
        %v3902 = vsub.f32 %v3262, %v3543
        %v3903 = vsub.f32 %v3263, %v3546
        %v3904 = vsub.f32 %v3264, %v3546
        %v3905 = vsub.f32 %v3265, %v3549
        %v3906 = vsub.f32 %v3266, %v3549
        %v3907 = vsub.f32 %v3267, %v3552
        %v3908 = vsub.f32 %v3268, %v3552
        %v3909 = vsub.f32 %v3269, %v3555
        %v3910 = vsub.f32 %v3270, %v3555
        %v3911 = vsub.f32 %v3271, %v3558
        %v3912 = vsub.f32 %v3272, %v3558
        %v3913 = vsub.f32 %v3273, %v3561
        %v3914 = vsub.f32 %v3274, %v3561
        %v3915 = vsub.f32 %v3275, %v3564
        %v3916 = vsub.f32 %v3276, %v3564
        %v3917 = vsub.f32 %v3277, %v3567
        %v3918 = vsub.f32 %v3278, %v3567
        %v3919 = vsub.f32 %v3279, %v3570
        %v3920 = vsub.f32 %v3280, %v3570
        %v3921 = vsub.f32 %v3281, %v3573
        %v3922 = vsub.f32 %v3282, %v3573
        %v3923 = vsub.f32 %v3283, %v3576
        %v3924 = vsub.f32 %v3284, %v3576
        %v3925 = vsub.f32 %v3285, %v3579
        %v3926 = vsub.f32 %v3286, %v3579
        %v3927 = vsub.f32 %v3287, %v3582
        %v3928 = vsub.f32 %v3288, %v3582
        %v3929 = vsub.f32 %v3289, %v3585
        %v3930 = vsub.f32 %v3290, %v3585
        %v3931 = vsub.f32 %v3291, %v3588
        %v3932 = vsub.f32 %v3292, %v3588
        %v3933 = vsub.f32 %v3293, %v3591
        %v3934 = vsub.f32 %v3294, %v3591
        %v3935 = vsub.f32 %v3295, %v3594
        %v3936 = vsub.f32 %v3296, %v3594
        %v3937 = vsub.f32 %v3297, %v3597
        %v3938 = vsub.f32 %v3298, %v3597
        %v3939 = vsub.f32 %v3299, %v3600
        %v3940 = vsub.f32 %v3300, %v3600
        %v3941 = vsub.f32 %v3301, %v3603
        %v3942 = vsub.f32 %v3302, %v3603
        %v3943 = vsub.f32 %v3303, %v3606
        %v3944 = vsub.f32 %v3304, %v3606
        %v3945 = vsub.f32 %v3305, %v3609
        %v3946 = vsub.f32 %v3306, %v3609
        %v3947 = vsub.f32 %v3307, %v3612
        %v3948 = vsub.f32 %v3308, %v3612
        %v3949 = vsub.f32 %v3309, %v3615
        %v3950 = vsub.f32 %v3310, %v3615
        %v3951 = vsub.f32 %v3311, %v3618
        %v3952 = vsub.f32 %v3312, %v3618
        %v3953 = vsub.f32 %v3313, %v3621
        %v3954 = vsub.f32 %v3314, %v3621
        %v3955 = vsub.f32 %v3315, %v3624
        %v3956 = vsub.f32 %v3316, %v3624
        %v3957 = vsub.f32 %v3317, %v3627
        %v3958 = vsub.f32 %v3318, %v3627
        %v3959 = vsub.f32 %v3319, %v3630
        %v3960 = vsub.f32 %v3320, %v3630
        %v3961 = vsub.f32 %v3321, %v3633
        %v3962 = vsub.f32 %v3322, %v3633
        %v3963 = vsub.f32 %v3323, %v3636
        %v3964 = vsub.f32 %v3324, %v3636
        %v3965 = vsub.f32 %v3325, %v3639
        %v3966 = vsub.f32 %v3326, %v3639
        %v3967 = vsub.f32 %v3327, %v3642
        %v3968 = vsub.f32 %v3328, %v3642
        %v3969 = vsub.f32 %v3329, %v3645
        %v3970 = vsub.f32 %v3330, %v3645
        %v3971 = vsub.f32 %v3331, %v3648
        %v3972 = vsub.f32 %v3332, %v3648
        %v3973 = vsub.f32 %v3333, %v3651
        %v3974 = vsub.f32 %v3334, %v3651
        %v3975 = vsub.f32 %v3335, %v3654
        %v3976 = vsub.f32 %v3336, %v3654
        %v3977 = vsub.f32 %v3337, %v3657
        %v3978 = vsub.f32 %v3338, %v3657
        %v3979 = vsub.f32 %v3339, %v3660
        %v3980 = vsub.f32 %v3340, %v3660
        %v3981 = vsub.f32 %v3341, %v3663
        %v3982 = vsub.f32 %v3342, %v3663
        %v3983 = vsub.f32 %v3343, %v3666
        %v3984 = vsub.f32 %v3344, %v3666
        %v3985 = vsub.f32 %v3345, %v3669
        %v3986 = vsub.f32 %v3346, %v3669
        %v3987 = vsub.f32 %v3347, %v3672
        %v3988 = vsub.f32 %v3348, %v3672
        %v3989 = vsub.f32 %v3349, %v3675
        %v3990 = vsub.f32 %v3350, %v3675
        %v3991 = vsub.f32 %v3351, %v3678
        %v3992 = vsub.f32 %v3352, %v3678
        %v3993 = vsub.f32 %v3353, %v3681
        %v3994 = vsub.f32 %v3354, %v3681
        %v3995 = vsub.f32 %v3355, %v3684
        %v3996 = vsub.f32 %v3356, %v3684
        %v3997 = vsub.f32 %v3357, %v3687
        %v3998 = vsub.f32 %v3358, %v3687
        %v3999 = vsub.f32 %v3359, %v3690
        %v4000 = vsub.f32 %v3360, %v3690
        %v4001 = vsub.f32 %v3361, %v3693
        %v4002 = vsub.f32 %v3362, %v3693
        %v4003 = vsub.f32 %v3363, %v3696
        %v4004 = vsub.f32 %v3364, %v3696
        %v4005 = vsub.f32 %v3365, %v3699
        %v4006 = vsub.f32 %v3366, %v3699
        %v4007 = vsub.f32 %v3367, %v3702
        %v4008 = vsub.f32 %v3368, %v3702
        %v4009 = vsub.f32 %v3369, %v3705
        %v4010 = vsub.f32 %v3370, %v3705
        %v4011 = vsub.f32 %v3371, %v3708
        %v4012 = vsub.f32 %v3372, %v3708
        %v4013 = vsub.f32 %v3373, %v3711
        %v4014 = vsub.f32 %v3374, %v3711
        %v4015 = vsub.f32 %v3375, %v3714
        %v4016 = vsub.f32 %v3376, %v3714
        %v4017 = vsub.f32 %v3377, %v3717
        %v4018 = vsub.f32 %v3378, %v3717
        %v4019 = vsub.f32 %v3379, %v3720
        %v4020 = vsub.f32 %v3380, %v3720
        %v4021 = vsub.f32 %v3381, %v3723
        %v4022 = vsub.f32 %v3382, %v3723
        %v4023 = vsub.f32 %v3383, %v3726
        %v4024 = vsub.f32 %v3384, %v3726
        %v4025 = vsub.f32 %v3385, %v3729
        %v4026 = vsub.f32 %v3386, %v3729
        %v4027 = vsub.f32 %v3387, %v3732
        %v4028 = vsub.f32 %v3388, %v3732
        %v4029 = vsub.f32 %v3389, %v3735
        %v4030 = vsub.f32 %v3390, %v3735
        %v4031 = vsub.f32 %v3391, %v3738
        %v4032 = vsub.f32 %v3392, %v3738
        %v4033 = vsub.f32 %v3393, %v3741
        %v4034 = vsub.f32 %v3394, %v3741
        %v4035 = vsub.f32 %v3395, %v3744
        %v4036 = vsub.f32 %v3396, %v3744
        %v4037 = vsub.f32 %v3397, %v3747
        %v4038 = vsub.f32 %v3398, %v3747
        %v4039 = vsub.f32 %v3399, %v3750
        %v4040 = vsub.f32 %v3400, %v3750
        %v4041 = vsub.f32 %v3401, %v3753
        %v4042 = vsub.f32 %v3402, %v3753
        %v4043 = vsub.f32 %v3403, %v3756
        %v4044 = vsub.f32 %v3404, %v3756
        %v4045 = vsub.f32 %v3405, %v3759
        %v4046 = vsub.f32 %v3406, %v3759
        %v4047 = vsub.f32 %v3407, %v3762
        %v4048 = vsub.f32 %v3408, %v3762
        %v4049 = vsub.f32 %v3409, %v3765
        %v4050 = vsub.f32 %v3410, %v3765
        %v4051 = vsub.f32 %v3411, %v3768
        %v4052 = vsub.f32 %v3412, %v3768
        %v4053 = vsub.f32 %v3413, %v3771
        %v4054 = vsub.f32 %v3414, %v3771
        %v4055 = vsub.f32 %v3415, %v3774
        %v4056 = vsub.f32 %v3416, %v3774
        %v4057 = vsub.f32 %v3417, %v3777
        %v4058 = vsub.f32 %v3418, %v3777
        %v4059 = vsub.f32 %v3419, %v3780
        %v4060 = vsub.f32 %v3420, %v3780
        %v4061 = vsub.f32 %v3421, %v3783
        %v4062 = vsub.f32 %v3422, %v3783
        %v4063 = vsub.f32 %v3423, %v3786
        %v4064 = vsub.f32 %v3424, %v3786
        %v4065 = vsub.f32 %v3425, %v3789
        %v4066 = vsub.f32 %v3426, %v3789
        %v4067 = vsub.f32 %v3427, %v3792
        %v4068 = vsub.f32 %v3428, %v3792
        %v4069 = vsub.f32 %v3429, %v3795
        %v4070 = vsub.f32 %v3430, %v3795
        %v4071 = vsub.f32 %v3431, %v3798
        %v4072 = vsub.f32 %v3432, %v3798
        %v4073 = vsub.f32 %v3433, %v3801
        %v4074 = vsub.f32 %v3434, %v3801
        %v4075 = vsub.f32 %v3435, %v3804
        %v4076 = vsub.f32 %v3436, %v3804
        %v4077 = vsub.f32 %v3437, %v3807
        %v4078 = vsub.f32 %v3438, %v3807
        %v4079 = vsub.f32 %v3439, %v3810
        %v4080 = vsub.f32 %v3440, %v3810
        %v4081 = vsub.f32 %v3441, %v3813
        %v4082 = vsub.f32 %v3442, %v3813
        %v4083 = vsub.f32 %v3443, %v3816
        %v4084 = vsub.f32 %v3444, %v3816
        %v4085 = vsub.f32 %v3445, %v3819
        %v4086 = vsub.f32 %v3446, %v3819
        %v4087 = vsub.f32 %v3447, %v3822
        %v4088 = vsub.f32 %v3448, %v3822
        %v4089 = vsub.f32 %v3449, %v3825
        %v4090 = vsub.f32 %v3450, %v3825
        %v4091 = vsub.f32 %v3451, %v3828
        %v4092 = vsub.f32 %v3452, %v3828
        %v4093 = vsub.f32 %v3453, %v3831
        %v4094 = vsub.f32 %v3454, %v3831
        %v4095 = vsub.f32 %v3455, %v3834
        %v4096 = vsub.f32 %v3456, %v3834
        %v4097 = vsub.f32 %v3457, %v3837
        %v4098 = vsub.f32 %v3458, %v3837
        %v4099 = vsub.f32 %v3459, %v3840
        %v4100 = vsub.f32 %v3460, %v3840
        %v4101 = vsub.f32 %v3461, %v3843
        %v4102 = vsub.f32 %v3462, %v3843
        %v4103 = vsub.f32 %v3463, %v3846
        %v4104 = vsub.f32 %v3464, %v3846
        %v4105 = vsub.f32 %v3465, %v3849
        %v4106 = vsub.f32 %v3466, %v3849
        %v4107 = vsub.f32 %v3467, %v3852
        %v4108 = vsub.f32 %v3468, %v3852
        %v4109 = vmul.f32 %v3853, 1.442695
        %v4110 = vpow.pop %v4109
        %v4111 = vmul.f32 %v3854, 1.442695
        %v4112 = vpow.pop %v4111
        %v4113 = vmul.f32 %v3855, 1.442695
        %v4114 = vpow.pop %v4113
        %v4115 = vmul.f32 %v3856, 1.442695
        %v4116 = vpow.pop %v4115
        %v4117 = vmul.f32 %v3857, 1.442695
        %v4118 = vpow.pop %v4117
        %v4119 = vmul.f32 %v3858, 1.442695
        %v4120 = vpow.pop %v4119
        %v4121 = vmul.f32 %v3859, 1.442695
        %v4122 = vpow.pop %v4121
        %v4123 = vmul.f32 %v3860, 1.442695
        %v4124 = vpow.pop %v4123
        %v4125 = vmul.f32 %v3861, 1.442695
        %v4126 = vpow.pop %v4125
        %v4127 = vmul.f32 %v3862, 1.442695
        %v4128 = vpow.pop %v4127
        %v4129 = vmul.f32 %v3863, 1.442695
        %v4130 = vpow.pop %v4129
        %v4131 = vmul.f32 %v3864, 1.442695
        %v4132 = vpow.pop %v4131
        %v4133 = vmul.f32 %v3865, 1.442695
        %v4134 = vpow.pop %v4133
        %v4135 = vmul.f32 %v3866, 1.442695
        %v4136 = vpow.pop %v4135
        %v4137 = vmul.f32 %v3867, 1.442695
        %v4138 = vpow.pop %v4137
        %v4139 = vmul.f32 %v3868, 1.442695
        %v4140 = vpow.pop %v4139
        %v4141 = vmul.f32 %v3869, 1.442695
        %v4142 = vpow.pop %v4141
        %v4143 = vmul.f32 %v3870, 1.442695
        %v4144 = vpow.pop %v4143
        %v4145 = vmul.f32 %v3871, 1.442695
        %v4146 = vpow.pop %v4145
        %v4147 = vmul.f32 %v3872, 1.442695
        %v4148 = vpow.pop %v4147
        %v4149 = vmul.f32 %v3873, 1.442695
        %v4150 = vpow.pop %v4149
        %v4151 = vmul.f32 %v3874, 1.442695
        %v4152 = vpow.pop %v4151
        %v4153 = vmul.f32 %v3875, 1.442695
        %v4154 = vpow.pop %v4153
        %v4155 = vmul.f32 %v3876, 1.442695
        %v4156 = vpow.pop %v4155
        %v4157 = vmul.f32 %v3877, 1.442695
        %v4158 = vpow.pop %v4157
        %v4159 = vmul.f32 %v3878, 1.442695
        %v4160 = vpow.pop %v4159
        %v4161 = vmul.f32 %v3879, 1.442695
        %v4162 = vpow.pop %v4161
        %v4163 = vmul.f32 %v3880, 1.442695
        %v4164 = vpow.pop %v4163
        %v4165 = vmul.f32 %v3881, 1.442695
        %v4166 = vpow.pop %v4165
        %v4167 = vmul.f32 %v3882, 1.442695
        %v4168 = vpow.pop %v4167
        %v4169 = vmul.f32 %v3883, 1.442695
        %v4170 = vpow.pop %v4169
        %v4171 = vmul.f32 %v3884, 1.442695
        %v4172 = vpow.pop %v4171
        %v4173 = vmul.f32 %v3885, 1.442695
        %v4174 = vpow.pop %v4173
        %v4175 = vmul.f32 %v3886, 1.442695
        %v4176 = vpow.pop %v4175
        %v4177 = vmul.f32 %v3887, 1.442695
        %v4178 = vpow.pop %v4177
        %v4179 = vmul.f32 %v3888, 1.442695
        %v4180 = vpow.pop %v4179
        %v4181 = vmul.f32 %v3889, 1.442695
        %v4182 = vpow.pop %v4181
        %v4183 = vmul.f32 %v3890, 1.442695
        %v4184 = vpow.pop %v4183
        %v4185 = vmul.f32 %v3891, 1.442695
        %v4186 = vpow.pop %v4185
        %v4187 = vmul.f32 %v3892, 1.442695
        %v4188 = vpow.pop %v4187
        %v4189 = vmul.f32 %v3893, 1.442695
        %v4190 = vpow.pop %v4189
        %v4191 = vmul.f32 %v3894, 1.442695
        %v4192 = vpow.pop %v4191
        %v4193 = vmul.f32 %v3895, 1.442695
        %v4194 = vpow.pop %v4193
        %v4195 = vmul.f32 %v3896, 1.442695
        %v4196 = vpow.pop %v4195
        %v4197 = vmul.f32 %v3897, 1.442695
        %v4198 = vpow.pop %v4197
        %v4199 = vmul.f32 %v3898, 1.442695
        %v4200 = vpow.pop %v4199
        %v4201 = vmul.f32 %v3899, 1.442695
        %v4202 = vpow.pop %v4201
        %v4203 = vmul.f32 %v3900, 1.442695
        %v4204 = vpow.pop %v4203
        %v4205 = vmul.f32 %v3901, 1.442695
        %v4206 = vpow.pop %v4205
        %v4207 = vmul.f32 %v3902, 1.442695
        %v4208 = vpow.pop %v4207
        %v4209 = vmul.f32 %v3903, 1.442695
        %v4210 = vpow.pop %v4209
        %v4211 = vmul.f32 %v3904, 1.442695
        %v4212 = vpow.pop %v4211
        %v4213 = vmul.f32 %v3905, 1.442695
        %v4214 = vpow.pop %v4213
        %v4215 = vmul.f32 %v3906, 1.442695
        %v4216 = vpow.pop %v4215
        %v4217 = vmul.f32 %v3907, 1.442695
        %v4218 = vpow.pop %v4217
        %v4219 = vmul.f32 %v3908, 1.442695
        %v4220 = vpow.pop %v4219
        %v4221 = vmul.f32 %v3909, 1.442695
        %v4222 = vpow.pop %v4221
        %v4223 = vmul.f32 %v3910, 1.442695
        %v4224 = vpow.pop %v4223
        %v4225 = vmul.f32 %v3911, 1.442695
        %v4226 = vpow.pop %v4225
        %v4227 = vmul.f32 %v3912, 1.442695
        %v4228 = vpow.pop %v4227
        %v4229 = vmul.f32 %v3913, 1.442695
        %v4230 = vpow.pop %v4229
        %v4231 = vmul.f32 %v3914, 1.442695
        %v4232 = vpow.pop %v4231
        %v4233 = vmul.f32 %v3915, 1.442695
        %v4234 = vpow.pop %v4233
        %v4235 = vmul.f32 %v3916, 1.442695
        %v4236 = vpow.pop %v4235
        %v4237 = vmul.f32 %v3917, 1.442695
        %v4238 = vpow.pop %v4237
        %v4239 = vmul.f32 %v3918, 1.442695
        %v4240 = vpow.pop %v4239
        %v4241 = vmul.f32 %v3919, 1.442695
        %v4242 = vpow.pop %v4241
        %v4243 = vmul.f32 %v3920, 1.442695
        %v4244 = vpow.pop %v4243
        %v4245 = vmul.f32 %v3921, 1.442695
        %v4246 = vpow.pop %v4245
        %v4247 = vmul.f32 %v3922, 1.442695
        %v4248 = vpow.pop %v4247
        %v4249 = vmul.f32 %v3923, 1.442695
        %v4250 = vpow.pop %v4249
        %v4251 = vmul.f32 %v3924, 1.442695
        %v4252 = vpow.pop %v4251
        %v4253 = vmul.f32 %v3925, 1.442695
        %v4254 = vpow.pop %v4253
        %v4255 = vmul.f32 %v3926, 1.442695
        %v4256 = vpow.pop %v4255
        %v4257 = vmul.f32 %v3927, 1.442695
        %v4258 = vpow.pop %v4257
        %v4259 = vmul.f32 %v3928, 1.442695
        %v4260 = vpow.pop %v4259
        %v4261 = vmul.f32 %v3929, 1.442695
        %v4262 = vpow.pop %v4261
        %v4263 = vmul.f32 %v3930, 1.442695
        %v4264 = vpow.pop %v4263
        %v4265 = vmul.f32 %v3931, 1.442695
        %v4266 = vpow.pop %v4265
        %v4267 = vmul.f32 %v3932, 1.442695
        %v4268 = vpow.pop %v4267
        %v4269 = vmul.f32 %v3933, 1.442695
        %v4270 = vpow.pop %v4269
        %v4271 = vmul.f32 %v3934, 1.442695
        %v4272 = vpow.pop %v4271
        %v4273 = vmul.f32 %v3935, 1.442695
        %v4274 = vpow.pop %v4273
        %v4275 = vmul.f32 %v3936, 1.442695
        %v4276 = vpow.pop %v4275
        %v4277 = vmul.f32 %v3937, 1.442695
        %v4278 = vpow.pop %v4277
        %v4279 = vmul.f32 %v3938, 1.442695
        %v4280 = vpow.pop %v4279
        %v4281 = vmul.f32 %v3939, 1.442695
        %v4282 = vpow.pop %v4281
        %v4283 = vmul.f32 %v3940, 1.442695
        %v4284 = vpow.pop %v4283
        %v4285 = vmul.f32 %v3941, 1.442695
        %v4286 = vpow.pop %v4285
        %v4287 = vmul.f32 %v3942, 1.442695
        %v4288 = vpow.pop %v4287
        %v4289 = vmul.f32 %v3943, 1.442695
        %v4290 = vpow.pop %v4289
        %v4291 = vmul.f32 %v3944, 1.442695
        %v4292 = vpow.pop %v4291
        %v4293 = vmul.f32 %v3945, 1.442695
        %v4294 = vpow.pop %v4293
        %v4295 = vmul.f32 %v3946, 1.442695
        %v4296 = vpow.pop %v4295
        %v4297 = vmul.f32 %v3947, 1.442695
        %v4298 = vpow.pop %v4297
        %v4299 = vmul.f32 %v3948, 1.442695
        %v4300 = vpow.pop %v4299
        %v4301 = vmul.f32 %v3949, 1.442695
        %v4302 = vpow.pop %v4301
        %v4303 = vmul.f32 %v3950, 1.442695
        %v4304 = vpow.pop %v4303
        %v4305 = vmul.f32 %v3951, 1.442695
        %v4306 = vpow.pop %v4305
        %v4307 = vmul.f32 %v3952, 1.442695
        %v4308 = vpow.pop %v4307
        %v4309 = vmul.f32 %v3953, 1.442695
        %v4310 = vpow.pop %v4309
        %v4311 = vmul.f32 %v3954, 1.442695
        %v4312 = vpow.pop %v4311
        %v4313 = vmul.f32 %v3955, 1.442695
        %v4314 = vpow.pop %v4313
        %v4315 = vmul.f32 %v3956, 1.442695
        %v4316 = vpow.pop %v4315
        %v4317 = vmul.f32 %v3957, 1.442695
        %v4318 = vpow.pop %v4317
        %v4319 = vmul.f32 %v3958, 1.442695
        %v4320 = vpow.pop %v4319
        %v4321 = vmul.f32 %v3959, 1.442695
        %v4322 = vpow.pop %v4321
        %v4323 = vmul.f32 %v3960, 1.442695
        %v4324 = vpow.pop %v4323
        %v4325 = vmul.f32 %v3961, 1.442695
        %v4326 = vpow.pop %v4325
        %v4327 = vmul.f32 %v3962, 1.442695
        %v4328 = vpow.pop %v4327
        %v4329 = vmul.f32 %v3963, 1.442695
        %v4330 = vpow.pop %v4329
        %v4331 = vmul.f32 %v3964, 1.442695
        %v4332 = vpow.pop %v4331
        %v4333 = vmul.f32 %v3965, 1.442695
        %v4334 = vpow.pop %v4333
        %v4335 = vmul.f32 %v3966, 1.442695
        %v4336 = vpow.pop %v4335
        %v4337 = vmul.f32 %v3967, 1.442695
        %v4338 = vpow.pop %v4337
        %v4339 = vmul.f32 %v3968, 1.442695
        %v4340 = vpow.pop %v4339
        %v4341 = vmul.f32 %v3969, 1.442695
        %v4342 = vpow.pop %v4341
        %v4343 = vmul.f32 %v3970, 1.442695
        %v4344 = vpow.pop %v4343
        %v4345 = vmul.f32 %v3971, 1.442695
        %v4346 = vpow.pop %v4345
        %v4347 = vmul.f32 %v3972, 1.442695
        %v4348 = vpow.pop %v4347
        %v4349 = vmul.f32 %v3973, 1.442695
        %v4350 = vpow.pop %v4349
        %v4351 = vmul.f32 %v3974, 1.442695
        %v4352 = vpow.pop %v4351
        %v4353 = vmul.f32 %v3975, 1.442695
        %v4354 = vpow.pop %v4353
        %v4355 = vmul.f32 %v3976, 1.442695
        %v4356 = vpow.pop %v4355
        %v4357 = vmul.f32 %v3977, 1.442695
        %v4358 = vpow.pop %v4357
        %v4359 = vmul.f32 %v3978, 1.442695
        %v4360 = vpow.pop %v4359
        %v4361 = vmul.f32 %v3979, 1.442695
        %v4362 = vpow.pop %v4361
        %v4363 = vmul.f32 %v3980, 1.442695
        %v4364 = vpow.pop %v4363
        %v4365 = vmul.f32 %v3981, 1.442695
        %v4366 = vpow.pop %v4365
        %v4367 = vmul.f32 %v3982, 1.442695
        %v4368 = vpow.pop %v4367
        %v4369 = vmul.f32 %v3983, 1.442695
        %v4370 = vpow.pop %v4369
        %v4371 = vmul.f32 %v3984, 1.442695
        %v4372 = vpow.pop %v4371
        %v4373 = vmul.f32 %v3985, 1.442695
        %v4374 = vpow.pop %v4373
        %v4375 = vmul.f32 %v3986, 1.442695
        %v4376 = vpow.pop %v4375
        %v4377 = vmul.f32 %v3987, 1.442695
        %v4378 = vpow.pop %v4377
        %v4379 = vmul.f32 %v3988, 1.442695
        %v4380 = vpow.pop %v4379
        %v4381 = vmul.f32 %v3989, 1.442695
        %v4382 = vpow.pop %v4381
        %v4383 = vmul.f32 %v3990, 1.442695
        %v4384 = vpow.pop %v4383
        %v4385 = vmul.f32 %v3991, 1.442695
        %v4386 = vpow.pop %v4385
        %v4387 = vmul.f32 %v3992, 1.442695
        %v4388 = vpow.pop %v4387
        %v4389 = vmul.f32 %v3993, 1.442695
        %v4390 = vpow.pop %v4389
        %v4391 = vmul.f32 %v3994, 1.442695
        %v4392 = vpow.pop %v4391
        %v4393 = vmul.f32 %v3995, 1.442695
        %v4394 = vpow.pop %v4393
        %v4395 = vmul.f32 %v3996, 1.442695
        %v4396 = vpow.pop %v4395
        %v4397 = vmul.f32 %v3997, 1.442695
        %v4398 = vpow.pop %v4397
        %v4399 = vmul.f32 %v3998, 1.442695
        %v4400 = vpow.pop %v4399
        %v4401 = vmul.f32 %v3999, 1.442695
        %v4402 = vpow.pop %v4401
        %v4403 = vmul.f32 %v4000, 1.442695
        %v4404 = vpow.pop %v4403
        %v4405 = vmul.f32 %v4001, 1.442695
        %v4406 = vpow.pop %v4405
        %v4407 = vmul.f32 %v4002, 1.442695
        %v4408 = vpow.pop %v4407
        %v4409 = vmul.f32 %v4003, 1.442695
        %v4410 = vpow.pop %v4409
        %v4411 = vmul.f32 %v4004, 1.442695
        %v4412 = vpow.pop %v4411
        %v4413 = vmul.f32 %v4005, 1.442695
        %v4414 = vpow.pop %v4413
        %v4415 = vmul.f32 %v4006, 1.442695
        %v4416 = vpow.pop %v4415
        %v4417 = vmul.f32 %v4007, 1.442695
        %v4418 = vpow.pop %v4417
        %v4419 = vmul.f32 %v4008, 1.442695
        %v4420 = vpow.pop %v4419
        %v4421 = vmul.f32 %v4009, 1.442695
        %v4422 = vpow.pop %v4421
        %v4423 = vmul.f32 %v4010, 1.442695
        %v4424 = vpow.pop %v4423
        %v4425 = vmul.f32 %v4011, 1.442695
        %v4426 = vpow.pop %v4425
        %v4427 = vmul.f32 %v4012, 1.442695
        %v4428 = vpow.pop %v4427
        %v4429 = vmul.f32 %v4013, 1.442695
        %v4430 = vpow.pop %v4429
        %v4431 = vmul.f32 %v4014, 1.442695
        %v4432 = vpow.pop %v4431
        %v4433 = vmul.f32 %v4015, 1.442695
        %v4434 = vpow.pop %v4433
        %v4435 = vmul.f32 %v4016, 1.442695
        %v4436 = vpow.pop %v4435
        %v4437 = vmul.f32 %v4017, 1.442695
        %v4438 = vpow.pop %v4437
        %v4439 = vmul.f32 %v4018, 1.442695
        %v4440 = vpow.pop %v4439
        %v4441 = vmul.f32 %v4019, 1.442695
        %v4442 = vpow.pop %v4441
        %v4443 = vmul.f32 %v4020, 1.442695
        %v4444 = vpow.pop %v4443
        %v4445 = vmul.f32 %v4021, 1.442695
        %v4446 = vpow.pop %v4445
        %v4447 = vmul.f32 %v4022, 1.442695
        %v4448 = vpow.pop %v4447
        %v4449 = vmul.f32 %v4023, 1.442695
        %v4450 = vpow.pop %v4449
        %v4451 = vmul.f32 %v4024, 1.442695
        %v4452 = vpow.pop %v4451
        %v4453 = vmul.f32 %v4025, 1.442695
        %v4454 = vpow.pop %v4453
        %v4455 = vmul.f32 %v4026, 1.442695
        %v4456 = vpow.pop %v4455
        %v4457 = vmul.f32 %v4027, 1.442695
        %v4458 = vpow.pop %v4457
        %v4459 = vmul.f32 %v4028, 1.442695
        %v4460 = vpow.pop %v4459
        %v4461 = vmul.f32 %v4029, 1.442695
        %v4462 = vpow.pop %v4461
        %v4463 = vmul.f32 %v4030, 1.442695
        %v4464 = vpow.pop %v4463
        %v4465 = vmul.f32 %v4031, 1.442695
        %v4466 = vpow.pop %v4465
        %v4467 = vmul.f32 %v4032, 1.442695
        %v4468 = vpow.pop %v4467
        %v4469 = vmul.f32 %v4033, 1.442695
        %v4470 = vpow.pop %v4469
        %v4471 = vmul.f32 %v4034, 1.442695
        %v4472 = vpow.pop %v4471
        %v4473 = vmul.f32 %v4035, 1.442695
        %v4474 = vpow.pop %v4473
        %v4475 = vmul.f32 %v4036, 1.442695
        %v4476 = vpow.pop %v4475
        %v4477 = vmul.f32 %v4037, 1.442695
        %v4478 = vpow.pop %v4477
        %v4479 = vmul.f32 %v4038, 1.442695
        %v4480 = vpow.pop %v4479
        %v4481 = vmul.f32 %v4039, 1.442695
        %v4482 = vpow.pop %v4481
        %v4483 = vmul.f32 %v4040, 1.442695
        %v4484 = vpow.pop %v4483
        %v4485 = vmul.f32 %v4041, 1.442695
        %v4486 = vpow.pop %v4485
        %v4487 = vmul.f32 %v4042, 1.442695
        %v4488 = vpow.pop %v4487
        %v4489 = vmul.f32 %v4043, 1.442695
        %v4490 = vpow.pop %v4489
        %v4491 = vmul.f32 %v4044, 1.442695
        %v4492 = vpow.pop %v4491
        %v4493 = vmul.f32 %v4045, 1.442695
        %v4494 = vpow.pop %v4493
        %v4495 = vmul.f32 %v4046, 1.442695
        %v4496 = vpow.pop %v4495
        %v4497 = vmul.f32 %v4047, 1.442695
        %v4498 = vpow.pop %v4497
        %v4499 = vmul.f32 %v4048, 1.442695
        %v4500 = vpow.pop %v4499
        %v4501 = vmul.f32 %v4049, 1.442695
        %v4502 = vpow.pop %v4501
        %v4503 = vmul.f32 %v4050, 1.442695
        %v4504 = vpow.pop %v4503
        %v4505 = vmul.f32 %v4051, 1.442695
        %v4506 = vpow.pop %v4505
        %v4507 = vmul.f32 %v4052, 1.442695
        %v4508 = vpow.pop %v4507
        %v4509 = vmul.f32 %v4053, 1.442695
        %v4510 = vpow.pop %v4509
        %v4511 = vmul.f32 %v4054, 1.442695
        %v4512 = vpow.pop %v4511
        %v4513 = vmul.f32 %v4055, 1.442695
        %v4514 = vpow.pop %v4513
        %v4515 = vmul.f32 %v4056, 1.442695
        %v4516 = vpow.pop %v4515
        %v4517 = vmul.f32 %v4057, 1.442695
        %v4518 = vpow.pop %v4517
        %v4519 = vmul.f32 %v4058, 1.442695
        %v4520 = vpow.pop %v4519
        %v4521 = vmul.f32 %v4059, 1.442695
        %v4522 = vpow.pop %v4521
        %v4523 = vmul.f32 %v4060, 1.442695
        %v4524 = vpow.pop %v4523
        %v4525 = vmul.f32 %v4061, 1.442695
        %v4526 = vpow.pop %v4525
        %v4527 = vmul.f32 %v4062, 1.442695
        %v4528 = vpow.pop %v4527
        %v4529 = vmul.f32 %v4063, 1.442695
        %v4530 = vpow.pop %v4529
        %v4531 = vmul.f32 %v4064, 1.442695
        %v4532 = vpow.pop %v4531
        %v4533 = vmul.f32 %v4065, 1.442695
        %v4534 = vpow.pop %v4533
        %v4535 = vmul.f32 %v4066, 1.442695
        %v4536 = vpow.pop %v4535
        %v4537 = vmul.f32 %v4067, 1.442695
        %v4538 = vpow.pop %v4537
        %v4539 = vmul.f32 %v4068, 1.442695
        %v4540 = vpow.pop %v4539
        %v4541 = vmul.f32 %v4069, 1.442695
        %v4542 = vpow.pop %v4541
        %v4543 = vmul.f32 %v4070, 1.442695
        %v4544 = vpow.pop %v4543
        %v4545 = vmul.f32 %v4071, 1.442695
        %v4546 = vpow.pop %v4545
        %v4547 = vmul.f32 %v4072, 1.442695
        %v4548 = vpow.pop %v4547
        %v4549 = vmul.f32 %v4073, 1.442695
        %v4550 = vpow.pop %v4549
        %v4551 = vmul.f32 %v4074, 1.442695
        %v4552 = vpow.pop %v4551
        %v4553 = vmul.f32 %v4075, 1.442695
        %v4554 = vpow.pop %v4553
        %v4555 = vmul.f32 %v4076, 1.442695
        %v4556 = vpow.pop %v4555
        %v4557 = vmul.f32 %v4077, 1.442695
        %v4558 = vpow.pop %v4557
        %v4559 = vmul.f32 %v4078, 1.442695
        %v4560 = vpow.pop %v4559
        %v4561 = vmul.f32 %v4079, 1.442695
        %v4562 = vpow.pop %v4561
        %v4563 = vmul.f32 %v4080, 1.442695
        %v4564 = vpow.pop %v4563
        %v4565 = vmul.f32 %v4081, 1.442695
        %v4566 = vpow.pop %v4565
        %v4567 = vmul.f32 %v4082, 1.442695
        %v4568 = vpow.pop %v4567
        %v4569 = vmul.f32 %v4083, 1.442695
        %v4570 = vpow.pop %v4569
        %v4571 = vmul.f32 %v4084, 1.442695
        %v4572 = vpow.pop %v4571
        %v4573 = vmul.f32 %v4085, 1.442695
        %v4574 = vpow.pop %v4573
        %v4575 = vmul.f32 %v4086, 1.442695
        %v4576 = vpow.pop %v4575
        %v4577 = vmul.f32 %v4087, 1.442695
        %v4578 = vpow.pop %v4577
        %v4579 = vmul.f32 %v4088, 1.442695
        %v4580 = vpow.pop %v4579
        %v4581 = vmul.f32 %v4089, 1.442695
        %v4582 = vpow.pop %v4581
        %v4583 = vmul.f32 %v4090, 1.442695
        %v4584 = vpow.pop %v4583
        %v4585 = vmul.f32 %v4091, 1.442695
        %v4586 = vpow.pop %v4585
        %v4587 = vmul.f32 %v4092, 1.442695
        %v4588 = vpow.pop %v4587
        %v4589 = vmul.f32 %v4093, 1.442695
        %v4590 = vpow.pop %v4589
        %v4591 = vmul.f32 %v4094, 1.442695
        %v4592 = vpow.pop %v4591
        %v4593 = vmul.f32 %v4095, 1.442695
        %v4594 = vpow.pop %v4593
        %v4595 = vmul.f32 %v4096, 1.442695
        %v4596 = vpow.pop %v4595
        %v4597 = vmul.f32 %v4097, 1.442695
        %v4598 = vpow.pop %v4597
        %v4599 = vmul.f32 %v4098, 1.442695
        %v4600 = vpow.pop %v4599
        %v4601 = vmul.f32 %v4099, 1.442695
        %v4602 = vpow.pop %v4601
        %v4603 = vmul.f32 %v4100, 1.442695
        %v4604 = vpow.pop %v4603
        %v4605 = vmul.f32 %v4101, 1.442695
        %v4606 = vpow.pop %v4605
        %v4607 = vmul.f32 %v4102, 1.442695
        %v4608 = vpow.pop %v4607
        %v4609 = vmul.f32 %v4103, 1.442695
        %v4610 = vpow.pop %v4609
        %v4611 = vmul.f32 %v4104, 1.442695
        %v4612 = vpow.pop %v4611
        %v4613 = vmul.f32 %v4105, 1.442695
        %v4614 = vpow.pop %v4613
        %v4615 = vmul.f32 %v4106, 1.442695
        %v4616 = vpow.pop %v4615
        %v4617 = vmul.f32 %v4107, 1.442695
        %v4618 = vpow.pop %v4617
        %v4619 = vmul.f32 %v4108, 1.442695
        %v4620 = vpow.pop %v4619
        %v4621 = vadd.f32 %v4110, %v4112
        %4622 = vadd.xlane.f32.xlu0 %v4621
        %v4623 = vpop.xlane.xlu0 %4622
        %v4624 = vadd.f32 %v4114, %v4116
        %4625 = vadd.xlane.f32.xlu0 %v4624
        %v4626 = vpop.xlane.xlu0 %4625
        %v4627 = vadd.f32 %v4118, %v4120
        %4628 = vadd.xlane.f32.xlu0 %v4627
        %v4629 = vpop.xlane.xlu0 %4628
        %v4630 = vadd.f32 %v4122, %v4124
        %4631 = vadd.xlane.f32.xlu0 %v4630
        %v4632 = vpop.xlane.xlu0 %4631
        %v4633 = vadd.f32 %v4126, %v4128
        %4634 = vadd.xlane.f32.xlu0 %v4633
        %v4635 = vpop.xlane.xlu0 %4634
        %v4636 = vadd.f32 %v4130, %v4132
        %4637 = vadd.xlane.f32.xlu0 %v4636
        %v4638 = vpop.xlane.xlu0 %4637
        %v4639 = vadd.f32 %v4134, %v4136
        %4640 = vadd.xlane.f32.xlu0 %v4639
        %v4641 = vpop.xlane.xlu0 %4640
        %v4642 = vadd.f32 %v4138, %v4140
        %4643 = vadd.xlane.f32.xlu0 %v4642
        %v4644 = vpop.xlane.xlu0 %4643
        %v4645 = vadd.f32 %v4142, %v4144
        %4646 = vadd.xlane.f32.xlu0 %v4645
        %v4647 = vpop.xlane.xlu0 %4646
        %v4648 = vadd.f32 %v4146, %v4148
        %4649 = vadd.xlane.f32.xlu0 %v4648
        %v4650 = vpop.xlane.xlu0 %4649
        %v4651 = vadd.f32 %v4150, %v4152
        %4652 = vadd.xlane.f32.xlu0 %v4651
        %v4653 = vpop.xlane.xlu0 %4652
        %v4654 = vadd.f32 %v4154, %v4156
        %4655 = vadd.xlane.f32.xlu0 %v4654
        %v4656 = vpop.xlane.xlu0 %4655
        %v4657 = vadd.f32 %v4158, %v4160
        %4658 = vadd.xlane.f32.xlu0 %v4657
        %v4659 = vpop.xlane.xlu0 %4658
        %v4660 = vadd.f32 %v4162, %v4164
        %4661 = vadd.xlane.f32.xlu0 %v4660
        %v4662 = vpop.xlane.xlu0 %4661
        %v4663 = vadd.f32 %v4166, %v4168
        %4664 = vadd.xlane.f32.xlu0 %v4663
        %v4665 = vpop.xlane.xlu0 %4664
        %v4666 = vadd.f32 %v4170, %v4172
        %4667 = vadd.xlane.f32.xlu0 %v4666
        %v4668 = vpop.xlane.xlu0 %4667
        %v4669 = vadd.f32 %v4174, %v4176
        %4670 = vadd.xlane.f32.xlu0 %v4669
        %v4671 = vpop.xlane.xlu0 %4670
        %v4672 = vadd.f32 %v4178, %v4180
        %4673 = vadd.xlane.f32.xlu0 %v4672
        %v4674 = vpop.xlane.xlu0 %4673
        %v4675 = vadd.f32 %v4182, %v4184
        %4676 = vadd.xlane.f32.xlu0 %v4675
        %v4677 = vpop.xlane.xlu0 %4676
        %v4678 = vadd.f32 %v4186, %v4188
        %4679 = vadd.xlane.f32.xlu0 %v4678
        %v4680 = vpop.xlane.xlu0 %4679
        %v4681 = vadd.f32 %v4190, %v4192
        %4682 = vadd.xlane.f32.xlu0 %v4681
        %v4683 = vpop.xlane.xlu0 %4682
        %v4684 = vadd.f32 %v4194, %v4196
        %4685 = vadd.xlane.f32.xlu0 %v4684
        %v4686 = vpop.xlane.xlu0 %4685
        %v4687 = vadd.f32 %v4198, %v4200
        %4688 = vadd.xlane.f32.xlu0 %v4687
        %v4689 = vpop.xlane.xlu0 %4688
        %v4690 = vadd.f32 %v4202, %v4204
        %4691 = vadd.xlane.f32.xlu0 %v4690
        %v4692 = vpop.xlane.xlu0 %4691
        %v4693 = vadd.f32 %v4206, %v4208
        %4694 = vadd.xlane.f32.xlu0 %v4693
        %v4695 = vpop.xlane.xlu0 %4694
        %v4696 = vadd.f32 %v4210, %v4212
        %4697 = vadd.xlane.f32.xlu0 %v4696
        %v4698 = vpop.xlane.xlu0 %4697
        %v4699 = vadd.f32 %v4214, %v4216
        %4700 = vadd.xlane.f32.xlu0 %v4699
        %v4701 = vpop.xlane.xlu0 %4700
        %v4702 = vadd.f32 %v4218, %v4220
        %4703 = vadd.xlane.f32.xlu0 %v4702
        %v4704 = vpop.xlane.xlu0 %4703
        %v4705 = vadd.f32 %v4222, %v4224
        %4706 = vadd.xlane.f32.xlu0 %v4705
        %v4707 = vpop.xlane.xlu0 %4706
        %v4708 = vadd.f32 %v4226, %v4228
        %4709 = vadd.xlane.f32.xlu0 %v4708
        %v4710 = vpop.xlane.xlu0 %4709
        %v4711 = vadd.f32 %v4230, %v4232
        %4712 = vadd.xlane.f32.xlu0 %v4711
        %v4713 = vpop.xlane.xlu0 %4712
        %v4714 = vadd.f32 %v4234, %v4236
        %4715 = vadd.xlane.f32.xlu0 %v4714
        %v4716 = vpop.xlane.xlu0 %4715
        %v4717 = vadd.f32 %v4238, %v4240
        %4718 = vadd.xlane.f32.xlu0 %v4717
        %v4719 = vpop.xlane.xlu0 %4718
        %v4720 = vadd.f32 %v4242, %v4244
        %4721 = vadd.xlane.f32.xlu0 %v4720
        %v4722 = vpop.xlane.xlu0 %4721
        %v4723 = vadd.f32 %v4246, %v4248
        %4724 = vadd.xlane.f32.xlu0 %v4723
        %v4725 = vpop.xlane.xlu0 %4724
        %v4726 = vadd.f32 %v4250, %v4252
        %4727 = vadd.xlane.f32.xlu0 %v4726
        %v4728 = vpop.xlane.xlu0 %4727
        %v4729 = vadd.f32 %v4254, %v4256
        %4730 = vadd.xlane.f32.xlu0 %v4729
        %v4731 = vpop.xlane.xlu0 %4730
        %v4732 = vadd.f32 %v4258, %v4260
        %4733 = vadd.xlane.f32.xlu0 %v4732
        %v4734 = vpop.xlane.xlu0 %4733
        %v4735 = vadd.f32 %v4262, %v4264
        %4736 = vadd.xlane.f32.xlu0 %v4735
        %v4737 = vpop.xlane.xlu0 %4736
        %v4738 = vadd.f32 %v4266, %v4268
        %4739 = vadd.xlane.f32.xlu0 %v4738
        %v4740 = vpop.xlane.xlu0 %4739
        %v4741 = vadd.f32 %v4270, %v4272
        %4742 = vadd.xlane.f32.xlu0 %v4741
        %v4743 = vpop.xlane.xlu0 %4742
        %v4744 = vadd.f32 %v4274, %v4276
        %4745 = vadd.xlane.f32.xlu0 %v4744
        %v4746 = vpop.xlane.xlu0 %4745
        %v4747 = vadd.f32 %v4278, %v4280
        %4748 = vadd.xlane.f32.xlu0 %v4747
        %v4749 = vpop.xlane.xlu0 %4748
        %v4750 = vadd.f32 %v4282, %v4284
        %4751 = vadd.xlane.f32.xlu0 %v4750
        %v4752 = vpop.xlane.xlu0 %4751
        %v4753 = vadd.f32 %v4286, %v4288
        %4754 = vadd.xlane.f32.xlu0 %v4753
        %v4755 = vpop.xlane.xlu0 %4754
        %v4756 = vadd.f32 %v4290, %v4292
        %4757 = vadd.xlane.f32.xlu0 %v4756
        %v4758 = vpop.xlane.xlu0 %4757
        %v4759 = vadd.f32 %v4294, %v4296
        %4760 = vadd.xlane.f32.xlu0 %v4759
        %v4761 = vpop.xlane.xlu0 %4760
        %v4762 = vadd.f32 %v4298, %v4300
        %4763 = vadd.xlane.f32.xlu0 %v4762
        %v4764 = vpop.xlane.xlu0 %4763
        %v4765 = vadd.f32 %v4302, %v4304
        %4766 = vadd.xlane.f32.xlu0 %v4765
        %v4767 = vpop.xlane.xlu0 %4766
        %v4768 = vadd.f32 %v4306, %v4308
        %4769 = vadd.xlane.f32.xlu0 %v4768
        %v4770 = vpop.xlane.xlu0 %4769
        %v4771 = vadd.f32 %v4310, %v4312
        %4772 = vadd.xlane.f32.xlu0 %v4771
        %v4773 = vpop.xlane.xlu0 %4772
        %v4774 = vadd.f32 %v4314, %v4316
        %4775 = vadd.xlane.f32.xlu0 %v4774
        %v4776 = vpop.xlane.xlu0 %4775
        %v4777 = vadd.f32 %v4318, %v4320
        %4778 = vadd.xlane.f32.xlu0 %v4777
        %v4779 = vpop.xlane.xlu0 %4778
        %v4780 = vadd.f32 %v4322, %v4324
        %4781 = vadd.xlane.f32.xlu0 %v4780
        %v4782 = vpop.xlane.xlu0 %4781
        %v4783 = vadd.f32 %v4326, %v4328
        %4784 = vadd.xlane.f32.xlu0 %v4783
        %v4785 = vpop.xlane.xlu0 %4784
        %v4786 = vadd.f32 %v4330, %v4332
        %4787 = vadd.xlane.f32.xlu0 %v4786
        %v4788 = vpop.xlane.xlu0 %4787
        %v4789 = vadd.f32 %v4334, %v4336
        %4790 = vadd.xlane.f32.xlu0 %v4789
        %v4791 = vpop.xlane.xlu0 %4790
        %v4792 = vadd.f32 %v4338, %v4340
        %4793 = vadd.xlane.f32.xlu0 %v4792
        %v4794 = vpop.xlane.xlu0 %4793
        %v4795 = vadd.f32 %v4342, %v4344
        %4796 = vadd.xlane.f32.xlu0 %v4795
        %v4797 = vpop.xlane.xlu0 %4796
        %v4798 = vadd.f32 %v4346, %v4348
        %4799 = vadd.xlane.f32.xlu0 %v4798
        %v4800 = vpop.xlane.xlu0 %4799
        %v4801 = vadd.f32 %v4350, %v4352
        %4802 = vadd.xlane.f32.xlu0 %v4801
        %v4803 = vpop.xlane.xlu0 %4802
        %v4804 = vadd.f32 %v4354, %v4356
        %4805 = vadd.xlane.f32.xlu0 %v4804
        %v4806 = vpop.xlane.xlu0 %4805
        %v4807 = vadd.f32 %v4358, %v4360
        %4808 = vadd.xlane.f32.xlu0 %v4807
        %v4809 = vpop.xlane.xlu0 %4808
        %v4810 = vadd.f32 %v4362, %v4364
        %4811 = vadd.xlane.f32.xlu0 %v4810
        %v4812 = vpop.xlane.xlu0 %4811
        %v4813 = vadd.f32 %v4366, %v4368
        %4814 = vadd.xlane.f32.xlu0 %v4813
        %v4815 = vpop.xlane.xlu0 %4814
        %v4816 = vadd.f32 %v4370, %v4372
        %4817 = vadd.xlane.f32.xlu0 %v4816
        %v4818 = vpop.xlane.xlu0 %4817
        %v4819 = vadd.f32 %v4374, %v4376
        %4820 = vadd.xlane.f32.xlu0 %v4819
        %v4821 = vpop.xlane.xlu0 %4820
        %v4822 = vadd.f32 %v4378, %v4380
        %4823 = vadd.xlane.f32.xlu0 %v4822
        %v4824 = vpop.xlane.xlu0 %4823
        %v4825 = vadd.f32 %v4382, %v4384
        %4826 = vadd.xlane.f32.xlu0 %v4825
        %v4827 = vpop.xlane.xlu0 %4826
        %v4828 = vadd.f32 %v4386, %v4388
        %4829 = vadd.xlane.f32.xlu0 %v4828
        %v4830 = vpop.xlane.xlu0 %4829
        %v4831 = vadd.f32 %v4390, %v4392
        %4832 = vadd.xlane.f32.xlu0 %v4831
        %v4833 = vpop.xlane.xlu0 %4832
        %v4834 = vadd.f32 %v4394, %v4396
        %4835 = vadd.xlane.f32.xlu0 %v4834
        %v4836 = vpop.xlane.xlu0 %4835
        %v4837 = vadd.f32 %v4398, %v4400
        %4838 = vadd.xlane.f32.xlu0 %v4837
        %v4839 = vpop.xlane.xlu0 %4838
        %v4840 = vadd.f32 %v4402, %v4404
        %4841 = vadd.xlane.f32.xlu0 %v4840
        %v4842 = vpop.xlane.xlu0 %4841
        %v4843 = vadd.f32 %v4406, %v4408
        %4844 = vadd.xlane.f32.xlu0 %v4843
        %v4845 = vpop.xlane.xlu0 %4844
        %v4846 = vadd.f32 %v4410, %v4412
        %4847 = vadd.xlane.f32.xlu0 %v4846
        %v4848 = vpop.xlane.xlu0 %4847
        %v4849 = vadd.f32 %v4414, %v4416
        %4850 = vadd.xlane.f32.xlu0 %v4849
        %v4851 = vpop.xlane.xlu0 %4850
        %v4852 = vadd.f32 %v4418, %v4420
        %4853 = vadd.xlane.f32.xlu0 %v4852
        %v4854 = vpop.xlane.xlu0 %4853
        %v4855 = vadd.f32 %v4422, %v4424
        %4856 = vadd.xlane.f32.xlu0 %v4855
        %v4857 = vpop.xlane.xlu0 %4856
        %v4858 = vadd.f32 %v4426, %v4428
        %4859 = vadd.xlane.f32.xlu0 %v4858
        %v4860 = vpop.xlane.xlu0 %4859
        %v4861 = vadd.f32 %v4430, %v4432
        %4862 = vadd.xlane.f32.xlu0 %v4861
        %v4863 = vpop.xlane.xlu0 %4862
        %v4864 = vadd.f32 %v4434, %v4436
        %4865 = vadd.xlane.f32.xlu0 %v4864
        %v4866 = vpop.xlane.xlu0 %4865
        %v4867 = vadd.f32 %v4438, %v4440
        %4868 = vadd.xlane.f32.xlu0 %v4867
        %v4869 = vpop.xlane.xlu0 %4868
        %v4870 = vadd.f32 %v4442, %v4444
        %4871 = vadd.xlane.f32.xlu0 %v4870
        %v4872 = vpop.xlane.xlu0 %4871
        %v4873 = vadd.f32 %v4446, %v4448
        %4874 = vadd.xlane.f32.xlu0 %v4873
        %v4875 = vpop.xlane.xlu0 %4874
        %v4876 = vadd.f32 %v4450, %v4452
        %4877 = vadd.xlane.f32.xlu0 %v4876
        %v4878 = vpop.xlane.xlu0 %4877
        %v4879 = vadd.f32 %v4454, %v4456
        %4880 = vadd.xlane.f32.xlu0 %v4879
        %v4881 = vpop.xlane.xlu0 %4880
        %v4882 = vadd.f32 %v4458, %v4460
        %4883 = vadd.xlane.f32.xlu0 %v4882
        %v4884 = vpop.xlane.xlu0 %4883
        %v4885 = vadd.f32 %v4462, %v4464
        %4886 = vadd.xlane.f32.xlu0 %v4885
        %v4887 = vpop.xlane.xlu0 %4886
        %v4888 = vadd.f32 %v4466, %v4468
        %4889 = vadd.xlane.f32.xlu0 %v4888
        %v4890 = vpop.xlane.xlu0 %4889
        %v4891 = vadd.f32 %v4470, %v4472
        %4892 = vadd.xlane.f32.xlu0 %v4891
        %v4893 = vpop.xlane.xlu0 %4892
        %v4894 = vadd.f32 %v4474, %v4476
        %4895 = vadd.xlane.f32.xlu0 %v4894
        %v4896 = vpop.xlane.xlu0 %4895
        %v4897 = vadd.f32 %v4478, %v4480
        %4898 = vadd.xlane.f32.xlu0 %v4897
        %v4899 = vpop.xlane.xlu0 %4898
        %v4900 = vadd.f32 %v4482, %v4484
        %4901 = vadd.xlane.f32.xlu0 %v4900
        %v4902 = vpop.xlane.xlu0 %4901
        %v4903 = vadd.f32 %v4486, %v4488
        %4904 = vadd.xlane.f32.xlu0 %v4903
        %v4905 = vpop.xlane.xlu0 %4904
        %v4906 = vadd.f32 %v4490, %v4492
        %4907 = vadd.xlane.f32.xlu0 %v4906
        %v4908 = vpop.xlane.xlu0 %4907
        %v4909 = vadd.f32 %v4494, %v4496
        %4910 = vadd.xlane.f32.xlu0 %v4909
        %v4911 = vpop.xlane.xlu0 %4910
        %v4912 = vadd.f32 %v4498, %v4500
        %4913 = vadd.xlane.f32.xlu0 %v4912
        %v4914 = vpop.xlane.xlu0 %4913
        %v4915 = vadd.f32 %v4502, %v4504
        %4916 = vadd.xlane.f32.xlu0 %v4915
        %v4917 = vpop.xlane.xlu0 %4916
        %v4918 = vadd.f32 %v4506, %v4508
        %4919 = vadd.xlane.f32.xlu0 %v4918
        %v4920 = vpop.xlane.xlu0 %4919
        %v4921 = vadd.f32 %v4510, %v4512
        %4922 = vadd.xlane.f32.xlu0 %v4921
        %v4923 = vpop.xlane.xlu0 %4922
        %v4924 = vadd.f32 %v4514, %v4516
        %4925 = vadd.xlane.f32.xlu0 %v4924
        %v4926 = vpop.xlane.xlu0 %4925
        %v4927 = vadd.f32 %v4518, %v4520
        %4928 = vadd.xlane.f32.xlu0 %v4927
        %v4929 = vpop.xlane.xlu0 %4928
        %v4930 = vadd.f32 %v4522, %v4524
        %4931 = vadd.xlane.f32.xlu0 %v4930
        %v4932 = vpop.xlane.xlu0 %4931
        %v4933 = vadd.f32 %v4526, %v4528
        %4934 = vadd.xlane.f32.xlu0 %v4933
        %v4935 = vpop.xlane.xlu0 %4934
        %v4936 = vadd.f32 %v4530, %v4532
        %4937 = vadd.xlane.f32.xlu0 %v4936
        %v4938 = vpop.xlane.xlu0 %4937
        %v4939 = vadd.f32 %v4534, %v4536
        %4940 = vadd.xlane.f32.xlu0 %v4939
        %v4941 = vpop.xlane.xlu0 %4940
        %v4942 = vadd.f32 %v4538, %v4540
        %4943 = vadd.xlane.f32.xlu0 %v4942
        %v4944 = vpop.xlane.xlu0 %4943
        %v4945 = vadd.f32 %v4542, %v4544
        %4946 = vadd.xlane.f32.xlu0 %v4945
        %v4947 = vpop.xlane.xlu0 %4946
        %v4948 = vadd.f32 %v4546, %v4548
        %4949 = vadd.xlane.f32.xlu0 %v4948
        %v4950 = vpop.xlane.xlu0 %4949
        %v4951 = vadd.f32 %v4550, %v4552
        %4952 = vadd.xlane.f32.xlu0 %v4951
        %v4953 = vpop.xlane.xlu0 %4952
        %v4954 = vadd.f32 %v4554, %v4556
        %4955 = vadd.xlane.f32.xlu0 %v4954
        %v4956 = vpop.xlane.xlu0 %4955
        %v4957 = vadd.f32 %v4558, %v4560
        %4958 = vadd.xlane.f32.xlu0 %v4957
        %v4959 = vpop.xlane.xlu0 %4958
        %v4960 = vadd.f32 %v4562, %v4564
        %4961 = vadd.xlane.f32.xlu0 %v4960
        %v4962 = vpop.xlane.xlu0 %4961
        %v4963 = vadd.f32 %v4566, %v4568
        %4964 = vadd.xlane.f32.xlu0 %v4963
        %v4965 = vpop.xlane.xlu0 %4964
        %v4966 = vadd.f32 %v4570, %v4572
        %4967 = vadd.xlane.f32.xlu0 %v4966
        %v4968 = vpop.xlane.xlu0 %4967
        %v4969 = vadd.f32 %v4574, %v4576
        %4970 = vadd.xlane.f32.xlu0 %v4969
        %v4971 = vpop.xlane.xlu0 %4970
        %v4972 = vadd.f32 %v4578, %v4580
        %4973 = vadd.xlane.f32.xlu0 %v4972
        %v4974 = vpop.xlane.xlu0 %4973
        %v4975 = vadd.f32 %v4582, %v4584
        %4976 = vadd.xlane.f32.xlu0 %v4975
        %v4977 = vpop.xlane.xlu0 %4976
        %v4978 = vadd.f32 %v4586, %v4588
        %4979 = vadd.xlane.f32.xlu0 %v4978
        %v4980 = vpop.xlane.xlu0 %4979
        %v4981 = vadd.f32 %v4590, %v4592
        %4982 = vadd.xlane.f32.xlu0 %v4981
        %v4983 = vpop.xlane.xlu0 %4982
        %v4984 = vadd.f32 %v4594, %v4596
        %4985 = vadd.xlane.f32.xlu0 %v4984
        %v4986 = vpop.xlane.xlu0 %4985
        %v4987 = vadd.f32 %v4598, %v4600
        %4988 = vadd.xlane.f32.xlu0 %v4987
        %v4989 = vpop.xlane.xlu0 %4988
        %v4990 = vadd.f32 %v4602, %v4604
        %4991 = vadd.xlane.f32.xlu0 %v4990
        %v4992 = vpop.xlane.xlu0 %4991
        %v4993 = vadd.f32 %v4606, %v4608
        %4994 = vadd.xlane.f32.xlu0 %v4993
        %v4995 = vpop.xlane.xlu0 %4994
        %v4996 = vadd.f32 %v4610, %v4612
        %4997 = vadd.xlane.f32.xlu0 %v4996
        %v4998 = vpop.xlane.xlu0 %4997
        %v4999 = vadd.f32 %v4614, %v4616
        %5000 = vadd.xlane.f32.xlu0 %v4999
        %v5001 = vpop.xlane.xlu0 %5000
        %v5002 = vadd.f32 %v4618, %v4620
        %5003 = vadd.xlane.f32.xlu0 %v5002
        %v5004 = vpop.xlane.xlu0 %5003
        %v5005 = vrcp.pop %v4623
        %v5006 = vrcp.pop %v4626
        %v5007 = vrcp.pop %v4629
        %v5008 = vrcp.pop %v4632
        %v5009 = vrcp.pop %v4635
        %v5010 = vrcp.pop %v4638
        %v5011 = vrcp.pop %v4641
        %v5012 = vrcp.pop %v4644
        %v5013 = vrcp.pop %v4647
        %v5014 = vrcp.pop %v4650
        %v5015 = vrcp.pop %v4653
        %v5016 = vrcp.pop %v4656
        %v5017 = vrcp.pop %v4659
        %v5018 = vrcp.pop %v4662
        %v5019 = vrcp.pop %v4665
        %v5020 = vrcp.pop %v4668
        %v5021 = vrcp.pop %v4671
        %v5022 = vrcp.pop %v4674
        %v5023 = vrcp.pop %v4677
        %v5024 = vrcp.pop %v4680
        %v5025 = vrcp.pop %v4683
        %v5026 = vrcp.pop %v4686
        %v5027 = vrcp.pop %v4689
        %v5028 = vrcp.pop %v4692
        %v5029 = vrcp.pop %v4695
        %v5030 = vrcp.pop %v4698
        %v5031 = vrcp.pop %v4701
        %v5032 = vrcp.pop %v4704
        %v5033 = vrcp.pop %v4707
        %v5034 = vrcp.pop %v4710
        %v5035 = vrcp.pop %v4713
        %v5036 = vrcp.pop %v4716
        %v5037 = vrcp.pop %v4719
        %v5038 = vrcp.pop %v4722
        %v5039 = vrcp.pop %v4725
        %v5040 = vrcp.pop %v4728
        %v5041 = vrcp.pop %v4731
        %v5042 = vrcp.pop %v4734
        %v5043 = vrcp.pop %v4737
        %v5044 = vrcp.pop %v4740
        %v5045 = vrcp.pop %v4743
        %v5046 = vrcp.pop %v4746
        %v5047 = vrcp.pop %v4749
        %v5048 = vrcp.pop %v4752
        %v5049 = vrcp.pop %v4755
        %v5050 = vrcp.pop %v4758
        %v5051 = vrcp.pop %v4761
        %v5052 = vrcp.pop %v4764
        %v5053 = vrcp.pop %v4767
        %v5054 = vrcp.pop %v4770
        %v5055 = vrcp.pop %v4773
        %v5056 = vrcp.pop %v4776
        %v5057 = vrcp.pop %v4779
        %v5058 = vrcp.pop %v4782
        %v5059 = vrcp.pop %v4785
        %v5060 = vrcp.pop %v4788
        %v5061 = vrcp.pop %v4791
        %v5062 = vrcp.pop %v4794
        %v5063 = vrcp.pop %v4797
        %v5064 = vrcp.pop %v4800
        %v5065 = vrcp.pop %v4803
        %v5066 = vrcp.pop %v4806
        %v5067 = vrcp.pop %v4809
        %v5068 = vrcp.pop %v4812
        %v5069 = vrcp.pop %v4815
        %v5070 = vrcp.pop %v4818
        %v5071 = vrcp.pop %v4821
        %v5072 = vrcp.pop %v4824
        %v5073 = vrcp.pop %v4827
        %v5074 = vrcp.pop %v4830
        %v5075 = vrcp.pop %v4833
        %v5076 = vrcp.pop %v4836
        %v5077 = vrcp.pop %v4839
        %v5078 = vrcp.pop %v4842
        %v5079 = vrcp.pop %v4845
        %v5080 = vrcp.pop %v4848
        %v5081 = vrcp.pop %v4851
        %v5082 = vrcp.pop %v4854
        %v5083 = vrcp.pop %v4857
        %v5084 = vrcp.pop %v4860
        %v5085 = vrcp.pop %v4863
        %v5086 = vrcp.pop %v4866
        %v5087 = vrcp.pop %v4869
        %v5088 = vrcp.pop %v4872
        %v5089 = vrcp.pop %v4875
        %v5090 = vrcp.pop %v4878
        %v5091 = vrcp.pop %v4881
        %v5092 = vrcp.pop %v4884
        %v5093 = vrcp.pop %v4887
        %v5094 = vrcp.pop %v4890
        %v5095 = vrcp.pop %v4893
        %v5096 = vrcp.pop %v4896
        %v5097 = vrcp.pop %v4899
        %v5098 = vrcp.pop %v4902
        %v5099 = vrcp.pop %v4905
        %v5100 = vrcp.pop %v4908
        %v5101 = vrcp.pop %v4911
        %v5102 = vrcp.pop %v4914
        %v5103 = vrcp.pop %v4917
        %v5104 = vrcp.pop %v4920
        %v5105 = vrcp.pop %v4923
        %v5106 = vrcp.pop %v4926
        %v5107 = vrcp.pop %v4929
        %v5108 = vrcp.pop %v4932
        %v5109 = vrcp.pop %v4935
        %v5110 = vrcp.pop %v4938
        %v5111 = vrcp.pop %v4941
        %v5112 = vrcp.pop %v4944
        %v5113 = vrcp.pop %v4947
        %v5114 = vrcp.pop %v4950
        %v5115 = vrcp.pop %v4953
        %v5116 = vrcp.pop %v4956
        %v5117 = vrcp.pop %v4959
        %v5118 = vrcp.pop %v4962
        %v5119 = vrcp.pop %v4965
        %v5120 = vrcp.pop %v4968
        %v5121 = vrcp.pop %v4971
        %v5122 = vrcp.pop %v4974
        %v5123 = vrcp.pop %v4977
        %v5124 = vrcp.pop %v4980
        %v5125 = vrcp.pop %v4983
        %v5126 = vrcp.pop %v4986
        %v5127 = vrcp.pop %v4989
        %v5128 = vrcp.pop %v4992
        %v5129 = vrcp.pop %v4995
        %v5130 = vrcp.pop %v4998
        %v5131 = vrcp.pop %v5001
        %v5132 = vrcp.pop %v5004
        %v5133 = vmul.f32 %v4110, %v5005
        %v5134 = vmul.f32 %v4112, %v5005
        %v5135 = vmul.f32 %v4114, %v5006
        %v5136 = vmul.f32 %v4116, %v5006
        %v5137 = vmul.f32 %v4118, %v5007
        %v5138 = vmul.f32 %v4120, %v5007
        %v5139 = vmul.f32 %v4122, %v5008
        %v5140 = vmul.f32 %v4124, %v5008
        %v5141 = vmul.f32 %v4126, %v5009
        %v5142 = vmul.f32 %v4128, %v5009
        %v5143 = vmul.f32 %v4130, %v5010
        %v5144 = vmul.f32 %v4132, %v5010
        %v5145 = vmul.f32 %v4134, %v5011
        %v5146 = vmul.f32 %v4136, %v5011
        %v5147 = vmul.f32 %v4138, %v5012
        %v5148 = vmul.f32 %v4140, %v5012
        %v5149 = vmul.f32 %v4142, %v5013
        %v5150 = vmul.f32 %v4144, %v5013
        %v5151 = vmul.f32 %v4146, %v5014
        %v5152 = vmul.f32 %v4148, %v5014
        %v5153 = vmul.f32 %v4150, %v5015
        %v5154 = vmul.f32 %v4152, %v5015
        %v5155 = vmul.f32 %v4154, %v5016
        %v5156 = vmul.f32 %v4156, %v5016
        %v5157 = vmul.f32 %v4158, %v5017
        %v5158 = vmul.f32 %v4160, %v5017
        %v5159 = vmul.f32 %v4162, %v5018
        %v5160 = vmul.f32 %v4164, %v5018
        %v5161 = vmul.f32 %v4166, %v5019
        %v5162 = vmul.f32 %v4168, %v5019
        %v5163 = vmul.f32 %v4170, %v5020
        %v5164 = vmul.f32 %v4172, %v5020
        %v5165 = vmul.f32 %v4174, %v5021
        %v5166 = vmul.f32 %v4176, %v5021
        %v5167 = vmul.f32 %v4178, %v5022
        %v5168 = vmul.f32 %v4180, %v5022
        %v5169 = vmul.f32 %v4182, %v5023
        %v5170 = vmul.f32 %v4184, %v5023
        %v5171 = vmul.f32 %v4186, %v5024
        %v5172 = vmul.f32 %v4188, %v5024
        %v5173 = vmul.f32 %v4190, %v5025
        %v5174 = vmul.f32 %v4192, %v5025
        %v5175 = vmul.f32 %v4194, %v5026
        %v5176 = vmul.f32 %v4196, %v5026
        %v5177 = vmul.f32 %v4198, %v5027
        %v5178 = vmul.f32 %v4200, %v5027
        %v5179 = vmul.f32 %v4202, %v5028
        %v5180 = vmul.f32 %v4204, %v5028
        %v5181 = vmul.f32 %v4206, %v5029
        %v5182 = vmul.f32 %v4208, %v5029
        %v5183 = vmul.f32 %v4210, %v5030
        %v5184 = vmul.f32 %v4212, %v5030
        %v5185 = vmul.f32 %v4214, %v5031
        %v5186 = vmul.f32 %v4216, %v5031
        %v5187 = vmul.f32 %v4218, %v5032
        %v5188 = vmul.f32 %v4220, %v5032
        %v5189 = vmul.f32 %v4222, %v5033
        %v5190 = vmul.f32 %v4224, %v5033
        %v5191 = vmul.f32 %v4226, %v5034
        %v5192 = vmul.f32 %v4228, %v5034
        %v5193 = vmul.f32 %v4230, %v5035
        %v5194 = vmul.f32 %v4232, %v5035
        %v5195 = vmul.f32 %v4234, %v5036
        %v5196 = vmul.f32 %v4236, %v5036
        %v5197 = vmul.f32 %v4238, %v5037
        %v5198 = vmul.f32 %v4240, %v5037
        %v5199 = vmul.f32 %v4242, %v5038
        %v5200 = vmul.f32 %v4244, %v5038
        %v5201 = vmul.f32 %v4246, %v5039
        %v5202 = vmul.f32 %v4248, %v5039
        %v5203 = vmul.f32 %v4250, %v5040
        %v5204 = vmul.f32 %v4252, %v5040
        %v5205 = vmul.f32 %v4254, %v5041
        %v5206 = vmul.f32 %v4256, %v5041
        %v5207 = vmul.f32 %v4258, %v5042
        %v5208 = vmul.f32 %v4260, %v5042
        %v5209 = vmul.f32 %v4262, %v5043
        %v5210 = vmul.f32 %v4264, %v5043
        %v5211 = vmul.f32 %v4266, %v5044
        %v5212 = vmul.f32 %v4268, %v5044
        %v5213 = vmul.f32 %v4270, %v5045
        %v5214 = vmul.f32 %v4272, %v5045
        %v5215 = vmul.f32 %v4274, %v5046
        %v5216 = vmul.f32 %v4276, %v5046
        %v5217 = vmul.f32 %v4278, %v5047
        %v5218 = vmul.f32 %v4280, %v5047
        %v5219 = vmul.f32 %v4282, %v5048
        %v5220 = vmul.f32 %v4284, %v5048
        %v5221 = vmul.f32 %v4286, %v5049
        %v5222 = vmul.f32 %v4288, %v5049
        %v5223 = vmul.f32 %v4290, %v5050
        %v5224 = vmul.f32 %v4292, %v5050
        %v5225 = vmul.f32 %v4294, %v5051
        %v5226 = vmul.f32 %v4296, %v5051
        %v5227 = vmul.f32 %v4298, %v5052
        %v5228 = vmul.f32 %v4300, %v5052
        %v5229 = vmul.f32 %v4302, %v5053
        %v5230 = vmul.f32 %v4304, %v5053
        %v5231 = vmul.f32 %v4306, %v5054
        %v5232 = vmul.f32 %v4308, %v5054
        %v5233 = vmul.f32 %v4310, %v5055
        %v5234 = vmul.f32 %v4312, %v5055
        %v5235 = vmul.f32 %v4314, %v5056
        %v5236 = vmul.f32 %v4316, %v5056
        %v5237 = vmul.f32 %v4318, %v5057
        %v5238 = vmul.f32 %v4320, %v5057
        %v5239 = vmul.f32 %v4322, %v5058
        %v5240 = vmul.f32 %v4324, %v5058
        %v5241 = vmul.f32 %v4326, %v5059
        %v5242 = vmul.f32 %v4328, %v5059
        %v5243 = vmul.f32 %v4330, %v5060
        %v5244 = vmul.f32 %v4332, %v5060
        %v5245 = vmul.f32 %v4334, %v5061
        %v5246 = vmul.f32 %v4336, %v5061
        %v5247 = vmul.f32 %v4338, %v5062
        %v5248 = vmul.f32 %v4340, %v5062
        %v5249 = vmul.f32 %v4342, %v5063
        %v5250 = vmul.f32 %v4344, %v5063
        %v5251 = vmul.f32 %v4346, %v5064
        %v5252 = vmul.f32 %v4348, %v5064
        %v5253 = vmul.f32 %v4350, %v5065
        %v5254 = vmul.f32 %v4352, %v5065
        %v5255 = vmul.f32 %v4354, %v5066
        %v5256 = vmul.f32 %v4356, %v5066
        %v5257 = vmul.f32 %v4358, %v5067
        %v5258 = vmul.f32 %v4360, %v5067
        %v5259 = vmul.f32 %v4362, %v5068
        %v5260 = vmul.f32 %v4364, %v5068
        %v5261 = vmul.f32 %v4366, %v5069
        %v5262 = vmul.f32 %v4368, %v5069
        %v5263 = vmul.f32 %v4370, %v5070
        %v5264 = vmul.f32 %v4372, %v5070
        %v5265 = vmul.f32 %v4374, %v5071
        %v5266 = vmul.f32 %v4376, %v5071
        %v5267 = vmul.f32 %v4378, %v5072
        %v5268 = vmul.f32 %v4380, %v5072
        %v5269 = vmul.f32 %v4382, %v5073
        %v5270 = vmul.f32 %v4384, %v5073
        %v5271 = vmul.f32 %v4386, %v5074
        %v5272 = vmul.f32 %v4388, %v5074
        %v5273 = vmul.f32 %v4390, %v5075
        %v5274 = vmul.f32 %v4392, %v5075
        %v5275 = vmul.f32 %v4394, %v5076
        %v5276 = vmul.f32 %v4396, %v5076
        %v5277 = vmul.f32 %v4398, %v5077
        %v5278 = vmul.f32 %v4400, %v5077
        %v5279 = vmul.f32 %v4402, %v5078
        %v5280 = vmul.f32 %v4404, %v5078
        %v5281 = vmul.f32 %v4406, %v5079
        %v5282 = vmul.f32 %v4408, %v5079
        %v5283 = vmul.f32 %v4410, %v5080
        %v5284 = vmul.f32 %v4412, %v5080
        %v5285 = vmul.f32 %v4414, %v5081
        %v5286 = vmul.f32 %v4416, %v5081
        %v5287 = vmul.f32 %v4418, %v5082
        %v5288 = vmul.f32 %v4420, %v5082
        %v5289 = vmul.f32 %v4422, %v5083
        %v5290 = vmul.f32 %v4424, %v5083
        %v5291 = vmul.f32 %v4426, %v5084
        %v5292 = vmul.f32 %v4428, %v5084
        %v5293 = vmul.f32 %v4430, %v5085
        %v5294 = vmul.f32 %v4432, %v5085
        %v5295 = vmul.f32 %v4434, %v5086
        %v5296 = vmul.f32 %v4436, %v5086
        %v5297 = vmul.f32 %v4438, %v5087
        %v5298 = vmul.f32 %v4440, %v5087
        %v5299 = vmul.f32 %v4442, %v5088
        %v5300 = vmul.f32 %v4444, %v5088
        %v5301 = vmul.f32 %v4446, %v5089
        %v5302 = vmul.f32 %v4448, %v5089
        %v5303 = vmul.f32 %v4450, %v5090
        %v5304 = vmul.f32 %v4452, %v5090
        %v5305 = vmul.f32 %v4454, %v5091
        %v5306 = vmul.f32 %v4456, %v5091
        %v5307 = vmul.f32 %v4458, %v5092
        %v5308 = vmul.f32 %v4460, %v5092
        %v5309 = vmul.f32 %v4462, %v5093
        %v5310 = vmul.f32 %v4464, %v5093
        %v5311 = vmul.f32 %v4466, %v5094
        %v5312 = vmul.f32 %v4468, %v5094
        %v5313 = vmul.f32 %v4470, %v5095
        %v5314 = vmul.f32 %v4472, %v5095
        %v5315 = vmul.f32 %v4474, %v5096
        %v5316 = vmul.f32 %v4476, %v5096
        %v5317 = vmul.f32 %v4478, %v5097
        %v5318 = vmul.f32 %v4480, %v5097
        %v5319 = vmul.f32 %v4482, %v5098
        %v5320 = vmul.f32 %v4484, %v5098
        %v5321 = vmul.f32 %v4486, %v5099
        %v5322 = vmul.f32 %v4488, %v5099
        %v5323 = vmul.f32 %v4490, %v5100
        %v5324 = vmul.f32 %v4492, %v5100
        %v5325 = vmul.f32 %v4494, %v5101
        %v5326 = vmul.f32 %v4496, %v5101
        %v5327 = vmul.f32 %v4498, %v5102
        %v5328 = vmul.f32 %v4500, %v5102
        %v5329 = vmul.f32 %v4502, %v5103
        %v5330 = vmul.f32 %v4504, %v5103
        %v5331 = vmul.f32 %v4506, %v5104
        %v5332 = vmul.f32 %v4508, %v5104
        %v5333 = vmul.f32 %v4510, %v5105
        %v5334 = vmul.f32 %v4512, %v5105
        %v5335 = vmul.f32 %v4514, %v5106
        %v5336 = vmul.f32 %v4516, %v5106
        %v5337 = vmul.f32 %v4518, %v5107
        %v5338 = vmul.f32 %v4520, %v5107
        %v5339 = vmul.f32 %v4522, %v5108
        %v5340 = vmul.f32 %v4524, %v5108
        %v5341 = vmul.f32 %v4526, %v5109
        %v5342 = vmul.f32 %v4528, %v5109
        %v5343 = vmul.f32 %v4530, %v5110
        %v5344 = vmul.f32 %v4532, %v5110
        %v5345 = vmul.f32 %v4534, %v5111
        %v5346 = vmul.f32 %v4536, %v5111
        %v5347 = vmul.f32 %v4538, %v5112
        %v5348 = vmul.f32 %v4540, %v5112
        %v5349 = vmul.f32 %v4542, %v5113
        %v5350 = vmul.f32 %v4544, %v5113
        %v5351 = vmul.f32 %v4546, %v5114
        %v5352 = vmul.f32 %v4548, %v5114
        %v5353 = vmul.f32 %v4550, %v5115
        %v5354 = vmul.f32 %v4552, %v5115
        %v5355 = vmul.f32 %v4554, %v5116
        %v5356 = vmul.f32 %v4556, %v5116
        %v5357 = vmul.f32 %v4558, %v5117
        %v5358 = vmul.f32 %v4560, %v5117
        %v5359 = vmul.f32 %v4562, %v5118
        %v5360 = vmul.f32 %v4564, %v5118
        %v5361 = vmul.f32 %v4566, %v5119
        %v5362 = vmul.f32 %v4568, %v5119
        %v5363 = vmul.f32 %v4570, %v5120
        %v5364 = vmul.f32 %v4572, %v5120
        %v5365 = vmul.f32 %v4574, %v5121
        %v5366 = vmul.f32 %v4576, %v5121
        %v5367 = vmul.f32 %v4578, %v5122
        %v5368 = vmul.f32 %v4580, %v5122
        %v5369 = vmul.f32 %v4582, %v5123
        %v5370 = vmul.f32 %v4584, %v5123
        %v5371 = vmul.f32 %v4586, %v5124
        %v5372 = vmul.f32 %v4588, %v5124
        %v5373 = vmul.f32 %v4590, %v5125
        %v5374 = vmul.f32 %v4592, %v5125
        %v5375 = vmul.f32 %v4594, %v5126
        %v5376 = vmul.f32 %v4596, %v5126
        %v5377 = vmul.f32 %v4598, %v5127
        %v5378 = vmul.f32 %v4600, %v5127
        %v5379 = vmul.f32 %v4602, %v5128
        %v5380 = vmul.f32 %v4604, %v5128
        %v5381 = vmul.f32 %v4606, %v5129
        %v5382 = vmul.f32 %v4608, %v5129
        %v5383 = vmul.f32 %v4610, %v5130
        %v5384 = vmul.f32 %v4612, %v5130
        %v5385 = vmul.f32 %v4614, %v5131
        %v5386 = vmul.f32 %v4616, %v5131
        %v5387 = vmul.f32 %v4618, %v5132
        %v5388 = vmul.f32 %v4620, %v5132
        %v5389 = vpack.c.bf16 %v2063, %v2063
        %v5390 = vpack.c.bf16 %v2065, %v2065
        %v5391 = vpack.c.bf16 %v2067, %v2067
        %v5392 = vpack.c.bf16 %v2069, %v2069
        %v5393 = vpack.c.bf16 %v2073, %v2073
        %v5394 = vpack.c.bf16 %v2075, %v2075
        %v5395 = vpack.c.bf16 %v2077, %v2077
        %v5396 = vpack.c.bf16 %v2079, %v2079
        %v5397 = vpack.c.bf16 %v5135, %v5133
        %v5398 = vpack.c.bf16 %v5136, %v5134
        %v5399 = vpack.c.bf16 %v5139, %v5137
        %v5400 = vpack.c.bf16 %v5140, %v5138
        %v5401 = vpack.c.bf16 %v5143, %v5141
        %v5402 = vpack.c.bf16 %v5144, %v5142
        %v5403 = vpack.c.bf16 %v5147, %v5145
        %v5404 = vpack.c.bf16 %v5148, %v5146
        %v5405 = vpack.c.bf16 %v5151, %v5149
        %v5406 = vpack.c.bf16 %v5152, %v5150
        %v5407 = vpack.c.bf16 %v5155, %v5153
        %v5408 = vpack.c.bf16 %v5156, %v5154
        %v5409 = vpack.c.bf16 %v5159, %v5157
        %v5410 = vpack.c.bf16 %v5160, %v5158
        %v5411 = vpack.c.bf16 %v5163, %v5161
        %v5412 = vpack.c.bf16 %v5164, %v5162
        %v5413 = vpack.c.bf16 %v5167, %v5165
        %v5414 = vpack.c.bf16 %v5168, %v5166
        %v5415 = vpack.c.bf16 %v5171, %v5169
        %v5416 = vpack.c.bf16 %v5172, %v5170
        %v5417 = vpack.c.bf16 %v5175, %v5173
        %v5418 = vpack.c.bf16 %v5176, %v5174
        %v5419 = vpack.c.bf16 %v5179, %v5177
        %v5420 = vpack.c.bf16 %v5180, %v5178
        %v5421 = vpack.c.bf16 %v5183, %v5181
        %v5422 = vpack.c.bf16 %v5184, %v5182
        %v5423 = vpack.c.bf16 %v5187, %v5185
        %v5424 = vpack.c.bf16 %v5188, %v5186
        %v5425 = vpack.c.bf16 %v5191, %v5189
        %v5426 = vpack.c.bf16 %v5192, %v5190
        %v5427 = vpack.c.bf16 %v5195, %v5193
        %v5428 = vpack.c.bf16 %v5196, %v5194
        %v5429 = vpack.c.bf16 %v5199, %v5197
        %v5430 = vpack.c.bf16 %v5200, %v5198
        %v5431 = vpack.c.bf16 %v5203, %v5201
        %v5432 = vpack.c.bf16 %v5204, %v5202
        %v5433 = vpack.c.bf16 %v5207, %v5205
        %v5434 = vpack.c.bf16 %v5208, %v5206
        %v5435 = vpack.c.bf16 %v5211, %v5209
        %v5436 = vpack.c.bf16 %v5212, %v5210
        %v5437 = vpack.c.bf16 %v5215, %v5213
        %v5438 = vpack.c.bf16 %v5216, %v5214
        %v5439 = vpack.c.bf16 %v5219, %v5217
        %v5440 = vpack.c.bf16 %v5220, %v5218
        %v5441 = vpack.c.bf16 %v5223, %v5221
        %v5442 = vpack.c.bf16 %v5224, %v5222
        %v5443 = vpack.c.bf16 %v5227, %v5225
        %v5444 = vpack.c.bf16 %v5228, %v5226
        %v5445 = vpack.c.bf16 %v5231, %v5229
        %v5446 = vpack.c.bf16 %v5232, %v5230
        %v5447 = vpack.c.bf16 %v5235, %v5233
        %v5448 = vpack.c.bf16 %v5236, %v5234
        %v5449 = vpack.c.bf16 %v5239, %v5237
        %v5450 = vpack.c.bf16 %v5240, %v5238
        %v5451 = vpack.c.bf16 %v5243, %v5241
        %v5452 = vpack.c.bf16 %v5244, %v5242
        %v5453 = vpack.c.bf16 %v5247, %v5245
        %v5454 = vpack.c.bf16 %v5248, %v5246
        %v5455 = vpack.c.bf16 %v5251, %v5249
        %v5456 = vpack.c.bf16 %v5252, %v5250
        %v5457 = vpack.c.bf16 %v5255, %v5253
        %v5458 = vpack.c.bf16 %v5256, %v5254
        %v5459 = vpack.c.bf16 %v5259, %v5257
        %v5460 = vpack.c.bf16 %v5260, %v5258
        %v5461 = vpack.c.bf16 %v5263, %v5261
        %v5462 = vpack.c.bf16 %v5264, %v5262
        %v5463 = vpack.c.bf16 %v5267, %v5265
        %v5464 = vpack.c.bf16 %v5268, %v5266
        %v5465 = vpack.c.bf16 %v5271, %v5269
        %v5466 = vpack.c.bf16 %v5272, %v5270
        %v5467 = vpack.c.bf16 %v5275, %v5273
        %v5468 = vpack.c.bf16 %v5276, %v5274
        %v5469 = vpack.c.bf16 %v5279, %v5277
        %v5470 = vpack.c.bf16 %v5280, %v5278
        %v5471 = vpack.c.bf16 %v5283, %v5281
        %v5472 = vpack.c.bf16 %v5284, %v5282
        %v5473 = vpack.c.bf16 %v5287, %v5285
        %v5474 = vpack.c.bf16 %v5288, %v5286
        %v5475 = vpack.c.bf16 %v5291, %v5289
        %v5476 = vpack.c.bf16 %v5292, %v5290
        %v5477 = vpack.c.bf16 %v5295, %v5293
        %v5478 = vpack.c.bf16 %v5296, %v5294
        %v5479 = vpack.c.bf16 %v5299, %v5297
        %v5480 = vpack.c.bf16 %v5300, %v5298
        %v5481 = vpack.c.bf16 %v5303, %v5301
        %v5482 = vpack.c.bf16 %v5304, %v5302
        %v5483 = vpack.c.bf16 %v5307, %v5305
        %v5484 = vpack.c.bf16 %v5308, %v5306
        %v5485 = vpack.c.bf16 %v5311, %v5309
        %v5486 = vpack.c.bf16 %v5312, %v5310
        %v5487 = vpack.c.bf16 %v5315, %v5313
        %v5488 = vpack.c.bf16 %v5316, %v5314
        %v5489 = vpack.c.bf16 %v5319, %v5317
        %v5490 = vpack.c.bf16 %v5320, %v5318
        %v5491 = vpack.c.bf16 %v5323, %v5321
        %v5492 = vpack.c.bf16 %v5324, %v5322
        %v5493 = vpack.c.bf16 %v5327, %v5325
        %v5494 = vpack.c.bf16 %v5328, %v5326
        %v5495 = vpack.c.bf16 %v5331, %v5329
        %v5496 = vpack.c.bf16 %v5332, %v5330
        %v5497 = vpack.c.bf16 %v5335, %v5333
        %v5498 = vpack.c.bf16 %v5336, %v5334
        %v5499 = vpack.c.bf16 %v5339, %v5337
        %v5500 = vpack.c.bf16 %v5340, %v5338
        %v5501 = vpack.c.bf16 %v5343, %v5341
        %v5502 = vpack.c.bf16 %v5344, %v5342
        %v5503 = vpack.c.bf16 %v5347, %v5345
        %v5504 = vpack.c.bf16 %v5348, %v5346
        %v5505 = vpack.c.bf16 %v5351, %v5349
        %v5506 = vpack.c.bf16 %v5352, %v5350
        %v5507 = vpack.c.bf16 %v5355, %v5353
        %v5508 = vpack.c.bf16 %v5356, %v5354
        %v5509 = vpack.c.bf16 %v5359, %v5357
        %v5510 = vpack.c.bf16 %v5360, %v5358
        %v5511 = vpack.c.bf16 %v5363, %v5361
        %v5512 = vpack.c.bf16 %v5364, %v5362
        %v5513 = vpack.c.bf16 %v5367, %v5365
        %v5514 = vpack.c.bf16 %v5368, %v5366
        %v5515 = vpack.c.bf16 %v5371, %v5369
        %v5516 = vpack.c.bf16 %v5372, %v5370
        %v5517 = vpack.c.bf16 %v5375, %v5373
        %v5518 = vpack.c.bf16 %v5376, %v5374
        %v5519 = vpack.c.bf16 %v5379, %v5377
        %v5520 = vpack.c.bf16 %v5380, %v5378
        %v5521 = vpack.c.bf16 %v5383, %v5381
        %v5522 = vpack.c.bf16 %v5384, %v5382
        %v5523 = vpack.c.bf16 %v5387, %v5385
        %v5524 = vpack.c.bf16 %v5388, %v5386
        %5525 = vmatprep.subr.bf16.mxu0 %v5412
        %5526 = vmatpush1.bf16.xpose.msra.mxu0 %v5411
        %5527 = vmatprep.subr.bf16.mxu0 %v5410
        %5528 = vmatpush1.bf16.xpose.msra.mxu0 %v5409
        %5529 = vmatprep.subr.bf16.mxu0 %v5408
        %5530 = vmatpush1.bf16.xpose.msra.mxu0 %v5407
        %5531 = vmatprep.subr.bf16.mxu0 %v5406
        %5532 = vmatpush1.bf16.xpose.msra.mxu0 %v5405
        %5533 = vmatprep.subr.bf16.mxu0 %v5404
        %5534 = vmatpush1.bf16.xpose.msra.mxu0 %v5403
        %5535 = vmatprep.subr.bf16.mxu0 %v5402
        %5536 = vmatpush1.bf16.xpose.msra.mxu0 %v5401
        %5537 = vmatprep.subr.bf16.mxu0 %v5400
        %5538 = vmatpush1.bf16.xpose.msra.mxu0 %v5399
        %5539 = vmatprep.subr.bf16.mxu0 %v5398
        %5540 = vmatpush1.bf16.xpose.msra.mxu0 %v5397
        %5541 = vmatprep.subr.bf16.mxu0 %v5428
        %5542 = vmatpush2.bf16.xpose.msra.mxu0 %v5427
        %5543 = vmatprep.subr.bf16.mxu0 %v5426
        %5544 = vmatpush2.bf16.xpose.msra.mxu0 %v5425
        %5545 = vmatprep.subr.bf16.mxu0 %v5424
        %5546 = vmatpush2.bf16.xpose.msra.mxu0 %v5423
        %5547 = vmatprep.subr.bf16.mxu0 %v5422
        %5548 = vmatpush2.bf16.xpose.msra.mxu0 %v5421
        %5549 = vmatprep.subr.bf16.mxu0 %v5420
        %5550 = vmatpush2.bf16.xpose.msra.mxu0 %v5419
        %5551 = vmatprep.subr.bf16.mxu0 %v5418
        %5552 = vmatpush2.bf16.xpose.msra.mxu0 %v5417
        %5553 = vmatprep.subr.bf16.mxu0 %v5416
        %5554 = vmatpush2.bf16.xpose.msra.mxu0 %v5415
        %5555 = vmatprep.subr.bf16.mxu0 %v5414
        %5556 = vmatpush2.bf16.xpose.msra.mxu0 %v5413
        %5557 = vmatprep.mubr.bf16.mxu0 %v5390
        %5558 = vmatmul.mubr.bf16.gmra.mxu0 %v5389
        %v5559 = vpop.f32.mrf.mxu0
        %v5560 = vadd.f32 0.0, %v5559
        %v5561 = vpop.f32.mrf.mxu0
        %v5562 = vadd.f32 0.0, %v5561
        %v5563 = vpop.f32.mrf.mxu0
        %v5564 = vpop.f32.mrf.mxu0
        %5565 = vdwg.mxu0
        %5566 = vmatprep.subr.bf16.mxu0 %v5444
        %5567 = vmatpush1.bf16.xpose.msra.mxu0 %v5443
        %5568 = vmatprep.subr.bf16.mxu0 %v5442
        %5569 = vmatpush1.bf16.xpose.msra.mxu0 %v5441
        %5570 = vmatprep.subr.bf16.mxu0 %v5440
        %5571 = vmatpush1.bf16.xpose.msra.mxu0 %v5439
        %5572 = vmatprep.subr.bf16.mxu0 %v5438
        %5573 = vmatpush1.bf16.xpose.msra.mxu0 %v5437
        %5574 = vmatprep.subr.bf16.mxu0 %v5436
        %5575 = vmatpush1.bf16.xpose.msra.mxu0 %v5435
        %5576 = vmatprep.subr.bf16.mxu0 %v5434
        %5577 = vmatpush1.bf16.xpose.msra.mxu0 %v5433
        %5578 = vmatprep.subr.bf16.mxu0 %v5432
        %5579 = vmatpush1.bf16.xpose.msra.mxu0 %v5431
        %5580 = vmatprep.subr.bf16.mxu0 %v5430
        %5581 = vmatpush1.bf16.xpose.msra.mxu0 %v5429
        %5582 = vmatprep.subr.bf16.mxu0 %v5460
        %5583 = vmatpush2.bf16.xpose.msra.mxu0 %v5459
        %5584 = vmatprep.subr.bf16.mxu0 %v5458
        %5585 = vmatpush2.bf16.xpose.msra.mxu0 %v5457
        %5586 = vmatprep.subr.bf16.mxu0 %v5456
        %5587 = vmatpush2.bf16.xpose.msra.mxu0 %v5455
        %5588 = vmatprep.subr.bf16.mxu0 %v5454
        %5589 = vmatpush2.bf16.xpose.msra.mxu0 %v5453
        %5590 = vmatprep.subr.bf16.mxu0 %v5452
        %5591 = vmatpush2.bf16.xpose.msra.mxu0 %v5451
        %5592 = vmatprep.subr.bf16.mxu0 %v5450
        %5593 = vmatpush2.bf16.xpose.msra.mxu0 %v5449
        %5594 = vmatprep.subr.bf16.mxu0 %v5448
        %5595 = vmatpush2.bf16.xpose.msra.mxu0 %v5447
        %5596 = vmatprep.subr.bf16.mxu0 %v5446
        %5597 = vmatpush2.bf16.xpose.msra.mxu0 %v5445
        %5598 = vmatprep.mubr.bf16.mxu0 %v5392
        %5599 = vmatmul.mubr.bf16.gmra.mxu0 %v5391
        %v5600 = vpop.f32.mrf.mxu0
        %v5601 = vadd.f32 0.0, %v5600
        %v5602 = vpop.f32.mrf.mxu0
        %v5603 = vadd.f32 0.0, %v5602
        %v5604 = vpop.f32.mrf.mxu0
        %v5605 = vpop.f32.mrf.mxu0
        %5606 = vdwg.mxu0
        %5607 = vmatprep.subr.bf16.mxu0 %v5476
        %5608 = vmatpush1.bf16.xpose.msra.mxu0 %v5475
        %5609 = vmatprep.subr.bf16.mxu0 %v5474
        %5610 = vmatpush1.bf16.xpose.msra.mxu0 %v5473
        %5611 = vmatprep.subr.bf16.mxu0 %v5472
        %5612 = vmatpush1.bf16.xpose.msra.mxu0 %v5471
        %5613 = vmatprep.subr.bf16.mxu0 %v5470
        %5614 = vmatpush1.bf16.xpose.msra.mxu0 %v5469
        %5615 = vmatprep.subr.bf16.mxu0 %v5468
        %5616 = vmatpush1.bf16.xpose.msra.mxu0 %v5467
        %5617 = vmatprep.subr.bf16.mxu0 %v5466
        %5618 = vmatpush1.bf16.xpose.msra.mxu0 %v5465
        %5619 = vmatprep.subr.bf16.mxu0 %v5464
        %5620 = vmatpush1.bf16.xpose.msra.mxu0 %v5463
        %5621 = vmatprep.subr.bf16.mxu0 %v5462
        %5622 = vmatpush1.bf16.xpose.msra.mxu0 %v5461
        %5623 = vmatprep.subr.bf16.mxu0 %v5492
        %5624 = vmatpush2.bf16.xpose.msra.mxu0 %v5491
        %5625 = vmatprep.subr.bf16.mxu0 %v5490
        %5626 = vmatpush2.bf16.xpose.msra.mxu0 %v5489
        %5627 = vmatprep.subr.bf16.mxu0 %v5488
        %5628 = vmatpush2.bf16.xpose.msra.mxu0 %v5487
        %5629 = vmatprep.subr.bf16.mxu0 %v5486
        %5630 = vmatpush2.bf16.xpose.msra.mxu0 %v5485
        %5631 = vmatprep.subr.bf16.mxu0 %v5484
        %5632 = vmatpush2.bf16.xpose.msra.mxu0 %v5483
        %5633 = vmatprep.subr.bf16.mxu0 %v5482
        %5634 = vmatpush2.bf16.xpose.msra.mxu0 %v5481
        %5635 = vmatprep.subr.bf16.mxu0 %v5480
        %5636 = vmatpush2.bf16.xpose.msra.mxu0 %v5479
        %5637 = vmatprep.subr.bf16.mxu0 %v5478
        %5638 = vmatpush2.bf16.xpose.msra.mxu0 %v5477
        %5639 = vmatprep.mubr.bf16.mxu0 %v5394
        %5640 = vmatmul.mubr.bf16.gmra.mxu0 %v5393
        %v5641 = vpop.f32.mrf.mxu0
        %v5642 = vadd.f32 0.0, %v5641
        %v5643 = vpop.f32.mrf.mxu0
        %v5644 = vadd.f32 0.0, %v5643
        %v5645 = vpop.f32.mrf.mxu0
        %v5646 = vpop.f32.mrf.mxu0
        %5647 = vdwg.mxu0
        %5648 = vmatprep.subr.bf16.mxu0 %v5508
        %5649 = vmatpush1.bf16.xpose.msra.mxu0 %v5507
        %5650 = vmatprep.subr.bf16.mxu0 %v5506
        %5651 = vmatpush1.bf16.xpose.msra.mxu0 %v5505
        %5652 = vmatprep.subr.bf16.mxu0 %v5504
        %5653 = vmatpush1.bf16.xpose.msra.mxu0 %v5503
        %5654 = vmatprep.subr.bf16.mxu0 %v5502
        %5655 = vmatpush1.bf16.xpose.msra.mxu0 %v5501
        %5656 = vmatprep.subr.bf16.mxu0 %v5500
        %5657 = vmatpush1.bf16.xpose.msra.mxu0 %v5499
        %5658 = vmatprep.subr.bf16.mxu0 %v5498
        %5659 = vmatpush1.bf16.xpose.msra.mxu0 %v5497
        %5660 = vmatprep.subr.bf16.mxu0 %v5496
        %5661 = vmatpush1.bf16.xpose.msra.mxu0 %v5495
        %5662 = vmatprep.subr.bf16.mxu0 %v5494
        %5663 = vmatpush1.bf16.xpose.msra.mxu0 %v5493
        %5664 = vmatprep.subr.bf16.mxu0 %v5524
        %5665 = vmatpush2.bf16.xpose.msra.mxu0 %v5523
        %5666 = vmatprep.subr.bf16.mxu0 %v5522
        %5667 = vmatpush2.bf16.xpose.msra.mxu0 %v5521
        %5668 = vmatprep.subr.bf16.mxu0 %v5520
        %5669 = vmatpush2.bf16.xpose.msra.mxu0 %v5519
        %5670 = vmatprep.subr.bf16.mxu0 %v5518
        %5671 = vmatpush2.bf16.xpose.msra.mxu0 %v5517
        %5672 = vmatprep.subr.bf16.mxu0 %v5516
        %5673 = vmatpush2.bf16.xpose.msra.mxu0 %v5515
        %5674 = vmatprep.subr.bf16.mxu0 %v5514
        %5675 = vmatpush2.bf16.xpose.msra.mxu0 %v5513
        %5676 = vmatprep.subr.bf16.mxu0 %v5512
        %5677 = vmatpush2.bf16.xpose.msra.mxu0 %v5511
        %5678 = vmatprep.subr.bf16.mxu0 %v5510
        %5679 = vmatpush2.bf16.xpose.msra.mxu0 %v5509
        %5680 = vmatprep.mubr.bf16.mxu0 %v5396
        %5681 = vmatmul.mubr.bf16.gmra.mxu0 %v5395
        %v5682 = vpop.f32.mrf.mxu0
        %v5683 = vadd.f32 0.0, %v5682
        %v5684 = vpop.f32.mrf.mxu0
        %v5685 = vadd.f32 0.0, %v5684
        %v5686 = vpop.f32.mrf.mxu0
        %v5687 = vpop.f32.mrf.mxu0
        %5688 = vdwg.mxu0
        %v5689 = vpack.c.bf16 %v5601, %v5560
        %v5690 = vpack.c.bf16 %v5603, %v5562
        %v5691 = vpack.c.bf16 %v5683, %v5642
        %v5692 = vpack.c.bf16 %v5685, %v5644
        %5694 = vset.pattern.permute.xlu0 0
        %5695 = vperm.xlu0 %5694, %v1806
        %v5696 = vpop.permute.xlu0 %5695
        %5699 = vset.pattern.permute.xlu0 0
        %5700 = vperm.xlu0 %5699, %v1807
        %v5701 = vpop.permute.xlu0 %5700
        %5704 = vset.pattern.permute.xlu0 0
        %5705 = vperm.xlu0 %5704, %v1808
        %v5706 = vpop.permute.xlu0 %5705
        %5709 = vset.pattern.permute.xlu0 0
        %5710 = vperm.xlu0 %5709, %v1809
        %v5711 = vpop.permute.xlu0 %5710
        %v5717 = vunpack.c.l.b16 %v1790
        %v5718 = vunpack.c.l.b16 %v1791
        %v5719 = vunpack.c.l.b16 %v1792
        %v5720 = vunpack.c.l.b16 %v1793
        %v5721 = vpack.c.b16 %v5718, %v5717
        %v5722 = vpack.c.b16 %v5720, %v5719
        %v5724 = vsel %vm762, %v5721, 0
        %v5727 = vsel %vm762, %v5722, 0
        %5729 = vmatprep.subr.bf16.mxu0 0
        %5730 = vmatpush1.bf16.msra.mxu0 0
        %5731 = vmatprep.subr.bf16.mxu0 0
        %5732 = vmatpush1.bf16.msra.mxu0 0
        %5733 = vmatprep.subr.bf16.mxu0 0
        %5734 = vmatpush1.bf16.msra.mxu0 0
        %5735 = vmatprep.subr.bf16.mxu0 0
        %5736 = vmatpush1.bf16.msra.mxu0 0
        %5737 = vmatprep.subr.bf16.mxu0 0
        %5738 = vmatpush1.bf16.msra.mxu0 0
        %5739 = vmatprep.subr.bf16.mxu0 0
        %5740 = vmatpush1.bf16.msra.mxu0 0
        %5741 = vmatprep.subr.bf16.mxu0 %v5692
        %5742 = vmatpush1.bf16.msra.mxu0 %v5691
        %5743 = vmatprep.subr.bf16.mxu0 %v5690
        %5744 = vmatpush1.bf16.msra.mxu0 %v5689
        %5745 = vmatprep.subr.bf16.mxu0 0
        %5746 = vmatpush2.bf16.msra.mxu0 0
        %5747 = vmatprep.subr.bf16.mxu0 0
        %5748 = vmatpush2.bf16.msra.mxu0 0
        %5749 = vmatprep.subr.bf16.mxu0 0
        %5750 = vmatpush2.bf16.msra.mxu0 0
        %5751 = vmatprep.subr.bf16.mxu0 0
        %5752 = vmatpush2.bf16.msra.mxu0 0
        %5753 = vmatprep.subr.bf16.mxu0 0
        %5754 = vmatpush2.bf16.msra.mxu0 0
        %5755 = vmatprep.subr.bf16.mxu0 0
        %5756 = vmatpush2.bf16.msra.mxu0 0
        %5757 = vmatprep.subr.bf16.mxu0 0
        %5758 = vmatpush2.bf16.msra.mxu0 0
        %5759 = vmatprep.subr.bf16.mxu0 0
        %5760 = vmatpush2.bf16.msra.mxu0 0
        %5761 = vmatprep.mubr.bf16.mxu0 0
        %5762 = vmatmul.mubr.bf16.gmra.mxu0 %v5724
        %v5763 = vpop.f32.mrf.mxu0
        %v5764 = vadd.f32 %v5696, %v5763
        %v5765 = vpop.f32.mrf.mxu0
        %v5766 = vadd.f32 %v5696, %v5765
        %v5767 = vpop.f32.mrf.mxu0
        %v5768 = vadd.f32 %v5701, %v5767
        %v5769 = vpop.f32.mrf.mxu0
        %v5770 = vadd.f32 %v5701, %v5769
        %5771 = vmatprep.mubr.bf16.mxu0 0
        %5772 = vmatmul.mubr.bf16.gmra.mxu0 %v5727
        %v5773 = vpop.f32.mrf.mxu0
        %v5774 = vadd.f32 %v5706, %v5773
        %v5775 = vpop.f32.mrf.mxu0
        %v5776 = vadd.f32 %v5706, %v5775
        %v5777 = vpop.f32.mrf.mxu0
        %v5778 = vadd.f32 %v5711, %v5777
        %v5779 = vpop.f32.mrf.mxu0
        %v5780 = vadd.f32 %v5711, %v5779
        %5781 = vdwg.mxu0
        %v5782 = vadd.f32 %v1770, %v5764
        %v5783 = vadd.f32 %v1771, %v5766
        %v5784 = vadd.f32 %v1772, %v5768
        %v5785 = vadd.f32 %v1773, %v5770
        %v5786 = vadd.f32 %v1774, %v5774
        %v5787 = vadd.f32 %v1775, %v5776
        %v5788 = vadd.f32 %v1776, %v5778
        %v5789 = vadd.f32 %v1777, %v5780
        %v5790 = vadd.f32 %v5782, %v5784
        %v5791 = vadd.f32 %v5790, %v5786
        %v5792 = vadd.f32 %v5791, %v5788
        %v5793 = vrot.slane %v5792, 4
        %v5794 = vadd.f32 %v5792, %v5793
        %v5795 = vrot.slane %v5794, 2
        %v5796 = vadd.f32 %v5794, %v5795
        %v5797 = vrot.slane %v5796, 1
        %v5798 = vadd.f32 %v5796, %v5797
        %v5799 = vadd.f32 %v5783, %v5785
        %v5800 = vadd.f32 %v5799, %v5787
        %v5801 = vadd.f32 %v5800, %v5789
        %v5802 = vrot.slane %v5801, 4
        %v5803 = vadd.f32 %v5801, %v5802
        %v5804 = vrot.slane %v5803, 2
        %v5805 = vadd.f32 %v5803, %v5804
        %v5806 = vrot.slane %v5805, 1
        %v5807 = vadd.f32 %v5805, %v5806
        %v5808 = vmul.f32 %v5798, %v1671
        %v5809 = vmul.f32 %v5807, %v1671
        %v5810 = vsub.f32 %v5782, %v5808
        %v5811 = vsub.f32 %v5783, %v5809
        %v5812 = vsub.f32 %v5784, %v5808
        %v5813 = vsub.f32 %v5785, %v5809
        %v5814 = vsub.f32 %v5786, %v5808
        %v5815 = vsub.f32 %v5787, %v5809
        %v5816 = vsub.f32 %v5788, %v5808
        %v5817 = vsub.f32 %v5789, %v5809
        %v5818 = vmul.f32 %v5810, %v5810
        %v5819 = vmul.f32 %v5811, %v5811
        %v5820 = vmul.f32 %v5812, %v5812
        %v5821 = vmul.f32 %v5813, %v5813
        %v5822 = vmul.f32 %v5814, %v5814
        %v5823 = vmul.f32 %v5815, %v5815
        %v5824 = vmul.f32 %v5816, %v5816
        %v5825 = vmul.f32 %v5817, %v5817
        %v5826 = vadd.f32 %v5818, %v5820
        %v5827 = vadd.f32 %v5826, %v5822
        %v5828 = vadd.f32 %v5827, %v5824
        %v5829 = vrot.slane %v5828, 4
        %v5830 = vadd.f32 %v5828, %v5829
        %v5831 = vrot.slane %v5830, 2
        %v5832 = vadd.f32 %v5830, %v5831
        %v5833 = vrot.slane %v5832, 1
        %v5834 = vadd.f32 %v5832, %v5833
        %v5835 = vadd.f32 %v5819, %v5821
        %v5836 = vadd.f32 %v5835, %v5823
        %v5837 = vadd.f32 %v5836, %v5825
        %v5838 = vrot.slane %v5837, 4
        %v5839 = vadd.f32 %v5837, %v5838
        %v5840 = vrot.slane %v5839, 2
        %v5841 = vadd.f32 %v5839, %v5840
        %v5842 = vrot.slane %v5841, 1
        %v5843 = vadd.f32 %v5841, %v5842
        %v5844 = vmul.f32 %v5834, %v1671
        %v5845 = vmul.f32 %v5843, %v1671
        %v5846 = vadd.f32 %v5844, 1e-05
        %v5847 = vadd.f32 %v5845, 1e-05
        %v5848 = vrsqrt.pop %v5846
        %v5849 = vrsqrt.pop %v5847
        %v5850 = vmul.f32 %v5810, %v5848
        %v5851 = vmul.f32 %v5811, %v5849
        %v5852 = vmul.f32 %v5812, %v5848
        %v5853 = vmul.f32 %v5813, %v5849
        %v5854 = vmul.f32 %v5814, %v5848
        %v5855 = vmul.f32 %v5815, %v5849
        %v5856 = vmul.f32 %v5816, %v5848
        %v5857 = vmul.f32 %v5817, %v5849
        %5859 = vset.pattern.permute.xlu0 0
        %5860 = vperm.xlu0 %5859, %v554
        %v5861 = vpop.permute.xlu0 %5860
        %5864 = vset.pattern.permute.xlu0 0
        %5865 = vperm.xlu0 %5864, %v555
        %v5866 = vpop.permute.xlu0 %5865
        %5869 = vset.pattern.permute.xlu0 0
        %5870 = vperm.xlu0 %5869, %v556
        %v5871 = vpop.permute.xlu0 %5870
        %5874 = vset.pattern.permute.xlu0 0
        %5875 = vperm.xlu0 %5874, %v557
        %v5876 = vpop.permute.xlu0 %5875
        %v5878 = vmul.f32 %v5850, %v5861
        %v5879 = vmul.f32 %v5851, %v5861
        %v5880 = vmul.f32 %v5852, %v5866
        %v5881 = vmul.f32 %v5853, %v5866
        %v5882 = vmul.f32 %v5854, %v5871
        %v5883 = vmul.f32 %v5855, %v5871
        %v5884 = vmul.f32 %v5856, %v5876
        %v5885 = vmul.f32 %v5857, %v5876
        %5887 = vset.pattern.permute.xlu0 0
        %5888 = vperm.xlu0 %5887, %v558
        %v5889 = vpop.permute.xlu0 %5888
        %5892 = vset.pattern.permute.xlu0 0
        %5893 = vperm.xlu0 %5892, %v559
        %v5894 = vpop.permute.xlu0 %5893
        %5897 = vset.pattern.permute.xlu0 0
        %5898 = vperm.xlu0 %5897, %v560
        %v5899 = vpop.permute.xlu0 %5898
        %5902 = vset.pattern.permute.xlu0 0
        %5903 = vperm.xlu0 %5902, %v561
        %v5904 = vpop.permute.xlu0 %5903
        %v5906 = vadd.f32 %v5878, %v5889
        %v5907 = vadd.f32 %v5879, %v5889
        %v5908 = vadd.f32 %v5880, %v5894
        %v5909 = vadd.f32 %v5881, %v5894
        %v5910 = vadd.f32 %v5882, %v5899
        %v5911 = vadd.f32 %v5883, %v5899
        %v5912 = vadd.f32 %v5884, %v5904
        %v5913 = vadd.f32 %v5885, %v5904
        %v5914 = vld [vmem:[%s10] sm:$0xf]
        %v5915 = vld [vmem:[%s10 + $0x4] sm:$0xf]
        %v5916 = vld [vmem:[%s10 + $0x8] sm:$0xf]
        %v5917 = vld [vmem:[%s10 + $0xc] sm:$0xf]
        %v5918 = vld [vmem:[%s10 + $0x10] sm:$0xf]
        %v5919 = vld [vmem:[%s10 + $0x14] sm:$0xf]
        %v5920 = vld [vmem:[%s10 + $0x18] sm:$0xf]
        %v5921 = vld [vmem:[%s10 + $0x1c] sm:$0xf]
        %v5922 = vpack.c.bf16 %v5908, %v5906
        %v5923 = vpack.c.bf16 %v5909, %v5907
        %v5924 = vpack.c.bf16 %v5912, %v5910
        %v5925 = vpack.c.bf16 %v5913, %v5911
        %v5926 = vld [vmem:[%s11] sm:$0xff]
        %v5927 = vld [vmem:[%s11 + $0x8] sm:$0xff]
        %v5928 = vld [vmem:[%s11 + $0x10] sm:$0xff]
        %v5929 = vld [vmem:[%s11 + $0x18] sm:$0xff]
        %v5930 = vld [vmem:[%s11 + $0x20] sm:$0xff]
        %v5931 = vld [vmem:[%s11 + $0x28] sm:$0xff]
        %v5932 = vld [vmem:[%s11 + $0x30] sm:$0xff]
        %v5933 = vld [vmem:[%s11 + $0x38] sm:$0xff]
        %5935 = vset.pattern.permute.xlu0 0
        %5936 = vperm.xlu0 %5935, %v5926
        %v5937 = vpop.permute.xlu0 %5936
        %5940 = vset.pattern.permute.xlu0 0
        %5941 = vperm.xlu0 %5940, %v5927
        %v5942 = vpop.permute.xlu0 %5941
        %5945 = vset.pattern.permute.xlu0 0
        %5946 = vperm.xlu0 %5945, %v5928
        %v5947 = vpop.permute.xlu0 %5946
        %5950 = vset.pattern.permute.xlu0 0
        %5951 = vperm.xlu0 %5950, %v5929
        %v5952 = vpop.permute.xlu0 %5951
        %5955 = vset.pattern.permute.xlu0 0
        %5956 = vperm.xlu0 %5955, %v5930
        %v5957 = vpop.permute.xlu0 %5956
        %5960 = vset.pattern.permute.xlu0 0
        %5961 = vperm.xlu0 %5960, %v5931
        %v5962 = vpop.permute.xlu0 %5961
        %5965 = vset.pattern.permute.xlu0 0
        %5966 = vperm.xlu0 %5965, %v5932
        %v5967 = vpop.permute.xlu0 %5966
        %5970 = vset.pattern.permute.xlu0 0
        %5971 = vperm.xlu0 %5970, %v5933
        %v5972 = vpop.permute.xlu0 %5971
        %v5982 = vunpack.c.l.b16 %v5914
        %v5983 = vunpack.c.l.b16 %v5915
        %v5984 = vunpack.c.l.b16 %v5916
        %v5985 = vunpack.c.l.b16 %v5917
        %v5986 = vunpack.c.l.b16 %v5918
        %v5987 = vunpack.c.l.b16 %v5919
        %v5988 = vunpack.c.l.b16 %v5920
        %v5989 = vunpack.c.l.b16 %v5921
        %v5990 = vpack.c.b16 %v5983, %v5982
        %v5991 = vpack.c.b16 %v5985, %v5984
        %v5992 = vpack.c.b16 %v5987, %v5986
        %v5993 = vpack.c.b16 %v5989, %v5988
        %v5995 = vsel %vm762, %v5990, 0
        %v5998 = vsel %vm762, %v5991, 0
        %v6001 = vsel %vm762, %v5992, 0
        %v6004 = vsel %vm762, %v5993, 0
        %6006 = vmatprep.subr.bf16.mxu0 0
        %6007 = vmatpush1.bf16.msra.mxu0 0
        %6008 = vmatprep.subr.bf16.mxu0 0
        %6009 = vmatpush1.bf16.msra.mxu0 0
        %6010 = vmatprep.subr.bf16.mxu0 0
        %6011 = vmatpush1.bf16.msra.mxu0 0
        %6012 = vmatprep.subr.bf16.mxu0 0
        %6013 = vmatpush1.bf16.msra.mxu0 0
        %6014 = vmatprep.subr.bf16.mxu0 0
        %6015 = vmatpush1.bf16.msra.mxu0 0
        %6016 = vmatprep.subr.bf16.mxu0 0
        %6017 = vmatpush1.bf16.msra.mxu0 0
        %6018 = vmatprep.subr.bf16.mxu0 %v5925
        %6019 = vmatpush1.bf16.msra.mxu0 %v5924
        %6020 = vmatprep.subr.bf16.mxu0 %v5923
        %6021 = vmatpush1.bf16.msra.mxu0 %v5922
        %6022 = vmatprep.subr.bf16.mxu0 0
        %6023 = vmatpush2.bf16.msra.mxu0 0
        %6024 = vmatprep.subr.bf16.mxu0 0
        %6025 = vmatpush2.bf16.msra.mxu0 0
        %6026 = vmatprep.subr.bf16.mxu0 0
        %6027 = vmatpush2.bf16.msra.mxu0 0
        %6028 = vmatprep.subr.bf16.mxu0 0
        %6029 = vmatpush2.bf16.msra.mxu0 0
        %6030 = vmatprep.subr.bf16.mxu0 0
        %6031 = vmatpush2.bf16.msra.mxu0 0
        %6032 = vmatprep.subr.bf16.mxu0 0
        %6033 = vmatpush2.bf16.msra.mxu0 0
        %6034 = vmatprep.subr.bf16.mxu0 0
        %6035 = vmatpush2.bf16.msra.mxu0 0
        %6036 = vmatprep.subr.bf16.mxu0 0
        %6037 = vmatpush2.bf16.msra.mxu0 0
        %6038 = vmatprep.mubr.bf16.mxu0 0
        %6039 = vmatmul.mubr.bf16.gmra.mxu0 %v5995
        %v6040 = vpop.f32.mrf.mxu0
        %v6041 = vadd.f32 %v5937, %v6040
        %v6042 = vpop.f32.mrf.mxu0
        %v6043 = vadd.f32 %v5937, %v6042
        %v6044 = vpop.f32.mrf.mxu0
        %v6045 = vadd.f32 %v5942, %v6044
        %v6046 = vpop.f32.mrf.mxu0
        %v6047 = vadd.f32 %v5942, %v6046
        %6048 = vmatprep.mubr.bf16.mxu0 0
        %6049 = vmatmul.mubr.bf16.gmra.mxu0 %v5998
        %v6050 = vpop.f32.mrf.mxu0
        %v6051 = vadd.f32 %v5947, %v6050
        %v6052 = vpop.f32.mrf.mxu0
        %v6053 = vadd.f32 %v5947, %v6052
        %v6054 = vpop.f32.mrf.mxu0
        %v6055 = vadd.f32 %v5952, %v6054
        %v6056 = vpop.f32.mrf.mxu0
        %v6057 = vadd.f32 %v5952, %v6056
        %6058 = vmatprep.mubr.bf16.mxu0 0
        %6059 = vmatmul.mubr.bf16.gmra.mxu0 %v6001
        %v6060 = vpop.f32.mrf.mxu0
        %v6061 = vadd.f32 %v5957, %v6060
        %v6062 = vpop.f32.mrf.mxu0
        %v6063 = vadd.f32 %v5957, %v6062
        %v6064 = vpop.f32.mrf.mxu0
        %v6065 = vadd.f32 %v5962, %v6064
        %v6066 = vpop.f32.mrf.mxu0
        %v6067 = vadd.f32 %v5962, %v6066
        %6068 = vmatprep.mubr.bf16.mxu0 0
        %6069 = vmatmul.mubr.bf16.gmra.mxu0 %v6004
        %v6070 = vpop.f32.mrf.mxu0
        %v6071 = vadd.f32 %v5967, %v6070
        %v6072 = vpop.f32.mrf.mxu0
        %v6073 = vadd.f32 %v5967, %v6072
        %v6074 = vpop.f32.mrf.mxu0
        %v6075 = vadd.f32 %v5972, %v6074
        %v6076 = vpop.f32.mrf.mxu0
        %v6077 = vadd.f32 %v5972, %v6076
        %6078 = vdwg.mxu0
        %v6079 = vmax.f32 %v6041, 0.0
        %v6080 = vmax.f32 %v6043, 0.0
        %v6081 = vmax.f32 %v6045, 0.0
        %v6082 = vmax.f32 %v6047, 0.0
        %v6083 = vmax.f32 %v6051, 0.0
        %v6084 = vmax.f32 %v6053, 0.0
        %v6085 = vmax.f32 %v6055, 0.0
        %v6086 = vmax.f32 %v6057, 0.0
        %v6087 = vmax.f32 %v6061, 0.0
        %v6088 = vmax.f32 %v6063, 0.0
        %v6089 = vmax.f32 %v6065, 0.0
        %v6090 = vmax.f32 %v6067, 0.0
        %v6091 = vmax.f32 %v6071, 0.0
        %v6092 = vmax.f32 %v6073, 0.0
        %v6093 = vmax.f32 %v6075, 0.0
        %v6094 = vmax.f32 %v6077, 0.0
        %v6095 = vld [vmem:[%s12] sm:$0xf]
        %v6096 = vld [vmem:[%s12 + $0x4] sm:$0xf]
        %v6097 = vld [vmem:[%s12 + $0x8] sm:$0xf]
        %v6098 = vld [vmem:[%s12 + $0xc] sm:$0xf]
        %v6099 = vpack.c.bf16 %v6081, %v6079
        %v6100 = vpack.c.bf16 %v6082, %v6080
        %v6101 = vpack.c.bf16 %v6085, %v6083
        %v6102 = vpack.c.bf16 %v6086, %v6084
        %v6103 = vpack.c.bf16 %v6089, %v6087
        %v6104 = vpack.c.bf16 %v6090, %v6088
        %v6105 = vpack.c.bf16 %v6093, %v6091
        %v6106 = vpack.c.bf16 %v6094, %v6092
        %v6107 = vld [vmem:[%s13] sm:$0xff]
        %v6108 = vld [vmem:[%s13 + $0x8] sm:$0xff]
        %v6109 = vld [vmem:[%s13 + $0x10] sm:$0xff]
        %v6110 = vld [vmem:[%s13 + $0x18] sm:$0xff]
        %6112 = vset.pattern.permute.xlu0 0
        %6113 = vperm.xlu0 %6112, %v6107
        %v6114 = vpop.permute.xlu0 %6113
        %6117 = vset.pattern.permute.xlu0 0
        %6118 = vperm.xlu0 %6117, %v6108
        %v6119 = vpop.permute.xlu0 %6118
        %6122 = vset.pattern.permute.xlu0 0
        %6123 = vperm.xlu0 %6122, %v6109
        %v6124 = vpop.permute.xlu0 %6123
        %6127 = vset.pattern.permute.xlu0 0
        %6128 = vperm.xlu0 %6127, %v6110
        %v6129 = vpop.permute.xlu0 %6128
        %v6135 = vunpack.c.l.b16 %v6095
        %v6136 = vunpack.c.l.b16 %v6096
        %v6137 = vunpack.c.l.b16 %v6097
        %v6138 = vunpack.c.l.b16 %v6098
        %v6139 = vpack.c.b16 %v6136, %v6135
        %v6140 = vpack.c.b16 %v6138, %v6137
        %vm6141 = vcmask 523264
        %v6143 = vsel %vm6141, %v6139, 0
        %v6146 = vsel %vm6141, %v6140, 0
        %6148 = vmatprep.subr.bf16.mxu0 0
        %6149 = vmatpush1.bf16.msra.mxu0 0
        %6150 = vmatprep.subr.bf16.mxu0 0
        %6151 = vmatpush1.bf16.msra.mxu0 0
        %6152 = vmatprep.subr.bf16.mxu0 0
        %6153 = vmatpush1.bf16.msra.mxu0 0
        %6154 = vmatprep.subr.bf16.mxu0 0
        %6155 = vmatpush1.bf16.msra.mxu0 0
        %6156 = vmatprep.subr.bf16.mxu0 %v6106
        %6157 = vmatpush1.bf16.msra.mxu0 %v6105
        %6158 = vmatprep.subr.bf16.mxu0 %v6104
        %6159 = vmatpush1.bf16.msra.mxu0 %v6103
        %6160 = vmatprep.subr.bf16.mxu0 %v6102
        %6161 = vmatpush1.bf16.msra.mxu0 %v6101
        %6162 = vmatprep.subr.bf16.mxu0 %v6100
        %6163 = vmatpush1.bf16.msra.mxu0 %v6099
        %6164 = vmatprep.subr.bf16.mxu0 0
        %6165 = vmatpush2.bf16.msra.mxu0 0
        %6166 = vmatprep.subr.bf16.mxu0 0
        %6167 = vmatpush2.bf16.msra.mxu0 0
        %6168 = vmatprep.subr.bf16.mxu0 0
        %6169 = vmatpush2.bf16.msra.mxu0 0
        %6170 = vmatprep.subr.bf16.mxu0 0
        %6171 = vmatpush2.bf16.msra.mxu0 0
        %6172 = vmatprep.subr.bf16.mxu0 0
        %6173 = vmatpush2.bf16.msra.mxu0 0
        %6174 = vmatprep.subr.bf16.mxu0 0
        %6175 = vmatpush2.bf16.msra.mxu0 0
        %6176 = vmatprep.subr.bf16.mxu0 0
        %6177 = vmatpush2.bf16.msra.mxu0 0
        %6178 = vmatprep.subr.bf16.mxu0 0
        %6179 = vmatpush2.bf16.msra.mxu0 0
        %6180 = vmatprep.mubr.bf16.mxu0 0
        %6181 = vmatmul.mubr.bf16.gmra.mxu0 %v6143
        %v6182 = vpop.f32.mrf.mxu0
        %v6183 = vadd.f32 %v6114, %v6182
        %v6184 = vpop.f32.mrf.mxu0
        %v6185 = vadd.f32 %v6114, %v6184
        %v6186 = vpop.f32.mrf.mxu0
        %v6187 = vadd.f32 %v6119, %v6186
        %v6188 = vpop.f32.mrf.mxu0
        %v6189 = vadd.f32 %v6119, %v6188
        %6190 = vmatprep.mubr.bf16.mxu0 0
        %6191 = vmatmul.mubr.bf16.gmra.mxu0 %v6146
        %v6192 = vpop.f32.mrf.mxu0
        %v6193 = vadd.f32 %v6124, %v6192
        %v6194 = vpop.f32.mrf.mxu0
        %v6195 = vadd.f32 %v6124, %v6194
        %v6196 = vpop.f32.mrf.mxu0
        %v6197 = vadd.f32 %v6129, %v6196
        %v6198 = vpop.f32.mrf.mxu0
        %v6199 = vadd.f32 %v6129, %v6198
        %6200 = vdwg.mxu0
        %v6201 = vadd.f32 %v5906, %v6183
        %v6202 = vadd.f32 %v5907, %v6185
        %v6203 = vadd.f32 %v5908, %v6187
        %v6204 = vadd.f32 %v5909, %v6189
        %v6205 = vadd.f32 %v5910, %v6193
        %v6206 = vadd.f32 %v5911, %v6195
        %v6207 = vadd.f32 %v5912, %v6197
        %v6208 = vadd.f32 %v5913, %v6199
        %v6209 = vadd.f32 %v6201, %v6203
        %v6210 = vadd.f32 %v6209, %v6205
        %v6211 = vadd.f32 %v6210, %v6207
        %v6212 = vrot.slane %v6211, 4
        %v6213 = vadd.f32 %v6211, %v6212
        %v6214 = vrot.slane %v6213, 2
        %v6215 = vadd.f32 %v6213, %v6214
        %v6216 = vrot.slane %v6215, 1
        %v6217 = vadd.f32 %v6215, %v6216
        %v6218 = vadd.f32 %v6202, %v6204
        %v6219 = vadd.f32 %v6218, %v6206
        %v6220 = vadd.f32 %v6219, %v6208
        %v6221 = vrot.slane %v6220, 4
        %v6222 = vadd.f32 %v6220, %v6221
        %v6223 = vrot.slane %v6222, 2
        %v6224 = vadd.f32 %v6222, %v6223
        %v6225 = vrot.slane %v6224, 1
        %v6226 = vadd.f32 %v6224, %v6225
        %v6227 = vmul.f32 %v6217, %v1671
        %v6228 = vmul.f32 %v6226, %v1671
        %v6229 = vsub.f32 %v6201, %v6227
        %v6230 = vsub.f32 %v6202, %v6228
        %v6231 = vsub.f32 %v6203, %v6227
        %v6232 = vsub.f32 %v6204, %v6228
        %v6233 = vsub.f32 %v6205, %v6227
        %v6234 = vsub.f32 %v6206, %v6228
        %v6235 = vsub.f32 %v6207, %v6227
        %v6236 = vsub.f32 %v6208, %v6228
        %v6237 = vmul.f32 %v6229, %v6229
        %v6238 = vmul.f32 %v6230, %v6230
        %v6239 = vmul.f32 %v6231, %v6231
        %v6240 = vmul.f32 %v6232, %v6232
        %v6241 = vmul.f32 %v6233, %v6233
        %v6242 = vmul.f32 %v6234, %v6234
        %v6243 = vmul.f32 %v6235, %v6235
        %v6244 = vmul.f32 %v6236, %v6236
        %v6245 = vadd.f32 %v6237, %v6239
        %v6246 = vadd.f32 %v6245, %v6241
        %v6247 = vadd.f32 %v6246, %v6243
        %v6248 = vrot.slane %v6247, 4
        %v6249 = vadd.f32 %v6247, %v6248
        %v6250 = vrot.slane %v6249, 2
        %v6251 = vadd.f32 %v6249, %v6250
        %v6252 = vrot.slane %v6251, 1
        %v6253 = vadd.f32 %v6251, %v6252
        %v6254 = vadd.f32 %v6238, %v6240
        %v6255 = vadd.f32 %v6254, %v6242
        %v6256 = vadd.f32 %v6255, %v6244
        %v6257 = vrot.slane %v6256, 4
        %v6258 = vadd.f32 %v6256, %v6257
        %v6259 = vrot.slane %v6258, 2
        %v6260 = vadd.f32 %v6258, %v6259
        %v6261 = vrot.slane %v6260, 1
        %v6262 = vadd.f32 %v6260, %v6261
        %v6263 = vmul.f32 %v6253, %v1671
        %v6264 = vmul.f32 %v6262, %v1671
        %v6265 = vadd.f32 %v6263, 1e-05
        %v6266 = vadd.f32 %v6264, 1e-05
        %v6267 = vrsqrt.pop %v6265
        %v6268 = vrsqrt.pop %v6266
        %v6269 = vmul.f32 %v6229, %v6267
        %v6270 = vmul.f32 %v6230, %v6268
        %v6271 = vmul.f32 %v6231, %v6267
        %v6272 = vmul.f32 %v6232, %v6268
        %v6273 = vmul.f32 %v6233, %v6267
        %v6274 = vmul.f32 %v6234, %v6268
        %v6275 = vmul.f32 %v6235, %v6267
        %v6276 = vmul.f32 %v6236, %v6268
        %6278 = vset.pattern.permute.xlu0 0
        %6279 = vperm.xlu0 %6278, %v562
        %v6280 = vpop.permute.xlu0 %6279
        %6283 = vset.pattern.permute.xlu0 0
        %6284 = vperm.xlu0 %6283, %v563
        %v6285 = vpop.permute.xlu0 %6284
        %6288 = vset.pattern.permute.xlu0 0
        %6289 = vperm.xlu0 %6288, %v564
        %v6290 = vpop.permute.xlu0 %6289
        %6293 = vset.pattern.permute.xlu0 0
        %6294 = vperm.xlu0 %6293, %v565
        %v6295 = vpop.permute.xlu0 %6294
        %v6297 = vmul.f32 %v6269, %v6280
        %v6298 = vmul.f32 %v6270, %v6280
        %v6299 = vmul.f32 %v6271, %v6285
        %v6300 = vmul.f32 %v6272, %v6285
        %v6301 = vmul.f32 %v6273, %v6290
        %v6302 = vmul.f32 %v6274, %v6290
        %v6303 = vmul.f32 %v6275, %v6295
        %v6304 = vmul.f32 %v6276, %v6295
        %6306 = vset.pattern.permute.xlu0 0
        %6307 = vperm.xlu0 %6306, %v566
        %v6308 = vpop.permute.xlu0 %6307
        %6311 = vset.pattern.permute.xlu0 0
        %6312 = vperm.xlu0 %6311, %v567
        %v6313 = vpop.permute.xlu0 %6312
        %6316 = vset.pattern.permute.xlu0 0
        %6317 = vperm.xlu0 %6316, %v568
        %v6318 = vpop.permute.xlu0 %6317
        %6321 = vset.pattern.permute.xlu0 0
        %6322 = vperm.xlu0 %6321, %v569
        %v6323 = vpop.permute.xlu0 %6322
        %v6325 = vadd.f32 %v6297, %v6308
        %v6326 = vadd.f32 %v6298, %v6308
        %v6327 = vadd.f32 %v6299, %v6313
        %v6328 = vadd.f32 %v6300, %v6313
        %v6329 = vadd.f32 %v6301, %v6318
        %v6330 = vadd.f32 %v6302, %v6318
        %v6331 = vadd.f32 %v6303, %v6323
        %v6332 = vadd.f32 %v6304, %v6323
        %v6333 = vld [vmem:[%s14] sm:$0x1]
        %v6334 = vpack.c.bf16 %v6327, %v6325
        %v6335 = vpack.c.bf16 %v6328, %v6326
        %v6336 = vpack.c.bf16 %v6331, %v6329
        %v6337 = vpack.c.bf16 %v6332, %v6330
        %v6338 = vld [vmem:[%s15] sm:$0x3]
        %6340 = vset.pattern.permute.xlu0 0
        %6341 = vperm.xlu0 %6340, %v6338
        %v6342 = vpop.permute.xlu0 %6341
        %v6345 = vsel %vm762, %v6333, 0
        %6347 = vmatprep.subr.bf16.mxu0 0
        %6348 = vmatpush1.bf16.msra.mxu0 0
        %6349 = vmatprep.subr.bf16.mxu0 0
        %6350 = vmatpush1.bf16.msra.mxu0 0
        %6351 = vmatprep.subr.bf16.mxu0 0
        %6352 = vmatpush1.bf16.msra.mxu0 0
        %6353 = vmatprep.subr.bf16.mxu0 0
        %6354 = vmatpush1.bf16.msra.mxu0 0
        %6355 = vmatprep.subr.bf16.mxu0 0
        %6356 = vmatpush1.bf16.msra.mxu0 0
        %6357 = vmatprep.subr.bf16.mxu0 0
        %6358 = vmatpush1.bf16.msra.mxu0 0
        %6359 = vmatprep.subr.bf16.mxu0 %v6337
        %6360 = vmatpush1.bf16.msra.mxu0 %v6336
        %6361 = vmatprep.subr.bf16.mxu0 %v6335
        %6362 = vmatpush1.bf16.msra.mxu0 %v6334
        %6363 = vmatprep.subr.bf16.mxu0 0
        %6364 = vmatpush2.bf16.msra.mxu0 0
        %6365 = vmatprep.subr.bf16.mxu0 0
        %6366 = vmatpush2.bf16.msra.mxu0 0
        %6367 = vmatprep.subr.bf16.mxu0 0
        %6368 = vmatpush2.bf16.msra.mxu0 0
        %6369 = vmatprep.subr.bf16.mxu0 0
        %6370 = vmatpush2.bf16.msra.mxu0 0
        %6371 = vmatprep.subr.bf16.mxu0 0
        %6372 = vmatpush2.bf16.msra.mxu0 0
        %6373 = vmatprep.subr.bf16.mxu0 0
        %6374 = vmatpush2.bf16.msra.mxu0 0
        %6375 = vmatprep.subr.bf16.mxu0 0
        %6376 = vmatpush2.bf16.msra.mxu0 0
        %6377 = vmatprep.subr.bf16.mxu0 0
        %6378 = vmatpush2.bf16.msra.mxu0 0
        %6379 = vmatprep.mubr.bf16.mxu0 0
        %6380 = vmatmul.mubr.bf16.gmra.mxu0 %v6345
        %v6381 = vpop.f32.mrf.mxu0
        %v6382 = vadd.f32 %v6342, %v6381
        %v6383 = vpop.f32.mrf.mxu0
        %v6384 = vadd.f32 %v6342, %v6383
        %v6385 = vpop.f32.mrf.mxu0
        %v6386 = vpop.f32.mrf.mxu0
        %6387 = vdwg.mxu0
        %v6390 = vcombine.low %v6382, %v6384
        %v6392 = vunpack.c.l.s4 1983009808
        %v6393 = vunpack.c.0.s8 %v6392
        %v6394 = vlaneseq
        %v6395 = vshrl.u32 %v6394, 7
        %v6396 = vsub.s32 %v6393, %v6395
        %v6397 = vrot.slane %v6390, %v6396
        %6399 = vst [vmem:[%s529] sm:$0xf] %v6397
        %s6400 = sand.u32 %s384, 1
        %s6401 = scalar_lea.sflag [#allocation3], %s6400
        %s6402 = sand.u32 %s384, 1
        %s6403 = smul.addr %s6402, 4
        %s6404 = scalar_lea.vmem [#allocation2], %s6403
        // Predicated region
        $region85: #{tpu_custom_call.1} parent=83 // pred_check
          %p6405 = pneg %p394
        $region86: #{tpu_custom_call.1} parent=83 // pred_check_branch
          %6407 = sbr.rel (%p6405) target = $region88
        $region87: #{tpu_custom_call.1} parent=83 // pred_region
          %s6409 = ssub.s32 64, 64
          %6410 = vsyncadd %s6401, %s6409
          %s6411 = smul.addr %s30, 2
          %s6412 = smul.addr %s6411, 32
          %s6413 = scalar_lea.hbm %s16, %s6412
          %s6415 = sshll.u32 %s6404, 4
          %s6416 = int_to_ptr.vmem [resolvable:$true] %s6415
          %6418 = dma.vmem_to_hbm [thread:$0]  %s6416, 64, %s6413, %s6401
        $region88: #{tpu_custom_call.1} parent=83 // pred_fallthru
          _
      $region84: #{tpu_custom_call.1} parent=5 // pred_fallthru
        _
      %p6419 = scmp.le.s32.totalorder 2, %s25
      // Predicated region
      $region89: #{tpu_custom_call.1} parent=5 // pred_check
        %p6420 = pneg %p6419
      $region90: #{tpu_custom_call.1} parent=5 // pred_check_branch
        %6422 = sbr.rel (%p6420) target = $region92
      $region91: #{tpu_custom_call.1} parent=5 // pred_region
        %s6423 = ssub.s32 %s25, 2
        // Predicated region
        $region93: #{tpu_custom_call.1} parent=91 // pred_check
          %p6424 = pneg %p400
        $region94: #{tpu_custom_call.1} parent=91 // pred_check_branch
          %6426 = sbr.rel (%p6424) target = $region96
        $region95: #{tpu_custom_call.1} parent=91 // pred_region
          %s6427 = sand.u32 %s385, 1
          %s6428 = scalar_lea.sflag [#allocation3], %s6427
          %s6429 = sand.u32 %s385, 1
          %s6430 = smul.addr %s6429, 4
          %s6431 = scalar_lea.vmem [#allocation2], %s6430
          %6432 = dma.done %s6428, 64
        $region96: #{tpu_custom_call.1} parent=91 // pred_fallthru
          _
      $region92: #{tpu_custom_call.1} parent=5 // pred_fallthru
        _
    $region6: #{tpu_custom_call.1} parent=1 // loop_footer
      %s29 = sadd.s32 1, %s25
    $region7: #{tpu_custom_call.1} parent=1 // loop_footer_branch
      %24 = sbr.rel target = $region3
    $region8: #{tpu_custom_call.1} parent=1 // loop_exit
      _
    %6433 = vsyncpa [#allocation3], 1
    %s6434 = scalar_lea.sflag [#allocation3], 1
    %6435 = vsyncpa %s6434, 1

</llo_original>
